<compile_context>
chip_gen: v6e
topology: v6e:2x2x1
jax: 0.10.0
libtpu: 0.0.40
codegen_flags: <defaults>
</compile_context>

<pallas_src>
import functools

import jax
import jax.numpy as jnp
from jax.experimental import pallas as pl
from jax.experimental.pallas import tpu as pltpu


# ----------------------------------------------------------------------------
# Helpers
# ----------------------------------------------------------------------------
def _round_up(x, m):
    return ((x + m - 1) // m) * m


_VMEM = pl.BlockSpec(memory_space=pltpu.MemorySpace.VMEM)


# ----------------------------------------------------------------------------
# Pallas kernels
# ----------------------------------------------------------------------------
def _gated_conv_kernel(x_ref, w_ref, b_ref, o_ref, *, c_out):
    # x: (TM, K*K*Cin) bf16 im2col patches
    # w: (K*K*Cin, 2*Cout) bf16  = [Wh | Wg]   (fused: one MXU pass)
    # b: (1, 2*Cout) f32         = [bh | bg]
    y = jnp.dot(x_ref[...], w_ref[...], preferred_element_type=jnp.float32)
    y = y + b_ref[...]
    h = y[:, :c_out]
    g = y[:, c_out:]
    o_ref[...] = (h * jax.nn.sigmoid(g)).astype(o_ref.dtype)


def _head_kernel(x_ref, w_ref, b_ref, mu_ref, std_ref, *, latent):
    # x: (B, h+S) bf16; w: (h+S, 2*latent) bf16 = [Wmu | Wlv]; b: (1, 2*latent) f32
    y = jnp.dot(x_ref[...], w_ref[...], preferred_element_type=jnp.float32)
    y = y + b_ref[...]
    mu = y[:, :latent]
    lv = jnp.clip(y[:, latent:], -6.0, 2.0)       # nn.Hardtanh(min=-6.0, max=2.0)
    mu_ref[...] = mu
    std_ref[...] = jnp.exp(0.5 * lv)              # std = exp(0.5 * log_var)


# ----------------------------------------------------------------------------
# Pallas wrappers
# ----------------------------------------------------------------------------
def gated_conv_matmul(patches, w_fused, b_fused, *, tm_max=256):
    """Row-tiled fused gated-conv matmul.  patches: (N, Kdim) bf16."""
    n, kdim = patches.shape
    two_c = w_fused.shape[1]
    c_out = two_c // 2

    # Tile size: multiple of 16 (bf16 sublane packing), capped at tm_max.
    tm = min(tm_max, _round_up(n, 16))
    n_pad = _round_up(n, tm)
    if n_pad != n:
        patches = jnp.pad(patches, ((0, n_pad - n), (0, 0)))

    cost = pl.CostEstimate(
        flops=2 * n_pad * kdim * two_c,
        transcendentals=n_pad * c_out,
        bytes_accessed=(n_pad * kdim * 2 + kdim * two_c * 2
                        + two_c * 4 + n_pad * c_out * 2),
    )

    out = pl.pallas_call(
        functools.partial(_gated_conv_kernel, c_out=c_out),
        out_shape=jax.ShapeDtypeStruct((n_pad, c_out), jnp.bfloat16),
        grid_spec=pltpu.PrefetchScalarGridSpec(
            num_scalar_prefetch=0,
            grid=(n_pad // tm,),
            in_specs=[
                pl.BlockSpec((tm, kdim), lambda i: (i, 0)),      # patch tiles stream
                pl.BlockSpec((kdim, two_c), lambda i: (0, 0)),   # weights resident
                pl.BlockSpec((1, two_c), lambda i: (0, 0)),      # bias resident
            ],
            out_specs=pl.BlockSpec((tm, c_out), lambda i: (i, 0)),
        ),
        compiler_params=pltpu.CompilerParams(
            dimension_semantics=("parallel",)),                  # shards across TCs on v7x
        cost_estimate=cost,
    )(patches, w_fused, b_fused)
    return out[:n]


def vae_head(feat, w_head, b_head):
    """Fused mu / log_var head.  feat: (B, h+S) bf16."""
    n, in_f = feat.shape
    two_l = w_head.shape[1]
    latent = two_l // 2
    cost = pl.CostEstimate(
        flops=2 * n * in_f * two_l,
        transcendentals=n * latent,
        bytes_accessed=(n * in_f * 2 + in_f * two_l * 2
                        + two_l * 4 + 2 * n * latent * 4),
    )
    return pl.pallas_call(
        functools.partial(_head_kernel, latent=latent),
        out_shape=(jax.ShapeDtypeStruct((n, latent), jnp.float32),
                   jax.ShapeDtypeStruct((n, latent), jnp.float32)),
        in_specs=[_VMEM] * 3,
        out_specs=(_VMEM, _VMEM),
        cost_estimate=cost,
    )(feat, w_head, b_head)


# ----------------------------------------------------------------------------
# Plain-JAX glue: im2col patch extraction (pure reshuffling, no FLOPs).
# Kept in bf16 so the K*K-duplicated patch matrix is half-size in HBM.
# (Further win: build patches in-kernel from shifted slices to avoid the
#  K*K duplication entirely — not done here to keep lowering simple.)
# ----------------------------------------------------------------------------
def im2col(x_nhwc, ksize, stride, pad):
    B, H, W, C = x_nhwc.shape
    xp = jnp.pad(x_nhwc, ((0, 0), (pad, pad), (pad, pad), (0, 0)))
    Ho = (H + 2 * pad - ksize) // stride + 1
    Wo = (W + 2 * pad - ksize) // stride + 1
    cols = []
    for ki in range(ksize):
        for kj in range(ksize):
            cols.append(xp[:, ki:ki + stride * Ho:stride,
                           kj:kj + stride * Wo:stride, :])
    p = jnp.stack(cols, axis=3)                       # (B, Ho, Wo, K*K, C)
    return p.reshape(B * Ho * Wo, ksize * ksize * C), Ho, Wo


# ----------------------------------------------------------------------------
# Config & parameter init (shapes taken from the module's __init__)
# ----------------------------------------------------------------------------
CONV_CFG = [  # (c_in, c_out, kernel, stride, pad)
    (1, 32, 7, 1, 3),
    (32, 32, 3, 2, 1),
    (32, 64, 5, 1, 2),
    (64, 64, 3, 2, 1),
    (64, 6, 3, 1, 1),
]


def conv_out_hw(H, W):
    for (_cin, _cout, k, s, p) in CONV_CFG:
        H = (H + 2 * p - k) // s + 1
        W = (W + 2 * p - k) // s + 1
    return H, W


def init_params(key, S, latent_dims, h_dim, spatial_in):
    conv_params = []
    for (cin, cout, k, _s, _p) in CONV_CFG:
        key, k1, k2, k3, k4 = jax.random.split(key, 5)
        fan_in = cin * k * k
        scale = 1.0 / jnp.sqrt(jnp.float32(fan_in))
        wh = jax.random.uniform(k1, (k * k * cin, cout), jnp.float32, -scale, scale)
        bh = jax.random.uniform(k2, (1, cout), jnp.float32, -scale, scale)
        wg = jax.random.uniform(k3, (k * k * cin, cout), jnp.float32, -scale, scale)
        bg = jax.random.uniform(k4, (1, cout), jnp.float32, -scale, scale)
        # Fuse h- and gate-branch weights once at init: W = [Wh | Wg].
        w_fused = jnp.concatenate([wh, wg], axis=1).astype(jnp.bfloat16)
        b_fused = jnp.concatenate([bh, bg], axis=1)               # f32
        conv_params.append((w_fused, b_fused))

    in_f = h_dim + S
    key, k1, k2, k3, k4 = jax.random.split(key, 5)
    lscale = 1.0 / jnp.sqrt(jnp.float32(in_f))
    # Head weights defined in PyTorch's flatten order (NCHW: f = c*H*W + i*W + j).
    wmu = jax.random.uniform(k1, (in_f, latent_dims), jnp.float32, -lscale, lscale)
    bmu = jax.random.uniform(k2, (1, latent_dims), jnp.float32, -lscale, lscale)
    wlv = jax.random.uniform(k3, (in_f, latent_dims), jnp.float32, -lscale, lscale)
    blv = jax.random.uniform(k4, (1, latent_dims), jnp.float32, -lscale, lscale)

    # Permute the first h_dim rows from NCHW-flatten order to NHWC-flatten order
    # so the conv output can be flattened directly without a transpose.
    Hl, Wl = conv_out_hw(*spatial_in)
    Cl = CONV_CFG[-1][1]
    assert Hl * Wl * Cl == h_dim
    ii, jj, cc = jnp.meshgrid(jnp.arange(Hl), jnp.arange(Wl), jnp.arange(Cl),
                              indexing="ij")
    perm_hw = (cc * (Hl * Wl) + ii * Wl + jj).reshape(-1)         # NHWC pos -> NCHW pos
    perm = jnp.concatenate([perm_hw, jnp.arange(h_dim, in_f)])
    w_head = jnp.concatenate([wmu[perm], wlv[perm]], axis=1).astype(jnp.bfloat16)
    b_head = jnp.concatenate([bmu, blv], axis=1)                  # f32
    return conv_params, (w_head, b_head)


# ----------------------------------------------------------------------------
# Forward pass (matches GatedConv2dEncoder.forward semantics)
# ----------------------------------------------------------------------------
def gated_conv2d_encoder_forward(conv_params, head_params, x_nchw, component):
    B = x_nchw.shape[0]
    x = jnp.transpose(x_nchw, (0, 2, 3, 1)).astype(jnp.bfloat16)  # NCHW -> NHWC, bf16

    for (w_fused, b_fused), (_cin, cout, k, s, p) in zip(conv_params, CONV_CFG):
        patches, Ho, Wo = im2col(x, k, s, p)
        y = gated_conv_matmul(patches, w_fused, b_fused)          # (B*Ho*Wo, cout) bf16
        x = y.reshape(B, Ho, Wo, cout)

    # Head weights are row-permuted to NHWC order, so flatten directly:
    # equivalent to PyTorch's NCHW x.view(-1, h) against the original weights.
    flat = x.reshape(B, -1)
    feat = jnp.concatenate([flat, component.astype(jnp.bfloat16)], axis=-1)

    w_head, b_head = head_params
    mu, std = vae_head(feat, w_head, b_head)
    return mu, std


# ----------------------------------------------------------------------------
if __name__ == "__main__":
    # h = 294 = 6 * 7 * 7  <=>  28x28 input spatial (28 -> 28 -> 14 -> 14 -> 7 -> 7)
    B, S, latent_dims, h_dim = 2, 8, 16, 294

    key = jax.random.PRNGKey(0)
    key, kx, kc, kp = jax.random.split(key, 4)
    x = jax.random.normal(kx, (B, 1, 28, 28), jnp.float32)        # NCHW like PyTorch
    component = jax.random.normal(kc, (B, S), jnp.float32)

    conv_params, head_params = init_params(kp, S, latent_dims, h_dim, (28, 28))

    fwd = jax.jit(gated_conv2d_encoder_forward)
    mu, std = fwd(conv_params, head_params, x, component)
    mu, std = jax.block_until_ready(mu), jax.block_until_ready(std)

    assert mu.shape == (B, latent_dims) and std.shape == (B, latent_dims)
    assert bool(jnp.all(jnp.isfinite(mu))) and bool(jnp.all(jnp.isfinite(std)))
    assert bool(jnp.all(std > 0.0))
    # Hardtanh(-6, 2) => std in [exp(-3), exp(1)]
    assert bool(jnp.all(std >= jnp.exp(-3.0) - 1e-5))
    assert bool(jnp.all(std <= jnp.exp(1.0) + 1e-5))

    print("KERNEL_OK")
</pallas_src>

<mosaic_0001>
module attributes {stable_mosaic.version = 11 : i64} {
  func.func @_gated_conv_kernel(%arg0: i32, %arg1: memref<256x49xbf16, #tpu.memory_space<vmem>>, %arg2: memref<49x64xbf16, #tpu.memory_space<vmem>>, %arg3: memref<1x64xf32, #tpu.memory_space<vmem>>, %arg4: memref<256x32xbf16, #tpu.memory_space<vmem>>) attributes {dimension_semantics = [#tpu.dimension_semantics<parallel>], iteration_bounds = array<i64: 7>, scalar_prefetch = 0 : i64, scratch_operands = 0 : i64, tpu.core_type = #tpu.core_type<tc>, window_params = [{transform_indices = @transform_0, window_bounds = array<i64: 256, 49>}, {pipeline_mode = #tpu.pipeline_mode<synchronous>, transform_indices = @transform_1, window_bounds = array<i64: 49, 64>}, {pipeline_mode = #tpu.pipeline_mode<synchronous>, transform_indices = @transform_2, window_bounds = array<i64: 1, 64>}, {transform_indices = @transform_3, window_bounds = array<i64: 256, 32>}]} {
    %c0 = arith.constant 0 : index
    %c0_0 = arith.constant 0 : index
    %0 = vector.load %arg1[%c0, %c0_0] : memref<256x49xbf16, #tpu.memory_space<vmem>>, vector<256x49xbf16>
    %c0_1 = arith.constant 0 : index
    %c0_2 = arith.constant 0 : index
    %1 = vector.load %arg2[%c0_1, %c0_2] : memref<49x64xbf16, #tpu.memory_space<vmem>>, vector<49x64xbf16>
    %cst = arith.constant dense<0.000000e+00> : vector<256x64xf32>
    %2 = tpu.matmul %0, %1, %cst {dimension_numbers = #tpu.dot_dimension_numbers<[1], [0], [0], [1], [0, 0, 1, 1], [], []>} : vector<256x49xbf16>, vector<49x64xbf16>, vector<256x64xf32> -> vector<256x64xf32>
    %c0_3 = arith.constant 0 : index
    %c0_4 = arith.constant 0 : index
    %3 = vector.load %arg3[%c0_3, %c0_4] : memref<1x64xf32, #tpu.memory_space<vmem>>, vector<1x64xf32>
    %4 = vector.broadcast %3 : vector<1x64xf32> to vector<256x64xf32>
    %5 = arith.addf %2, %4 : vector<256x64xf32>
    %6 = vector.extract_strided_slice %5 {offsets = [0, 0], sizes = [256, 32], strides = [1, 1]} : vector<256x64xf32> to vector<256x32xf32>
    %7 = vector.extract_strided_slice %5 {offsets = [0, 32], sizes = [256, 32], strides = [1, 1]} : vector<256x64xf32> to vector<256x32xf32>
    %8 = arith.negf %7 : vector<256x32xf32>
    %9 = math.exp %8 : vector<256x32xf32>
    %cst_5 = arith.constant 1.000000e+00 : f32
    %10 = vector.broadcast %cst_5 : f32 to vector<256x32xf32>
    %11 = arith.addf %10, %9 : vector<256x32xf32>
    %12 = arith.divf %10, %11 : vector<256x32xf32>
    %13 = arith.mulf %6, %12 : vector<256x32xf32>
    %14 = arith.truncf %13 : vector<256x32xf32> to vector<256x32xbf16>
    %c0_6 = arith.constant 0 : index
    %c0_7 = arith.constant 0 : index
    %15 = vector.load %arg4[%c0_6, %c0_7] : memref<256x32xbf16, #tpu.memory_space<vmem>>, vector<256x32xbf16>
    tpu.vector_store %arg4[%c0_6, %c0_7], %14 {strides = array<i32>} : memref<256x32xbf16, #tpu.memory_space<vmem>>, vector<256x32xbf16>,
    return
  }
  func.func @transform_0(%arg0: i32) -> (i32, i32) {
    %c0_i32 = arith.constant 0 : i32
    %c0_i32_0 = arith.constant 0 : i32
    return %arg0, %c0_i32 : i32, i32
  }
  func.func @transform_1(%arg0: i32) -> (i32, i32) {
    %c0_i32 = arith.constant 0 : i32
    %c0_i32_0 = arith.constant 0 : i32
    %c0_i32_1 = arith.constant 0 : i32
    return %c0_i32, %c0_i32_0 : i32, i32
  }
  func.func @transform_2(%arg0: i32) -> (i32, i32) {
    %c0_i32 = arith.constant 0 : i32
    %c0_i32_0 = arith.constant 0 : i32
    %c0_i32_1 = arith.constant 0 : i32
    return %c0_i32, %c0_i32_0 : i32, i32
  }
  func.func @transform_3(%arg0: i32) -> (i32, i32) {
    %c0_i32 = arith.constant 0 : i32
    %c0_i32_0 = arith.constant 0 : i32
    return %arg0, %c0_i32 : i32, i32
  }
}

module attributes {stable_mosaic.version = 11 : i64} {
  func.func @_gated_conv_kernel(%arg0: i32, %arg1: memref<256x288xbf16, #tpu.memory_space<vmem>>, %arg2: memref<288x64xbf16, #tpu.memory_space<vmem>>, %arg3: memref<1x64xf32, #tpu.memory_space<vmem>>, %arg4: memref<256x32xbf16, #tpu.memory_space<vmem>>) attributes {dimension_semantics = [#tpu.dimension_semantics<parallel>], iteration_bounds = array<i64: 2>, scalar_prefetch = 0 : i64, scratch_operands = 0 : i64, tpu.core_type = #tpu.core_type<tc>, window_params = [{transform_indices = @transform_0, window_bounds = array<i64: 256, 288>}, {pipeline_mode = #tpu.pipeline_mode<synchronous>, transform_indices = @transform_1, window_bounds = array<i64: 288, 64>}, {pipeline_mode = #tpu.pipeline_mode<synchronous>, transform_indices = @transform_2, window_bounds = array<i64: 1, 64>}, {transform_indices = @transform_3, window_bounds = array<i64: 256, 32>}]} {
    %c0 = arith.constant 0 : index
    %c0_0 = arith.constant 0 : index
    %0 = vector.load %arg1[%c0, %c0_0] : memref<256x288xbf16, #tpu.memory_space<vmem>>, vector<256x288xbf16>
    %c0_1 = arith.constant 0 : index
    %c0_2 = arith.constant 0 : index
    %1 = vector.load %arg2[%c0_1, %c0_2] : memref<288x64xbf16, #tpu.memory_space<vmem>>, vector<288x64xbf16>
    %cst = arith.constant dense<0.000000e+00> : vector<256x64xf32>
    %2 = tpu.matmul %0, %1, %cst {dimension_numbers = #tpu.dot_dimension_numbers<[1], [0], [0], [1], [0, 0, 1, 1], [], []>} : vector<256x288xbf16>, vector<288x64xbf16>, vector<256x64xf32> -> vector<256x64xf32>
    %c0_3 = arith.constant 0 : index
    %c0_4 = arith.constant 0 : index
    %3 = vector.load %arg3[%c0_3, %c0_4] : memref<1x64xf32, #tpu.memory_space<vmem>>, vector<1x64xf32>
    %4 = vector.broadcast %3 : vector<1x64xf32> to vector<256x64xf32>
    %5 = arith.addf %2, %4 : vector<256x64xf32>
    %6 = vector.extract_strided_slice %5 {offsets = [0, 0], sizes = [256, 32], strides = [1, 1]} : vector<256x64xf32> to vector<256x32xf32>
    %7 = vector.extract_strided_slice %5 {offsets = [0, 32], sizes = [256, 32], strides = [1, 1]} : vector<256x64xf32> to vector<256x32xf32>
    %8 = arith.negf %7 : vector<256x32xf32>
    %9 = math.exp %8 : vector<256x32xf32>
    %cst_5 = arith.constant 1.000000e+00 : f32
    %10 = vector.broadcast %cst_5 : f32 to vector<256x32xf32>
    %11 = arith.addf %10, %9 : vector<256x32xf32>
    %12 = arith.divf %10, %11 : vector<256x32xf32>
    %13 = arith.mulf %6, %12 : vector<256x32xf32>
    %14 = arith.truncf %13 : vector<256x32xf32> to vector<256x32xbf16>
    %c0_6 = arith.constant 0 : index
    %c0_7 = arith.constant 0 : index
    %15 = vector.load %arg4[%c0_6, %c0_7] : memref<256x32xbf16, #tpu.memory_space<vmem>>, vector<256x32xbf16>
    tpu.vector_store %arg4[%c0_6, %c0_7], %14 {strides = array<i32>} : memref<256x32xbf16, #tpu.memory_space<vmem>>, vector<256x32xbf16>,
    return
  }
  func.func @transform_0(%arg0: i32) -> (i32, i32) {
    %c0_i32 = arith.constant 0 : i32
    %c0_i32_0 = arith.constant 0 : i32
    return %arg0, %c0_i32 : i32, i32
  }
  func.func @transform_1(%arg0: i32) -> (i32, i32) {
    %c0_i32 = arith.constant 0 : i32
    %c0_i32_0 = arith.constant 0 : i32
    %c0_i32_1 = arith.constant 0 : i32
    return %c0_i32, %c0_i32_0 : i32, i32
  }
  func.func @transform_2(%arg0: i32) -> (i32, i32) {
    %c0_i32 = arith.constant 0 : i32
    %c0_i32_0 = arith.constant 0 : i32
    %c0_i32_1 = arith.constant 0 : i32
    return %c0_i32, %c0_i32_0 : i32, i32
  }
  func.func @transform_3(%arg0: i32) -> (i32, i32) {
    %c0_i32 = arith.constant 0 : i32
    %c0_i32_0 = arith.constant 0 : i32
    return %arg0, %c0_i32 : i32, i32
  }
}

module attributes {stable_mosaic.version = 11 : i64} {
  func.func @_gated_conv_kernel(%arg0: i32, %arg1: memref<256x800xbf16, #tpu.memory_space<vmem>>, %arg2: memref<800x128xbf16, #tpu.memory_space<vmem>>, %arg3: memref<1x128xf32, #tpu.memory_space<vmem>>, %arg4: memref<256x64xbf16, #tpu.memory_space<vmem>>) attributes {dimension_semantics = [#tpu.dimension_semantics<parallel>], iteration_bounds = array<i64: 2>, scalar_prefetch = 0 : i64, scratch_operands = 0 : i64, tpu.core_type = #tpu.core_type<tc>, window_params = [{transform_indices = @transform_0, window_bounds = array<i64: 256, 800>}, {pipeline_mode = #tpu.pipeline_mode<synchronous>, transform_indices = @transform_1, window_bounds = array<i64: 800, 128>}, {pipeline_mode = #tpu.pipeline_mode<synchronous>, transform_indices = @transform_2, window_bounds = array<i64: 1, 128>}, {transform_indices = @transform_3, window_bounds = array<i64: 256, 64>}]} {
    %c0 = arith.constant 0 : index
    %c0_0 = arith.constant 0 : index
    %0 = vector.load %arg1[%c0, %c0_0] : memref<256x800xbf16, #tpu.memory_space<vmem>>, vector<256x800xbf16>
    %c0_1 = arith.constant 0 : index
    %c0_2 = arith.constant 0 : index
    %1 = vector.load %arg2[%c0_1, %c0_2] : memref<800x128xbf16, #tpu.memory_space<vmem>>, vector<800x128xbf16>
    %cst = arith.constant dense<0.000000e+00> : vector<256x128xf32>
    %2 = tpu.matmul %0, %1, %cst {dimension_numbers = #tpu.dot_dimension_numbers<[1], [0], [0], [1], [0, 0, 1, 1], [], []>} : vector<256x800xbf16>, vector<800x128xbf16>, vector<256x128xf32> -> vector<256x128xf32>
    %c0_3 = arith.constant 0 : index
    %c0_4 = arith.constant 0 : index
    %3 = vector.load %arg3[%c0_3, %c0_4] : memref<1x128xf32, #tpu.memory_space<vmem>>, vector<1x128xf32>
    %4 = vector.broadcast %3 : vector<1x128xf32> to vector<256x128xf32>
    %5 = arith.addf %2, %4 : vector<256x128xf32>
    %6 = vector.extract_strided_slice %5 {offsets = [0, 0], sizes = [256, 64], strides = [1, 1]} : vector<256x128xf32> to vector<256x64xf32>
    %7 = vector.extract_strided_slice %5 {offsets = [0, 64], sizes = [256, 64], strides = [1, 1]} : vector<256x128xf32> to vector<256x64xf32>
    %8 = arith.negf %7 : vector<256x64xf32>
    %9 = math.exp %8 : vector<256x64xf32>
    %cst_5 = arith.constant 1.000000e+00 : f32
    %10 = vector.broadcast %cst_5 : f32 to vector<256x64xf32>
    %11 = arith.addf %10, %9 : vector<256x64xf32>
    %12 = arith.divf %10, %11 : vector<256x64xf32>
    %13 = arith.mulf %6, %12 : vector<256x64xf32>
    %14 = arith.truncf %13 : vector<256x64xf32> to vector<256x64xbf16>
    %c0_6 = arith.constant 0 : index
    %c0_7 = arith.constant 0 : index
    %15 = vector.load %arg4[%c0_6, %c0_7] : memref<256x64xbf16, #tpu.memory_space<vmem>>, vector<256x64xbf16>
    tpu.vector_store %arg4[%c0_6, %c0_7], %14 {strides = array<i32>} : memref<256x64xbf16, #tpu.memory_space<vmem>>, vector<256x64xbf16>,
    return
  }
  func.func @transform_0(%arg0: i32) -> (i32, i32) {
    %c0_i32 = arith.constant 0 : i32
    %c0_i32_0 = arith.constant 0 : i32
    return %arg0, %c0_i32 : i32, i32
  }
  func.func @transform_1(%arg0: i32) -> (i32, i32) {
    %c0_i32 = arith.constant 0 : i32
    %c0_i32_0 = arith.constant 0 : i32
    %c0_i32_1 = arith.constant 0 : i32
    return %c0_i32, %c0_i32_0 : i32, i32
  }
  func.func @transform_2(%arg0: i32) -> (i32, i32) {
    %c0_i32 = arith.constant 0 : i32
    %c0_i32_0 = arith.constant 0 : i32
    %c0_i32_1 = arith.constant 0 : i32
    return %c0_i32, %c0_i32_0 : i32, i32
  }
  func.func @transform_3(%arg0: i32) -> (i32, i32) {
    %c0_i32 = arith.constant 0 : i32
    %c0_i32_0 = arith.constant 0 : i32
    return %arg0, %c0_i32 : i32, i32
  }
}

module attributes {stable_mosaic.version = 11 : i64} {
  func.func @_gated_conv_kernel(%arg0: i32, %arg1: memref<112x576xbf16, #tpu.memory_space<vmem>>, %arg2: memref<576x128xbf16, #tpu.memory_space<vmem>>, %arg3: memref<1x128xf32, #tpu.memory_space<vmem>>, %arg4: memref<112x64xbf16, #tpu.memory_space<vmem>>) attributes {dimension_semantics = [#tpu.dimension_semantics<parallel>], iteration_bounds = array<i64: 1>, scalar_prefetch = 0 : i64, scratch_operands = 0 : i64, tpu.core_type = #tpu.core_type<tc>, window_params = [{transform_indices = @transform_0, window_bounds = array<i64: 112, 576>}, {pipeline_mode = #tpu.pipeline_mode<synchronous>, transform_indices = @transform_1, window_bounds = array<i64: 576, 128>}, {pipeline_mode = #tpu.pipeline_mode<synchronous>, transform_indices = @transform_2, window_bounds = array<i64: 1, 128>}, {transform_indices = @transform_3, window_bounds = array<i64: 112, 64>}]} {
    %c0 = arith.constant 0 : index
    %c0_0 = arith.constant 0 : index
    %0 = vector.load %arg1[%c0, %c0_0] : memref<112x576xbf16, #tpu.memory_space<vmem>>, vector<112x576xbf16>
    %c0_1 = arith.constant 0 : index
    %c0_2 = arith.constant 0 : index
    %1 = vector.load %arg2[%c0_1, %c0_2] : memref<576x128xbf16, #tpu.memory_space<vmem>>, vector<576x128xbf16>
    %cst = arith.constant dense<0.000000e+00> : vector<112x128xf32>
    %2 = tpu.matmul %0, %1, %cst {dimension_numbers = #tpu.dot_dimension_numbers<[1], [0], [0], [1], [0, 0, 1, 1], [], []>} : vector<112x576xbf16>, vector<576x128xbf16>, vector<112x128xf32> -> vector<112x128xf32>
    %c0_3 = arith.constant 0 : index
    %c0_4 = arith.constant 0 : index
    %3 = vector.load %arg3[%c0_3, %c0_4] : memref<1x128xf32, #tpu.memory_space<vmem>>, vector<1x128xf32>
    %4 = vector.broadcast %3 : vector<1x128xf32> to vector<112x128xf32>
    %5 = arith.addf %2, %4 : vector<112x128xf32>
    %6 = vector.extract_strided_slice %5 {offsets = [0, 0], sizes = [112, 64], strides = [1, 1]} : vector<112x128xf32> to vector<112x64xf32>
    %7 = vector.extract_strided_slice %5 {offsets = [0, 64], sizes = [112, 64], strides = [1, 1]} : vector<112x128xf32> to vector<112x64xf32>
    %8 = arith.negf %7 : vector<112x64xf32>
    %9 = math.exp %8 : vector<112x64xf32>
    %cst_5 = arith.constant 1.000000e+00 : f32
    %10 = vector.broadcast %cst_5 : f32 to vector<112x64xf32>
    %11 = arith.addf %10, %9 : vector<112x64xf32>
    %12 = arith.divf %10, %11 : vector<112x64xf32>
    %13 = arith.mulf %6, %12 : vector<112x64xf32>
    %14 = arith.truncf %13 : vector<112x64xf32> to vector<112x64xbf16>
    %c0_6 = arith.constant 0 : index
    %c0_7 = arith.constant 0 : index
    %15 = vector.load %arg4[%c0_6, %c0_7] : memref<112x64xbf16, #tpu.memory_space<vmem>>, vector<112x64xbf16>
    tpu.vector_store %arg4[%c0_6, %c0_7], %14 {strides = array<i32>} : memref<112x64xbf16, #tpu.memory_space<vmem>>, vector<112x64xbf16>,
    return
  }
  func.func @transform_0(%arg0: i32) -> (i32, i32) {
    %c0_i32 = arith.constant 0 : i32
    %c0_i32_0 = arith.constant 0 : i32
    return %arg0, %c0_i32 : i32, i32
  }
  func.func @transform_1(%arg0: i32) -> (i32, i32) {
    %c0_i32 = arith.constant 0 : i32
    %c0_i32_0 = arith.constant 0 : i32
    %c0_i32_1 = arith.constant 0 : i32
    return %c0_i32, %c0_i32_0 : i32, i32
  }
  func.func @transform_2(%arg0: i32) -> (i32, i32) {
    %c0_i32 = arith.constant 0 : i32
    %c0_i32_0 = arith.constant 0 : i32
    %c0_i32_1 = arith.constant 0 : i32
    return %c0_i32, %c0_i32_0 : i32, i32
  }
  func.func @transform_3(%arg0: i32) -> (i32, i32) {
    %c0_i32 = arith.constant 0 : i32
    %c0_i32_0 = arith.constant 0 : i32
    return %arg0, %c0_i32 : i32, i32
  }
}

module attributes {stable_mosaic.version = 11 : i64} {
  func.func @_gated_conv_kernel(%arg0: i32, %arg1: memref<112x576xbf16, #tpu.memory_space<vmem>>, %arg2: memref<576x12xbf16, #tpu.memory_space<vmem>>, %arg3: memref<1x12xf32, #tpu.memory_space<vmem>>, %arg4: memref<112x6xbf16, #tpu.memory_space<vmem>>) attributes {dimension_semantics = [#tpu.dimension_semantics<parallel>], iteration_bounds = array<i64: 1>, scalar_prefetch = 0 : i64, scratch_operands = 0 : i64, tpu.core_type = #tpu.core_type<tc>, window_params = [{transform_indices = @transform_0, window_bounds = array<i64: 112, 576>}, {pipeline_mode = #tpu.pipeline_mode<synchronous>, transform_indices = @transform_1, window_bounds = array<i64: 576, 12>}, {pipeline_mode = #tpu.pipeline_mode<synchronous>, transform_indices = @transform_2, window_bounds = array<i64: 1, 12>}, {transform_indices = @transform_3, window_bounds = array<i64: 112, 6>}]} {
    %c0 = arith.constant 0 : index
    %c0_0 = arith.constant 0 : index
    %0 = vector.load %arg1[%c0, %c0_0] : memref<112x576xbf16, #tpu.memory_space<vmem>>, vector<112x576xbf16>
    %c0_1 = arith.constant 0 : index
    %c0_2 = arith.constant 0 : index
    %1 = vector.load %arg2[%c0_1, %c0_2] : memref<576x12xbf16, #tpu.memory_space<vmem>>, vector<576x12xbf16>
    %cst = arith.constant dense<0.000000e+00> : vector<112x12xf32>
    %2 = tpu.matmul %0, %1, %cst {dimension_numbers = #tpu.dot_dimension_numbers<[1], [0], [0], [1], [0, 0, 1, 1], [], []>} : vector<112x576xbf16>, vector<576x12xbf16>, vector<112x12xf32> -> vector<112x12xf32>
    %c0_3 = arith.constant 0 : index
    %c0_4 = arith.constant 0 : index
    %3 = vector.load %arg3[%c0_3, %c0_4] : memref<1x12xf32, #tpu.memory_space<vmem>>, vector<1x12xf32>
    %4 = vector.broadcast %3 : vector<1x12xf32> to vector<112x12xf32>
    %5 = arith.addf %2, %4 : vector<112x12xf32>
    %6 = vector.extract_strided_slice %5 {offsets = [0, 0], sizes = [112, 6], strides = [1, 1]} : vector<112x12xf32> to vector<112x6xf32>
    %7 = vector.extract_strided_slice %5 {offsets = [0, 6], sizes = [112, 6], strides = [1, 1]} : vector<112x12xf32> to vector<112x6xf32>
    %8 = arith.negf %7 : vector<112x6xf32>
    %9 = math.exp %8 : vector<112x6xf32>
    %cst_5 = arith.constant 1.000000e+00 : f32
    %10 = vector.broadcast %cst_5 : f32 to vector<112x6xf32>
    %11 = arith.addf %10, %9 : vector<112x6xf32>
    %12 = arith.divf %10, %11 : vector<112x6xf32>
    %13 = arith.mulf %6, %12 : vector<112x6xf32>
    %14 = arith.truncf %13 : vector<112x6xf32> to vector<112x6xbf16>
    %c0_6 = arith.constant 0 : index
    %c0_7 = arith.constant 0 : index
    %15 = vector.load %arg4[%c0_6, %c0_7] : memref<112x6xbf16, #tpu.memory_space<vmem>>, vector<112x6xbf16>
    tpu.vector_store %arg4[%c0_6, %c0_7], %14 {strides = array<i32>} : memref<112x6xbf16, #tpu.memory_space<vmem>>, vector<112x6xbf16>,
    return
  }
  func.func @transform_0(%arg0: i32) -> (i32, i32) {
    %c0_i32 = arith.constant 0 : i32
    %c0_i32_0 = arith.constant 0 : i32
    return %arg0, %c0_i32 : i32, i32
  }
  func.func @transform_1(%arg0: i32) -> (i32, i32) {
    %c0_i32 = arith.constant 0 : i32
    %c0_i32_0 = arith.constant 0 : i32
    %c0_i32_1 = arith.constant 0 : i32
    return %c0_i32, %c0_i32_0 : i32, i32
  }
  func.func @transform_2(%arg0: i32) -> (i32, i32) {
    %c0_i32 = arith.constant 0 : i32
    %c0_i32_0 = arith.constant 0 : i32
    %c0_i32_1 = arith.constant 0 : i32
    return %c0_i32, %c0_i32_0 : i32, i32
  }
  func.func @transform_3(%arg0: i32) -> (i32, i32) {
    %c0_i32 = arith.constant 0 : i32
    %c0_i32_0 = arith.constant 0 : i32
    return %arg0, %c0_i32 : i32, i32
  }
}

module attributes {stable_mosaic.version = 11 : i64} {
  func.func @_head_kernel(%arg0: memref<2x302xbf16, #tpu.memory_space<vmem>>, %arg1: memref<302x32xbf16, #tpu.memory_space<vmem>>, %arg2: memref<1x32xf32, #tpu.memory_space<vmem>>, %arg3: memref<2x16xf32, #tpu.memory_space<vmem>>, %arg4: memref<2x16xf32, #tpu.memory_space<vmem>>) attributes {dimension_semantics = [], scalar_prefetch = 0 : i64, scratch_operands = 0 : i64, tpu.core_type = #tpu.core_type<tc>} {
    %c0 = arith.constant 0 : index
    %c0_0 = arith.constant 0 : index
    %0 = vector.load %arg0[%c0, %c0_0] : memref<2x302xbf16, #tpu.memory_space<vmem>>, vector<2x302xbf16>
    %c0_1 = arith.constant 0 : index
    %c0_2 = arith.constant 0 : index
    %1 = vector.load %arg1[%c0_1, %c0_2] : memref<302x32xbf16, #tpu.memory_space<vmem>>, vector<302x32xbf16>
    %cst = arith.constant dense<0.000000e+00> : vector<2x32xf32>
    %2 = tpu.matmul %0, %1, %cst {dimension_numbers = #tpu.dot_dimension_numbers<[1], [0], [0], [1], [0, 0, 1, 1], [], []>} : vector<2x302xbf16>, vector<302x32xbf16>, vector<2x32xf32> -> vector<2x32xf32>
    %c0_3 = arith.constant 0 : index
    %c0_4 = arith.constant 0 : index
    %3 = vector.load %arg2[%c0_3, %c0_4] : memref<1x32xf32, #tpu.memory_space<vmem>>, vector<1x32xf32>
    %4 = vector.broadcast %3 : vector<1x32xf32> to vector<2x32xf32>
    %5 = arith.addf %2, %4 : vector<2x32xf32>
    %6 = vector.extract_strided_slice %5 {offsets = [0, 0], sizes = [2, 16], strides = [1, 1]} : vector<2x32xf32> to vector<2x16xf32>
    %7 = vector.extract_strided_slice %5 {offsets = [0, 16], sizes = [2, 16], strides = [1, 1]} : vector<2x32xf32> to vector<2x16xf32>
    %cst_5 = arith.constant -6.000000e+00 : f32
    %cst_6 = arith.constant 2.000000e+00 : f32
    %8 = vector.broadcast %cst_5 : f32 to vector<2x16xf32>
    %9 = arith.maximumf %8, %7 : vector<2x16xf32>
    %10 = vector.broadcast %cst_6 : f32 to vector<2x16xf32>
    %11 = arith.minimumf %10, %9 : vector<2x16xf32>
    %c0_7 = arith.constant 0 : index
    %c0_8 = arith.constant 0 : index
    %12 = vector.load %arg3[%c0_7, %c0_8] : memref<2x16xf32, #tpu.memory_space<vmem>>, vector<2x16xf32>
    tpu.vector_store %arg3[%c0_7, %c0_8], %6 {strides = array<i32>} : memref<2x16xf32, #tpu.memory_space<vmem>>, vector<2x16xf32>,
    %cst_9 = arith.constant 5.000000e-01 : f32
    %13 = vector.broadcast %cst_9 : f32 to vector<2x16xf32>
    %14 = arith.mulf %13, %11 : vector<2x16xf32>
    %15 = math.exp %14 : vector<2x16xf32>
    %c0_10 = arith.constant 0 : index
    %c0_11 = arith.constant 0 : index
    %16 = vector.load %arg4[%c0_10, %c0_11] : memref<2x16xf32, #tpu.memory_space<vmem>>, vector<2x16xf32>
    tpu.vector_store %arg4[%c0_10, %c0_11], %15 {strides = array<i32>} : memref<2x16xf32, #tpu.memory_space<vmem>>, vector<2x16xf32>,
    return
  }
}

</mosaic_0001>

<llo_original>
// kernel: gated_conv2d_encoder_forward.6
$region0: #{gated_conv2d_encoder_forward.6}
  #allocation0 [shape = 'u32[]', space=smem, size = 0x4, offset = 0x4, fixed_abs, tag = 'smem constant byte address 0x4 - core index']
  #allocation1 [shape = 'u32[144,128]{1,0:T(1,128)}', space=vmem, size = 0x12000, scoped, tag = 'internal scratch']
  %s0 = inlined_call_operand.vmem [shape: bf16[1792,49], index: 0, kind: input, shape index: {}]
  %s1 = inlined_call_operand.vmem [shape: bf16[49,64], index: 1, kind: input, shape index: {}]
  %s2 = inlined_call_operand.vmem [shape: f32[1,64], index: 2, kind: input, shape index: {}]
  %s3 = inlined_call_operand.vmem [shape: bf16[1792,32], index: 3, kind: output, shape index: {}]
  %s4 = sld [smem:[#allocation0]]
  $region45: #{gated_conv2d_encoder_forward.6} parent=0
    _
  %s6 = ssub.s32 1, %s4
  %s7 = scalar_select 0, %s6, %s4
  loop: start=0, step=1, limit=9
  $region2: #{gated_conv2d_encoder_forward.6} parent=0 // loop_pre_header
    _
  $region3: #{gated_conv2d_encoder_forward.6} parent=0 // loop_header
    %s9 = sphi 0, %s13
    %p10 = scmp.ge.s32.totalorder %s9, 9
    %s19 = sphi 0, %s21
    %s22 = sphi 0, %s19
    %s23 = sphi 0, %s22
    %s39 = sphi 0, %s23
    %s43 = sphi 0, %s43
    %s45 = sphi 0, %s43
    %s46 = sphi 0, %s45
    %s60 = sphi 0, %s46
    %s64 = sphi 0, %s64
    %s66 = sphi 0, %s64
    %s67 = sphi 0, %s66
    %s81 = sphi 0, %s67
    %s87 = sphi 0, %s89
    %s90 = sphi 0, %s87
    %s91 = sphi 0, %s90
    %s107 = sphi 0, %s91
  $region4: #{gated_conv2d_encoder_forward.6} parent=0 // loop_header_branch
    %12 = sbr.rel (%p10) target = $region8
  $region5: #{gated_conv2d_encoder_forward.6} parent=0 // loop_body
    %s14 = ssub.s32 %s9, 1
    %s15 = ssub.s32 %s9, 2
    %s16 = sadd.s32 %s9, 1
    %s17 = ssub.s32 %s9, %s16
    %p18 = scmp.eq.s32.totalorder %s17, 0
    %s20 = sadd.s32 %s19, 1
    %s21 = scalar_select %p18, %s19, %s20
    %p24 = pneg %p18
    %p25 = scmp.eq.s32.totalorder %s9, 6
    %p26 = por %p24, %p25
    %p27 = scmp.ne.s32.totalorder %s19, %s22
    %p28 = scmp.eq.s32.totalorder %s9, 0
    %p29 = por %p27, %p28
    %p30 = scmp.ne.s32.totalorder %s19, %s22
    %p31 = scmp.eq.s32.totalorder %s14, 6
    %p32 = por %p30, %p31
    %p33 = scmp.ne.s32.totalorder %s22, %s23
    %p34 = scmp.eq.s32.totalorder %s14, 0
    %p35 = por %p33, %p34
    %p36 = scmp.ne.s32.totalorder %s22, %s23
    %p37 = scmp.eq.s32.totalorder %s15, 6
    %p38 = por %p36, %p37
    %p40 = scmp.ne.s32.totalorder %s23, %s39
    %p41 = scmp.eq.s32.totalorder %s15, 0
    %p42 = por %p40, %p41
    %s44 = sadd.s32 %s43, 1
    %p47 = scmp.eq.s32.totalorder %s9, 6
    %p48 = scmp.ne.s32.totalorder %s43, %s45
    %p49 = scmp.eq.s32.totalorder %s9, 0
    %p50 = por %p48, %p49
    %p51 = scmp.ne.s32.totalorder %s43, %s45
    %p52 = scmp.eq.s32.totalorder %s14, 6
    %p53 = por %p51, %p52
    %p54 = scmp.ne.s32.totalorder %s45, %s46
    %p55 = scmp.eq.s32.totalorder %s14, 0
    %p56 = por %p54, %p55
    %p57 = scmp.ne.s32.totalorder %s45, %s46
    %p58 = scmp.eq.s32.totalorder %s15, 6
    %p59 = por %p57, %p58
    %p61 = scmp.ne.s32.totalorder %s46, %s60
    %p62 = scmp.eq.s32.totalorder %s15, 0
    %p63 = por %p61, %p62
    %s65 = sadd.s32 %s64, 1
    %p68 = scmp.eq.s32.totalorder %s9, 6
    %p69 = scmp.ne.s32.totalorder %s64, %s66
    %p70 = scmp.eq.s32.totalorder %s9, 0
    %p71 = por %p69, %p70
    %p72 = scmp.ne.s32.totalorder %s64, %s66
    %p73 = scmp.eq.s32.totalorder %s14, 6
    %p74 = por %p72, %p73
    %p75 = scmp.ne.s32.totalorder %s66, %s67
    %p76 = scmp.eq.s32.totalorder %s14, 0
    %p77 = por %p75, %p76
    %p78 = scmp.ne.s32.totalorder %s66, %s67
    %p79 = scmp.eq.s32.totalorder %s15, 6
    %p80 = por %p78, %p79
    %p82 = scmp.ne.s32.totalorder %s67, %s81
    %p83 = scmp.eq.s32.totalorder %s15, 0
    %p84 = por %p82, %p83
    %s85 = ssub.s32 %s9, %s16
    %p86 = scmp.eq.s32.totalorder %s85, 0
    %s88 = sadd.s32 %s87, 1
    %s89 = scalar_select %p86, %s87, %s88
    %p92 = pneg %p86
    %p93 = scmp.eq.s32.totalorder %s9, 6
    %p94 = por %p92, %p93
    %p95 = scmp.ne.s32.totalorder %s87, %s90
    %p96 = scmp.eq.s32.totalorder %s9, 0
    %p97 = por %p95, %p96
    %p98 = scmp.ne.s32.totalorder %s87, %s90
    %p99 = scmp.eq.s32.totalorder %s14, 6
    %p100 = por %p98, %p99
    %p101 = scmp.ne.s32.totalorder %s90, %s91
    %p102 = scmp.eq.s32.totalorder %s14, 0
    %p103 = por %p101, %p102
    %p104 = scmp.ne.s32.totalorder %s90, %s91
    %p105 = scmp.eq.s32.totalorder %s15, 6
    %p106 = por %p104, %p105
    %p108 = scmp.ne.s32.totalorder %s91, %s107
    %p109 = scmp.eq.s32.totalorder %s15, 0
    %p110 = por %p108, %p109
    %p111 = scmp.le.s32.totalorder 1, %s9
    %p112 = scmp.lt.s32.totalorder %s9, 8
    %p113 = pnand %p111, %p112
    %p114 = pneg %p113
    // Predicated region
    $region9: #{gated_conv2d_encoder_forward.6} parent=5 // pred_check
      _
    $region10: #{gated_conv2d_encoder_forward.6} parent=5 // pred_check_branch
      %116 = sbr.rel (%p113) target = $region12
    $region11: #{gated_conv2d_encoder_forward.6} parent=5 // pred_region
      %s117 = ssub.s32 %s9, 1
      // Predicated region
      $region13: #{gated_conv2d_encoder_forward.6} parent=11 // pred_check
        %p118 = pneg %p56
      $region14: #{gated_conv2d_encoder_forward.6} parent=11 // pred_check_branch
        %120 = sbr.rel (%p118) target = $region16
      $region15: #{gated_conv2d_encoder_forward.6} parent=11 // pred_region
        _
      $region16: #{gated_conv2d_encoder_forward.6} parent=11 // pred_fallthru
        _
      // Predicated region
      $region17: #{gated_conv2d_encoder_forward.6} parent=11 // pred_check
        %p121 = pneg %p77
      $region18: #{gated_conv2d_encoder_forward.6} parent=11 // pred_check_branch
        %123 = sbr.rel (%p121) target = $region20
      $region19: #{gated_conv2d_encoder_forward.6} parent=11 // pred_region
        _
      $region20: #{gated_conv2d_encoder_forward.6} parent=11 // pred_fallthru
        _
    $region12: #{gated_conv2d_encoder_forward.6} parent=5 // pred_fallthru
      _
    %p124 = scmp.lt.s32.totalorder %s9, 7
    // Predicated region
    $region21: #{gated_conv2d_encoder_forward.6} parent=5 // pred_check
      %p125 = pneg %p124
    $region22: #{gated_conv2d_encoder_forward.6} parent=5 // pred_check_branch
      %127 = sbr.rel (%p125) target = $region24
    $region23: #{gated_conv2d_encoder_forward.6} parent=5 // pred_region
      // Predicated region
      $region25: #{gated_conv2d_encoder_forward.6} parent=23 // pred_check
        %p128 = pneg %p29
      $region26: #{gated_conv2d_encoder_forward.6} parent=23 // pred_check_branch
        %130 = sbr.rel (%p128) target = $region28
      $region27: #{gated_conv2d_encoder_forward.6} parent=23 // pred_region
        %s131 = smul.u32 32, %s9
        %p132 = scmp.lt.s32.totalorder %s131, 223
        %s133 = scalar_select %p132, %s131, 223
        %s134 = smul.addr %s133, 4
        %s135 = scalar_lea.vmem %s0, %s134
        %s136 = smul.u32 32, %s9
      $region28: #{gated_conv2d_encoder_forward.6} parent=23 // pred_fallthru
        _
    $region24: #{gated_conv2d_encoder_forward.6} parent=5 // pred_fallthru
      _
    %p137 = scmp.le.s32.totalorder 1, %s9
    %p138 = scmp.lt.s32.totalorder %s9, 8
    %p139 = pnand %p137, %p138
    %p140 = pneg %p139
    // Predicated region
    $region29: #{gated_conv2d_encoder_forward.6} parent=5 // pred_check
      _
    $region30: #{gated_conv2d_encoder_forward.6} parent=5 // pred_check_branch
      %142 = sbr.rel (%p139) target = $region32
    $region31: #{gated_conv2d_encoder_forward.6} parent=5 // pred_region
      %s143 = ssub.s32 %s9, 1
      %s144 = smul.u32 32, %s14
      %p145 = scmp.lt.s32.totalorder %s144, 223
      %s146 = scalar_select %p145, %s144, 223
      %s147 = smul.addr %s146, 4
      %s148 = scalar_lea.vmem %s0, %s147
      %p149 = pneg %p35
      %p150 = pneg %p32
      %p151 = pneg %p56
      %p152 = pneg %p53
      %p153 = pneg %p77
      %p154 = pneg %p74
      %p155 = pneg %p103
      %p156 = pneg %p100
      %s157 = smul.u32 32, %s14
      %p158 = scmp.lt.s32.totalorder %s157, 223
      %s159 = scalar_select %p158, %s157, 223
      %s160 = smul.addr %s159, 4
      %s161 = scalar_lea.vmem %s3, %s160
      %s162 = smul.u32 32, %s14
      %p163 = scmp.lt.s32.totalorder %s162, 223
      %s164 = scalar_select %p163, %s162, 223
      %s165 = smul.addr %s164, 4
      %s166 = scalar_lea.vmem %s0, %s165
      %s167 = smul.u32 32, %s14
      %s168 = smul.u32 32, %s14
      %p169 = scmp.lt.s32.totalorder %s168, 223
      %s170 = scalar_select %p169, %s168, 223
      %s171 = smul.addr %s170, 4
      %s172 = scalar_lea.vmem %s3, %s171
      %s173 = smul.u32 32, %s14
      %v175 = vld [vmem:[%s166] sm:$0xf]
      %v176 = vld [vmem:[%s166 + $0x4] sm:$0xf]
      %v177 = vld [vmem:[%s166 + $0x8] sm:$0xf]
      %v178 = vld [vmem:[%s166 + $0xc] sm:$0xf]
      %v179 = vld [vmem:[%s166 + $0x10] sm:$0xf]
      %v180 = vld [vmem:[%s166 + $0x14] sm:$0xf]
      %v181 = vld [vmem:[%s166 + $0x18] sm:$0xf]
      %v182 = vld [vmem:[%s166 + $0x1c] sm:$0xf]
      %v183 = vld [vmem:[%s166 + $0x20] sm:$0xf]
      %v184 = vld [vmem:[%s166 + $0x24] sm:$0xf]
      %v185 = vld [vmem:[%s166 + $0x28] sm:$0xf]
      %v186 = vld [vmem:[%s166 + $0x2c] sm:$0xf]
      %v187 = vld [vmem:[%s166 + $0x30] sm:$0xf]
      %v188 = vld [vmem:[%s166 + $0x34] sm:$0xf]
      %v189 = vld [vmem:[%s166 + $0x38] sm:$0xf]
      %v190 = vld [vmem:[%s166 + $0x3c] sm:$0xf]
      %v191 = vld [vmem:[%s166 + $0x40] sm:$0xf]
      %v192 = vld [vmem:[%s166 + $0x44] sm:$0xf]
      %v193 = vld [vmem:[%s166 + $0x48] sm:$0xf]
      %v194 = vld [vmem:[%s166 + $0x4c] sm:$0xf]
      %v195 = vld [vmem:[%s166 + $0x50] sm:$0xf]
      %v196 = vld [vmem:[%s166 + $0x54] sm:$0xf]
      %v197 = vld [vmem:[%s166 + $0x58] sm:$0xf]
      %v198 = vld [vmem:[%s166 + $0x5c] sm:$0xf]
      %v199 = vld [vmem:[%s166 + $0x60] sm:$0xf]
      %v200 = vld [vmem:[%s166 + $0x64] sm:$0xf]
      %v201 = vld [vmem:[%s166 + $0x68] sm:$0xf]
      %v202 = vld [vmem:[%s166 + $0x6c] sm:$0xf]
      %v203 = vld [vmem:[%s166 + $0x70] sm:$0xf]
      %v204 = vld [vmem:[%s166 + $0x74] sm:$0xf]
      %v205 = vld [vmem:[%s166 + $0x78] sm:$0xf]
      %v206 = vld [vmem:[%s166 + $0x7c] sm:$0xf]
      %v207 = vld [vmem:[%s1] sm:$0xf]
      %v208 = vld [vmem:[%s1 + $0x4] sm:$0xf]
      %v209 = vld [vmem:[%s1 + $0x8] sm:$0xf]
      %v210 = vld [vmem:[%s1 + $0xc] sm:$0xf]
      %v211 = vld [vmem:[%s1 + $0x10] sm:$0xf]
      %v212 = vld [vmem:[%s1 + $0x14] sm:$0xf]
      %v213 = vld [vmem:[%s1 + $0x18] sm:$0x1]
      %v214 = vld [vmem:[%s2] sm:$0x1]
      %v216 = vlaneseq
      %v217 = vshrl.u32 %v216, 7
      %v218 = vsub.s32 0, %v217
      %v219 = vrot.slane %v214, %v218
      %v253 = vunpack.c.l.b16 %v175
      %v254 = vunpack.c.l.b16 %v176
      %v255 = vunpack.c.l.b16 %v177
      %v256 = vunpack.c.l.b16 %v178
      %v257 = vunpack.c.l.b16 %v179
      %v258 = vunpack.c.l.b16 %v180
      %v259 = vunpack.c.l.b16 %v181
      %v260 = vunpack.c.l.b16 %v182
      %v261 = vunpack.c.l.b16 %v183
      %v262 = vunpack.c.l.b16 %v184
      %v263 = vunpack.c.l.b16 %v185
      %v264 = vunpack.c.l.b16 %v186
      %v265 = vunpack.c.l.b16 %v187
      %v266 = vunpack.c.l.b16 %v188
      %v267 = vunpack.c.l.b16 %v189
      %v268 = vunpack.c.l.b16 %v190
      %v269 = vunpack.c.l.b16 %v191
      %v270 = vunpack.c.l.b16 %v192
      %v271 = vunpack.c.l.b16 %v193
      %v272 = vunpack.c.l.b16 %v194
      %v273 = vunpack.c.l.b16 %v195
      %v274 = vunpack.c.l.b16 %v196
      %v275 = vunpack.c.l.b16 %v197
      %v276 = vunpack.c.l.b16 %v198
      %v277 = vunpack.c.l.b16 %v199
      %v278 = vunpack.c.l.b16 %v200
      %v279 = vunpack.c.l.b16 %v201
      %v280 = vunpack.c.l.b16 %v202
      %v281 = vunpack.c.l.b16 %v203
      %v282 = vunpack.c.l.b16 %v204
      %v283 = vunpack.c.l.b16 %v205
      %v284 = vunpack.c.l.b16 %v206
      %v285 = vpack.c.b16 %v254, %v253
      %v286 = vpack.c.b16 %v256, %v255
      %v287 = vpack.c.b16 %v258, %v257
      %v288 = vpack.c.b16 %v260, %v259
      %v289 = vpack.c.b16 %v262, %v261
      %v290 = vpack.c.b16 %v264, %v263
      %v291 = vpack.c.b16 %v266, %v265
      %v292 = vpack.c.b16 %v268, %v267
      %v293 = vpack.c.b16 %v270, %v269
      %v294 = vpack.c.b16 %v272, %v271
      %v295 = vpack.c.b16 %v274, %v273
      %v296 = vpack.c.b16 %v276, %v275
      %v297 = vpack.c.b16 %v278, %v277
      %v298 = vpack.c.b16 %v280, %v279
      %v299 = vpack.c.b16 %v282, %v281
      %v300 = vpack.c.b16 %v284, %v283
      %v308 = vunpack.c.l.b16 %v207
      %v309 = vunpack.c.l.b16 %v208
      %v310 = vunpack.c.l.b16 %v209
      %v311 = vunpack.c.l.b16 %v210
      %v312 = vunpack.c.l.b16 %v211
      %v313 = vunpack.c.l.b16 %v212
      %v314 = vunpack.c.l.b16 %v213
      %v315 = vpack.c.b16 %v309, %v308
      %v316 = vpack.c.b16 %v311, %v310
      %v317 = vpack.c.b16 %v313, %v312
      %v318 = vpack.c.b16 %v314, %v314
      %vm322 = vcmask 400384
      %v324 = vsel %vm322, %v285, 0
      %v327 = vsel %vm322, %v286, 0
      %v330 = vsel %vm322, %v287, 0
      %v333 = vsel %vm322, %v288, 0
      %v336 = vsel %vm322, %v289, 0
      %v339 = vsel %vm322, %v290, 0
      %v342 = vsel %vm322, %v291, 0
      %v345 = vsel %vm322, %v292, 0
      %v348 = vsel %vm322, %v293, 0
      %v351 = vsel %vm322, %v294, 0
      %v354 = vsel %vm322, %v295, 0
      %v357 = vsel %vm322, %v296, 0
      %v360 = vsel %vm322, %v297, 0
      %v363 = vsel %vm322, %v298, 0
      %v366 = vsel %vm322, %v299, 0
      %v369 = vsel %vm322, %v300, 0
      %vm371 = vcmask 1040384
      %v372 = vsel 0, 4294967295, 65535
      %v373 = vsel %vm371, %v372, 0
      %v375 = vand.u32 %v318, %v373
      %377 = vmatprep.subr.bf16.mxu0 0
      %378 = vmatpush1.bf16.msra.mxu0 0
      %379 = vmatprep.subr.bf16.mxu0 0
      %380 = vmatpush1.bf16.msra.mxu0 0
      %381 = vmatprep.subr.bf16.mxu0 0
      %382 = vmatpush1.bf16.msra.mxu0 0
      %383 = vmatprep.subr.bf16.mxu0 0
      %384 = vmatpush1.bf16.msra.mxu0 0
      %385 = vmatprep.subr.bf16.mxu0 0
      %386 = vmatpush1.bf16.msra.mxu0 %v375
      %387 = vmatprep.subr.bf16.mxu0 0
      %388 = vmatpush1.bf16.msra.mxu0 %v317
      %389 = vmatprep.subr.bf16.mxu0 0
      %390 = vmatpush1.bf16.msra.mxu0 %v316
      %391 = vmatprep.subr.bf16.mxu0 0
      %392 = vmatpush1.bf16.msra.mxu0 %v315
      %393 = vmatprep.subr.bf16.mxu0 0
      %394 = vmatpush2.bf16.msra.mxu0 0
      %395 = vmatprep.subr.bf16.mxu0 0
      %396 = vmatpush2.bf16.msra.mxu0 0
      %397 = vmatprep.subr.bf16.mxu0 0
      %398 = vmatpush2.bf16.msra.mxu0 0
      %399 = vmatprep.subr.bf16.mxu0 0
      %400 = vmatpush2.bf16.msra.mxu0 0
      %401 = vmatprep.subr.bf16.mxu0 0
      %402 = vmatpush2.bf16.msra.mxu0 0
      %403 = vmatprep.subr.bf16.mxu0 0
      %404 = vmatpush2.bf16.msra.mxu0 0
      %405 = vmatprep.subr.bf16.mxu0 0
      %406 = vmatpush2.bf16.msra.mxu0 0
      %407 = vmatprep.subr.bf16.mxu0 0
      %408 = vmatpush2.bf16.msra.mxu0 0
      %409 = vmatprep.mubr.bf16.mxu0 0
      %410 = vmatmul.mubr.bf16.gmra.mxu0 %v324
      %v411 = vpop.f32.mrf.mxu0
      %v412 = vadd.f32 %v219, %v411
      %v413 = vpop.f32.mrf.mxu0
      %v414 = vpop.f32.mrf.mxu0
      %v415 = vadd.f32 %v219, %v414
      %v416 = vpop.f32.mrf.mxu0
      %417 = vmatprep.mubr.bf16.mxu0 0
      %418 = vmatmul.mubr.bf16.gmra.mxu0 %v327
      %v419 = vpop.f32.mrf.mxu0
      %v420 = vadd.f32 %v219, %v419
      %v421 = vpop.f32.mrf.mxu0
      %v422 = vpop.f32.mrf.mxu0
      %v423 = vadd.f32 %v219, %v422
      %v424 = vpop.f32.mrf.mxu0
      %425 = vmatprep.mubr.bf16.mxu0 0
      %426 = vmatmul.mubr.bf16.gmra.mxu0 %v330
      %v427 = vpop.f32.mrf.mxu0
      %v428 = vadd.f32 %v219, %v427
      %v429 = vpop.f32.mrf.mxu0
      %v430 = vpop.f32.mrf.mxu0
      %v431 = vadd.f32 %v219, %v430
      %v432 = vpop.f32.mrf.mxu0
      %433 = vmatprep.mubr.bf16.mxu0 0
      %434 = vmatmul.mubr.bf16.gmra.mxu0 %v333
      %v435 = vpop.f32.mrf.mxu0
      %v436 = vadd.f32 %v219, %v435
      %v437 = vpop.f32.mrf.mxu0
      %v438 = vpop.f32.mrf.mxu0
      %v439 = vadd.f32 %v219, %v438
      %v440 = vpop.f32.mrf.mxu0
      %441 = vmatprep.mubr.bf16.mxu0 0
      %442 = vmatmul.mubr.bf16.gmra.mxu0 %v336
      %v443 = vpop.f32.mrf.mxu0
      %v444 = vadd.f32 %v219, %v443
      %v445 = vpop.f32.mrf.mxu0
      %v446 = vpop.f32.mrf.mxu0
      %v447 = vadd.f32 %v219, %v446
      %v448 = vpop.f32.mrf.mxu0
      %449 = vmatprep.mubr.bf16.mxu0 0
      %450 = vmatmul.mubr.bf16.gmra.mxu0 %v339
      %v451 = vpop.f32.mrf.mxu0
      %v452 = vadd.f32 %v219, %v451
      %v453 = vpop.f32.mrf.mxu0
      %v454 = vpop.f32.mrf.mxu0
      %v455 = vadd.f32 %v219, %v454
      %v456 = vpop.f32.mrf.mxu0
      %457 = vmatprep.mubr.bf16.mxu0 0
      %458 = vmatmul.mubr.bf16.gmra.mxu0 %v342
      %v459 = vpop.f32.mrf.mxu0
      %v460 = vadd.f32 %v219, %v459
      %v461 = vpop.f32.mrf.mxu0
      %v462 = vpop.f32.mrf.mxu0
      %v463 = vadd.f32 %v219, %v462
      %v464 = vpop.f32.mrf.mxu0
      %465 = vmatprep.mubr.bf16.mxu0 0
      %466 = vmatmul.mubr.bf16.gmra.mxu0 %v345
      %v467 = vpop.f32.mrf.mxu0
      %v468 = vadd.f32 %v219, %v467
      %v469 = vpop.f32.mrf.mxu0
      %v470 = vpop.f32.mrf.mxu0
      %v471 = vadd.f32 %v219, %v470
      %v472 = vpop.f32.mrf.mxu0
      %473 = vmatprep.mubr.bf16.mxu0 0
      %474 = vmatmul.mubr.bf16.gmra.mxu0 %v348
      %v475 = vpop.f32.mrf.mxu0
      %v476 = vadd.f32 %v219, %v475
      %v477 = vpop.f32.mrf.mxu0
      %v478 = vpop.f32.mrf.mxu0
      %v479 = vadd.f32 %v219, %v478
      %v480 = vpop.f32.mrf.mxu0
      %481 = vmatprep.mubr.bf16.mxu0 0
      %482 = vmatmul.mubr.bf16.gmra.mxu0 %v351
      %v483 = vpop.f32.mrf.mxu0
      %v484 = vadd.f32 %v219, %v483
      %v485 = vpop.f32.mrf.mxu0
      %v486 = vpop.f32.mrf.mxu0
      %v487 = vadd.f32 %v219, %v486
      %v488 = vpop.f32.mrf.mxu0
      %489 = vmatprep.mubr.bf16.mxu0 0
      %490 = vmatmul.mubr.bf16.gmra.mxu0 %v354
      %v491 = vpop.f32.mrf.mxu0
      %v492 = vadd.f32 %v219, %v491
      %v493 = vpop.f32.mrf.mxu0
      %v494 = vpop.f32.mrf.mxu0
      %v495 = vadd.f32 %v219, %v494
      %v496 = vpop.f32.mrf.mxu0
      %497 = vmatprep.mubr.bf16.mxu0 0
      %498 = vmatmul.mubr.bf16.gmra.mxu0 %v357
      %v499 = vpop.f32.mrf.mxu0
      %v500 = vadd.f32 %v219, %v499
      %v501 = vpop.f32.mrf.mxu0
      %v502 = vpop.f32.mrf.mxu0
      %v503 = vadd.f32 %v219, %v502
      %v504 = vpop.f32.mrf.mxu0
      %505 = vmatprep.mubr.bf16.mxu0 0
      %506 = vmatmul.mubr.bf16.gmra.mxu0 %v360
      %v507 = vpop.f32.mrf.mxu0
      %v508 = vadd.f32 %v219, %v507
      %v509 = vpop.f32.mrf.mxu0
      %v510 = vpop.f32.mrf.mxu0
      %v511 = vadd.f32 %v219, %v510
      %v512 = vpop.f32.mrf.mxu0
      %513 = vmatprep.mubr.bf16.mxu0 0
      %514 = vmatmul.mubr.bf16.gmra.mxu0 %v363
      %v515 = vpop.f32.mrf.mxu0
      %v516 = vadd.f32 %v219, %v515
      %v517 = vpop.f32.mrf.mxu0
      %v518 = vpop.f32.mrf.mxu0
      %v519 = vadd.f32 %v219, %v518
      %v520 = vpop.f32.mrf.mxu0
      %521 = vmatprep.mubr.bf16.mxu0 0
      %522 = vmatmul.mubr.bf16.gmra.mxu0 %v366
      %v523 = vpop.f32.mrf.mxu0
      %v524 = vadd.f32 %v219, %v523
      %v525 = vpop.f32.mrf.mxu0
      %v526 = vpop.f32.mrf.mxu0
      %v527 = vadd.f32 %v219, %v526
      %v528 = vpop.f32.mrf.mxu0
      %529 = vmatprep.mubr.bf16.mxu0 0
      %530 = vmatmul.mubr.bf16.gmra.mxu0 %v369
      %v531 = vpop.f32.mrf.mxu0
      %v532 = vadd.f32 %v219, %v531
      %v533 = vpop.f32.mrf.mxu0
      %v534 = vpop.f32.mrf.mxu0
      %v535 = vadd.f32 %v219, %v534
      %v536 = vpop.f32.mrf.mxu0
      %537 = vdwg.mxu0
      %v538 = vxor.u32 %v412, 2147483648
      %v539 = vxor.u32 %v415, 2147483648
      %v540 = vxor.u32 %v420, 2147483648
      %v541 = vxor.u32 %v423, 2147483648
      %v542 = vxor.u32 %v428, 2147483648
      %v543 = vxor.u32 %v431, 2147483648
      %v544 = vxor.u32 %v436, 2147483648
      %v545 = vxor.u32 %v439, 2147483648
      %v546 = vxor.u32 %v444, 2147483648
      %v547 = vxor.u32 %v447, 2147483648
      %v548 = vxor.u32 %v452, 2147483648
      %v549 = vxor.u32 %v455, 2147483648
      %v550 = vxor.u32 %v460, 2147483648
      %v551 = vxor.u32 %v463, 2147483648
      %v552 = vxor.u32 %v468, 2147483648
      %v553 = vxor.u32 %v471, 2147483648
      %v554 = vxor.u32 %v476, 2147483648
      %v555 = vxor.u32 %v479, 2147483648
      %v556 = vxor.u32 %v484, 2147483648
      %v557 = vxor.u32 %v487, 2147483648
      %v558 = vxor.u32 %v492, 2147483648
      %v559 = vxor.u32 %v495, 2147483648
      %v560 = vxor.u32 %v500, 2147483648
      %v561 = vxor.u32 %v503, 2147483648
      %v562 = vxor.u32 %v508, 2147483648
      %v563 = vxor.u32 %v511, 2147483648
      %v564 = vxor.u32 %v516, 2147483648
      %v565 = vxor.u32 %v519, 2147483648
      %v566 = vxor.u32 %v524, 2147483648
      %v567 = vxor.u32 %v527, 2147483648
      %v568 = vxor.u32 %v532, 2147483648
      %v569 = vxor.u32 %v535, 2147483648
      %v570 = vmul.f32 %v538, 1.442695
      %v571 = vpow.pop %v570
      %v572 = vmul.f32 %v539, 1.442695
      %v573 = vpow.pop %v572
      %v574 = vmul.f32 %v540, 1.442695
      %v575 = vpow.pop %v574
      %v576 = vmul.f32 %v541, 1.442695
      %v577 = vpow.pop %v576
      %v578 = vmul.f32 %v542, 1.442695
      %v579 = vpow.pop %v578
      %v580 = vmul.f32 %v543, 1.442695
      %v581 = vpow.pop %v580
      %v582 = vmul.f32 %v544, 1.442695
      %v583 = vpow.pop %v582
      %v584 = vmul.f32 %v545, 1.442695
      %v585 = vpow.pop %v584
      %v586 = vmul.f32 %v546, 1.442695
      %v587 = vpow.pop %v586
      %v588 = vmul.f32 %v547, 1.442695
      %v589 = vpow.pop %v588
      %v590 = vmul.f32 %v548, 1.442695
      %v591 = vpow.pop %v590
      %v592 = vmul.f32 %v549, 1.442695
      %v593 = vpow.pop %v592
      %v594 = vmul.f32 %v550, 1.442695
      %v595 = vpow.pop %v594
      %v596 = vmul.f32 %v551, 1.442695
      %v597 = vpow.pop %v596
      %v598 = vmul.f32 %v552, 1.442695
      %v599 = vpow.pop %v598
      %v600 = vmul.f32 %v553, 1.442695
      %v601 = vpow.pop %v600
      %v602 = vmul.f32 %v554, 1.442695
      %v603 = vpow.pop %v602
      %v604 = vmul.f32 %v555, 1.442695
      %v605 = vpow.pop %v604
      %v606 = vmul.f32 %v556, 1.442695
      %v607 = vpow.pop %v606
      %v608 = vmul.f32 %v557, 1.442695
      %v609 = vpow.pop %v608
      %v610 = vmul.f32 %v558, 1.442695
      %v611 = vpow.pop %v610
      %v612 = vmul.f32 %v559, 1.442695
      %v613 = vpow.pop %v612
      %v614 = vmul.f32 %v560, 1.442695
      %v615 = vpow.pop %v614
      %v616 = vmul.f32 %v561, 1.442695
      %v617 = vpow.pop %v616
      %v618 = vmul.f32 %v562, 1.442695
      %v619 = vpow.pop %v618
      %v620 = vmul.f32 %v563, 1.442695
      %v621 = vpow.pop %v620
      %v622 = vmul.f32 %v564, 1.442695
      %v623 = vpow.pop %v622
      %v624 = vmul.f32 %v565, 1.442695
      %v625 = vpow.pop %v624
      %v626 = vmul.f32 %v566, 1.442695
      %v627 = vpow.pop %v626
      %v628 = vmul.f32 %v567, 1.442695
      %v629 = vpow.pop %v628
      %v630 = vmul.f32 %v568, 1.442695
      %v631 = vpow.pop %v630
      %v632 = vmul.f32 %v569, 1.442695
      %v633 = vpow.pop %v632
      %v634 = vadd.f32 %v571, 1.0
      %v635 = vadd.f32 %v573, 1.0
      %v636 = vadd.f32 %v575, 1.0
      %v637 = vadd.f32 %v577, 1.0
      %v638 = vadd.f32 %v579, 1.0
      %v639 = vadd.f32 %v581, 1.0
      %v640 = vadd.f32 %v583, 1.0
      %v641 = vadd.f32 %v585, 1.0
      %v642 = vadd.f32 %v587, 1.0
      %v643 = vadd.f32 %v589, 1.0
      %v644 = vadd.f32 %v591, 1.0
      %v645 = vadd.f32 %v593, 1.0
      %v646 = vadd.f32 %v595, 1.0
      %v647 = vadd.f32 %v597, 1.0
      %v648 = vadd.f32 %v599, 1.0
      %v649 = vadd.f32 %v601, 1.0
      %v650 = vadd.f32 %v603, 1.0
      %v651 = vadd.f32 %v605, 1.0
      %v652 = vadd.f32 %v607, 1.0
      %v653 = vadd.f32 %v609, 1.0
      %v654 = vadd.f32 %v611, 1.0
      %v655 = vadd.f32 %v613, 1.0
      %v656 = vadd.f32 %v615, 1.0
      %v657 = vadd.f32 %v617, 1.0
      %v658 = vadd.f32 %v619, 1.0
      %v659 = vadd.f32 %v621, 1.0
      %v660 = vadd.f32 %v623, 1.0
      %v661 = vadd.f32 %v625, 1.0
      %v662 = vadd.f32 %v627, 1.0
      %v663 = vadd.f32 %v629, 1.0
      %v664 = vadd.f32 %v631, 1.0
      %v665 = vadd.f32 %v633, 1.0
      %v666 = vrcp.pop %v634
      %v667 = vmul.f32 1.0, %v666
      %v668 = vrcp.pop %v635
      %v669 = vmul.f32 1.0, %v668
      %v670 = vrcp.pop %v636
      %v671 = vmul.f32 1.0, %v670
      %v672 = vrcp.pop %v637
      %v673 = vmul.f32 1.0, %v672
      %v674 = vrcp.pop %v638
      %v675 = vmul.f32 1.0, %v674
      %v676 = vrcp.pop %v639
      %v677 = vmul.f32 1.0, %v676
      %v678 = vrcp.pop %v640
      %v679 = vmul.f32 1.0, %v678
      %v680 = vrcp.pop %v641
      %v681 = vmul.f32 1.0, %v680
      %v682 = vrcp.pop %v642
      %v683 = vmul.f32 1.0, %v682
      %v684 = vrcp.pop %v643
      %v685 = vmul.f32 1.0, %v684
      %v686 = vrcp.pop %v644
      %v687 = vmul.f32 1.0, %v686
      %v688 = vrcp.pop %v645
      %v689 = vmul.f32 1.0, %v688
      %v690 = vrcp.pop %v646
      %v691 = vmul.f32 1.0, %v690
      %v692 = vrcp.pop %v647
      %v693 = vmul.f32 1.0, %v692
      %v694 = vrcp.pop %v648
      %v695 = vmul.f32 1.0, %v694
      %v696 = vrcp.pop %v649
      %v697 = vmul.f32 1.0, %v696
      %v698 = vrcp.pop %v650
      %v699 = vmul.f32 1.0, %v698
      %v700 = vrcp.pop %v651
      %v701 = vmul.f32 1.0, %v700
      %v702 = vrcp.pop %v652
      %v703 = vmul.f32 1.0, %v702
      %v704 = vrcp.pop %v653
      %v705 = vmul.f32 1.0, %v704
      %v706 = vrcp.pop %v654
      %v707 = vmul.f32 1.0, %v706
      %v708 = vrcp.pop %v655
      %v709 = vmul.f32 1.0, %v708
      %v710 = vrcp.pop %v656
      %v711 = vmul.f32 1.0, %v710
      %v712 = vrcp.pop %v657
      %v713 = vmul.f32 1.0, %v712
      %v714 = vrcp.pop %v658
      %v715 = vmul.f32 1.0, %v714
      %v716 = vrcp.pop %v659
      %v717 = vmul.f32 1.0, %v716
      %v718 = vrcp.pop %v660
      %v719 = vmul.f32 1.0, %v718
      %v720 = vrcp.pop %v661
      %v721 = vmul.f32 1.0, %v720
      %v722 = vrcp.pop %v662
      %v723 = vmul.f32 1.0, %v722
      %v724 = vrcp.pop %v663
      %v725 = vmul.f32 1.0, %v724
      %v726 = vrcp.pop %v664
      %v727 = vmul.f32 1.0, %v726
      %v728 = vrcp.pop %v665
      %v729 = vmul.f32 1.0, %v728
      %762 = vrot.lane.b32.xlu0 %v667, 96
      %v763 = vpop.permute.xlu0 %762
      %764 = vrot.lane.b32.xlu0 %v669, 96
      %v765 = vpop.permute.xlu0 %764
      %766 = vrot.lane.b32.xlu0 %v671, 96
      %v767 = vpop.permute.xlu0 %766
      %768 = vrot.lane.b32.xlu0 %v673, 96
      %v769 = vpop.permute.xlu0 %768
      %770 = vrot.lane.b32.xlu0 %v675, 96
      %v771 = vpop.permute.xlu0 %770
      %772 = vrot.lane.b32.xlu0 %v677, 96
      %v773 = vpop.permute.xlu0 %772
      %774 = vrot.lane.b32.xlu0 %v679, 96
      %v775 = vpop.permute.xlu0 %774
      %776 = vrot.lane.b32.xlu0 %v681, 96
      %v777 = vpop.permute.xlu0 %776
      %778 = vrot.lane.b32.xlu0 %v683, 96
      %v779 = vpop.permute.xlu0 %778
      %780 = vrot.lane.b32.xlu0 %v685, 96
      %v781 = vpop.permute.xlu0 %780
      %782 = vrot.lane.b32.xlu0 %v687, 96
      %v783 = vpop.permute.xlu0 %782
      %784 = vrot.lane.b32.xlu0 %v689, 96
      %v785 = vpop.permute.xlu0 %784
      %786 = vrot.lane.b32.xlu0 %v691, 96
      %v787 = vpop.permute.xlu0 %786
      %788 = vrot.lane.b32.xlu0 %v693, 96
      %v789 = vpop.permute.xlu0 %788
      %790 = vrot.lane.b32.xlu0 %v695, 96
      %v791 = vpop.permute.xlu0 %790
      %792 = vrot.lane.b32.xlu0 %v697, 96
      %v793 = vpop.permute.xlu0 %792
      %794 = vrot.lane.b32.xlu0 %v699, 96
      %v795 = vpop.permute.xlu0 %794
      %796 = vrot.lane.b32.xlu0 %v701, 96
      %v797 = vpop.permute.xlu0 %796
      %798 = vrot.lane.b32.xlu0 %v703, 96
      %v799 = vpop.permute.xlu0 %798
      %800 = vrot.lane.b32.xlu0 %v705, 96
      %v801 = vpop.permute.xlu0 %800
      %802 = vrot.lane.b32.xlu0 %v707, 96
      %v803 = vpop.permute.xlu0 %802
      %804 = vrot.lane.b32.xlu0 %v709, 96
      %v805 = vpop.permute.xlu0 %804
      %806 = vrot.lane.b32.xlu0 %v711, 96
      %v807 = vpop.permute.xlu0 %806
      %808 = vrot.lane.b32.xlu0 %v713, 96
      %v809 = vpop.permute.xlu0 %808
      %810 = vrot.lane.b32.xlu0 %v715, 96
      %v811 = vpop.permute.xlu0 %810
      %812 = vrot.lane.b32.xlu0 %v717, 96
      %v813 = vpop.permute.xlu0 %812
      %814 = vrot.lane.b32.xlu0 %v719, 96
      %v815 = vpop.permute.xlu0 %814
      %816 = vrot.lane.b32.xlu0 %v721, 96
      %v817 = vpop.permute.xlu0 %816
      %818 = vrot.lane.b32.xlu0 %v723, 96
      %v819 = vpop.permute.xlu0 %818
      %820 = vrot.lane.b32.xlu0 %v725, 96
      %v821 = vpop.permute.xlu0 %820
      %822 = vrot.lane.b32.xlu0 %v727, 96
      %v823 = vpop.permute.xlu0 %822
      %824 = vrot.lane.b32.xlu0 %v729, 96
      %v825 = vpop.permute.xlu0 %824
      %v858 = vmul.f32 %v412, %v763
      %v859 = vmul.f32 %v415, %v765
      %v860 = vmul.f32 %v420, %v767
      %v861 = vmul.f32 %v423, %v769
      %v862 = vmul.f32 %v428, %v771
      %v863 = vmul.f32 %v431, %v773
      %v864 = vmul.f32 %v436, %v775
      %v865 = vmul.f32 %v439, %v777
      %v866 = vmul.f32 %v444, %v779
      %v867 = vmul.f32 %v447, %v781
      %v868 = vmul.f32 %v452, %v783
      %v869 = vmul.f32 %v455, %v785
      %v870 = vmul.f32 %v460, %v787
      %v871 = vmul.f32 %v463, %v789
      %v872 = vmul.f32 %v468, %v791
      %v873 = vmul.f32 %v471, %v793
      %v874 = vmul.f32 %v476, %v795
      %v875 = vmul.f32 %v479, %v797
      %v876 = vmul.f32 %v484, %v799
      %v877 = vmul.f32 %v487, %v801
      %v878 = vmul.f32 %v492, %v803
      %v879 = vmul.f32 %v495, %v805
      %v880 = vmul.f32 %v500, %v807
      %v881 = vmul.f32 %v503, %v809
      %v882 = vmul.f32 %v508, %v811
      %v883 = vmul.f32 %v511, %v813
      %v884 = vmul.f32 %v516, %v815
      %v885 = vmul.f32 %v519, %v817
      %v886 = vmul.f32 %v524, %v819
      %v887 = vmul.f32 %v527, %v821
      %v888 = vmul.f32 %v532, %v823
      %v889 = vmul.f32 %v535, %v825
      %v890 = vpack.c.bf16 %v859, %v858
      %v891 = vpack.c.bf16 %v861, %v860
      %v892 = vpack.c.bf16 %v863, %v862
      %v893 = vpack.c.bf16 %v865, %v864
      %v894 = vpack.c.bf16 %v867, %v866
      %v895 = vpack.c.bf16 %v869, %v868
      %v896 = vpack.c.bf16 %v871, %v870
      %v897 = vpack.c.bf16 %v873, %v872
      %v898 = vpack.c.bf16 %v875, %v874
      %v899 = vpack.c.bf16 %v877, %v876
      %v900 = vpack.c.bf16 %v879, %v878
      %v901 = vpack.c.bf16 %v881, %v880
      %v902 = vpack.c.bf16 %v883, %v882
      %v903 = vpack.c.bf16 %v885, %v884
      %v904 = vpack.c.bf16 %v887, %v886
      %v905 = vpack.c.bf16 %v889, %v888
      %v922 = vunpack.c.l.b16 %v890
      %v923 = vunpack.c.h.b16 %v890
      %v924 = vunpack.c.l.b16 %v891
      %v925 = vunpack.c.h.b16 %v891
      %v926 = vunpack.c.l.b16 %v892
      %v927 = vunpack.c.h.b16 %v892
      %v928 = vunpack.c.l.b16 %v893
      %v929 = vunpack.c.h.b16 %v893
      %v930 = vunpack.c.l.b16 %v894
      %v931 = vunpack.c.h.b16 %v894
      %v932 = vunpack.c.l.b16 %v895
      %v933 = vunpack.c.h.b16 %v895
      %v934 = vunpack.c.l.b16 %v896
      %v935 = vunpack.c.h.b16 %v896
      %v936 = vunpack.c.l.b16 %v897
      %v937 = vunpack.c.h.b16 %v897
      %v938 = vunpack.c.l.b16 %v898
      %v939 = vunpack.c.h.b16 %v898
      %v940 = vunpack.c.l.b16 %v899
      %v941 = vunpack.c.h.b16 %v899
      %v942 = vunpack.c.l.b16 %v900
      %v943 = vunpack.c.h.b16 %v900
      %v944 = vunpack.c.l.b16 %v901
      %v945 = vunpack.c.h.b16 %v901
      %v946 = vunpack.c.l.b16 %v902
      %v947 = vunpack.c.h.b16 %v902
      %v948 = vunpack.c.l.b16 %v903
      %v949 = vunpack.c.h.b16 %v903
      %v950 = vunpack.c.l.b16 %v904
      %v951 = vunpack.c.h.b16 %v904
      %v952 = vunpack.c.l.b16 %v905
      %v953 = vunpack.c.h.b16 %v905
      %v954 = vpack.c.b16 %v922, %v922
      %v955 = vpack.c.b16 %v923, %v923
      %v956 = vpack.c.b16 %v924, %v924
      %v957 = vpack.c.b16 %v925, %v925
      %v958 = vpack.c.b16 %v926, %v926
      %v959 = vpack.c.b16 %v927, %v927
      %v960 = vpack.c.b16 %v928, %v928
      %v961 = vpack.c.b16 %v929, %v929
      %v962 = vpack.c.b16 %v930, %v930
      %v963 = vpack.c.b16 %v931, %v931
      %v964 = vpack.c.b16 %v932, %v932
      %v965 = vpack.c.b16 %v933, %v933
      %v966 = vpack.c.b16 %v934, %v934
      %v967 = vpack.c.b16 %v935, %v935
      %v968 = vpack.c.b16 %v936, %v936
      %v969 = vpack.c.b16 %v937, %v937
      %v970 = vpack.c.b16 %v938, %v938
      %v971 = vpack.c.b16 %v939, %v939
      %v972 = vpack.c.b16 %v940, %v940
      %v973 = vpack.c.b16 %v941, %v941
      %v974 = vpack.c.b16 %v942, %v942
      %v975 = vpack.c.b16 %v943, %v943
      %v976 = vpack.c.b16 %v944, %v944
      %v977 = vpack.c.b16 %v945, %v945
      %v978 = vpack.c.b16 %v946, %v946
      %v979 = vpack.c.b16 %v947, %v947
      %v980 = vpack.c.b16 %v948, %v948
      %v981 = vpack.c.b16 %v949, %v949
      %v982 = vpack.c.b16 %v950, %v950
      %v983 = vpack.c.b16 %v951, %v951
      %v984 = vpack.c.b16 %v952, %v952
      %v985 = vpack.c.b16 %v953, %v953
      %vm1018 = vcmask 257024
      %1019 = vst.msk [vmem:[%s172] sm:$0xf] %vm1018, %v954
      %1020 = vst.msk [vmem:[%s172 + $0x4] sm:$0xf] %vm1018, %v955
      %1021 = vst.msk [vmem:[%s172 + $0x8] sm:$0xf] %vm1018, %v956
      %1022 = vst.msk [vmem:[%s172 + $0xc] sm:$0xf] %vm1018, %v957
      %1023 = vst.msk [vmem:[%s172 + $0x10] sm:$0xf] %vm1018, %v958
      %1024 = vst.msk [vmem:[%s172 + $0x14] sm:$0xf] %vm1018, %v959
      %1025 = vst.msk [vmem:[%s172 + $0x18] sm:$0xf] %vm1018, %v960
      %1026 = vst.msk [vmem:[%s172 + $0x1c] sm:$0xf] %vm1018, %v961
      %1027 = vst.msk [vmem:[%s172 + $0x20] sm:$0xf] %vm1018, %v962
      %1028 = vst.msk [vmem:[%s172 + $0x24] sm:$0xf] %vm1018, %v963
      %1029 = vst.msk [vmem:[%s172 + $0x28] sm:$0xf] %vm1018, %v964
      %1030 = vst.msk [vmem:[%s172 + $0x2c] sm:$0xf] %vm1018, %v965
      %1031 = vst.msk [vmem:[%s172 + $0x30] sm:$0xf] %vm1018, %v966
      %1032 = vst.msk [vmem:[%s172 + $0x34] sm:$0xf] %vm1018, %v967
      %1033 = vst.msk [vmem:[%s172 + $0x38] sm:$0xf] %vm1018, %v968
      %1034 = vst.msk [vmem:[%s172 + $0x3c] sm:$0xf] %vm1018, %v969
      %1035 = vst.msk [vmem:[%s172 + $0x40] sm:$0xf] %vm1018, %v970
      %1036 = vst.msk [vmem:[%s172 + $0x44] sm:$0xf] %vm1018, %v971
      %1037 = vst.msk [vmem:[%s172 + $0x48] sm:$0xf] %vm1018, %v972
      %1038 = vst.msk [vmem:[%s172 + $0x4c] sm:$0xf] %vm1018, %v973
      %1039 = vst.msk [vmem:[%s172 + $0x50] sm:$0xf] %vm1018, %v974
      %1040 = vst.msk [vmem:[%s172 + $0x54] sm:$0xf] %vm1018, %v975
      %1041 = vst.msk [vmem:[%s172 + $0x58] sm:$0xf] %vm1018, %v976
      %1042 = vst.msk [vmem:[%s172 + $0x5c] sm:$0xf] %vm1018, %v977
      %1043 = vst.msk [vmem:[%s172 + $0x60] sm:$0xf] %vm1018, %v978
      %1044 = vst.msk [vmem:[%s172 + $0x64] sm:$0xf] %vm1018, %v979
      %1045 = vst.msk [vmem:[%s172 + $0x68] sm:$0xf] %vm1018, %v980
      %1046 = vst.msk [vmem:[%s172 + $0x6c] sm:$0xf] %vm1018, %v981
      %1047 = vst.msk [vmem:[%s172 + $0x70] sm:$0xf] %vm1018, %v982
      %1048 = vst.msk [vmem:[%s172 + $0x74] sm:$0xf] %vm1018, %v983
      %1049 = vst.msk [vmem:[%s172 + $0x78] sm:$0xf] %vm1018, %v984
      %1050 = vst.msk [vmem:[%s172 + $0x7c] sm:$0xf] %vm1018, %v985
      %s1051 = smul.u32 32, %s14
      %p1052 = scmp.lt.s32.totalorder %s1051, 223
      %s1053 = scalar_select %p1052, %s1051, 223
      %s1054 = smul.addr %s1053, 4
      %s1055 = scalar_lea.vmem %s3, %s1054
      // Predicated region
      $region33: #{gated_conv2d_encoder_forward.6} parent=31 // pred_check
        %p1056 = pneg %p100
      $region34: #{gated_conv2d_encoder_forward.6} parent=31 // pred_check_branch
        %1058 = sbr.rel (%p1056) target = $region36
      $region35: #{gated_conv2d_encoder_forward.6} parent=31 // pred_region
        %s1059 = smul.u32 32, %s14
      $region36: #{gated_conv2d_encoder_forward.6} parent=31 // pred_fallthru
        _
    $region32: #{gated_conv2d_encoder_forward.6} parent=5 // pred_fallthru
      _
    %p1060 = scmp.le.s32.totalorder 2, %s9
    // Predicated region
    $region37: #{gated_conv2d_encoder_forward.6} parent=5 // pred_check
      %p1061 = pneg %p1060
    $region38: #{gated_conv2d_encoder_forward.6} parent=5 // pred_check_branch
      %1063 = sbr.rel (%p1061) target = $region40
    $region39: #{gated_conv2d_encoder_forward.6} parent=5 // pred_region
      %s1064 = ssub.s32 %s9, 2
      // Predicated region
      $region41: #{gated_conv2d_encoder_forward.6} parent=39 // pred_check
        %p1065 = pneg %p106
      $region42: #{gated_conv2d_encoder_forward.6} parent=39 // pred_check_branch
        %1067 = sbr.rel (%p1065) target = $region44
      $region43: #{gated_conv2d_encoder_forward.6} parent=39 // pred_region
        %s1068 = smul.u32 32, %s15
        %p1069 = scmp.lt.s32.totalorder %s1068, 223
        %s1070 = scalar_select %p1069, %s1068, 223
        %s1071 = smul.addr %s1070, 4
        %s1072 = scalar_lea.vmem %s3, %s1071
      $region44: #{gated_conv2d_encoder_forward.6} parent=39 // pred_fallthru
        _
    $region40: #{gated_conv2d_encoder_forward.6} parent=5 // pred_fallthru
      _
  $region6: #{gated_conv2d_encoder_forward.6} parent=0 // loop_footer
    %s13 = sadd.s32 1, %s9
  $region7: #{gated_conv2d_encoder_forward.6} parent=0 // loop_footer_branch
    %8 = sbr.rel target = $region3
  $region8: #{gated_conv2d_encoder_forward.6} parent=0 // loop_exit
    _

// kernel: gated_conv2d_encoder_forward.7
$region0: #{gated_conv2d_encoder_forward.7}
  #allocation0 [shape = 'u32[]', space=smem, size = 0x4, offset = 0x4, fixed_abs, tag = 'smem constant byte address 0x4 - core index']
  #allocation1 [shape = 'u32[144,128]{1,0:T(1,128)}', space=vmem, size = 0x12000, scoped, tag = 'internal scratch']
  %s0 = inlined_call_operand.vmem [shape: bf16[512,288], index: 0, kind: input, shape index: {}]
  %s1 = inlined_call_operand.vmem [shape: bf16[288,64], index: 1, kind: input, shape index: {}]
  %s2 = inlined_call_operand.vmem [shape: f32[1,64], index: 2, kind: input, shape index: {}]
  %s3 = inlined_call_operand.vmem [shape: bf16[512,32], index: 3, kind: output, shape index: {}]
  %s4 = sld [smem:[#allocation0]]
  $region45: #{gated_conv2d_encoder_forward.7} parent=0
    _
  %s6 = ssub.s32 1, %s4
  %s7 = scalar_select 0, %s6, %s4
  loop: start=0, step=1, limit=4
  $region2: #{gated_conv2d_encoder_forward.7} parent=0 // loop_pre_header
    _
  $region3: #{gated_conv2d_encoder_forward.7} parent=0 // loop_header
    %s9 = sphi 0, %s13
    %p10 = scmp.ge.s32.totalorder %s9, 4
    %s19 = sphi 0, %s21
    %s22 = sphi 0, %s19
    %s23 = sphi 0, %s22
    %s39 = sphi 0, %s23
    %s43 = sphi 0, %s43
    %s45 = sphi 0, %s43
    %s46 = sphi 0, %s45
    %s60 = sphi 0, %s46
    %s64 = sphi 0, %s64
    %s66 = sphi 0, %s64
    %s67 = sphi 0, %s66
    %s81 = sphi 0, %s67
    %s87 = sphi 0, %s89
    %s90 = sphi 0, %s87
    %s91 = sphi 0, %s90
    %s107 = sphi 0, %s91
  $region4: #{gated_conv2d_encoder_forward.7} parent=0 // loop_header_branch
    %12 = sbr.rel (%p10) target = $region8
  $region5: #{gated_conv2d_encoder_forward.7} parent=0 // loop_body
    %s14 = ssub.s32 %s9, 1
    %s15 = ssub.s32 %s9, 2
    %s16 = sadd.s32 %s9, 1
    %s17 = ssub.s32 %s9, %s16
    %p18 = scmp.eq.s32.totalorder %s17, 0
    %s20 = sadd.s32 %s19, 1
    %s21 = scalar_select %p18, %s19, %s20
    %p24 = pneg %p18
    %p25 = scmp.eq.s32.totalorder %s9, 1
    %p26 = por %p24, %p25
    %p27 = scmp.ne.s32.totalorder %s19, %s22
    %p28 = scmp.eq.s32.totalorder %s9, 0
    %p29 = por %p27, %p28
    %p30 = scmp.ne.s32.totalorder %s19, %s22
    %p31 = scmp.eq.s32.totalorder %s14, 1
    %p32 = por %p30, %p31
    %p33 = scmp.ne.s32.totalorder %s22, %s23
    %p34 = scmp.eq.s32.totalorder %s14, 0
    %p35 = por %p33, %p34
    %p36 = scmp.ne.s32.totalorder %s22, %s23
    %p37 = scmp.eq.s32.totalorder %s15, 1
    %p38 = por %p36, %p37
    %p40 = scmp.ne.s32.totalorder %s23, %s39
    %p41 = scmp.eq.s32.totalorder %s15, 0
    %p42 = por %p40, %p41
    %s44 = sadd.s32 %s43, 1
    %p47 = scmp.eq.s32.totalorder %s9, 1
    %p48 = scmp.ne.s32.totalorder %s43, %s45
    %p49 = scmp.eq.s32.totalorder %s9, 0
    %p50 = por %p48, %p49
    %p51 = scmp.ne.s32.totalorder %s43, %s45
    %p52 = scmp.eq.s32.totalorder %s14, 1
    %p53 = por %p51, %p52
    %p54 = scmp.ne.s32.totalorder %s45, %s46
    %p55 = scmp.eq.s32.totalorder %s14, 0
    %p56 = por %p54, %p55
    %p57 = scmp.ne.s32.totalorder %s45, %s46
    %p58 = scmp.eq.s32.totalorder %s15, 1
    %p59 = por %p57, %p58
    %p61 = scmp.ne.s32.totalorder %s46, %s60
    %p62 = scmp.eq.s32.totalorder %s15, 0
    %p63 = por %p61, %p62
    %s65 = sadd.s32 %s64, 1
    %p68 = scmp.eq.s32.totalorder %s9, 1
    %p69 = scmp.ne.s32.totalorder %s64, %s66
    %p70 = scmp.eq.s32.totalorder %s9, 0
    %p71 = por %p69, %p70
    %p72 = scmp.ne.s32.totalorder %s64, %s66
    %p73 = scmp.eq.s32.totalorder %s14, 1
    %p74 = por %p72, %p73
    %p75 = scmp.ne.s32.totalorder %s66, %s67
    %p76 = scmp.eq.s32.totalorder %s14, 0
    %p77 = por %p75, %p76
    %p78 = scmp.ne.s32.totalorder %s66, %s67
    %p79 = scmp.eq.s32.totalorder %s15, 1
    %p80 = por %p78, %p79
    %p82 = scmp.ne.s32.totalorder %s67, %s81
    %p83 = scmp.eq.s32.totalorder %s15, 0
    %p84 = por %p82, %p83
    %s85 = ssub.s32 %s9, %s16
    %p86 = scmp.eq.s32.totalorder %s85, 0
    %s88 = sadd.s32 %s87, 1
    %s89 = scalar_select %p86, %s87, %s88
    %p92 = pneg %p86
    %p93 = scmp.eq.s32.totalorder %s9, 1
    %p94 = por %p92, %p93
    %p95 = scmp.ne.s32.totalorder %s87, %s90
    %p96 = scmp.eq.s32.totalorder %s9, 0
    %p97 = por %p95, %p96
    %p98 = scmp.ne.s32.totalorder %s87, %s90
    %p99 = scmp.eq.s32.totalorder %s14, 1
    %p100 = por %p98, %p99
    %p101 = scmp.ne.s32.totalorder %s90, %s91
    %p102 = scmp.eq.s32.totalorder %s14, 0
    %p103 = por %p101, %p102
    %p104 = scmp.ne.s32.totalorder %s90, %s91
    %p105 = scmp.eq.s32.totalorder %s15, 1
    %p106 = por %p104, %p105
    %p108 = scmp.ne.s32.totalorder %s91, %s107
    %p109 = scmp.eq.s32.totalorder %s15, 0
    %p110 = por %p108, %p109
    %p111 = scmp.le.s32.totalorder 1, %s9
    %p112 = scmp.lt.s32.totalorder %s9, 3
    %p113 = pnand %p111, %p112
    %p114 = pneg %p113
    // Predicated region
    $region9: #{gated_conv2d_encoder_forward.7} parent=5 // pred_check
      _
    $region10: #{gated_conv2d_encoder_forward.7} parent=5 // pred_check_branch
      %116 = sbr.rel (%p113) target = $region12
    $region11: #{gated_conv2d_encoder_forward.7} parent=5 // pred_region
      %s117 = ssub.s32 %s9, 1
      // Predicated region
      $region13: #{gated_conv2d_encoder_forward.7} parent=11 // pred_check
        %p118 = pneg %p56
      $region14: #{gated_conv2d_encoder_forward.7} parent=11 // pred_check_branch
        %120 = sbr.rel (%p118) target = $region16
      $region15: #{gated_conv2d_encoder_forward.7} parent=11 // pred_region
        _
      $region16: #{gated_conv2d_encoder_forward.7} parent=11 // pred_fallthru
        _
      // Predicated region
      $region17: #{gated_conv2d_encoder_forward.7} parent=11 // pred_check
        %p121 = pneg %p77
      $region18: #{gated_conv2d_encoder_forward.7} parent=11 // pred_check_branch
        %123 = sbr.rel (%p121) target = $region20
      $region19: #{gated_conv2d_encoder_forward.7} parent=11 // pred_region
        _
      $region20: #{gated_conv2d_encoder_forward.7} parent=11 // pred_fallthru
        _
    $region12: #{gated_conv2d_encoder_forward.7} parent=5 // pred_fallthru
      _
    %p124 = scmp.lt.s32.totalorder %s9, 2
    // Predicated region
    $region21: #{gated_conv2d_encoder_forward.7} parent=5 // pred_check
      %p125 = pneg %p124
    $region22: #{gated_conv2d_encoder_forward.7} parent=5 // pred_check_branch
      %127 = sbr.rel (%p125) target = $region24
    $region23: #{gated_conv2d_encoder_forward.7} parent=5 // pred_region
      // Predicated region
      $region25: #{gated_conv2d_encoder_forward.7} parent=23 // pred_check
        %p128 = pneg %p29
      $region26: #{gated_conv2d_encoder_forward.7} parent=23 // pred_check_branch
        %130 = sbr.rel (%p128) target = $region28
      $region27: #{gated_conv2d_encoder_forward.7} parent=23 // pred_region
        %s131 = smul.u32 32, %s9
        %p132 = scmp.lt.s32.totalorder %s131, 63
        %s133 = scalar_select %p132, %s131, 63
        %s134 = smul.addr %s133, 3
        %s135 = smul.addr %s134, 4
        %s136 = scalar_lea.vmem %s0, %s135
        %s137 = smul.u32 32, %s9
      $region28: #{gated_conv2d_encoder_forward.7} parent=23 // pred_fallthru
        _
    $region24: #{gated_conv2d_encoder_forward.7} parent=5 // pred_fallthru
      _
    %p138 = scmp.le.s32.totalorder 1, %s9
    %p139 = scmp.lt.s32.totalorder %s9, 3
    %p140 = pnand %p138, %p139
    %p141 = pneg %p140
    // Predicated region
    $region29: #{gated_conv2d_encoder_forward.7} parent=5 // pred_check
      _
    $region30: #{gated_conv2d_encoder_forward.7} parent=5 // pred_check_branch
      %143 = sbr.rel (%p140) target = $region32
    $region31: #{gated_conv2d_encoder_forward.7} parent=5 // pred_region
      %s144 = ssub.s32 %s9, 1
      %s145 = smul.u32 32, %s14
      %p146 = scmp.lt.s32.totalorder %s145, 63
      %s147 = scalar_select %p146, %s145, 63
      %s148 = smul.addr %s147, 3
      %s149 = smul.addr %s148, 4
      %s150 = scalar_lea.vmem %s0, %s149
      %p151 = pneg %p35
      %p152 = pneg %p32
      %p153 = pneg %p56
      %p154 = pneg %p53
      %p155 = pneg %p77
      %p156 = pneg %p74
      %p157 = pneg %p103
      %p158 = pneg %p100
      %s159 = smul.u32 32, %s14
      %p160 = scmp.lt.s32.totalorder %s159, 63
      %s161 = scalar_select %p160, %s159, 63
      %s162 = smul.addr %s161, 4
      %s163 = scalar_lea.vmem %s3, %s162
      %s164 = smul.u32 32, %s14
      %p165 = scmp.lt.s32.totalorder %s164, 63
      %s166 = scalar_select %p165, %s164, 63
      %s167 = smul.addr %s166, 3
      %s168 = smul.addr %s167, 4
      %s169 = scalar_lea.vmem %s0, %s168
      %s170 = smul.u32 32, %s14
      %s171 = smul.u32 32, %s14
      %p172 = scmp.lt.s32.totalorder %s171, 63
      %s173 = scalar_select %p172, %s171, 63
      %s174 = smul.addr %s173, 4
      %s175 = scalar_lea.vmem %s3, %s174
      %s176 = smul.u32 32, %s14
      %v178 = vld [vmem:[%s169] sm:$0xff]
      %v179 = vld [vmem:[%s169 + $0x8] sm:$0xf]
      %v180 = vld [vmem:[%s169 + $0xc] sm:$0xff]
      %v181 = vld [vmem:[%s169 + $0x14] sm:$0xf]
      %v182 = vld [vmem:[%s169 + $0x18] sm:$0xff]
      %v183 = vld [vmem:[%s169 + $0x20] sm:$0xf]
      %v184 = vld [vmem:[%s169 + $0x24] sm:$0xff]
      %v185 = vld [vmem:[%s169 + $0x2c] sm:$0xf]
      %v186 = vld [vmem:[%s169 + $0x30] sm:$0xff]
      %v187 = vld [vmem:[%s169 + $0x38] sm:$0xf]
      %v188 = vld [vmem:[%s169 + $0x3c] sm:$0xff]
      %v189 = vld [vmem:[%s169 + $0x44] sm:$0xf]
      %v190 = vld [vmem:[%s169 + $0x48] sm:$0xff]
      %v191 = vld [vmem:[%s169 + $0x50] sm:$0xf]
      %v192 = vld [vmem:[%s169 + $0x54] sm:$0xff]
      %v193 = vld [vmem:[%s169 + $0x5c] sm:$0xf]
      %v194 = vld [vmem:[%s169 + $0x60] sm:$0xff]
      %v195 = vld [vmem:[%s169 + $0x68] sm:$0xf]
      %v196 = vld [vmem:[%s169 + $0x6c] sm:$0xff]
      %v197 = vld [vmem:[%s169 + $0x74] sm:$0xf]
      %v198 = vld [vmem:[%s169 + $0x78] sm:$0xff]
      %v199 = vld [vmem:[%s169 + $0x80] sm:$0xf]
      %v200 = vld [vmem:[%s169 + $0x84] sm:$0xff]
      %v201 = vld [vmem:[%s169 + $0x8c] sm:$0xf]
      %v202 = vld [vmem:[%s169 + $0x90] sm:$0xff]
      %v203 = vld [vmem:[%s169 + $0x98] sm:$0xf]
      %v204 = vld [vmem:[%s169 + $0x9c] sm:$0xff]
      %v205 = vld [vmem:[%s169 + $0xa4] sm:$0xf]
      %v206 = vld [vmem:[%s169 + $0xa8] sm:$0xff]
      %v207 = vld [vmem:[%s169 + $0xb0] sm:$0xf]
      %v208 = vld [vmem:[%s169 + $0xb4] sm:$0xff]
      %v209 = vld [vmem:[%s169 + $0xbc] sm:$0xf]
      %v210 = vld [vmem:[%s169 + $0xc0] sm:$0xff]
      %v211 = vld [vmem:[%s169 + $0xc8] sm:$0xf]
      %v212 = vld [vmem:[%s169 + $0xcc] sm:$0xff]
      %v213 = vld [vmem:[%s169 + $0xd4] sm:$0xf]
      %v214 = vld [vmem:[%s169 + $0xd8] sm:$0xff]
      %v215 = vld [vmem:[%s169 + $0xe0] sm:$0xf]
      %v216 = vld [vmem:[%s169 + $0xe4] sm:$0xff]
      %v217 = vld [vmem:[%s169 + $0xec] sm:$0xf]
      %v218 = vld [vmem:[%s169 + $0xf0] sm:$0xff]
      %v219 = vld [vmem:[%s169 + $0xf8] sm:$0xf]
      %v220 = vld [vmem:[%s169 + $0xfc] sm:$0xff]
      %v221 = vld [vmem:[%s169 + $0x104] sm:$0xf]
      %v222 = vld [vmem:[%s169 + $0x108] sm:$0xff]
      %v223 = vld [vmem:[%s169 + $0x110] sm:$0xf]
      %v224 = vld [vmem:[%s169 + $0x114] sm:$0xff]
      %v225 = vld [vmem:[%s169 + $0x11c] sm:$0xf]
      %v226 = vld [vmem:[%s169 + $0x120] sm:$0xff]
      %v227 = vld [vmem:[%s169 + $0x128] sm:$0xf]
      %v228 = vld [vmem:[%s169 + $0x12c] sm:$0xff]
      %v229 = vld [vmem:[%s169 + $0x134] sm:$0xf]
      %v230 = vld [vmem:[%s169 + $0x138] sm:$0xff]
      %v231 = vld [vmem:[%s169 + $0x140] sm:$0xf]
      %v232 = vld [vmem:[%s169 + $0x144] sm:$0xff]
      %v233 = vld [vmem:[%s169 + $0x14c] sm:$0xf]
      %v234 = vld [vmem:[%s169 + $0x150] sm:$0xff]
      %v235 = vld [vmem:[%s169 + $0x158] sm:$0xf]
      %v236 = vld [vmem:[%s169 + $0x15c] sm:$0xff]
      %v237 = vld [vmem:[%s169 + $0x164] sm:$0xf]
      %v238 = vld [vmem:[%s169 + $0x168] sm:$0xff]
      %v239 = vld [vmem:[%s169 + $0x170] sm:$0xf]
      %v240 = vld [vmem:[%s169 + $0x174] sm:$0xff]
      %v241 = vld [vmem:[%s169 + $0x17c] sm:$0xf]
      %v242 = vld [vmem:[%s1] sm:$0xf]
      %v243 = vld [vmem:[%s1 + $0x4] sm:$0xf]
      %v244 = vld [vmem:[%s1 + $0x8] sm:$0xf]
      %v245 = vld [vmem:[%s1 + $0xc] sm:$0xf]
      %v246 = vld [vmem:[%s1 + $0x10] sm:$0xf]
      %v247 = vld [vmem:[%s1 + $0x14] sm:$0xf]
      %v248 = vld [vmem:[%s1 + $0x18] sm:$0xf]
      %v249 = vld [vmem:[%s1 + $0x1c] sm:$0xf]
      %v250 = vld [vmem:[%s1 + $0x20] sm:$0xf]
      %v251 = vld [vmem:[%s1 + $0x24] sm:$0xf]
      %v252 = vld [vmem:[%s1 + $0x28] sm:$0xf]
      %v253 = vld [vmem:[%s1 + $0x2c] sm:$0xf]
      %v254 = vld [vmem:[%s1 + $0x30] sm:$0xf]
      %v255 = vld [vmem:[%s1 + $0x34] sm:$0xf]
      %v256 = vld [vmem:[%s1 + $0x38] sm:$0xf]
      %v257 = vld [vmem:[%s1 + $0x3c] sm:$0xf]
      %v258 = vld [vmem:[%s1 + $0x40] sm:$0xf]
      %v259 = vld [vmem:[%s1 + $0x44] sm:$0xf]
      %v260 = vld [vmem:[%s1 + $0x48] sm:$0xf]
      %v261 = vld [vmem:[%s1 + $0x4c] sm:$0xf]
      %v262 = vld [vmem:[%s1 + $0x50] sm:$0xf]
      %v263 = vld [vmem:[%s1 + $0x54] sm:$0xf]
      %v264 = vld [vmem:[%s1 + $0x58] sm:$0xf]
      %v265 = vld [vmem:[%s1 + $0x5c] sm:$0xf]
      %v266 = vld [vmem:[%s1 + $0x60] sm:$0xf]
      %v267 = vld [vmem:[%s1 + $0x64] sm:$0xf]
      %v268 = vld [vmem:[%s1 + $0x68] sm:$0xf]
      %v269 = vld [vmem:[%s1 + $0x6c] sm:$0xf]
      %v270 = vld [vmem:[%s1 + $0x70] sm:$0xf]
      %v271 = vld [vmem:[%s1 + $0x74] sm:$0xf]
      %v272 = vld [vmem:[%s1 + $0x78] sm:$0xf]
      %v273 = vld [vmem:[%s1 + $0x7c] sm:$0xf]
      %v274 = vld [vmem:[%s1 + $0x80] sm:$0xf]
      %v275 = vld [vmem:[%s1 + $0x84] sm:$0xf]
      %v276 = vld [vmem:[%s1 + $0x88] sm:$0xf]
      %v277 = vld [vmem:[%s1 + $0x8c] sm:$0xf]
      %v278 = vld [vmem:[%s2] sm:$0x1]
      %v280 = vlaneseq
      %v281 = vshrl.u32 %v280, 7
      %v282 = vsub.s32 0, %v281
      %v283 = vrot.slane %v278, %v282
      %v349 = vunpack.c.l.b16 %v178
      %v350 = vunpack.c.h.b16 %v178
      %v351 = vunpack.c.l.b16 %v179
      %v352 = vunpack.c.l.b16 %v180
      %v353 = vunpack.c.h.b16 %v180
      %v354 = vunpack.c.l.b16 %v181
      %v355 = vunpack.c.l.b16 %v182
      %v356 = vunpack.c.h.b16 %v182
      %v357 = vunpack.c.l.b16 %v183
      %v358 = vunpack.c.l.b16 %v184
      %v359 = vunpack.c.h.b16 %v184
      %v360 = vunpack.c.l.b16 %v185
      %v361 = vunpack.c.l.b16 %v186
      %v362 = vunpack.c.h.b16 %v186
      %v363 = vunpack.c.l.b16 %v187
      %v364 = vunpack.c.l.b16 %v188
      %v365 = vunpack.c.h.b16 %v188
      %v366 = vunpack.c.l.b16 %v189
      %v367 = vunpack.c.l.b16 %v190
      %v368 = vunpack.c.h.b16 %v190
      %v369 = vunpack.c.l.b16 %v191
      %v370 = vunpack.c.l.b16 %v192
      %v371 = vunpack.c.h.b16 %v192
      %v372 = vunpack.c.l.b16 %v193
      %v373 = vunpack.c.l.b16 %v194
      %v374 = vunpack.c.h.b16 %v194
      %v375 = vunpack.c.l.b16 %v195
      %v376 = vunpack.c.l.b16 %v196
      %v377 = vunpack.c.h.b16 %v196
      %v378 = vunpack.c.l.b16 %v197
      %v379 = vunpack.c.l.b16 %v198
      %v380 = vunpack.c.h.b16 %v198
      %v381 = vunpack.c.l.b16 %v199
      %v382 = vunpack.c.l.b16 %v200
      %v383 = vunpack.c.h.b16 %v200
      %v384 = vunpack.c.l.b16 %v201
      %v385 = vunpack.c.l.b16 %v202
      %v386 = vunpack.c.h.b16 %v202
      %v387 = vunpack.c.l.b16 %v203
      %v388 = vunpack.c.l.b16 %v204
      %v389 = vunpack.c.h.b16 %v204
      %v390 = vunpack.c.l.b16 %v205
      %v391 = vunpack.c.l.b16 %v206
      %v392 = vunpack.c.h.b16 %v206
      %v393 = vunpack.c.l.b16 %v207
      %v394 = vunpack.c.l.b16 %v208
      %v395 = vunpack.c.h.b16 %v208
      %v396 = vunpack.c.l.b16 %v209
      %v397 = vunpack.c.l.b16 %v210
      %v398 = vunpack.c.h.b16 %v210
      %v399 = vunpack.c.l.b16 %v211
      %v400 = vunpack.c.l.b16 %v212
      %v401 = vunpack.c.h.b16 %v212
      %v402 = vunpack.c.l.b16 %v213
      %v403 = vunpack.c.l.b16 %v214
      %v404 = vunpack.c.h.b16 %v214
      %v405 = vunpack.c.l.b16 %v215
      %v406 = vunpack.c.l.b16 %v216
      %v407 = vunpack.c.h.b16 %v216
      %v408 = vunpack.c.l.b16 %v217
      %v409 = vunpack.c.l.b16 %v218
      %v410 = vunpack.c.h.b16 %v218
      %v411 = vunpack.c.l.b16 %v219
      %v412 = vunpack.c.l.b16 %v220
      %v413 = vunpack.c.h.b16 %v220
      %v414 = vunpack.c.l.b16 %v221
      %v415 = vunpack.c.l.b16 %v222
      %v416 = vunpack.c.h.b16 %v222
      %v417 = vunpack.c.l.b16 %v223
      %v418 = vunpack.c.l.b16 %v224
      %v419 = vunpack.c.h.b16 %v224
      %v420 = vunpack.c.l.b16 %v225
      %v421 = vunpack.c.l.b16 %v226
      %v422 = vunpack.c.h.b16 %v226
      %v423 = vunpack.c.l.b16 %v227
      %v424 = vunpack.c.l.b16 %v228
      %v425 = vunpack.c.h.b16 %v228
      %v426 = vunpack.c.l.b16 %v229
      %v427 = vunpack.c.l.b16 %v230
      %v428 = vunpack.c.h.b16 %v230
      %v429 = vunpack.c.l.b16 %v231
      %v430 = vunpack.c.l.b16 %v232
      %v431 = vunpack.c.h.b16 %v232
      %v432 = vunpack.c.l.b16 %v233
      %v433 = vunpack.c.l.b16 %v234
      %v434 = vunpack.c.h.b16 %v234
      %v435 = vunpack.c.l.b16 %v235
      %v436 = vunpack.c.l.b16 %v236
      %v437 = vunpack.c.h.b16 %v236
      %v438 = vunpack.c.l.b16 %v237
      %v439 = vunpack.c.l.b16 %v238
      %v440 = vunpack.c.h.b16 %v238
      %v441 = vunpack.c.l.b16 %v239
      %v442 = vunpack.c.l.b16 %v240
      %v443 = vunpack.c.h.b16 %v240
      %v444 = vunpack.c.l.b16 %v241
      %v445 = vpack.c.b16 %v352, %v349
      %v446 = vpack.c.b16 %v353, %v350
      %v447 = vpack.c.b16 %v354, %v351
      %v448 = vpack.c.b16 %v358, %v355
      %v449 = vpack.c.b16 %v359, %v356
      %v450 = vpack.c.b16 %v360, %v357
      %v451 = vpack.c.b16 %v364, %v361
      %v452 = vpack.c.b16 %v365, %v362
      %v453 = vpack.c.b16 %v366, %v363
      %v454 = vpack.c.b16 %v370, %v367
      %v455 = vpack.c.b16 %v371, %v368
      %v456 = vpack.c.b16 %v372, %v369
      %v457 = vpack.c.b16 %v376, %v373
      %v458 = vpack.c.b16 %v377, %v374
      %v459 = vpack.c.b16 %v378, %v375
      %v460 = vpack.c.b16 %v382, %v379
      %v461 = vpack.c.b16 %v383, %v380
      %v462 = vpack.c.b16 %v384, %v381
      %v463 = vpack.c.b16 %v388, %v385
      %v464 = vpack.c.b16 %v389, %v386
      %v465 = vpack.c.b16 %v390, %v387
      %v466 = vpack.c.b16 %v394, %v391
      %v467 = vpack.c.b16 %v395, %v392
      %v468 = vpack.c.b16 %v396, %v393
      %v469 = vpack.c.b16 %v400, %v397
      %v470 = vpack.c.b16 %v401, %v398
      %v471 = vpack.c.b16 %v402, %v399
      %v472 = vpack.c.b16 %v406, %v403
      %v473 = vpack.c.b16 %v407, %v404
      %v474 = vpack.c.b16 %v408, %v405
      %v475 = vpack.c.b16 %v412, %v409
      %v476 = vpack.c.b16 %v413, %v410
      %v477 = vpack.c.b16 %v414, %v411
      %v478 = vpack.c.b16 %v418, %v415
      %v479 = vpack.c.b16 %v419, %v416
      %v480 = vpack.c.b16 %v420, %v417
      %v481 = vpack.c.b16 %v424, %v421
      %v482 = vpack.c.b16 %v425, %v422
      %v483 = vpack.c.b16 %v426, %v423
      %v484 = vpack.c.b16 %v430, %v427
      %v485 = vpack.c.b16 %v431, %v428
      %v486 = vpack.c.b16 %v432, %v429
      %v487 = vpack.c.b16 %v436, %v433
      %v488 = vpack.c.b16 %v437, %v434
      %v489 = vpack.c.b16 %v438, %v435
      %v490 = vpack.c.b16 %v442, %v439
      %v491 = vpack.c.b16 %v443, %v440
      %v492 = vpack.c.b16 %v444, %v441
      %v561 = vunpack.c.l.b16 %v242
      %v562 = vunpack.c.l.b16 %v243
      %v563 = vunpack.c.l.b16 %v244
      %v564 = vunpack.c.l.b16 %v245
      %v565 = vunpack.c.l.b16 %v246
      %v566 = vunpack.c.l.b16 %v247
      %v567 = vunpack.c.l.b16 %v248
      %v568 = vunpack.c.l.b16 %v249
      %v569 = vunpack.c.l.b16 %v250
      %v570 = vunpack.c.l.b16 %v251
      %v571 = vunpack.c.l.b16 %v252
      %v572 = vunpack.c.l.b16 %v253
      %v573 = vunpack.c.l.b16 %v254
      %v574 = vunpack.c.l.b16 %v255
      %v575 = vunpack.c.l.b16 %v256
      %v576 = vunpack.c.l.b16 %v257
      %v577 = vunpack.c.l.b16 %v258
      %v578 = vunpack.c.l.b16 %v259
      %v579 = vunpack.c.l.b16 %v260
      %v580 = vunpack.c.l.b16 %v261
      %v581 = vunpack.c.l.b16 %v262
      %v582 = vunpack.c.l.b16 %v263
      %v583 = vunpack.c.l.b16 %v264
      %v584 = vunpack.c.l.b16 %v265
      %v585 = vunpack.c.l.b16 %v266
      %v586 = vunpack.c.l.b16 %v267
      %v587 = vunpack.c.l.b16 %v268
      %v588 = vunpack.c.l.b16 %v269
      %v589 = vunpack.c.l.b16 %v270
      %v590 = vunpack.c.l.b16 %v271
      %v591 = vunpack.c.l.b16 %v272
      %v592 = vunpack.c.l.b16 %v273
      %v593 = vunpack.c.l.b16 %v274
      %v594 = vunpack.c.l.b16 %v275
      %v595 = vunpack.c.l.b16 %v276
      %v596 = vunpack.c.l.b16 %v277
      %v597 = vpack.c.b16 %v562, %v561
      %v598 = vpack.c.b16 %v564, %v563
      %v599 = vpack.c.b16 %v566, %v565
      %v600 = vpack.c.b16 %v568, %v567
      %v601 = vpack.c.b16 %v570, %v569
      %v602 = vpack.c.b16 %v572, %v571
      %v603 = vpack.c.b16 %v574, %v573
      %v604 = vpack.c.b16 %v576, %v575
      %v605 = vpack.c.b16 %v578, %v577
      %v606 = vpack.c.b16 %v580, %v579
      %v607 = vpack.c.b16 %v582, %v581
      %v608 = vpack.c.b16 %v584, %v583
      %v609 = vpack.c.b16 %v586, %v585
      %v610 = vpack.c.b16 %v588, %v587
      %v611 = vpack.c.b16 %v590, %v589
      %v612 = vpack.c.b16 %v592, %v591
      %v613 = vpack.c.b16 %v594, %v593
      %v614 = vpack.c.b16 %v596, %v595
      %vm633 = vcmask 261120
      %v635 = vsel %vm633, %v447, 0
      %v638 = vsel %vm633, %v450, 0
      %v641 = vsel %vm633, %v453, 0
      %v644 = vsel %vm633, %v456, 0
      %v647 = vsel %vm633, %v459, 0
      %v650 = vsel %vm633, %v462, 0
      %v653 = vsel %vm633, %v465, 0
      %v656 = vsel %vm633, %v468, 0
      %v659 = vsel %vm633, %v471, 0
      %v662 = vsel %vm633, %v474, 0
      %v665 = vsel %vm633, %v477, 0
      %v668 = vsel %vm633, %v480, 0
      %v671 = vsel %vm633, %v483, 0
      %v674 = vsel %vm633, %v486, 0
      %v677 = vsel %vm633, %v489, 0
      %v680 = vsel %vm633, %v492, 0
      %682 = vmatprep.subr.bf16.mxu0 0
      %683 = vmatpush1.bf16.msra.mxu0 %v604
      %684 = vmatprep.subr.bf16.mxu0 0
      %685 = vmatpush1.bf16.msra.mxu0 %v603
      %686 = vmatprep.subr.bf16.mxu0 0
      %687 = vmatpush1.bf16.msra.mxu0 %v602
      %688 = vmatprep.subr.bf16.mxu0 0
      %689 = vmatpush1.bf16.msra.mxu0 %v601
      %690 = vmatprep.subr.bf16.mxu0 0
      %691 = vmatpush1.bf16.msra.mxu0 %v600
      %692 = vmatprep.subr.bf16.mxu0 0
      %693 = vmatpush1.bf16.msra.mxu0 %v599
      %694 = vmatprep.subr.bf16.mxu0 0
      %695 = vmatpush1.bf16.msra.mxu0 %v598
      %696 = vmatprep.subr.bf16.mxu0 0
      %697 = vmatpush1.bf16.msra.mxu0 %v597
      %698 = vmatprep.subr.bf16.mxu0 0
      %699 = vmatpush2.bf16.msra.mxu0 %v612
      %700 = vmatprep.subr.bf16.mxu0 0
      %701 = vmatpush2.bf16.msra.mxu0 %v611
      %702 = vmatprep.subr.bf16.mxu0 0
      %703 = vmatpush2.bf16.msra.mxu0 %v610
      %704 = vmatprep.subr.bf16.mxu0 0
      %705 = vmatpush2.bf16.msra.mxu0 %v609
      %706 = vmatprep.subr.bf16.mxu0 0
      %707 = vmatpush2.bf16.msra.mxu0 %v608
      %708 = vmatprep.subr.bf16.mxu0 0
      %709 = vmatpush2.bf16.msra.mxu0 %v607
      %710 = vmatprep.subr.bf16.mxu0 0
      %711 = vmatpush2.bf16.msra.mxu0 %v606
      %712 = vmatprep.subr.bf16.mxu0 0
      %713 = vmatpush2.bf16.msra.mxu0 %v605
      %714 = vmatprep.mubr.bf16.mxu0 %v446
      %715 = vmatmul.mubr.bf16.gmra.mxu0 %v445
      %v716 = vpop.f32.mrf.mxu0
      %v717 = vadd.f32 %v283, %v716
      %v718 = vpop.f32.mrf.mxu0
      %v719 = vpop.f32.mrf.mxu0
      %v720 = vadd.f32 %v283, %v719
      %v721 = vpop.f32.mrf.mxu0
      %722 = vmatprep.mubr.bf16.mxu0 %v449
      %723 = vmatmul.mubr.bf16.gmra.mxu0 %v448
      %v724 = vpop.f32.mrf.mxu0
      %v725 = vadd.f32 %v283, %v724
      %v726 = vpop.f32.mrf.mxu0
      %v727 = vpop.f32.mrf.mxu0
      %v728 = vadd.f32 %v283, %v727
      %v729 = vpop.f32.mrf.mxu0
      %730 = vmatprep.mubr.bf16.mxu0 %v452
      %731 = vmatmul.mubr.bf16.gmra.mxu0 %v451
      %v732 = vpop.f32.mrf.mxu0
      %v733 = vadd.f32 %v283, %v732
      %v734 = vpop.f32.mrf.mxu0
      %v735 = vpop.f32.mrf.mxu0
      %v736 = vadd.f32 %v283, %v735
      %v737 = vpop.f32.mrf.mxu0
      %738 = vmatprep.mubr.bf16.mxu0 %v455
      %739 = vmatmul.mubr.bf16.gmra.mxu0 %v454
      %v740 = vpop.f32.mrf.mxu0
      %v741 = vadd.f32 %v283, %v740
      %v742 = vpop.f32.mrf.mxu0
      %v743 = vpop.f32.mrf.mxu0
      %v744 = vadd.f32 %v283, %v743
      %v745 = vpop.f32.mrf.mxu0
      %746 = vmatprep.mubr.bf16.mxu0 %v458
      %747 = vmatmul.mubr.bf16.gmra.mxu0 %v457
      %v748 = vpop.f32.mrf.mxu0
      %v749 = vadd.f32 %v283, %v748
      %v750 = vpop.f32.mrf.mxu0
      %v751 = vpop.f32.mrf.mxu0
      %v752 = vadd.f32 %v283, %v751
      %v753 = vpop.f32.mrf.mxu0
      %754 = vmatprep.mubr.bf16.mxu0 %v461
      %755 = vmatmul.mubr.bf16.gmra.mxu0 %v460
      %v756 = vpop.f32.mrf.mxu0
      %v757 = vadd.f32 %v283, %v756
      %v758 = vpop.f32.mrf.mxu0
      %v759 = vpop.f32.mrf.mxu0
      %v760 = vadd.f32 %v283, %v759
      %v761 = vpop.f32.mrf.mxu0
      %762 = vmatprep.mubr.bf16.mxu0 %v464
      %763 = vmatmul.mubr.bf16.gmra.mxu0 %v463
      %v764 = vpop.f32.mrf.mxu0
      %v765 = vadd.f32 %v283, %v764
      %v766 = vpop.f32.mrf.mxu0
      %v767 = vpop.f32.mrf.mxu0
      %v768 = vadd.f32 %v283, %v767
      %v769 = vpop.f32.mrf.mxu0
      %770 = vmatprep.mubr.bf16.mxu0 %v467
      %771 = vmatmul.mubr.bf16.gmra.mxu0 %v466
      %v772 = vpop.f32.mrf.mxu0
      %v773 = vadd.f32 %v283, %v772
      %v774 = vpop.f32.mrf.mxu0
      %v775 = vpop.f32.mrf.mxu0
      %v776 = vadd.f32 %v283, %v775
      %v777 = vpop.f32.mrf.mxu0
      %778 = vmatprep.mubr.bf16.mxu0 %v470
      %779 = vmatmul.mubr.bf16.gmra.mxu0 %v469
      %v780 = vpop.f32.mrf.mxu0
      %v781 = vadd.f32 %v283, %v780
      %v782 = vpop.f32.mrf.mxu0
      %v783 = vpop.f32.mrf.mxu0
      %v784 = vadd.f32 %v283, %v783
      %v785 = vpop.f32.mrf.mxu0
      %786 = vmatprep.mubr.bf16.mxu0 %v473
      %787 = vmatmul.mubr.bf16.gmra.mxu0 %v472
      %v788 = vpop.f32.mrf.mxu0
      %v789 = vadd.f32 %v283, %v788
      %v790 = vpop.f32.mrf.mxu0
      %v791 = vpop.f32.mrf.mxu0
      %v792 = vadd.f32 %v283, %v791
      %v793 = vpop.f32.mrf.mxu0
      %794 = vmatprep.mubr.bf16.mxu0 %v476
      %795 = vmatmul.mubr.bf16.gmra.mxu0 %v475
      %v796 = vpop.f32.mrf.mxu0
      %v797 = vadd.f32 %v283, %v796
      %v798 = vpop.f32.mrf.mxu0
      %v799 = vpop.f32.mrf.mxu0
      %v800 = vadd.f32 %v283, %v799
      %v801 = vpop.f32.mrf.mxu0
      %802 = vmatprep.mubr.bf16.mxu0 %v479
      %803 = vmatmul.mubr.bf16.gmra.mxu0 %v478
      %v804 = vpop.f32.mrf.mxu0
      %v805 = vadd.f32 %v283, %v804
      %v806 = vpop.f32.mrf.mxu0
      %v807 = vpop.f32.mrf.mxu0
      %v808 = vadd.f32 %v283, %v807
      %v809 = vpop.f32.mrf.mxu0
      %810 = vmatprep.mubr.bf16.mxu0 %v482
      %811 = vmatmul.mubr.bf16.gmra.mxu0 %v481
      %v812 = vpop.f32.mrf.mxu0
      %v813 = vadd.f32 %v283, %v812
      %v814 = vpop.f32.mrf.mxu0
      %v815 = vpop.f32.mrf.mxu0
      %v816 = vadd.f32 %v283, %v815
      %v817 = vpop.f32.mrf.mxu0
      %818 = vmatprep.mubr.bf16.mxu0 %v485
      %819 = vmatmul.mubr.bf16.gmra.mxu0 %v484
      %v820 = vpop.f32.mrf.mxu0
      %v821 = vadd.f32 %v283, %v820
      %v822 = vpop.f32.mrf.mxu0
      %v823 = vpop.f32.mrf.mxu0
      %v824 = vadd.f32 %v283, %v823
      %v825 = vpop.f32.mrf.mxu0
      %826 = vmatprep.mubr.bf16.mxu0 %v488
      %827 = vmatmul.mubr.bf16.gmra.mxu0 %v487
      %v828 = vpop.f32.mrf.mxu0
      %v829 = vadd.f32 %v283, %v828
      %v830 = vpop.f32.mrf.mxu0
      %v831 = vpop.f32.mrf.mxu0
      %v832 = vadd.f32 %v283, %v831
      %v833 = vpop.f32.mrf.mxu0
      %834 = vmatprep.mubr.bf16.mxu0 %v491
      %835 = vmatmul.mubr.bf16.gmra.mxu0 %v490
      %v836 = vpop.f32.mrf.mxu0
      %v837 = vadd.f32 %v283, %v836
      %v838 = vpop.f32.mrf.mxu0
      %v839 = vpop.f32.mrf.mxu0
      %v840 = vadd.f32 %v283, %v839
      %v841 = vpop.f32.mrf.mxu0
      %842 = vdwg.mxu0
      %843 = vmatprep.subr.bf16.mxu0 0
      %844 = vmatpush1.bf16.msra.mxu0 0
      %845 = vmatprep.subr.bf16.mxu0 0
      %846 = vmatpush1.bf16.msra.mxu0 0
      %847 = vmatprep.subr.bf16.mxu0 0
      %848 = vmatpush1.bf16.msra.mxu0 0
      %849 = vmatprep.subr.bf16.mxu0 0
      %850 = vmatpush1.bf16.msra.mxu0 0
      %851 = vmatprep.subr.bf16.mxu0 0
      %852 = vmatpush1.bf16.msra.mxu0 0
      %853 = vmatprep.subr.bf16.mxu0 0
      %854 = vmatpush1.bf16.msra.mxu0 0
      %855 = vmatprep.subr.bf16.mxu0 0
      %856 = vmatpush1.bf16.msra.mxu0 %v614
      %857 = vmatprep.subr.bf16.mxu0 0
      %858 = vmatpush1.bf16.msra.mxu0 %v613
      %859 = vmatprep.subr.bf16.mxu0 0
      %860 = vmatpush2.bf16.msra.mxu0 0
      %861 = vmatprep.subr.bf16.mxu0 0
      %862 = vmatpush2.bf16.msra.mxu0 0
      %863 = vmatprep.subr.bf16.mxu0 0
      %864 = vmatpush2.bf16.msra.mxu0 0
      %865 = vmatprep.subr.bf16.mxu0 0
      %866 = vmatpush2.bf16.msra.mxu0 0
      %867 = vmatprep.subr.bf16.mxu0 0
      %868 = vmatpush2.bf16.msra.mxu0 0
      %869 = vmatprep.subr.bf16.mxu0 0
      %870 = vmatpush2.bf16.msra.mxu0 0
      %871 = vmatprep.subr.bf16.mxu0 0
      %872 = vmatpush2.bf16.msra.mxu0 0
      %873 = vmatprep.subr.bf16.mxu0 0
      %874 = vmatpush2.bf16.msra.mxu0 0
      %875 = vmatprep.mubr.bf16.mxu0 0
      %876 = vmatmul.mubr.bf16.gmra.mxu0 %v635
      %v877 = vpop.f32.mrf.mxu0
      %v878 = vadd.f32 %v717, %v877
      %v879 = vpop.f32.mrf.mxu0
      %v880 = vpop.f32.mrf.mxu0
      %v881 = vadd.f32 %v720, %v880
      %v882 = vpop.f32.mrf.mxu0
      %883 = vmatprep.mubr.bf16.mxu0 0
      %884 = vmatmul.mubr.bf16.gmra.mxu0 %v638
      %v885 = vpop.f32.mrf.mxu0
      %v886 = vadd.f32 %v725, %v885
      %v887 = vpop.f32.mrf.mxu0
      %v888 = vpop.f32.mrf.mxu0
      %v889 = vadd.f32 %v728, %v888
      %v890 = vpop.f32.mrf.mxu0
      %891 = vmatprep.mubr.bf16.mxu0 0
      %892 = vmatmul.mubr.bf16.gmra.mxu0 %v641
      %v893 = vpop.f32.mrf.mxu0
      %v894 = vadd.f32 %v733, %v893
      %v895 = vpop.f32.mrf.mxu0
      %v896 = vpop.f32.mrf.mxu0
      %v897 = vadd.f32 %v736, %v896
      %v898 = vpop.f32.mrf.mxu0
      %899 = vmatprep.mubr.bf16.mxu0 0
      %900 = vmatmul.mubr.bf16.gmra.mxu0 %v644
      %v901 = vpop.f32.mrf.mxu0
      %v902 = vadd.f32 %v741, %v901
      %v903 = vpop.f32.mrf.mxu0
      %v904 = vpop.f32.mrf.mxu0
      %v905 = vadd.f32 %v744, %v904
      %v906 = vpop.f32.mrf.mxu0
      %907 = vmatprep.mubr.bf16.mxu0 0
      %908 = vmatmul.mubr.bf16.gmra.mxu0 %v647
      %v909 = vpop.f32.mrf.mxu0
      %v910 = vadd.f32 %v749, %v909
      %v911 = vpop.f32.mrf.mxu0
      %v912 = vpop.f32.mrf.mxu0
      %v913 = vadd.f32 %v752, %v912
      %v914 = vpop.f32.mrf.mxu0
      %915 = vmatprep.mubr.bf16.mxu0 0
      %916 = vmatmul.mubr.bf16.gmra.mxu0 %v650
      %v917 = vpop.f32.mrf.mxu0
      %v918 = vadd.f32 %v757, %v917
      %v919 = vpop.f32.mrf.mxu0
      %v920 = vpop.f32.mrf.mxu0
      %v921 = vadd.f32 %v760, %v920
      %v922 = vpop.f32.mrf.mxu0
      %923 = vmatprep.mubr.bf16.mxu0 0
      %924 = vmatmul.mubr.bf16.gmra.mxu0 %v653
      %v925 = vpop.f32.mrf.mxu0
      %v926 = vadd.f32 %v765, %v925
      %v927 = vpop.f32.mrf.mxu0
      %v928 = vpop.f32.mrf.mxu0
      %v929 = vadd.f32 %v768, %v928
      %v930 = vpop.f32.mrf.mxu0
      %931 = vmatprep.mubr.bf16.mxu0 0
      %932 = vmatmul.mubr.bf16.gmra.mxu0 %v656
      %v933 = vpop.f32.mrf.mxu0
      %v934 = vadd.f32 %v773, %v933
      %v935 = vpop.f32.mrf.mxu0
      %v936 = vpop.f32.mrf.mxu0
      %v937 = vadd.f32 %v776, %v936
      %v938 = vpop.f32.mrf.mxu0
      %939 = vmatprep.mubr.bf16.mxu0 0
      %940 = vmatmul.mubr.bf16.gmra.mxu0 %v659
      %v941 = vpop.f32.mrf.mxu0
      %v942 = vadd.f32 %v781, %v941
      %v943 = vpop.f32.mrf.mxu0
      %v944 = vpop.f32.mrf.mxu0
      %v945 = vadd.f32 %v784, %v944
      %v946 = vpop.f32.mrf.mxu0
      %947 = vmatprep.mubr.bf16.mxu0 0
      %948 = vmatmul.mubr.bf16.gmra.mxu0 %v662
      %v949 = vpop.f32.mrf.mxu0
      %v950 = vadd.f32 %v789, %v949
      %v951 = vpop.f32.mrf.mxu0
      %v952 = vpop.f32.mrf.mxu0
      %v953 = vadd.f32 %v792, %v952
      %v954 = vpop.f32.mrf.mxu0
      %955 = vmatprep.mubr.bf16.mxu0 0
      %956 = vmatmul.mubr.bf16.gmra.mxu0 %v665
      %v957 = vpop.f32.mrf.mxu0
      %v958 = vadd.f32 %v797, %v957
      %v959 = vpop.f32.mrf.mxu0
      %v960 = vpop.f32.mrf.mxu0
      %v961 = vadd.f32 %v800, %v960
      %v962 = vpop.f32.mrf.mxu0
      %963 = vmatprep.mubr.bf16.mxu0 0
      %964 = vmatmul.mubr.bf16.gmra.mxu0 %v668
      %v965 = vpop.f32.mrf.mxu0
      %v966 = vadd.f32 %v805, %v965
      %v967 = vpop.f32.mrf.mxu0
      %v968 = vpop.f32.mrf.mxu0
      %v969 = vadd.f32 %v808, %v968
      %v970 = vpop.f32.mrf.mxu0
      %971 = vmatprep.mubr.bf16.mxu0 0
      %972 = vmatmul.mubr.bf16.gmra.mxu0 %v671
      %v973 = vpop.f32.mrf.mxu0
      %v974 = vadd.f32 %v813, %v973
      %v975 = vpop.f32.mrf.mxu0
      %v976 = vpop.f32.mrf.mxu0
      %v977 = vadd.f32 %v816, %v976
      %v978 = vpop.f32.mrf.mxu0
      %979 = vmatprep.mubr.bf16.mxu0 0
      %980 = vmatmul.mubr.bf16.gmra.mxu0 %v674
      %v981 = vpop.f32.mrf.mxu0
      %v982 = vadd.f32 %v821, %v981
      %v983 = vpop.f32.mrf.mxu0
      %v984 = vpop.f32.mrf.mxu0
      %v985 = vadd.f32 %v824, %v984
      %v986 = vpop.f32.mrf.mxu0
      %987 = vmatprep.mubr.bf16.mxu0 0
      %988 = vmatmul.mubr.bf16.gmra.mxu0 %v677
      %v989 = vpop.f32.mrf.mxu0
      %v990 = vadd.f32 %v829, %v989
      %v991 = vpop.f32.mrf.mxu0
      %v992 = vpop.f32.mrf.mxu0
      %v993 = vadd.f32 %v832, %v992
      %v994 = vpop.f32.mrf.mxu0
      %995 = vmatprep.mubr.bf16.mxu0 0
      %996 = vmatmul.mubr.bf16.gmra.mxu0 %v680
      %v997 = vpop.f32.mrf.mxu0
      %v998 = vadd.f32 %v837, %v997
      %v999 = vpop.f32.mrf.mxu0
      %v1000 = vpop.f32.mrf.mxu0
      %v1001 = vadd.f32 %v840, %v1000
      %v1002 = vpop.f32.mrf.mxu0
      %1003 = vdwg.mxu0
      %v1004 = vxor.u32 %v878, 2147483648
      %v1005 = vxor.u32 %v881, 2147483648
      %v1006 = vxor.u32 %v886, 2147483648
      %v1007 = vxor.u32 %v889, 2147483648
      %v1008 = vxor.u32 %v894, 2147483648
      %v1009 = vxor.u32 %v897, 2147483648
      %v1010 = vxor.u32 %v902, 2147483648
      %v1011 = vxor.u32 %v905, 2147483648
      %v1012 = vxor.u32 %v910, 2147483648
      %v1013 = vxor.u32 %v913, 2147483648
      %v1014 = vxor.u32 %v918, 2147483648
      %v1015 = vxor.u32 %v921, 2147483648
      %v1016 = vxor.u32 %v926, 2147483648
      %v1017 = vxor.u32 %v929, 2147483648
      %v1018 = vxor.u32 %v934, 2147483648
      %v1019 = vxor.u32 %v937, 2147483648
      %v1020 = vxor.u32 %v942, 2147483648
      %v1021 = vxor.u32 %v945, 2147483648
      %v1022 = vxor.u32 %v950, 2147483648
      %v1023 = vxor.u32 %v953, 2147483648
      %v1024 = vxor.u32 %v958, 2147483648
      %v1025 = vxor.u32 %v961, 2147483648
      %v1026 = vxor.u32 %v966, 2147483648
      %v1027 = vxor.u32 %v969, 2147483648
      %v1028 = vxor.u32 %v974, 2147483648
      %v1029 = vxor.u32 %v977, 2147483648
      %v1030 = vxor.u32 %v982, 2147483648
      %v1031 = vxor.u32 %v985, 2147483648
      %v1032 = vxor.u32 %v990, 2147483648
      %v1033 = vxor.u32 %v993, 2147483648
      %v1034 = vxor.u32 %v998, 2147483648
      %v1035 = vxor.u32 %v1001, 2147483648
      %v1036 = vmul.f32 %v1004, 1.442695
      %v1037 = vpow.pop %v1036
      %v1038 = vmul.f32 %v1005, 1.442695
      %v1039 = vpow.pop %v1038
      %v1040 = vmul.f32 %v1006, 1.442695
      %v1041 = vpow.pop %v1040
      %v1042 = vmul.f32 %v1007, 1.442695
      %v1043 = vpow.pop %v1042
      %v1044 = vmul.f32 %v1008, 1.442695
      %v1045 = vpow.pop %v1044
      %v1046 = vmul.f32 %v1009, 1.442695
      %v1047 = vpow.pop %v1046
      %v1048 = vmul.f32 %v1010, 1.442695
      %v1049 = vpow.pop %v1048
      %v1050 = vmul.f32 %v1011, 1.442695
      %v1051 = vpow.pop %v1050
      %v1052 = vmul.f32 %v1012, 1.442695
      %v1053 = vpow.pop %v1052
      %v1054 = vmul.f32 %v1013, 1.442695
      %v1055 = vpow.pop %v1054
      %v1056 = vmul.f32 %v1014, 1.442695
      %v1057 = vpow.pop %v1056
      %v1058 = vmul.f32 %v1015, 1.442695
      %v1059 = vpow.pop %v1058
      %v1060 = vmul.f32 %v1016, 1.442695
      %v1061 = vpow.pop %v1060
      %v1062 = vmul.f32 %v1017, 1.442695
      %v1063 = vpow.pop %v1062
      %v1064 = vmul.f32 %v1018, 1.442695
      %v1065 = vpow.pop %v1064
      %v1066 = vmul.f32 %v1019, 1.442695
      %v1067 = vpow.pop %v1066
      %v1068 = vmul.f32 %v1020, 1.442695
      %v1069 = vpow.pop %v1068
      %v1070 = vmul.f32 %v1021, 1.442695
      %v1071 = vpow.pop %v1070
      %v1072 = vmul.f32 %v1022, 1.442695
      %v1073 = vpow.pop %v1072
      %v1074 = vmul.f32 %v1023, 1.442695
      %v1075 = vpow.pop %v1074
      %v1076 = vmul.f32 %v1024, 1.442695
      %v1077 = vpow.pop %v1076
      %v1078 = vmul.f32 %v1025, 1.442695
      %v1079 = vpow.pop %v1078
      %v1080 = vmul.f32 %v1026, 1.442695
      %v1081 = vpow.pop %v1080
      %v1082 = vmul.f32 %v1027, 1.442695
      %v1083 = vpow.pop %v1082
      %v1084 = vmul.f32 %v1028, 1.442695
      %v1085 = vpow.pop %v1084
      %v1086 = vmul.f32 %v1029, 1.442695
      %v1087 = vpow.pop %v1086
      %v1088 = vmul.f32 %v1030, 1.442695
      %v1089 = vpow.pop %v1088
      %v1090 = vmul.f32 %v1031, 1.442695
      %v1091 = vpow.pop %v1090
      %v1092 = vmul.f32 %v1032, 1.442695
      %v1093 = vpow.pop %v1092
      %v1094 = vmul.f32 %v1033, 1.442695
      %v1095 = vpow.pop %v1094
      %v1096 = vmul.f32 %v1034, 1.442695
      %v1097 = vpow.pop %v1096
      %v1098 = vmul.f32 %v1035, 1.442695
      %v1099 = vpow.pop %v1098
      %v1100 = vadd.f32 %v1037, 1.0
      %v1101 = vadd.f32 %v1039, 1.0
      %v1102 = vadd.f32 %v1041, 1.0
      %v1103 = vadd.f32 %v1043, 1.0
      %v1104 = vadd.f32 %v1045, 1.0
      %v1105 = vadd.f32 %v1047, 1.0
      %v1106 = vadd.f32 %v1049, 1.0
      %v1107 = vadd.f32 %v1051, 1.0
      %v1108 = vadd.f32 %v1053, 1.0
      %v1109 = vadd.f32 %v1055, 1.0
      %v1110 = vadd.f32 %v1057, 1.0
      %v1111 = vadd.f32 %v1059, 1.0
      %v1112 = vadd.f32 %v1061, 1.0
      %v1113 = vadd.f32 %v1063, 1.0
      %v1114 = vadd.f32 %v1065, 1.0
      %v1115 = vadd.f32 %v1067, 1.0
      %v1116 = vadd.f32 %v1069, 1.0
      %v1117 = vadd.f32 %v1071, 1.0
      %v1118 = vadd.f32 %v1073, 1.0
      %v1119 = vadd.f32 %v1075, 1.0
      %v1120 = vadd.f32 %v1077, 1.0
      %v1121 = vadd.f32 %v1079, 1.0
      %v1122 = vadd.f32 %v1081, 1.0
      %v1123 = vadd.f32 %v1083, 1.0
      %v1124 = vadd.f32 %v1085, 1.0
      %v1125 = vadd.f32 %v1087, 1.0
      %v1126 = vadd.f32 %v1089, 1.0
      %v1127 = vadd.f32 %v1091, 1.0
      %v1128 = vadd.f32 %v1093, 1.0
      %v1129 = vadd.f32 %v1095, 1.0
      %v1130 = vadd.f32 %v1097, 1.0
      %v1131 = vadd.f32 %v1099, 1.0
      %v1132 = vrcp.pop %v1100
      %v1133 = vmul.f32 1.0, %v1132
      %v1134 = vrcp.pop %v1101
      %v1135 = vmul.f32 1.0, %v1134
      %v1136 = vrcp.pop %v1102
      %v1137 = vmul.f32 1.0, %v1136
      %v1138 = vrcp.pop %v1103
      %v1139 = vmul.f32 1.0, %v1138
      %v1140 = vrcp.pop %v1104
      %v1141 = vmul.f32 1.0, %v1140
      %v1142 = vrcp.pop %v1105
      %v1143 = vmul.f32 1.0, %v1142
      %v1144 = vrcp.pop %v1106
      %v1145 = vmul.f32 1.0, %v1144
      %v1146 = vrcp.pop %v1107
      %v1147 = vmul.f32 1.0, %v1146
      %v1148 = vrcp.pop %v1108
      %v1149 = vmul.f32 1.0, %v1148
      %v1150 = vrcp.pop %v1109
      %v1151 = vmul.f32 1.0, %v1150
      %v1152 = vrcp.pop %v1110
      %v1153 = vmul.f32 1.0, %v1152
      %v1154 = vrcp.pop %v1111
      %v1155 = vmul.f32 1.0, %v1154
      %v1156 = vrcp.pop %v1112
      %v1157 = vmul.f32 1.0, %v1156
      %v1158 = vrcp.pop %v1113
      %v1159 = vmul.f32 1.0, %v1158
      %v1160 = vrcp.pop %v1114
      %v1161 = vmul.f32 1.0, %v1160
      %v1162 = vrcp.pop %v1115
      %v1163 = vmul.f32 1.0, %v1162
      %v1164 = vrcp.pop %v1116
      %v1165 = vmul.f32 1.0, %v1164
      %v1166 = vrcp.pop %v1117
      %v1167 = vmul.f32 1.0, %v1166
      %v1168 = vrcp.pop %v1118
      %v1169 = vmul.f32 1.0, %v1168
      %v1170 = vrcp.pop %v1119
      %v1171 = vmul.f32 1.0, %v1170
      %v1172 = vrcp.pop %v1120
      %v1173 = vmul.f32 1.0, %v1172
      %v1174 = vrcp.pop %v1121
      %v1175 = vmul.f32 1.0, %v1174
      %v1176 = vrcp.pop %v1122
      %v1177 = vmul.f32 1.0, %v1176
      %v1178 = vrcp.pop %v1123
      %v1179 = vmul.f32 1.0, %v1178
      %v1180 = vrcp.pop %v1124
      %v1181 = vmul.f32 1.0, %v1180
      %v1182 = vrcp.pop %v1125
      %v1183 = vmul.f32 1.0, %v1182
      %v1184 = vrcp.pop %v1126
      %v1185 = vmul.f32 1.0, %v1184
      %v1186 = vrcp.pop %v1127
      %v1187 = vmul.f32 1.0, %v1186
      %v1188 = vrcp.pop %v1128
      %v1189 = vmul.f32 1.0, %v1188
      %v1190 = vrcp.pop %v1129
      %v1191 = vmul.f32 1.0, %v1190
      %v1192 = vrcp.pop %v1130
      %v1193 = vmul.f32 1.0, %v1192
      %v1194 = vrcp.pop %v1131
      %v1195 = vmul.f32 1.0, %v1194
      %1228 = vrot.lane.b32.xlu0 %v1133, 96
      %v1229 = vpop.permute.xlu0 %1228
      %1230 = vrot.lane.b32.xlu0 %v1135, 96
      %v1231 = vpop.permute.xlu0 %1230
      %1232 = vrot.lane.b32.xlu0 %v1137, 96
      %v1233 = vpop.permute.xlu0 %1232
      %1234 = vrot.lane.b32.xlu0 %v1139, 96
      %v1235 = vpop.permute.xlu0 %1234
      %1236 = vrot.lane.b32.xlu0 %v1141, 96
      %v1237 = vpop.permute.xlu0 %1236
      %1238 = vrot.lane.b32.xlu0 %v1143, 96
      %v1239 = vpop.permute.xlu0 %1238
      %1240 = vrot.lane.b32.xlu0 %v1145, 96
      %v1241 = vpop.permute.xlu0 %1240
      %1242 = vrot.lane.b32.xlu0 %v1147, 96
      %v1243 = vpop.permute.xlu0 %1242
      %1244 = vrot.lane.b32.xlu0 %v1149, 96
      %v1245 = vpop.permute.xlu0 %1244
      %1246 = vrot.lane.b32.xlu0 %v1151, 96
      %v1247 = vpop.permute.xlu0 %1246
      %1248 = vrot.lane.b32.xlu0 %v1153, 96
      %v1249 = vpop.permute.xlu0 %1248
      %1250 = vrot.lane.b32.xlu0 %v1155, 96
      %v1251 = vpop.permute.xlu0 %1250
      %1252 = vrot.lane.b32.xlu0 %v1157, 96
      %v1253 = vpop.permute.xlu0 %1252
      %1254 = vrot.lane.b32.xlu0 %v1159, 96
      %v1255 = vpop.permute.xlu0 %1254
      %1256 = vrot.lane.b32.xlu0 %v1161, 96
      %v1257 = vpop.permute.xlu0 %1256
      %1258 = vrot.lane.b32.xlu0 %v1163, 96
      %v1259 = vpop.permute.xlu0 %1258
      %1260 = vrot.lane.b32.xlu0 %v1165, 96
      %v1261 = vpop.permute.xlu0 %1260
      %1262 = vrot.lane.b32.xlu0 %v1167, 96
      %v1263 = vpop.permute.xlu0 %1262
      %1264 = vrot.lane.b32.xlu0 %v1169, 96
      %v1265 = vpop.permute.xlu0 %1264
      %1266 = vrot.lane.b32.xlu0 %v1171, 96
      %v1267 = vpop.permute.xlu0 %1266
      %1268 = vrot.lane.b32.xlu0 %v1173, 96
      %v1269 = vpop.permute.xlu0 %1268
      %1270 = vrot.lane.b32.xlu0 %v1175, 96
      %v1271 = vpop.permute.xlu0 %1270
      %1272 = vrot.lane.b32.xlu0 %v1177, 96
      %v1273 = vpop.permute.xlu0 %1272
      %1274 = vrot.lane.b32.xlu0 %v1179, 96
      %v1275 = vpop.permute.xlu0 %1274
      %1276 = vrot.lane.b32.xlu0 %v1181, 96
      %v1277 = vpop.permute.xlu0 %1276
      %1278 = vrot.lane.b32.xlu0 %v1183, 96
      %v1279 = vpop.permute.xlu0 %1278
      %1280 = vrot.lane.b32.xlu0 %v1185, 96
      %v1281 = vpop.permute.xlu0 %1280
      %1282 = vrot.lane.b32.xlu0 %v1187, 96
      %v1283 = vpop.permute.xlu0 %1282
      %1284 = vrot.lane.b32.xlu0 %v1189, 96
      %v1285 = vpop.permute.xlu0 %1284
      %1286 = vrot.lane.b32.xlu0 %v1191, 96
      %v1287 = vpop.permute.xlu0 %1286
      %1288 = vrot.lane.b32.xlu0 %v1193, 96
      %v1289 = vpop.permute.xlu0 %1288
      %1290 = vrot.lane.b32.xlu0 %v1195, 96
      %v1291 = vpop.permute.xlu0 %1290
      %v1324 = vmul.f32 %v878, %v1229
      %v1325 = vmul.f32 %v881, %v1231
      %v1326 = vmul.f32 %v886, %v1233
      %v1327 = vmul.f32 %v889, %v1235
      %v1328 = vmul.f32 %v894, %v1237
      %v1329 = vmul.f32 %v897, %v1239
      %v1330 = vmul.f32 %v902, %v1241
      %v1331 = vmul.f32 %v905, %v1243
      %v1332 = vmul.f32 %v910, %v1245
      %v1333 = vmul.f32 %v913, %v1247
      %v1334 = vmul.f32 %v918, %v1249
      %v1335 = vmul.f32 %v921, %v1251
      %v1336 = vmul.f32 %v926, %v1253
      %v1337 = vmul.f32 %v929, %v1255
      %v1338 = vmul.f32 %v934, %v1257
      %v1339 = vmul.f32 %v937, %v1259
      %v1340 = vmul.f32 %v942, %v1261
      %v1341 = vmul.f32 %v945, %v1263
      %v1342 = vmul.f32 %v950, %v1265
      %v1343 = vmul.f32 %v953, %v1267
      %v1344 = vmul.f32 %v958, %v1269
      %v1345 = vmul.f32 %v961, %v1271
      %v1346 = vmul.f32 %v966, %v1273
      %v1347 = vmul.f32 %v969, %v1275
      %v1348 = vmul.f32 %v974, %v1277
      %v1349 = vmul.f32 %v977, %v1279
      %v1350 = vmul.f32 %v982, %v1281
      %v1351 = vmul.f32 %v985, %v1283
      %v1352 = vmul.f32 %v990, %v1285
      %v1353 = vmul.f32 %v993, %v1287
      %v1354 = vmul.f32 %v998, %v1289
      %v1355 = vmul.f32 %v1001, %v1291
      %v1356 = vpack.c.bf16 %v1325, %v1324
      %v1357 = vpack.c.bf16 %v1327, %v1326
      %v1358 = vpack.c.bf16 %v1329, %v1328
      %v1359 = vpack.c.bf16 %v1331, %v1330
      %v1360 = vpack.c.bf16 %v1333, %v1332
      %v1361 = vpack.c.bf16 %v1335, %v1334
      %v1362 = vpack.c.bf16 %v1337, %v1336
      %v1363 = vpack.c.bf16 %v1339, %v1338
      %v1364 = vpack.c.bf16 %v1341, %v1340
      %v1365 = vpack.c.bf16 %v1343, %v1342
      %v1366 = vpack.c.bf16 %v1345, %v1344
      %v1367 = vpack.c.bf16 %v1347, %v1346
      %v1368 = vpack.c.bf16 %v1349, %v1348
      %v1369 = vpack.c.bf16 %v1351, %v1350
      %v1370 = vpack.c.bf16 %v1353, %v1352
      %v1371 = vpack.c.bf16 %v1355, %v1354
      %v1388 = vunpack.c.l.b16 %v1356
      %v1389 = vunpack.c.h.b16 %v1356
      %v1390 = vunpack.c.l.b16 %v1357
      %v1391 = vunpack.c.h.b16 %v1357
      %v1392 = vunpack.c.l.b16 %v1358
      %v1393 = vunpack.c.h.b16 %v1358
      %v1394 = vunpack.c.l.b16 %v1359
      %v1395 = vunpack.c.h.b16 %v1359
      %v1396 = vunpack.c.l.b16 %v1360
      %v1397 = vunpack.c.h.b16 %v1360
      %v1398 = vunpack.c.l.b16 %v1361
      %v1399 = vunpack.c.h.b16 %v1361
      %v1400 = vunpack.c.l.b16 %v1362
      %v1401 = vunpack.c.h.b16 %v1362
      %v1402 = vunpack.c.l.b16 %v1363
      %v1403 = vunpack.c.h.b16 %v1363
      %v1404 = vunpack.c.l.b16 %v1364
      %v1405 = vunpack.c.h.b16 %v1364
      %v1406 = vunpack.c.l.b16 %v1365
      %v1407 = vunpack.c.h.b16 %v1365
      %v1408 = vunpack.c.l.b16 %v1366
      %v1409 = vunpack.c.h.b16 %v1366
      %v1410 = vunpack.c.l.b16 %v1367
      %v1411 = vunpack.c.h.b16 %v1367
      %v1412 = vunpack.c.l.b16 %v1368
      %v1413 = vunpack.c.h.b16 %v1368
      %v1414 = vunpack.c.l.b16 %v1369
      %v1415 = vunpack.c.h.b16 %v1369
      %v1416 = vunpack.c.l.b16 %v1370
      %v1417 = vunpack.c.h.b16 %v1370
      %v1418 = vunpack.c.l.b16 %v1371
      %v1419 = vunpack.c.h.b16 %v1371
      %v1420 = vpack.c.b16 %v1388, %v1388
      %v1421 = vpack.c.b16 %v1389, %v1389
      %v1422 = vpack.c.b16 %v1390, %v1390
      %v1423 = vpack.c.b16 %v1391, %v1391
      %v1424 = vpack.c.b16 %v1392, %v1392
      %v1425 = vpack.c.b16 %v1393, %v1393
      %v1426 = vpack.c.b16 %v1394, %v1394
      %v1427 = vpack.c.b16 %v1395, %v1395
      %v1428 = vpack.c.b16 %v1396, %v1396
      %v1429 = vpack.c.b16 %v1397, %v1397
      %v1430 = vpack.c.b16 %v1398, %v1398
      %v1431 = vpack.c.b16 %v1399, %v1399
      %v1432 = vpack.c.b16 %v1400, %v1400
      %v1433 = vpack.c.b16 %v1401, %v1401
      %v1434 = vpack.c.b16 %v1402, %v1402
      %v1435 = vpack.c.b16 %v1403, %v1403
      %v1436 = vpack.c.b16 %v1404, %v1404
      %v1437 = vpack.c.b16 %v1405, %v1405
      %v1438 = vpack.c.b16 %v1406, %v1406
      %v1439 = vpack.c.b16 %v1407, %v1407
      %v1440 = vpack.c.b16 %v1408, %v1408
      %v1441 = vpack.c.b16 %v1409, %v1409
      %v1442 = vpack.c.b16 %v1410, %v1410
      %v1443 = vpack.c.b16 %v1411, %v1411
      %v1444 = vpack.c.b16 %v1412, %v1412
      %v1445 = vpack.c.b16 %v1413, %v1413
      %v1446 = vpack.c.b16 %v1414, %v1414
      %v1447 = vpack.c.b16 %v1415, %v1415
      %v1448 = vpack.c.b16 %v1416, %v1416
      %v1449 = vpack.c.b16 %v1417, %v1417
      %v1450 = vpack.c.b16 %v1418, %v1418
      %v1451 = vpack.c.b16 %v1419, %v1419
      %vm1484 = vcmask 257024
      %1485 = vst.msk [vmem:[%s175] sm:$0xf] %vm1484, %v1420
      %1486 = vst.msk [vmem:[%s175 + $0x4] sm:$0xf] %vm1484, %v1421
      %1487 = vst.msk [vmem:[%s175 + $0x8] sm:$0xf] %vm1484, %v1422
      %1488 = vst.msk [vmem:[%s175 + $0xc] sm:$0xf] %vm1484, %v1423
      %1489 = vst.msk [vmem:[%s175 + $0x10] sm:$0xf] %vm1484, %v1424
      %1490 = vst.msk [vmem:[%s175 + $0x14] sm:$0xf] %vm1484, %v1425
      %1491 = vst.msk [vmem:[%s175 + $0x18] sm:$0xf] %vm1484, %v1426
      %1492 = vst.msk [vmem:[%s175 + $0x1c] sm:$0xf] %vm1484, %v1427
      %1493 = vst.msk [vmem:[%s175 + $0x20] sm:$0xf] %vm1484, %v1428
      %1494 = vst.msk [vmem:[%s175 + $0x24] sm:$0xf] %vm1484, %v1429
      %1495 = vst.msk [vmem:[%s175 + $0x28] sm:$0xf] %vm1484, %v1430
      %1496 = vst.msk [vmem:[%s175 + $0x2c] sm:$0xf] %vm1484, %v1431
      %1497 = vst.msk [vmem:[%s175 + $0x30] sm:$0xf] %vm1484, %v1432
      %1498 = vst.msk [vmem:[%s175 + $0x34] sm:$0xf] %vm1484, %v1433
      %1499 = vst.msk [vmem:[%s175 + $0x38] sm:$0xf] %vm1484, %v1434
      %1500 = vst.msk [vmem:[%s175 + $0x3c] sm:$0xf] %vm1484, %v1435
      %1501 = vst.msk [vmem:[%s175 + $0x40] sm:$0xf] %vm1484, %v1436
      %1502 = vst.msk [vmem:[%s175 + $0x44] sm:$0xf] %vm1484, %v1437
      %1503 = vst.msk [vmem:[%s175 + $0x48] sm:$0xf] %vm1484, %v1438
      %1504 = vst.msk [vmem:[%s175 + $0x4c] sm:$0xf] %vm1484, %v1439
      %1505 = vst.msk [vmem:[%s175 + $0x50] sm:$0xf] %vm1484, %v1440
      %1506 = vst.msk [vmem:[%s175 + $0x54] sm:$0xf] %vm1484, %v1441
      %1507 = vst.msk [vmem:[%s175 + $0x58] sm:$0xf] %vm1484, %v1442
      %1508 = vst.msk [vmem:[%s175 + $0x5c] sm:$0xf] %vm1484, %v1443
      %1509 = vst.msk [vmem:[%s175 + $0x60] sm:$0xf] %vm1484, %v1444
      %1510 = vst.msk [vmem:[%s175 + $0x64] sm:$0xf] %vm1484, %v1445
      %1511 = vst.msk [vmem:[%s175 + $0x68] sm:$0xf] %vm1484, %v1446
      %1512 = vst.msk [vmem:[%s175 + $0x6c] sm:$0xf] %vm1484, %v1447
      %1513 = vst.msk [vmem:[%s175 + $0x70] sm:$0xf] %vm1484, %v1448
      %1514 = vst.msk [vmem:[%s175 + $0x74] sm:$0xf] %vm1484, %v1449
      %1515 = vst.msk [vmem:[%s175 + $0x78] sm:$0xf] %vm1484, %v1450
      %1516 = vst.msk [vmem:[%s175 + $0x7c] sm:$0xf] %vm1484, %v1451
      %s1517 = smul.u32 32, %s14
      %p1518 = scmp.lt.s32.totalorder %s1517, 63
      %s1519 = scalar_select %p1518, %s1517, 63
      %s1520 = smul.addr %s1519, 4
      %s1521 = scalar_lea.vmem %s3, %s1520
      // Predicated region
      $region33: #{gated_conv2d_encoder_forward.7} parent=31 // pred_check
        %p1522 = pneg %p100
      $region34: #{gated_conv2d_encoder_forward.7} parent=31 // pred_check_branch
        %1524 = sbr.rel (%p1522) target = $region36
      $region35: #{gated_conv2d_encoder_forward.7} parent=31 // pred_region
        %s1525 = smul.u32 32, %s14
      $region36: #{gated_conv2d_encoder_forward.7} parent=31 // pred_fallthru
        _
    $region32: #{gated_conv2d_encoder_forward.7} parent=5 // pred_fallthru
      _
    %p1526 = scmp.le.s32.totalorder 2, %s9
    // Predicated region
    $region37: #{gated_conv2d_encoder_forward.7} parent=5 // pred_check
      %p1527 = pneg %p1526
    $region38: #{gated_conv2d_encoder_forward.7} parent=5 // pred_check_branch
      %1529 = sbr.rel (%p1527) target = $region40
    $region39: #{gated_conv2d_encoder_forward.7} parent=5 // pred_region
      %s1530 = ssub.s32 %s9, 2
      // Predicated region
      $region41: #{gated_conv2d_encoder_forward.7} parent=39 // pred_check
        %p1531 = pneg %p106
      $region42: #{gated_conv2d_encoder_forward.7} parent=39 // pred_check_branch
        %1533 = sbr.rel (%p1531) target = $region44
      $region43: #{gated_conv2d_encoder_forward.7} parent=39 // pred_region
        %s1534 = smul.u32 32, %s15
        %p1535 = scmp.lt.s32.totalorder %s1534, 63
        %s1536 = scalar_select %p1535, %s1534, 63
        %s1537 = smul.addr %s1536, 4
        %s1538 = scalar_lea.vmem %s3, %s1537
      $region44: #{gated_conv2d_encoder_forward.7} parent=39 // pred_fallthru
        _
    $region40: #{gated_conv2d_encoder_forward.7} parent=5 // pred_fallthru
      _
  $region6: #{gated_conv2d_encoder_forward.7} parent=0 // loop_footer
    %s13 = sadd.s32 1, %s9
  $region7: #{gated_conv2d_encoder_forward.7} parent=0 // loop_footer_branch
    %8 = sbr.rel target = $region3
  $region8: #{gated_conv2d_encoder_forward.7} parent=0 // loop_exit
    _

// kernel: gated_conv2d_encoder_forward.8
$region0: #{gated_conv2d_encoder_forward.8}
  #allocation0 [shape = 'u32[]', space=smem, size = 0x4, offset = 0x4, fixed_abs, tag = 'smem constant byte address 0x4 - core index']
  #allocation1 [shape = 'u32[144,128]{1,0:T(1,128)}', space=vmem, size = 0x12000, scoped, tag = 'internal scratch']
  %s0 = inlined_call_operand.vmem [shape: bf16[512,800], index: 0, kind: input, shape index: {}]
  %s1 = inlined_call_operand.vmem [shape: bf16[800,128], index: 1, kind: input, shape index: {}]
  %s2 = inlined_call_operand.vmem [shape: f32[1,128], index: 2, kind: input, shape index: {}]
  %s3 = inlined_call_operand.vmem [shape: bf16[512,64], index: 3, kind: output, shape index: {}]
  %s4 = sld [smem:[#allocation0]]
  $region45: #{gated_conv2d_encoder_forward.8} parent=0
    _
  %s6 = ssub.s32 1, %s4
  %s7 = scalar_select 0, %s6, %s4
  loop: start=0, step=1, limit=4
  $region2: #{gated_conv2d_encoder_forward.8} parent=0 // loop_pre_header
    _
  $region3: #{gated_conv2d_encoder_forward.8} parent=0 // loop_header
    %s9 = sphi 0, %s13
    %p10 = scmp.ge.s32.totalorder %s9, 4
    %s19 = sphi 0, %s21
    %s22 = sphi 0, %s19
    %s23 = sphi 0, %s22
    %s39 = sphi 0, %s23
    %s43 = sphi 0, %s43
    %s45 = sphi 0, %s43
    %s46 = sphi 0, %s45
    %s60 = sphi 0, %s46
    %s64 = sphi 0, %s64
    %s66 = sphi 0, %s64
    %s67 = sphi 0, %s66
    %s81 = sphi 0, %s67
    %s87 = sphi 0, %s89
    %s90 = sphi 0, %s87
    %s91 = sphi 0, %s90
    %s107 = sphi 0, %s91
  $region4: #{gated_conv2d_encoder_forward.8} parent=0 // loop_header_branch
    %12 = sbr.rel (%p10) target = $region8
  $region5: #{gated_conv2d_encoder_forward.8} parent=0 // loop_body
    %s14 = ssub.s32 %s9, 1
    %s15 = ssub.s32 %s9, 2
    %s16 = sadd.s32 %s9, 1
    %s17 = ssub.s32 %s9, %s16
    %p18 = scmp.eq.s32.totalorder %s17, 0
    %s20 = sadd.s32 %s19, 1
    %s21 = scalar_select %p18, %s19, %s20
    %p24 = pneg %p18
    %p25 = scmp.eq.s32.totalorder %s9, 1
    %p26 = por %p24, %p25
    %p27 = scmp.ne.s32.totalorder %s19, %s22
    %p28 = scmp.eq.s32.totalorder %s9, 0
    %p29 = por %p27, %p28
    %p30 = scmp.ne.s32.totalorder %s19, %s22
    %p31 = scmp.eq.s32.totalorder %s14, 1
    %p32 = por %p30, %p31
    %p33 = scmp.ne.s32.totalorder %s22, %s23
    %p34 = scmp.eq.s32.totalorder %s14, 0
    %p35 = por %p33, %p34
    %p36 = scmp.ne.s32.totalorder %s22, %s23
    %p37 = scmp.eq.s32.totalorder %s15, 1
    %p38 = por %p36, %p37
    %p40 = scmp.ne.s32.totalorder %s23, %s39
    %p41 = scmp.eq.s32.totalorder %s15, 0
    %p42 = por %p40, %p41
    %s44 = sadd.s32 %s43, 1
    %p47 = scmp.eq.s32.totalorder %s9, 1
    %p48 = scmp.ne.s32.totalorder %s43, %s45
    %p49 = scmp.eq.s32.totalorder %s9, 0
    %p50 = por %p48, %p49
    %p51 = scmp.ne.s32.totalorder %s43, %s45
    %p52 = scmp.eq.s32.totalorder %s14, 1
    %p53 = por %p51, %p52
    %p54 = scmp.ne.s32.totalorder %s45, %s46
    %p55 = scmp.eq.s32.totalorder %s14, 0
    %p56 = por %p54, %p55
    %p57 = scmp.ne.s32.totalorder %s45, %s46
    %p58 = scmp.eq.s32.totalorder %s15, 1
    %p59 = por %p57, %p58
    %p61 = scmp.ne.s32.totalorder %s46, %s60
    %p62 = scmp.eq.s32.totalorder %s15, 0
    %p63 = por %p61, %p62
    %s65 = sadd.s32 %s64, 1
    %p68 = scmp.eq.s32.totalorder %s9, 1
    %p69 = scmp.ne.s32.totalorder %s64, %s66
    %p70 = scmp.eq.s32.totalorder %s9, 0
    %p71 = por %p69, %p70
    %p72 = scmp.ne.s32.totalorder %s64, %s66
    %p73 = scmp.eq.s32.totalorder %s14, 1
    %p74 = por %p72, %p73
    %p75 = scmp.ne.s32.totalorder %s66, %s67
    %p76 = scmp.eq.s32.totalorder %s14, 0
    %p77 = por %p75, %p76
    %p78 = scmp.ne.s32.totalorder %s66, %s67
    %p79 = scmp.eq.s32.totalorder %s15, 1
    %p80 = por %p78, %p79
    %p82 = scmp.ne.s32.totalorder %s67, %s81
    %p83 = scmp.eq.s32.totalorder %s15, 0
    %p84 = por %p82, %p83
    %s85 = ssub.s32 %s9, %s16
    %p86 = scmp.eq.s32.totalorder %s85, 0
    %s88 = sadd.s32 %s87, 1
    %s89 = scalar_select %p86, %s87, %s88
    %p92 = pneg %p86
    %p93 = scmp.eq.s32.totalorder %s9, 1
    %p94 = por %p92, %p93
    %p95 = scmp.ne.s32.totalorder %s87, %s90
    %p96 = scmp.eq.s32.totalorder %s9, 0
    %p97 = por %p95, %p96
    %p98 = scmp.ne.s32.totalorder %s87, %s90
    %p99 = scmp.eq.s32.totalorder %s14, 1
    %p100 = por %p98, %p99
    %p101 = scmp.ne.s32.totalorder %s90, %s91
    %p102 = scmp.eq.s32.totalorder %s14, 0
    %p103 = por %p101, %p102
    %p104 = scmp.ne.s32.totalorder %s90, %s91
    %p105 = scmp.eq.s32.totalorder %s15, 1
    %p106 = por %p104, %p105
    %p108 = scmp.ne.s32.totalorder %s91, %s107
    %p109 = scmp.eq.s32.totalorder %s15, 0
    %p110 = por %p108, %p109
    %p111 = scmp.le.s32.totalorder 1, %s9
    %p112 = scmp.lt.s32.totalorder %s9, 3
    %p113 = pnand %p111, %p112
    %p114 = pneg %p113
    // Predicated region
    $region9: #{gated_conv2d_encoder_forward.8} parent=5 // pred_check
      _
    $region10: #{gated_conv2d_encoder_forward.8} parent=5 // pred_check_branch
      %116 = sbr.rel (%p113) target = $region12
    $region11: #{gated_conv2d_encoder_forward.8} parent=5 // pred_region
      %s117 = ssub.s32 %s9, 1
      // Predicated region
      $region13: #{gated_conv2d_encoder_forward.8} parent=11 // pred_check
        %p118 = pneg %p56
      $region14: #{gated_conv2d_encoder_forward.8} parent=11 // pred_check_branch
        %120 = sbr.rel (%p118) target = $region16
      $region15: #{gated_conv2d_encoder_forward.8} parent=11 // pred_region
        _
      $region16: #{gated_conv2d_encoder_forward.8} parent=11 // pred_fallthru
        _
      // Predicated region
      $region17: #{gated_conv2d_encoder_forward.8} parent=11 // pred_check
        %p121 = pneg %p77
      $region18: #{gated_conv2d_encoder_forward.8} parent=11 // pred_check_branch
        %123 = sbr.rel (%p121) target = $region20
      $region19: #{gated_conv2d_encoder_forward.8} parent=11 // pred_region
        _
      $region20: #{gated_conv2d_encoder_forward.8} parent=11 // pred_fallthru
        _
    $region12: #{gated_conv2d_encoder_forward.8} parent=5 // pred_fallthru
      _
    %p124 = scmp.lt.s32.totalorder %s9, 2
    // Predicated region
    $region21: #{gated_conv2d_encoder_forward.8} parent=5 // pred_check
      %p125 = pneg %p124
    $region22: #{gated_conv2d_encoder_forward.8} parent=5 // pred_check_branch
      %127 = sbr.rel (%p125) target = $region24
    $region23: #{gated_conv2d_encoder_forward.8} parent=5 // pred_region
      // Predicated region
      $region25: #{gated_conv2d_encoder_forward.8} parent=23 // pred_check
        %p128 = pneg %p29
      $region26: #{gated_conv2d_encoder_forward.8} parent=23 // pred_check_branch
        %130 = sbr.rel (%p128) target = $region28
      $region27: #{gated_conv2d_encoder_forward.8} parent=23 // pred_region
        %s131 = smul.u32 32, %s9
        %p132 = scmp.lt.s32.totalorder %s131, 63
        %s133 = scalar_select %p132, %s131, 63
        %s134 = smul.addr %s133, 7
        %s135 = smul.addr %s134, 4
        %s136 = scalar_lea.vmem %s0, %s135
        %s137 = smul.u32 32, %s9
      $region28: #{gated_conv2d_encoder_forward.8} parent=23 // pred_fallthru
        _
    $region24: #{gated_conv2d_encoder_forward.8} parent=5 // pred_fallthru
      _
    %p138 = scmp.le.s32.totalorder 1, %s9
    %p139 = scmp.lt.s32.totalorder %s9, 3
    %p140 = pnand %p138, %p139
    %p141 = pneg %p140
    // Predicated region
    $region29: #{gated_conv2d_encoder_forward.8} parent=5 // pred_check
      _
    $region30: #{gated_conv2d_encoder_forward.8} parent=5 // pred_check_branch
      %143 = sbr.rel (%p140) target = $region32
    $region31: #{gated_conv2d_encoder_forward.8} parent=5 // pred_region
      %s144 = ssub.s32 %s9, 1
      %s145 = smul.u32 32, %s14
      %p146 = scmp.lt.s32.totalorder %s145, 63
      %s147 = scalar_select %p146, %s145, 63
      %s148 = smul.addr %s147, 7
      %s149 = smul.addr %s148, 4
      %s150 = scalar_lea.vmem %s0, %s149
      %p151 = pneg %p35
      %p152 = pneg %p32
      %p153 = pneg %p56
      %p154 = pneg %p53
      %p155 = pneg %p77
      %p156 = pneg %p74
      %p157 = pneg %p103
      %p158 = pneg %p100
      %s159 = smul.u32 32, %s14
      %p160 = scmp.lt.s32.totalorder %s159, 63
      %s161 = scalar_select %p160, %s159, 63
      %s162 = smul.addr %s161, 4
      %s163 = scalar_lea.vmem %s3, %s162
      %s164 = smul.u32 32, %s14
      %p165 = scmp.lt.s32.totalorder %s164, 63
      %s166 = scalar_select %p165, %s164, 63
      %s167 = smul.addr %s166, 7
      %s168 = smul.addr %s167, 4
      %s169 = scalar_lea.vmem %s0, %s168
      %s170 = smul.u32 32, %s14
      %s171 = smul.u32 32, %s14
      %p172 = scmp.lt.s32.totalorder %s171, 63
      %s173 = scalar_select %p172, %s171, 63
      %s174 = smul.addr %s173, 4
      %s175 = scalar_lea.vmem %s3, %s174
      %s176 = smul.u32 32, %s14
      %v178 = vld [vmem:[%s169] sm:$0xff]
      %v179 = vld [vmem:[%s169 + $0x8] sm:$0xff]
      %v180 = vld [vmem:[%s169 + $0x10] sm:$0xff]
      %v181 = vld [vmem:[%s169 + $0x18] sm:$0xf]
      %v182 = vld [vmem:[%s169 + $0x1c] sm:$0xff]
      %v183 = vld [vmem:[%s169 + $0x24] sm:$0xff]
      %v184 = vld [vmem:[%s169 + $0x2c] sm:$0xff]
      %v185 = vld [vmem:[%s169 + $0x34] sm:$0xf]
      %v186 = vld [vmem:[%s169 + $0x38] sm:$0xff]
      %v187 = vld [vmem:[%s169 + $0x40] sm:$0xff]
      %v188 = vld [vmem:[%s169 + $0x48] sm:$0xff]
      %v189 = vld [vmem:[%s169 + $0x50] sm:$0xf]
      %v190 = vld [vmem:[%s169 + $0x54] sm:$0xff]
      %v191 = vld [vmem:[%s169 + $0x5c] sm:$0xff]
      %v192 = vld [vmem:[%s169 + $0x64] sm:$0xff]
      %v193 = vld [vmem:[%s169 + $0x6c] sm:$0xf]
      %v194 = vld [vmem:[%s169 + $0x70] sm:$0xff]
      %v195 = vld [vmem:[%s169 + $0x78] sm:$0xff]
      %v196 = vld [vmem:[%s169 + $0x80] sm:$0xff]
      %v197 = vld [vmem:[%s169 + $0x88] sm:$0xf]
      %v198 = vld [vmem:[%s169 + $0x8c] sm:$0xff]
      %v199 = vld [vmem:[%s169 + $0x94] sm:$0xff]
      %v200 = vld [vmem:[%s169 + $0x9c] sm:$0xff]
      %v201 = vld [vmem:[%s169 + $0xa4] sm:$0xf]
      %v202 = vld [vmem:[%s169 + $0xa8] sm:$0xff]
      %v203 = vld [vmem:[%s169 + $0xb0] sm:$0xff]
      %v204 = vld [vmem:[%s169 + $0xb8] sm:$0xff]
      %v205 = vld [vmem:[%s169 + $0xc0] sm:$0xf]
      %v206 = vld [vmem:[%s169 + $0xc4] sm:$0xff]
      %v207 = vld [vmem:[%s169 + $0xcc] sm:$0xff]
      %v208 = vld [vmem:[%s169 + $0xd4] sm:$0xff]
      %v209 = vld [vmem:[%s169 + $0xdc] sm:$0xf]
      %v210 = vld [vmem:[%s169 + $0xe0] sm:$0xff]
      %v211 = vld [vmem:[%s169 + $0xe8] sm:$0xff]
      %v212 = vld [vmem:[%s169 + $0xf0] sm:$0xff]
      %v213 = vld [vmem:[%s169 + $0xf8] sm:$0xf]
      %v214 = vld [vmem:[%s169 + $0xfc] sm:$0xff]
      %v215 = vld [vmem:[%s169 + $0x104] sm:$0xff]
      %v216 = vld [vmem:[%s169 + $0x10c] sm:$0xff]
      %v217 = vld [vmem:[%s169 + $0x114] sm:$0xf]
      %v218 = vld [vmem:[%s169 + $0x118] sm:$0xff]
      %v219 = vld [vmem:[%s169 + $0x120] sm:$0xff]
      %v220 = vld [vmem:[%s169 + $0x128] sm:$0xff]
      %v221 = vld [vmem:[%s169 + $0x130] sm:$0xf]
      %v222 = vld [vmem:[%s169 + $0x134] sm:$0xff]
      %v223 = vld [vmem:[%s169 + $0x13c] sm:$0xff]
      %v224 = vld [vmem:[%s169 + $0x144] sm:$0xff]
      %v225 = vld [vmem:[%s169 + $0x14c] sm:$0xf]
      %v226 = vld [vmem:[%s169 + $0x150] sm:$0xff]
      %v227 = vld [vmem:[%s169 + $0x158] sm:$0xff]
      %v228 = vld [vmem:[%s169 + $0x160] sm:$0xff]
      %v229 = vld [vmem:[%s169 + $0x168] sm:$0xf]
      %v230 = vld [vmem:[%s169 + $0x16c] sm:$0xff]
      %v231 = vld [vmem:[%s169 + $0x174] sm:$0xff]
      %v232 = vld [vmem:[%s169 + $0x17c] sm:$0xff]
      %v233 = vld [vmem:[%s169 + $0x184] sm:$0xf]
      %v234 = vld [vmem:[%s169 + $0x188] sm:$0xff]
      %v235 = vld [vmem:[%s169 + $0x190] sm:$0xff]
      %v236 = vld [vmem:[%s169 + $0x198] sm:$0xff]
      %v237 = vld [vmem:[%s169 + $0x1a0] sm:$0xf]
      %v238 = vld [vmem:[%s169 + $0x1a4] sm:$0xff]
      %v239 = vld [vmem:[%s169 + $0x1ac] sm:$0xff]
      %v240 = vld [vmem:[%s169 + $0x1b4] sm:$0xff]
      %v241 = vld [vmem:[%s169 + $0x1bc] sm:$0xf]
      %v242 = vld [vmem:[%s169 + $0x1c0] sm:$0xff]
      %v243 = vld [vmem:[%s169 + $0x1c8] sm:$0xff]
      %v244 = vld [vmem:[%s169 + $0x1d0] sm:$0xff]
      %v245 = vld [vmem:[%s169 + $0x1d8] sm:$0xf]
      %v246 = vld [vmem:[%s169 + $0x1dc] sm:$0xff]
      %v247 = vld [vmem:[%s169 + $0x1e4] sm:$0xff]
      %v248 = vld [vmem:[%s169 + $0x1ec] sm:$0xff]
      %v249 = vld [vmem:[%s169 + $0x1f4] sm:$0xf]
      %v250 = vld [vmem:[%s169 + $0x1f8] sm:$0xff]
      %v251 = vld [vmem:[%s169 + $0x200] sm:$0xff]
      %v252 = vld [vmem:[%s169 + $0x208] sm:$0xff]
      %v253 = vld [vmem:[%s169 + $0x210] sm:$0xf]
      %v254 = vld [vmem:[%s169 + $0x214] sm:$0xff]
      %v255 = vld [vmem:[%s169 + $0x21c] sm:$0xff]
      %v256 = vld [vmem:[%s169 + $0x224] sm:$0xff]
      %v257 = vld [vmem:[%s169 + $0x22c] sm:$0xf]
      %v258 = vld [vmem:[%s169 + $0x230] sm:$0xff]
      %v259 = vld [vmem:[%s169 + $0x238] sm:$0xff]
      %v260 = vld [vmem:[%s169 + $0x240] sm:$0xff]
      %v261 = vld [vmem:[%s169 + $0x248] sm:$0xf]
      %v262 = vld [vmem:[%s169 + $0x24c] sm:$0xff]
      %v263 = vld [vmem:[%s169 + $0x254] sm:$0xff]
      %v264 = vld [vmem:[%s169 + $0x25c] sm:$0xff]
      %v265 = vld [vmem:[%s169 + $0x264] sm:$0xf]
      %v266 = vld [vmem:[%s169 + $0x268] sm:$0xff]
      %v267 = vld [vmem:[%s169 + $0x270] sm:$0xff]
      %v268 = vld [vmem:[%s169 + $0x278] sm:$0xff]
      %v269 = vld [vmem:[%s169 + $0x280] sm:$0xf]
      %v270 = vld [vmem:[%s169 + $0x284] sm:$0xff]
      %v271 = vld [vmem:[%s169 + $0x28c] sm:$0xff]
      %v272 = vld [vmem:[%s169 + $0x294] sm:$0xff]
      %v273 = vld [vmem:[%s169 + $0x29c] sm:$0xf]
      %v274 = vld [vmem:[%s169 + $0x2a0] sm:$0xff]
      %v275 = vld [vmem:[%s169 + $0x2a8] sm:$0xff]
      %v276 = vld [vmem:[%s169 + $0x2b0] sm:$0xff]
      %v277 = vld [vmem:[%s169 + $0x2b8] sm:$0xf]
      %v278 = vld [vmem:[%s169 + $0x2bc] sm:$0xff]
      %v279 = vld [vmem:[%s169 + $0x2c4] sm:$0xff]
      %v280 = vld [vmem:[%s169 + $0x2cc] sm:$0xff]
      %v281 = vld [vmem:[%s169 + $0x2d4] sm:$0xf]
      %v282 = vld [vmem:[%s169 + $0x2d8] sm:$0xff]
      %v283 = vld [vmem:[%s169 + $0x2e0] sm:$0xff]
      %v284 = vld [vmem:[%s169 + $0x2e8] sm:$0xff]
      %v285 = vld [vmem:[%s169 + $0x2f0] sm:$0xf]
      %v286 = vld [vmem:[%s169 + $0x2f4] sm:$0xff]
      %v287 = vld [vmem:[%s169 + $0x2fc] sm:$0xff]
      %v288 = vld [vmem:[%s169 + $0x304] sm:$0xff]
      %v289 = vld [vmem:[%s169 + $0x30c] sm:$0xf]
      %v290 = vld [vmem:[%s169 + $0x310] sm:$0xff]
      %v291 = vld [vmem:[%s169 + $0x318] sm:$0xff]
      %v292 = vld [vmem:[%s169 + $0x320] sm:$0xff]
      %v293 = vld [vmem:[%s169 + $0x328] sm:$0xf]
      %v294 = vld [vmem:[%s169 + $0x32c] sm:$0xff]
      %v295 = vld [vmem:[%s169 + $0x334] sm:$0xff]
      %v296 = vld [vmem:[%s169 + $0x33c] sm:$0xff]
      %v297 = vld [vmem:[%s169 + $0x344] sm:$0xf]
      %v298 = vld [vmem:[%s169 + $0x348] sm:$0xff]
      %v299 = vld [vmem:[%s169 + $0x350] sm:$0xff]
      %v300 = vld [vmem:[%s169 + $0x358] sm:$0xff]
      %v301 = vld [vmem:[%s169 + $0x360] sm:$0xf]
      %v302 = vld [vmem:[%s169 + $0x364] sm:$0xff]
      %v303 = vld [vmem:[%s169 + $0x36c] sm:$0xff]
      %v304 = vld [vmem:[%s169 + $0x374] sm:$0xff]
      %v305 = vld [vmem:[%s169 + $0x37c] sm:$0xf]
      %v306 = vld [vmem:[%s1] sm:$0xf]
      %v307 = vld [vmem:[%s1 + $0x4] sm:$0xf]
      %v308 = vld [vmem:[%s1 + $0x8] sm:$0xf]
      %v309 = vld [vmem:[%s1 + $0xc] sm:$0xf]
      %v310 = vld [vmem:[%s1 + $0x10] sm:$0xf]
      %v311 = vld [vmem:[%s1 + $0x14] sm:$0xf]
      %v312 = vld [vmem:[%s1 + $0x18] sm:$0xf]
      %v313 = vld [vmem:[%s1 + $0x1c] sm:$0xf]
      %v314 = vld [vmem:[%s1 + $0x20] sm:$0xf]
      %v315 = vld [vmem:[%s1 + $0x24] sm:$0xf]
      %v316 = vld [vmem:[%s1 + $0x28] sm:$0xf]
      %v317 = vld [vmem:[%s1 + $0x2c] sm:$0xf]
      %v318 = vld [vmem:[%s1 + $0x30] sm:$0xf]
      %v319 = vld [vmem:[%s1 + $0x34] sm:$0xf]
      %v320 = vld [vmem:[%s1 + $0x38] sm:$0xf]
      %v321 = vld [vmem:[%s1 + $0x3c] sm:$0xf]
      %v322 = vld [vmem:[%s1 + $0x40] sm:$0xf]
      %v323 = vld [vmem:[%s1 + $0x44] sm:$0xf]
      %v324 = vld [vmem:[%s1 + $0x48] sm:$0xf]
      %v325 = vld [vmem:[%s1 + $0x4c] sm:$0xf]
      %v326 = vld [vmem:[%s1 + $0x50] sm:$0xf]
      %v327 = vld [vmem:[%s1 + $0x54] sm:$0xf]
      %v328 = vld [vmem:[%s1 + $0x58] sm:$0xf]
      %v329 = vld [vmem:[%s1 + $0x5c] sm:$0xf]
      %v330 = vld [vmem:[%s1 + $0x60] sm:$0xf]
      %v331 = vld [vmem:[%s1 + $0x64] sm:$0xf]
      %v332 = vld [vmem:[%s1 + $0x68] sm:$0xf]
      %v333 = vld [vmem:[%s1 + $0x6c] sm:$0xf]
      %v334 = vld [vmem:[%s1 + $0x70] sm:$0xf]
      %v335 = vld [vmem:[%s1 + $0x74] sm:$0xf]
      %v336 = vld [vmem:[%s1 + $0x78] sm:$0xf]
      %v337 = vld [vmem:[%s1 + $0x7c] sm:$0xf]
      %v338 = vld [vmem:[%s1 + $0x80] sm:$0xf]
      %v339 = vld [vmem:[%s1 + $0x84] sm:$0xf]
      %v340 = vld [vmem:[%s1 + $0x88] sm:$0xf]
      %v341 = vld [vmem:[%s1 + $0x8c] sm:$0xf]
      %v342 = vld [vmem:[%s1 + $0x90] sm:$0xf]
      %v343 = vld [vmem:[%s1 + $0x94] sm:$0xf]
      %v344 = vld [vmem:[%s1 + $0x98] sm:$0xf]
      %v345 = vld [vmem:[%s1 + $0x9c] sm:$0xf]
      %v346 = vld [vmem:[%s1 + $0xa0] sm:$0xf]
      %v347 = vld [vmem:[%s1 + $0xa4] sm:$0xf]
      %v348 = vld [vmem:[%s1 + $0xa8] sm:$0xf]
      %v349 = vld [vmem:[%s1 + $0xac] sm:$0xf]
      %v350 = vld [vmem:[%s1 + $0xb0] sm:$0xf]
      %v351 = vld [vmem:[%s1 + $0xb4] sm:$0xf]
      %v352 = vld [vmem:[%s1 + $0xb8] sm:$0xf]
      %v353 = vld [vmem:[%s1 + $0xbc] sm:$0xf]
      %v354 = vld [vmem:[%s1 + $0xc0] sm:$0xf]
      %v355 = vld [vmem:[%s1 + $0xc4] sm:$0xf]
      %v356 = vld [vmem:[%s1 + $0xc8] sm:$0xf]
      %v357 = vld [vmem:[%s1 + $0xcc] sm:$0xf]
      %v358 = vld [vmem:[%s1 + $0xd0] sm:$0xf]
      %v359 = vld [vmem:[%s1 + $0xd4] sm:$0xf]
      %v360 = vld [vmem:[%s1 + $0xd8] sm:$0xf]
      %v361 = vld [vmem:[%s1 + $0xdc] sm:$0xf]
      %v362 = vld [vmem:[%s1 + $0xe0] sm:$0xf]
      %v363 = vld [vmem:[%s1 + $0xe4] sm:$0xf]
      %v364 = vld [vmem:[%s1 + $0xe8] sm:$0xf]
      %v365 = vld [vmem:[%s1 + $0xec] sm:$0xf]
      %v366 = vld [vmem:[%s1 + $0xf0] sm:$0xf]
      %v367 = vld [vmem:[%s1 + $0xf4] sm:$0xf]
      %v368 = vld [vmem:[%s1 + $0xf8] sm:$0xf]
      %v369 = vld [vmem:[%s1 + $0xfc] sm:$0xf]
      %v370 = vld [vmem:[%s1 + $0x100] sm:$0xf]
      %v371 = vld [vmem:[%s1 + $0x104] sm:$0xf]
      %v372 = vld [vmem:[%s1 + $0x108] sm:$0xf]
      %v373 = vld [vmem:[%s1 + $0x10c] sm:$0xf]
      %v374 = vld [vmem:[%s1 + $0x110] sm:$0xf]
      %v375 = vld [vmem:[%s1 + $0x114] sm:$0xf]
      %v376 = vld [vmem:[%s1 + $0x118] sm:$0xf]
      %v377 = vld [vmem:[%s1 + $0x11c] sm:$0xf]
      %v378 = vld [vmem:[%s1 + $0x120] sm:$0xf]
      %v379 = vld [vmem:[%s1 + $0x124] sm:$0xf]
      %v380 = vld [vmem:[%s1 + $0x128] sm:$0xf]
      %v381 = vld [vmem:[%s1 + $0x12c] sm:$0xf]
      %v382 = vld [vmem:[%s1 + $0x130] sm:$0xf]
      %v383 = vld [vmem:[%s1 + $0x134] sm:$0xf]
      %v384 = vld [vmem:[%s1 + $0x138] sm:$0xf]
      %v385 = vld [vmem:[%s1 + $0x13c] sm:$0xf]
      %v386 = vld [vmem:[%s1 + $0x140] sm:$0xf]
      %v387 = vld [vmem:[%s1 + $0x144] sm:$0xf]
      %v388 = vld [vmem:[%s1 + $0x148] sm:$0xf]
      %v389 = vld [vmem:[%s1 + $0x14c] sm:$0xf]
      %v390 = vld [vmem:[%s1 + $0x150] sm:$0xf]
      %v391 = vld [vmem:[%s1 + $0x154] sm:$0xf]
      %v392 = vld [vmem:[%s1 + $0x158] sm:$0xf]
      %v393 = vld [vmem:[%s1 + $0x15c] sm:$0xf]
      %v394 = vld [vmem:[%s1 + $0x160] sm:$0xf]
      %v395 = vld [vmem:[%s1 + $0x164] sm:$0xf]
      %v396 = vld [vmem:[%s1 + $0x168] sm:$0xf]
      %v397 = vld [vmem:[%s1 + $0x16c] sm:$0xf]
      %v398 = vld [vmem:[%s1 + $0x170] sm:$0xf]
      %v399 = vld [vmem:[%s1 + $0x174] sm:$0xf]
      %v400 = vld [vmem:[%s1 + $0x178] sm:$0xf]
      %v401 = vld [vmem:[%s1 + $0x17c] sm:$0xf]
      %v402 = vld [vmem:[%s1 + $0x180] sm:$0xf]
      %v403 = vld [vmem:[%s1 + $0x184] sm:$0xf]
      %v404 = vld [vmem:[%s1 + $0x188] sm:$0xf]
      %v405 = vld [vmem:[%s1 + $0x18c] sm:$0xf]
      %v406 = vld [vmem:[%s2] sm:$0x1]
      %v408 = vlaneseq
      %v409 = vshrl.u32 %v408, 7
      %v410 = vsub.s32 0, %v409
      %v411 = vrot.slane %v406, %v410
      %v541 = vunpack.c.l.b16 %v178
      %v542 = vunpack.c.h.b16 %v178
      %v543 = vunpack.c.l.b16 %v179
      %v544 = vunpack.c.h.b16 %v179
      %v545 = vunpack.c.l.b16 %v180
      %v546 = vunpack.c.h.b16 %v180
      %v547 = vunpack.c.l.b16 %v181
      %v548 = vunpack.c.l.b16 %v182
      %v549 = vunpack.c.h.b16 %v182
      %v550 = vunpack.c.l.b16 %v183
      %v551 = vunpack.c.h.b16 %v183
      %v552 = vunpack.c.l.b16 %v184
      %v553 = vunpack.c.h.b16 %v184
      %v554 = vunpack.c.l.b16 %v185
      %v555 = vunpack.c.l.b16 %v186
      %v556 = vunpack.c.h.b16 %v186
      %v557 = vunpack.c.l.b16 %v187
      %v558 = vunpack.c.h.b16 %v187
      %v559 = vunpack.c.l.b16 %v188
      %v560 = vunpack.c.h.b16 %v188
      %v561 = vunpack.c.l.b16 %v189
      %v562 = vunpack.c.l.b16 %v190
      %v563 = vunpack.c.h.b16 %v190
      %v564 = vunpack.c.l.b16 %v191
      %v565 = vunpack.c.h.b16 %v191
      %v566 = vunpack.c.l.b16 %v192
      %v567 = vunpack.c.h.b16 %v192
      %v568 = vunpack.c.l.b16 %v193
      %v569 = vunpack.c.l.b16 %v194
      %v570 = vunpack.c.h.b16 %v194
      %v571 = vunpack.c.l.b16 %v195
      %v572 = vunpack.c.h.b16 %v195
      %v573 = vunpack.c.l.b16 %v196
      %v574 = vunpack.c.h.b16 %v196
      %v575 = vunpack.c.l.b16 %v197
      %v576 = vunpack.c.l.b16 %v198
      %v577 = vunpack.c.h.b16 %v198
      %v578 = vunpack.c.l.b16 %v199
      %v579 = vunpack.c.h.b16 %v199
      %v580 = vunpack.c.l.b16 %v200
      %v581 = vunpack.c.h.b16 %v200
      %v582 = vunpack.c.l.b16 %v201
      %v583 = vunpack.c.l.b16 %v202
      %v584 = vunpack.c.h.b16 %v202
      %v585 = vunpack.c.l.b16 %v203
      %v586 = vunpack.c.h.b16 %v203
      %v587 = vunpack.c.l.b16 %v204
      %v588 = vunpack.c.h.b16 %v204
      %v589 = vunpack.c.l.b16 %v205
      %v590 = vunpack.c.l.b16 %v206
      %v591 = vunpack.c.h.b16 %v206
      %v592 = vunpack.c.l.b16 %v207
      %v593 = vunpack.c.h.b16 %v207
      %v594 = vunpack.c.l.b16 %v208
      %v595 = vunpack.c.h.b16 %v208
      %v596 = vunpack.c.l.b16 %v209
      %v597 = vunpack.c.l.b16 %v210
      %v598 = vunpack.c.h.b16 %v210
      %v599 = vunpack.c.l.b16 %v211
      %v600 = vunpack.c.h.b16 %v211
      %v601 = vunpack.c.l.b16 %v212
      %v602 = vunpack.c.h.b16 %v212
      %v603 = vunpack.c.l.b16 %v213
      %v604 = vunpack.c.l.b16 %v214
      %v605 = vunpack.c.h.b16 %v214
      %v606 = vunpack.c.l.b16 %v215
      %v607 = vunpack.c.h.b16 %v215
      %v608 = vunpack.c.l.b16 %v216
      %v609 = vunpack.c.h.b16 %v216
      %v610 = vunpack.c.l.b16 %v217
      %v611 = vunpack.c.l.b16 %v218
      %v612 = vunpack.c.h.b16 %v218
      %v613 = vunpack.c.l.b16 %v219
      %v614 = vunpack.c.h.b16 %v219
      %v615 = vunpack.c.l.b16 %v220
      %v616 = vunpack.c.h.b16 %v220
      %v617 = vunpack.c.l.b16 %v221
      %v618 = vunpack.c.l.b16 %v222
      %v619 = vunpack.c.h.b16 %v222
      %v620 = vunpack.c.l.b16 %v223
      %v621 = vunpack.c.h.b16 %v223
      %v622 = vunpack.c.l.b16 %v224
      %v623 = vunpack.c.h.b16 %v224
      %v624 = vunpack.c.l.b16 %v225
      %v625 = vunpack.c.l.b16 %v226
      %v626 = vunpack.c.h.b16 %v226
      %v627 = vunpack.c.l.b16 %v227
      %v628 = vunpack.c.h.b16 %v227
      %v629 = vunpack.c.l.b16 %v228
      %v630 = vunpack.c.h.b16 %v228
      %v631 = vunpack.c.l.b16 %v229
      %v632 = vunpack.c.l.b16 %v230
      %v633 = vunpack.c.h.b16 %v230
      %v634 = vunpack.c.l.b16 %v231
      %v635 = vunpack.c.h.b16 %v231
      %v636 = vunpack.c.l.b16 %v232
      %v637 = vunpack.c.h.b16 %v232
      %v638 = vunpack.c.l.b16 %v233
      %v639 = vunpack.c.l.b16 %v234
      %v640 = vunpack.c.h.b16 %v234
      %v641 = vunpack.c.l.b16 %v235
      %v642 = vunpack.c.h.b16 %v235
      %v643 = vunpack.c.l.b16 %v236
      %v644 = vunpack.c.h.b16 %v236
      %v645 = vunpack.c.l.b16 %v237
      %v646 = vunpack.c.l.b16 %v238
      %v647 = vunpack.c.h.b16 %v238
      %v648 = vunpack.c.l.b16 %v239
      %v649 = vunpack.c.h.b16 %v239
      %v650 = vunpack.c.l.b16 %v240
      %v651 = vunpack.c.h.b16 %v240
      %v652 = vunpack.c.l.b16 %v241
      %v653 = vunpack.c.l.b16 %v242
      %v654 = vunpack.c.h.b16 %v242
      %v655 = vunpack.c.l.b16 %v243
      %v656 = vunpack.c.h.b16 %v243
      %v657 = vunpack.c.l.b16 %v244
      %v658 = vunpack.c.h.b16 %v244
      %v659 = vunpack.c.l.b16 %v245
      %v660 = vunpack.c.l.b16 %v246
      %v661 = vunpack.c.h.b16 %v246
      %v662 = vunpack.c.l.b16 %v247
      %v663 = vunpack.c.h.b16 %v247
      %v664 = vunpack.c.l.b16 %v248
      %v665 = vunpack.c.h.b16 %v248
      %v666 = vunpack.c.l.b16 %v249
      %v667 = vunpack.c.l.b16 %v250
      %v668 = vunpack.c.h.b16 %v250
      %v669 = vunpack.c.l.b16 %v251
      %v670 = vunpack.c.h.b16 %v251
      %v671 = vunpack.c.l.b16 %v252
      %v672 = vunpack.c.h.b16 %v252
      %v673 = vunpack.c.l.b16 %v253
      %v674 = vunpack.c.l.b16 %v254
      %v675 = vunpack.c.h.b16 %v254
      %v676 = vunpack.c.l.b16 %v255
      %v677 = vunpack.c.h.b16 %v255
      %v678 = vunpack.c.l.b16 %v256
      %v679 = vunpack.c.h.b16 %v256
      %v680 = vunpack.c.l.b16 %v257
      %v681 = vunpack.c.l.b16 %v258
      %v682 = vunpack.c.h.b16 %v258
      %v683 = vunpack.c.l.b16 %v259
      %v684 = vunpack.c.h.b16 %v259
      %v685 = vunpack.c.l.b16 %v260
      %v686 = vunpack.c.h.b16 %v260
      %v687 = vunpack.c.l.b16 %v261
      %v688 = vunpack.c.l.b16 %v262
      %v689 = vunpack.c.h.b16 %v262
      %v690 = vunpack.c.l.b16 %v263
      %v691 = vunpack.c.h.b16 %v263
      %v692 = vunpack.c.l.b16 %v264
      %v693 = vunpack.c.h.b16 %v264
      %v694 = vunpack.c.l.b16 %v265
      %v695 = vunpack.c.l.b16 %v266
      %v696 = vunpack.c.h.b16 %v266
      %v697 = vunpack.c.l.b16 %v267
      %v698 = vunpack.c.h.b16 %v267
      %v699 = vunpack.c.l.b16 %v268
      %v700 = vunpack.c.h.b16 %v268
      %v701 = vunpack.c.l.b16 %v269
      %v702 = vunpack.c.l.b16 %v270
      %v703 = vunpack.c.h.b16 %v270
      %v704 = vunpack.c.l.b16 %v271
      %v705 = vunpack.c.h.b16 %v271
      %v706 = vunpack.c.l.b16 %v272
      %v707 = vunpack.c.h.b16 %v272
      %v708 = vunpack.c.l.b16 %v273
      %v709 = vunpack.c.l.b16 %v274
      %v710 = vunpack.c.h.b16 %v274
      %v711 = vunpack.c.l.b16 %v275
      %v712 = vunpack.c.h.b16 %v275
      %v713 = vunpack.c.l.b16 %v276
      %v714 = vunpack.c.h.b16 %v276
      %v715 = vunpack.c.l.b16 %v277
      %v716 = vunpack.c.l.b16 %v278
      %v717 = vunpack.c.h.b16 %v278
      %v718 = vunpack.c.l.b16 %v279
      %v719 = vunpack.c.h.b16 %v279
      %v720 = vunpack.c.l.b16 %v280
      %v721 = vunpack.c.h.b16 %v280
      %v722 = vunpack.c.l.b16 %v281
      %v723 = vunpack.c.l.b16 %v282
      %v724 = vunpack.c.h.b16 %v282
      %v725 = vunpack.c.l.b16 %v283
      %v726 = vunpack.c.h.b16 %v283
      %v727 = vunpack.c.l.b16 %v284
      %v728 = vunpack.c.h.b16 %v284
      %v729 = vunpack.c.l.b16 %v285
      %v730 = vunpack.c.l.b16 %v286
      %v731 = vunpack.c.h.b16 %v286
      %v732 = vunpack.c.l.b16 %v287
      %v733 = vunpack.c.h.b16 %v287
      %v734 = vunpack.c.l.b16 %v288
      %v735 = vunpack.c.h.b16 %v288
      %v736 = vunpack.c.l.b16 %v289
      %v737 = vunpack.c.l.b16 %v290
      %v738 = vunpack.c.h.b16 %v290
      %v739 = vunpack.c.l.b16 %v291
      %v740 = vunpack.c.h.b16 %v291
      %v741 = vunpack.c.l.b16 %v292
      %v742 = vunpack.c.h.b16 %v292
      %v743 = vunpack.c.l.b16 %v293
      %v744 = vunpack.c.l.b16 %v294
      %v745 = vunpack.c.h.b16 %v294
      %v746 = vunpack.c.l.b16 %v295
      %v747 = vunpack.c.h.b16 %v295
      %v748 = vunpack.c.l.b16 %v296
      %v749 = vunpack.c.h.b16 %v296
      %v750 = vunpack.c.l.b16 %v297
      %v751 = vunpack.c.l.b16 %v298
      %v752 = vunpack.c.h.b16 %v298
      %v753 = vunpack.c.l.b16 %v299
      %v754 = vunpack.c.h.b16 %v299
      %v755 = vunpack.c.l.b16 %v300
      %v756 = vunpack.c.h.b16 %v300
      %v757 = vunpack.c.l.b16 %v301
      %v758 = vunpack.c.l.b16 %v302
      %v759 = vunpack.c.h.b16 %v302
      %v760 = vunpack.c.l.b16 %v303
      %v761 = vunpack.c.h.b16 %v303
      %v762 = vunpack.c.l.b16 %v304
      %v763 = vunpack.c.h.b16 %v304
      %v764 = vunpack.c.l.b16 %v305
      %v765 = vpack.c.b16 %v548, %v541
      %v766 = vpack.c.b16 %v549, %v542
      %v767 = vpack.c.b16 %v550, %v543
      %v768 = vpack.c.b16 %v551, %v544
      %v769 = vpack.c.b16 %v552, %v545
      %v770 = vpack.c.b16 %v553, %v546
      %v771 = vpack.c.b16 %v554, %v547
      %v772 = vpack.c.b16 %v562, %v555
      %v773 = vpack.c.b16 %v563, %v556
      %v774 = vpack.c.b16 %v564, %v557
      %v775 = vpack.c.b16 %v565, %v558
      %v776 = vpack.c.b16 %v566, %v559
      %v777 = vpack.c.b16 %v567, %v560
      %v778 = vpack.c.b16 %v568, %v561
      %v779 = vpack.c.b16 %v576, %v569
      %v780 = vpack.c.b16 %v577, %v570
      %v781 = vpack.c.b16 %v578, %v571
      %v782 = vpack.c.b16 %v579, %v572
      %v783 = vpack.c.b16 %v580, %v573
      %v784 = vpack.c.b16 %v581, %v574
      %v785 = vpack.c.b16 %v582, %v575
      %v786 = vpack.c.b16 %v590, %v583
      %v787 = vpack.c.b16 %v591, %v584
      %v788 = vpack.c.b16 %v592, %v585
      %v789 = vpack.c.b16 %v593, %v586
      %v790 = vpack.c.b16 %v594, %v587
      %v791 = vpack.c.b16 %v595, %v588
      %v792 = vpack.c.b16 %v596, %v589
      %v793 = vpack.c.b16 %v604, %v597
      %v794 = vpack.c.b16 %v605, %v598
      %v795 = vpack.c.b16 %v606, %v599
      %v796 = vpack.c.b16 %v607, %v600
      %v797 = vpack.c.b16 %v608, %v601
      %v798 = vpack.c.b16 %v609, %v602
      %v799 = vpack.c.b16 %v610, %v603
      %v800 = vpack.c.b16 %v618, %v611
      %v801 = vpack.c.b16 %v619, %v612
      %v802 = vpack.c.b16 %v620, %v613
      %v803 = vpack.c.b16 %v621, %v614
      %v804 = vpack.c.b16 %v622, %v615
      %v805 = vpack.c.b16 %v623, %v616
      %v806 = vpack.c.b16 %v624, %v617
      %v807 = vpack.c.b16 %v632, %v625
      %v808 = vpack.c.b16 %v633, %v626
      %v809 = vpack.c.b16 %v634, %v627
      %v810 = vpack.c.b16 %v635, %v628
      %v811 = vpack.c.b16 %v636, %v629
      %v812 = vpack.c.b16 %v637, %v630
      %v813 = vpack.c.b16 %v638, %v631
      %v814 = vpack.c.b16 %v646, %v639
      %v815 = vpack.c.b16 %v647, %v640
      %v816 = vpack.c.b16 %v648, %v641
      %v817 = vpack.c.b16 %v649, %v642
      %v818 = vpack.c.b16 %v650, %v643
      %v819 = vpack.c.b16 %v651, %v644
      %v820 = vpack.c.b16 %v652, %v645
      %v821 = vpack.c.b16 %v660, %v653
      %v822 = vpack.c.b16 %v661, %v654
      %v823 = vpack.c.b16 %v662, %v655
      %v824 = vpack.c.b16 %v663, %v656
      %v825 = vpack.c.b16 %v664, %v657
      %v826 = vpack.c.b16 %v665, %v658
      %v827 = vpack.c.b16 %v666, %v659
      %v828 = vpack.c.b16 %v674, %v667
      %v829 = vpack.c.b16 %v675, %v668
      %v830 = vpack.c.b16 %v676, %v669
      %v831 = vpack.c.b16 %v677, %v670
      %v832 = vpack.c.b16 %v678, %v671
      %v833 = vpack.c.b16 %v679, %v672
      %v834 = vpack.c.b16 %v680, %v673
      %v835 = vpack.c.b16 %v688, %v681
      %v836 = vpack.c.b16 %v689, %v682
      %v837 = vpack.c.b16 %v690, %v683
      %v838 = vpack.c.b16 %v691, %v684
      %v839 = vpack.c.b16 %v692, %v685
      %v840 = vpack.c.b16 %v693, %v686
      %v841 = vpack.c.b16 %v694, %v687
      %v842 = vpack.c.b16 %v702, %v695
      %v843 = vpack.c.b16 %v703, %v696
      %v844 = vpack.c.b16 %v704, %v697
      %v845 = vpack.c.b16 %v705, %v698
      %v846 = vpack.c.b16 %v706, %v699
      %v847 = vpack.c.b16 %v707, %v700
      %v848 = vpack.c.b16 %v708, %v701
      %v849 = vpack.c.b16 %v716, %v709
      %v850 = vpack.c.b16 %v717, %v710
      %v851 = vpack.c.b16 %v718, %v711
      %v852 = vpack.c.b16 %v719, %v712
      %v853 = vpack.c.b16 %v720, %v713
      %v854 = vpack.c.b16 %v721, %v714
      %v855 = vpack.c.b16 %v722, %v715
      %v856 = vpack.c.b16 %v730, %v723
      %v857 = vpack.c.b16 %v731, %v724
      %v858 = vpack.c.b16 %v732, %v725
      %v859 = vpack.c.b16 %v733, %v726
      %v860 = vpack.c.b16 %v734, %v727
      %v861 = vpack.c.b16 %v735, %v728
      %v862 = vpack.c.b16 %v736, %v729
      %v863 = vpack.c.b16 %v744, %v737
      %v864 = vpack.c.b16 %v745, %v738
      %v865 = vpack.c.b16 %v746, %v739
      %v866 = vpack.c.b16 %v747, %v740
      %v867 = vpack.c.b16 %v748, %v741
      %v868 = vpack.c.b16 %v749, %v742
      %v869 = vpack.c.b16 %v750, %v743
      %v870 = vpack.c.b16 %v758, %v751
      %v871 = vpack.c.b16 %v759, %v752
      %v872 = vpack.c.b16 %v760, %v753
      %v873 = vpack.c.b16 %v761, %v754
      %v874 = vpack.c.b16 %v762, %v755
      %v875 = vpack.c.b16 %v763, %v756
      %v876 = vpack.c.b16 %v764, %v757
      %v1073 = vunpack.c.l.b16 %v306
      %v1074 = vunpack.c.l.b16 %v307
      %v1075 = vunpack.c.l.b16 %v308
      %v1076 = vunpack.c.l.b16 %v309
      %v1077 = vunpack.c.l.b16 %v310
      %v1078 = vunpack.c.l.b16 %v311
      %v1079 = vunpack.c.l.b16 %v312
      %v1080 = vunpack.c.l.b16 %v313
      %v1081 = vunpack.c.l.b16 %v314
      %v1082 = vunpack.c.l.b16 %v315
      %v1083 = vunpack.c.l.b16 %v316
      %v1084 = vunpack.c.l.b16 %v317
      %v1085 = vunpack.c.l.b16 %v318
      %v1086 = vunpack.c.l.b16 %v319
      %v1087 = vunpack.c.l.b16 %v320
      %v1088 = vunpack.c.l.b16 %v321
      %v1089 = vunpack.c.l.b16 %v322
      %v1090 = vunpack.c.l.b16 %v323
      %v1091 = vunpack.c.l.b16 %v324
      %v1092 = vunpack.c.l.b16 %v325
      %v1093 = vunpack.c.l.b16 %v326
      %v1094 = vunpack.c.l.b16 %v327
      %v1095 = vunpack.c.l.b16 %v328
      %v1096 = vunpack.c.l.b16 %v329
      %v1097 = vunpack.c.l.b16 %v330
      %v1098 = vunpack.c.l.b16 %v331
      %v1099 = vunpack.c.l.b16 %v332
      %v1100 = vunpack.c.l.b16 %v333
      %v1101 = vunpack.c.l.b16 %v334
      %v1102 = vunpack.c.l.b16 %v335
      %v1103 = vunpack.c.l.b16 %v336
      %v1104 = vunpack.c.l.b16 %v337
      %v1105 = vunpack.c.l.b16 %v338
      %v1106 = vunpack.c.l.b16 %v339
      %v1107 = vunpack.c.l.b16 %v340
      %v1108 = vunpack.c.l.b16 %v341
      %v1109 = vunpack.c.l.b16 %v342
      %v1110 = vunpack.c.l.b16 %v343
      %v1111 = vunpack.c.l.b16 %v344
      %v1112 = vunpack.c.l.b16 %v345
      %v1113 = vunpack.c.l.b16 %v346
      %v1114 = vunpack.c.l.b16 %v347
      %v1115 = vunpack.c.l.b16 %v348
      %v1116 = vunpack.c.l.b16 %v349
      %v1117 = vunpack.c.l.b16 %v350
      %v1118 = vunpack.c.l.b16 %v351
      %v1119 = vunpack.c.l.b16 %v352
      %v1120 = vunpack.c.l.b16 %v353
      %v1121 = vunpack.c.l.b16 %v354
      %v1122 = vunpack.c.l.b16 %v355
      %v1123 = vunpack.c.l.b16 %v356
      %v1124 = vunpack.c.l.b16 %v357
      %v1125 = vunpack.c.l.b16 %v358
      %v1126 = vunpack.c.l.b16 %v359
      %v1127 = vunpack.c.l.b16 %v360
      %v1128 = vunpack.c.l.b16 %v361
      %v1129 = vunpack.c.l.b16 %v362
      %v1130 = vunpack.c.l.b16 %v363
      %v1131 = vunpack.c.l.b16 %v364
      %v1132 = vunpack.c.l.b16 %v365
      %v1133 = vunpack.c.l.b16 %v366
      %v1134 = vunpack.c.l.b16 %v367
      %v1135 = vunpack.c.l.b16 %v368
      %v1136 = vunpack.c.l.b16 %v369
      %v1137 = vunpack.c.l.b16 %v370
      %v1138 = vunpack.c.l.b16 %v371
      %v1139 = vunpack.c.l.b16 %v372
      %v1140 = vunpack.c.l.b16 %v373
      %v1141 = vunpack.c.l.b16 %v374
      %v1142 = vunpack.c.l.b16 %v375
      %v1143 = vunpack.c.l.b16 %v376
      %v1144 = vunpack.c.l.b16 %v377
      %v1145 = vunpack.c.l.b16 %v378
      %v1146 = vunpack.c.l.b16 %v379
      %v1147 = vunpack.c.l.b16 %v380
      %v1148 = vunpack.c.l.b16 %v381
      %v1149 = vunpack.c.l.b16 %v382
      %v1150 = vunpack.c.l.b16 %v383
      %v1151 = vunpack.c.l.b16 %v384
      %v1152 = vunpack.c.l.b16 %v385
      %v1153 = vunpack.c.l.b16 %v386
      %v1154 = vunpack.c.l.b16 %v387
      %v1155 = vunpack.c.l.b16 %v388
      %v1156 = vunpack.c.l.b16 %v389
      %v1157 = vunpack.c.l.b16 %v390
      %v1158 = vunpack.c.l.b16 %v391
      %v1159 = vunpack.c.l.b16 %v392
      %v1160 = vunpack.c.l.b16 %v393
      %v1161 = vunpack.c.l.b16 %v394
      %v1162 = vunpack.c.l.b16 %v395
      %v1163 = vunpack.c.l.b16 %v396
      %v1164 = vunpack.c.l.b16 %v397
      %v1165 = vunpack.c.l.b16 %v398
      %v1166 = vunpack.c.l.b16 %v399
      %v1167 = vunpack.c.l.b16 %v400
      %v1168 = vunpack.c.l.b16 %v401
      %v1169 = vunpack.c.l.b16 %v402
      %v1170 = vunpack.c.l.b16 %v403
      %v1171 = vunpack.c.l.b16 %v404
      %v1172 = vunpack.c.l.b16 %v405
      %v1173 = vpack.c.b16 %v1074, %v1073
      %v1174 = vpack.c.b16 %v1076, %v1075
      %v1175 = vpack.c.b16 %v1078, %v1077
      %v1176 = vpack.c.b16 %v1080, %v1079
      %v1177 = vpack.c.b16 %v1082, %v1081
      %v1178 = vpack.c.b16 %v1084, %v1083
      %v1179 = vpack.c.b16 %v1086, %v1085
      %v1180 = vpack.c.b16 %v1088, %v1087
      %v1181 = vpack.c.b16 %v1090, %v1089
      %v1182 = vpack.c.b16 %v1092, %v1091
      %v1183 = vpack.c.b16 %v1094, %v1093
      %v1184 = vpack.c.b16 %v1096, %v1095
      %v1185 = vpack.c.b16 %v1098, %v1097
      %v1186 = vpack.c.b16 %v1100, %v1099
      %v1187 = vpack.c.b16 %v1102, %v1101
      %v1188 = vpack.c.b16 %v1104, %v1103
      %v1189 = vpack.c.b16 %v1106, %v1105
      %v1190 = vpack.c.b16 %v1108, %v1107
      %v1191 = vpack.c.b16 %v1110, %v1109
      %v1192 = vpack.c.b16 %v1112, %v1111
      %v1193 = vpack.c.b16 %v1114, %v1113
      %v1194 = vpack.c.b16 %v1116, %v1115
      %v1195 = vpack.c.b16 %v1118, %v1117
      %v1196 = vpack.c.b16 %v1120, %v1119
      %v1197 = vpack.c.b16 %v1122, %v1121
      %v1198 = vpack.c.b16 %v1124, %v1123
      %v1199 = vpack.c.b16 %v1126, %v1125
      %v1200 = vpack.c.b16 %v1128, %v1127
      %v1201 = vpack.c.b16 %v1130, %v1129
      %v1202 = vpack.c.b16 %v1132, %v1131
      %v1203 = vpack.c.b16 %v1134, %v1133
      %v1204 = vpack.c.b16 %v1136, %v1135
      %v1205 = vpack.c.b16 %v1138, %v1137
      %v1206 = vpack.c.b16 %v1140, %v1139
      %v1207 = vpack.c.b16 %v1142, %v1141
      %v1208 = vpack.c.b16 %v1144, %v1143
      %v1209 = vpack.c.b16 %v1146, %v1145
      %v1210 = vpack.c.b16 %v1148, %v1147
      %v1211 = vpack.c.b16 %v1150, %v1149
      %v1212 = vpack.c.b16 %v1152, %v1151
      %v1213 = vpack.c.b16 %v1154, %v1153
      %v1214 = vpack.c.b16 %v1156, %v1155
      %v1215 = vpack.c.b16 %v1158, %v1157
      %v1216 = vpack.c.b16 %v1160, %v1159
      %v1217 = vpack.c.b16 %v1162, %v1161
      %v1218 = vpack.c.b16 %v1164, %v1163
      %v1219 = vpack.c.b16 %v1166, %v1165
      %v1220 = vpack.c.b16 %v1168, %v1167
      %v1221 = vpack.c.b16 %v1170, %v1169
      %v1222 = vpack.c.b16 %v1172, %v1171
      %vm1273 = vcmask 261120
      %v1275 = vsel %vm1273, %v771, 0
      %v1278 = vsel %vm1273, %v778, 0
      %v1281 = vsel %vm1273, %v785, 0
      %v1284 = vsel %vm1273, %v792, 0
      %v1287 = vsel %vm1273, %v799, 0
      %v1290 = vsel %vm1273, %v806, 0
      %v1293 = vsel %vm1273, %v813, 0
      %v1296 = vsel %vm1273, %v820, 0
      %v1299 = vsel %vm1273, %v827, 0
      %v1302 = vsel %vm1273, %v834, 0
      %v1305 = vsel %vm1273, %v841, 0
      %v1308 = vsel %vm1273, %v848, 0
      %v1311 = vsel %vm1273, %v855, 0
      %v1314 = vsel %vm1273, %v862, 0
      %v1317 = vsel %vm1273, %v869, 0
      %v1320 = vsel %vm1273, %v876, 0
      %1322 = vmatprep.subr.bf16.mxu0 0
      %1323 = vmatpush1.bf16.msra.mxu0 %v1180
      %1324 = vmatprep.subr.bf16.mxu0 0
      %1325 = vmatpush1.bf16.msra.mxu0 %v1179
      %1326 = vmatprep.subr.bf16.mxu0 0
      %1327 = vmatpush1.bf16.msra.mxu0 %v1178
      %1328 = vmatprep.subr.bf16.mxu0 0
      %1329 = vmatpush1.bf16.msra.mxu0 %v1177
      %1330 = vmatprep.subr.bf16.mxu0 0
      %1331 = vmatpush1.bf16.msra.mxu0 %v1176
      %1332 = vmatprep.subr.bf16.mxu0 0
      %1333 = vmatpush1.bf16.msra.mxu0 %v1175
      %1334 = vmatprep.subr.bf16.mxu0 0
      %1335 = vmatpush1.bf16.msra.mxu0 %v1174
      %1336 = vmatprep.subr.bf16.mxu0 0
      %1337 = vmatpush1.bf16.msra.mxu0 %v1173
      %1338 = vmatprep.subr.bf16.mxu0 0
      %1339 = vmatpush2.bf16.msra.mxu0 %v1188
      %1340 = vmatprep.subr.bf16.mxu0 0
      %1341 = vmatpush2.bf16.msra.mxu0 %v1187
      %1342 = vmatprep.subr.bf16.mxu0 0
      %1343 = vmatpush2.bf16.msra.mxu0 %v1186
      %1344 = vmatprep.subr.bf16.mxu0 0
      %1345 = vmatpush2.bf16.msra.mxu0 %v1185
      %1346 = vmatprep.subr.bf16.mxu0 0
      %1347 = vmatpush2.bf16.msra.mxu0 %v1184
      %1348 = vmatprep.subr.bf16.mxu0 0
      %1349 = vmatpush2.bf16.msra.mxu0 %v1183
      %1350 = vmatprep.subr.bf16.mxu0 0
      %1351 = vmatpush2.bf16.msra.mxu0 %v1182
      %1352 = vmatprep.subr.bf16.mxu0 0
      %1353 = vmatpush2.bf16.msra.mxu0 %v1181
      %1354 = vmatprep.mubr.bf16.mxu0 %v766
      %1355 = vmatmul.mubr.bf16.gmra.mxu0 %v765
      %v1356 = vpop.f32.mrf.mxu0
      %v1357 = vadd.f32 %v411, %v1356
      %v1358 = vpop.f32.mrf.mxu0
      %v1359 = vpop.f32.mrf.mxu0
      %v1360 = vadd.f32 %v411, %v1359
      %v1361 = vpop.f32.mrf.mxu0
      %1362 = vmatprep.mubr.bf16.mxu0 %v773
      %1363 = vmatmul.mubr.bf16.gmra.mxu0 %v772
      %v1364 = vpop.f32.mrf.mxu0
      %v1365 = vadd.f32 %v411, %v1364
      %v1366 = vpop.f32.mrf.mxu0
      %v1367 = vpop.f32.mrf.mxu0
      %v1368 = vadd.f32 %v411, %v1367
      %v1369 = vpop.f32.mrf.mxu0
      %1370 = vmatprep.mubr.bf16.mxu0 %v780
      %1371 = vmatmul.mubr.bf16.gmra.mxu0 %v779
      %v1372 = vpop.f32.mrf.mxu0
      %v1373 = vadd.f32 %v411, %v1372
      %v1374 = vpop.f32.mrf.mxu0
      %v1375 = vpop.f32.mrf.mxu0
      %v1376 = vadd.f32 %v411, %v1375
      %v1377 = vpop.f32.mrf.mxu0
      %1378 = vmatprep.mubr.bf16.mxu0 %v787
      %1379 = vmatmul.mubr.bf16.gmra.mxu0 %v786
      %v1380 = vpop.f32.mrf.mxu0
      %v1381 = vadd.f32 %v411, %v1380
      %v1382 = vpop.f32.mrf.mxu0
      %v1383 = vpop.f32.mrf.mxu0
      %v1384 = vadd.f32 %v411, %v1383
      %v1385 = vpop.f32.mrf.mxu0
      %1386 = vmatprep.mubr.bf16.mxu0 %v794
      %1387 = vmatmul.mubr.bf16.gmra.mxu0 %v793
      %v1388 = vpop.f32.mrf.mxu0
      %v1389 = vadd.f32 %v411, %v1388
      %v1390 = vpop.f32.mrf.mxu0
      %v1391 = vpop.f32.mrf.mxu0
      %v1392 = vadd.f32 %v411, %v1391
      %v1393 = vpop.f32.mrf.mxu0
      %1394 = vmatprep.mubr.bf16.mxu0 %v801
      %1395 = vmatmul.mubr.bf16.gmra.mxu0 %v800
      %v1396 = vpop.f32.mrf.mxu0
      %v1397 = vadd.f32 %v411, %v1396
      %v1398 = vpop.f32.mrf.mxu0
      %v1399 = vpop.f32.mrf.mxu0
      %v1400 = vadd.f32 %v411, %v1399
      %v1401 = vpop.f32.mrf.mxu0
      %1402 = vmatprep.mubr.bf16.mxu0 %v808
      %1403 = vmatmul.mubr.bf16.gmra.mxu0 %v807
      %v1404 = vpop.f32.mrf.mxu0
      %v1405 = vadd.f32 %v411, %v1404
      %v1406 = vpop.f32.mrf.mxu0
      %v1407 = vpop.f32.mrf.mxu0
      %v1408 = vadd.f32 %v411, %v1407
      %v1409 = vpop.f32.mrf.mxu0
      %1410 = vmatprep.mubr.bf16.mxu0 %v815
      %1411 = vmatmul.mubr.bf16.gmra.mxu0 %v814
      %v1412 = vpop.f32.mrf.mxu0
      %v1413 = vadd.f32 %v411, %v1412
      %v1414 = vpop.f32.mrf.mxu0
      %v1415 = vpop.f32.mrf.mxu0
      %v1416 = vadd.f32 %v411, %v1415
      %v1417 = vpop.f32.mrf.mxu0
      %1418 = vmatprep.mubr.bf16.mxu0 %v822
      %1419 = vmatmul.mubr.bf16.gmra.mxu0 %v821
      %v1420 = vpop.f32.mrf.mxu0
      %v1421 = vadd.f32 %v411, %v1420
      %v1422 = vpop.f32.mrf.mxu0
      %v1423 = vpop.f32.mrf.mxu0
      %v1424 = vadd.f32 %v411, %v1423
      %v1425 = vpop.f32.mrf.mxu0
      %1426 = vmatprep.mubr.bf16.mxu0 %v829
      %1427 = vmatmul.mubr.bf16.gmra.mxu0 %v828
      %v1428 = vpop.f32.mrf.mxu0
      %v1429 = vadd.f32 %v411, %v1428
      %v1430 = vpop.f32.mrf.mxu0
      %v1431 = vpop.f32.mrf.mxu0
      %v1432 = vadd.f32 %v411, %v1431
      %v1433 = vpop.f32.mrf.mxu0
      %1434 = vmatprep.mubr.bf16.mxu0 %v836
      %1435 = vmatmul.mubr.bf16.gmra.mxu0 %v835
      %v1436 = vpop.f32.mrf.mxu0
      %v1437 = vadd.f32 %v411, %v1436
      %v1438 = vpop.f32.mrf.mxu0
      %v1439 = vpop.f32.mrf.mxu0
      %v1440 = vadd.f32 %v411, %v1439
      %v1441 = vpop.f32.mrf.mxu0
      %1442 = vmatprep.mubr.bf16.mxu0 %v843
      %1443 = vmatmul.mubr.bf16.gmra.mxu0 %v842
      %v1444 = vpop.f32.mrf.mxu0
      %v1445 = vadd.f32 %v411, %v1444
      %v1446 = vpop.f32.mrf.mxu0
      %v1447 = vpop.f32.mrf.mxu0
      %v1448 = vadd.f32 %v411, %v1447
      %v1449 = vpop.f32.mrf.mxu0
      %1450 = vmatprep.mubr.bf16.mxu0 %v850
      %1451 = vmatmul.mubr.bf16.gmra.mxu0 %v849
      %v1452 = vpop.f32.mrf.mxu0
      %v1453 = vadd.f32 %v411, %v1452
      %v1454 = vpop.f32.mrf.mxu0
      %v1455 = vpop.f32.mrf.mxu0
      %v1456 = vadd.f32 %v411, %v1455
      %v1457 = vpop.f32.mrf.mxu0
      %1458 = vmatprep.mubr.bf16.mxu0 %v857
      %1459 = vmatmul.mubr.bf16.gmra.mxu0 %v856
      %v1460 = vpop.f32.mrf.mxu0
      %v1461 = vadd.f32 %v411, %v1460
      %v1462 = vpop.f32.mrf.mxu0
      %v1463 = vpop.f32.mrf.mxu0
      %v1464 = vadd.f32 %v411, %v1463
      %v1465 = vpop.f32.mrf.mxu0
      %1466 = vmatprep.mubr.bf16.mxu0 %v864
      %1467 = vmatmul.mubr.bf16.gmra.mxu0 %v863
      %v1468 = vpop.f32.mrf.mxu0
      %v1469 = vadd.f32 %v411, %v1468
      %v1470 = vpop.f32.mrf.mxu0
      %v1471 = vpop.f32.mrf.mxu0
      %v1472 = vadd.f32 %v411, %v1471
      %v1473 = vpop.f32.mrf.mxu0
      %1474 = vmatprep.mubr.bf16.mxu0 %v871
      %1475 = vmatmul.mubr.bf16.gmra.mxu0 %v870
      %v1476 = vpop.f32.mrf.mxu0
      %v1477 = vadd.f32 %v411, %v1476
      %v1478 = vpop.f32.mrf.mxu0
      %v1479 = vpop.f32.mrf.mxu0
      %v1480 = vadd.f32 %v411, %v1479
      %v1481 = vpop.f32.mrf.mxu0
      %1482 = vdwg.mxu0
      %1483 = vmatprep.subr.bf16.mxu0 0
      %1484 = vmatpush1.bf16.msra.mxu0 %v1196
      %1485 = vmatprep.subr.bf16.mxu0 0
      %1486 = vmatpush1.bf16.msra.mxu0 %v1195
      %1487 = vmatprep.subr.bf16.mxu0 0
      %1488 = vmatpush1.bf16.msra.mxu0 %v1194
      %1489 = vmatprep.subr.bf16.mxu0 0
      %1490 = vmatpush1.bf16.msra.mxu0 %v1193
      %1491 = vmatprep.subr.bf16.mxu0 0
      %1492 = vmatpush1.bf16.msra.mxu0 %v1192
      %1493 = vmatprep.subr.bf16.mxu0 0
      %1494 = vmatpush1.bf16.msra.mxu0 %v1191
      %1495 = vmatprep.subr.bf16.mxu0 0
      %1496 = vmatpush1.bf16.msra.mxu0 %v1190
      %1497 = vmatprep.subr.bf16.mxu0 0
      %1498 = vmatpush1.bf16.msra.mxu0 %v1189
      %1499 = vmatprep.subr.bf16.mxu0 0
      %1500 = vmatpush2.bf16.msra.mxu0 %v1204
      %1501 = vmatprep.subr.bf16.mxu0 0
      %1502 = vmatpush2.bf16.msra.mxu0 %v1203
      %1503 = vmatprep.subr.bf16.mxu0 0
      %1504 = vmatpush2.bf16.msra.mxu0 %v1202
      %1505 = vmatprep.subr.bf16.mxu0 0
      %1506 = vmatpush2.bf16.msra.mxu0 %v1201
      %1507 = vmatprep.subr.bf16.mxu0 0
      %1508 = vmatpush2.bf16.msra.mxu0 %v1200
      %1509 = vmatprep.subr.bf16.mxu0 0
      %1510 = vmatpush2.bf16.msra.mxu0 %v1199
      %1511 = vmatprep.subr.bf16.mxu0 0
      %1512 = vmatpush2.bf16.msra.mxu0 %v1198
      %1513 = vmatprep.subr.bf16.mxu0 0
      %1514 = vmatpush2.bf16.msra.mxu0 %v1197
      %1515 = vmatprep.mubr.bf16.mxu0 %v768
      %1516 = vmatmul.mubr.bf16.gmra.mxu0 %v767
      %v1517 = vpop.f32.mrf.mxu0
      %v1518 = vadd.f32 %v1357, %v1517
      %v1519 = vpop.f32.mrf.mxu0
      %v1520 = vpop.f32.mrf.mxu0
      %v1521 = vadd.f32 %v1360, %v1520
      %v1522 = vpop.f32.mrf.mxu0
      %1523 = vmatprep.mubr.bf16.mxu0 %v775
      %1524 = vmatmul.mubr.bf16.gmra.mxu0 %v774
      %v1525 = vpop.f32.mrf.mxu0
      %v1526 = vadd.f32 %v1365, %v1525
      %v1527 = vpop.f32.mrf.mxu0
      %v1528 = vpop.f32.mrf.mxu0
      %v1529 = vadd.f32 %v1368, %v1528
      %v1530 = vpop.f32.mrf.mxu0
      %1531 = vmatprep.mubr.bf16.mxu0 %v782
      %1532 = vmatmul.mubr.bf16.gmra.mxu0 %v781
      %v1533 = vpop.f32.mrf.mxu0
      %v1534 = vadd.f32 %v1373, %v1533
      %v1535 = vpop.f32.mrf.mxu0
      %v1536 = vpop.f32.mrf.mxu0
      %v1537 = vadd.f32 %v1376, %v1536
      %v1538 = vpop.f32.mrf.mxu0
      %1539 = vmatprep.mubr.bf16.mxu0 %v789
      %1540 = vmatmul.mubr.bf16.gmra.mxu0 %v788
      %v1541 = vpop.f32.mrf.mxu0
      %v1542 = vadd.f32 %v1381, %v1541
      %v1543 = vpop.f32.mrf.mxu0
      %v1544 = vpop.f32.mrf.mxu0
      %v1545 = vadd.f32 %v1384, %v1544
      %v1546 = vpop.f32.mrf.mxu0
      %1547 = vmatprep.mubr.bf16.mxu0 %v796
      %1548 = vmatmul.mubr.bf16.gmra.mxu0 %v795
      %v1549 = vpop.f32.mrf.mxu0
      %v1550 = vadd.f32 %v1389, %v1549
      %v1551 = vpop.f32.mrf.mxu0
      %v1552 = vpop.f32.mrf.mxu0
      %v1553 = vadd.f32 %v1392, %v1552
      %v1554 = vpop.f32.mrf.mxu0
      %1555 = vmatprep.mubr.bf16.mxu0 %v803
      %1556 = vmatmul.mubr.bf16.gmra.mxu0 %v802
      %v1557 = vpop.f32.mrf.mxu0
      %v1558 = vadd.f32 %v1397, %v1557
      %v1559 = vpop.f32.mrf.mxu0
      %v1560 = vpop.f32.mrf.mxu0
      %v1561 = vadd.f32 %v1400, %v1560
      %v1562 = vpop.f32.mrf.mxu0
      %1563 = vmatprep.mubr.bf16.mxu0 %v810
      %1564 = vmatmul.mubr.bf16.gmra.mxu0 %v809
      %v1565 = vpop.f32.mrf.mxu0
      %v1566 = vadd.f32 %v1405, %v1565
      %v1567 = vpop.f32.mrf.mxu0
      %v1568 = vpop.f32.mrf.mxu0
      %v1569 = vadd.f32 %v1408, %v1568
      %v1570 = vpop.f32.mrf.mxu0
      %1571 = vmatprep.mubr.bf16.mxu0 %v817
      %1572 = vmatmul.mubr.bf16.gmra.mxu0 %v816
      %v1573 = vpop.f32.mrf.mxu0
      %v1574 = vadd.f32 %v1413, %v1573
      %v1575 = vpop.f32.mrf.mxu0
      %v1576 = vpop.f32.mrf.mxu0
      %v1577 = vadd.f32 %v1416, %v1576
      %v1578 = vpop.f32.mrf.mxu0
      %1579 = vmatprep.mubr.bf16.mxu0 %v824
      %1580 = vmatmul.mubr.bf16.gmra.mxu0 %v823
      %v1581 = vpop.f32.mrf.mxu0
      %v1582 = vadd.f32 %v1421, %v1581
      %v1583 = vpop.f32.mrf.mxu0
      %v1584 = vpop.f32.mrf.mxu0
      %v1585 = vadd.f32 %v1424, %v1584
      %v1586 = vpop.f32.mrf.mxu0
      %1587 = vmatprep.mubr.bf16.mxu0 %v831
      %1588 = vmatmul.mubr.bf16.gmra.mxu0 %v830
      %v1589 = vpop.f32.mrf.mxu0
      %v1590 = vadd.f32 %v1429, %v1589
      %v1591 = vpop.f32.mrf.mxu0
      %v1592 = vpop.f32.mrf.mxu0
      %v1593 = vadd.f32 %v1432, %v1592
      %v1594 = vpop.f32.mrf.mxu0
      %1595 = vmatprep.mubr.bf16.mxu0 %v838
      %1596 = vmatmul.mubr.bf16.gmra.mxu0 %v837
      %v1597 = vpop.f32.mrf.mxu0
      %v1598 = vadd.f32 %v1437, %v1597
      %v1599 = vpop.f32.mrf.mxu0
      %v1600 = vpop.f32.mrf.mxu0
      %v1601 = vadd.f32 %v1440, %v1600
      %v1602 = vpop.f32.mrf.mxu0
      %1603 = vmatprep.mubr.bf16.mxu0 %v845
      %1604 = vmatmul.mubr.bf16.gmra.mxu0 %v844
      %v1605 = vpop.f32.mrf.mxu0
      %v1606 = vadd.f32 %v1445, %v1605
      %v1607 = vpop.f32.mrf.mxu0
      %v1608 = vpop.f32.mrf.mxu0
      %v1609 = vadd.f32 %v1448, %v1608
      %v1610 = vpop.f32.mrf.mxu0
      %1611 = vmatprep.mubr.bf16.mxu0 %v852
      %1612 = vmatmul.mubr.bf16.gmra.mxu0 %v851
      %v1613 = vpop.f32.mrf.mxu0
      %v1614 = vadd.f32 %v1453, %v1613
      %v1615 = vpop.f32.mrf.mxu0
      %v1616 = vpop.f32.mrf.mxu0
      %v1617 = vadd.f32 %v1456, %v1616
      %v1618 = vpop.f32.mrf.mxu0
      %1619 = vmatprep.mubr.bf16.mxu0 %v859
      %1620 = vmatmul.mubr.bf16.gmra.mxu0 %v858
      %v1621 = vpop.f32.mrf.mxu0
      %v1622 = vadd.f32 %v1461, %v1621
      %v1623 = vpop.f32.mrf.mxu0
      %v1624 = vpop.f32.mrf.mxu0
      %v1625 = vadd.f32 %v1464, %v1624
      %v1626 = vpop.f32.mrf.mxu0
      %1627 = vmatprep.mubr.bf16.mxu0 %v866
      %1628 = vmatmul.mubr.bf16.gmra.mxu0 %v865
      %v1629 = vpop.f32.mrf.mxu0
      %v1630 = vadd.f32 %v1469, %v1629
      %v1631 = vpop.f32.mrf.mxu0
      %v1632 = vpop.f32.mrf.mxu0
      %v1633 = vadd.f32 %v1472, %v1632
      %v1634 = vpop.f32.mrf.mxu0
      %1635 = vmatprep.mubr.bf16.mxu0 %v873
      %1636 = vmatmul.mubr.bf16.gmra.mxu0 %v872
      %v1637 = vpop.f32.mrf.mxu0
      %v1638 = vadd.f32 %v1477, %v1637
      %v1639 = vpop.f32.mrf.mxu0
      %v1640 = vpop.f32.mrf.mxu0
      %v1641 = vadd.f32 %v1480, %v1640
      %v1642 = vpop.f32.mrf.mxu0
      %1643 = vdwg.mxu0
      %1644 = vmatprep.subr.bf16.mxu0 0
      %1645 = vmatpush1.bf16.msra.mxu0 %v1212
      %1646 = vmatprep.subr.bf16.mxu0 0
      %1647 = vmatpush1.bf16.msra.mxu0 %v1211
      %1648 = vmatprep.subr.bf16.mxu0 0
      %1649 = vmatpush1.bf16.msra.mxu0 %v1210
      %1650 = vmatprep.subr.bf16.mxu0 0
      %1651 = vmatpush1.bf16.msra.mxu0 %v1209
      %1652 = vmatprep.subr.bf16.mxu0 0
      %1653 = vmatpush1.bf16.msra.mxu0 %v1208
      %1654 = vmatprep.subr.bf16.mxu0 0
      %1655 = vmatpush1.bf16.msra.mxu0 %v1207
      %1656 = vmatprep.subr.bf16.mxu0 0
      %1657 = vmatpush1.bf16.msra.mxu0 %v1206
      %1658 = vmatprep.subr.bf16.mxu0 0
      %1659 = vmatpush1.bf16.msra.mxu0 %v1205
      %1660 = vmatprep.subr.bf16.mxu0 0
      %1661 = vmatpush2.bf16.msra.mxu0 %v1220
      %1662 = vmatprep.subr.bf16.mxu0 0
      %1663 = vmatpush2.bf16.msra.mxu0 %v1219
      %1664 = vmatprep.subr.bf16.mxu0 0
      %1665 = vmatpush2.bf16.msra.mxu0 %v1218
      %1666 = vmatprep.subr.bf16.mxu0 0
      %1667 = vmatpush2.bf16.msra.mxu0 %v1217
      %1668 = vmatprep.subr.bf16.mxu0 0
      %1669 = vmatpush2.bf16.msra.mxu0 %v1216
      %1670 = vmatprep.subr.bf16.mxu0 0
      %1671 = vmatpush2.bf16.msra.mxu0 %v1215
      %1672 = vmatprep.subr.bf16.mxu0 0
      %1673 = vmatpush2.bf16.msra.mxu0 %v1214
      %1674 = vmatprep.subr.bf16.mxu0 0
      %1675 = vmatpush2.bf16.msra.mxu0 %v1213
      %1676 = vmatprep.mubr.bf16.mxu0 %v770
      %1677 = vmatmul.mubr.bf16.gmra.mxu0 %v769
      %v1678 = vpop.f32.mrf.mxu0
      %v1679 = vadd.f32 %v1518, %v1678
      %v1680 = vpop.f32.mrf.mxu0
      %v1681 = vpop.f32.mrf.mxu0
      %v1682 = vadd.f32 %v1521, %v1681
      %v1683 = vpop.f32.mrf.mxu0
      %1684 = vmatprep.mubr.bf16.mxu0 %v777
      %1685 = vmatmul.mubr.bf16.gmra.mxu0 %v776
      %v1686 = vpop.f32.mrf.mxu0
      %v1687 = vadd.f32 %v1526, %v1686
      %v1688 = vpop.f32.mrf.mxu0
      %v1689 = vpop.f32.mrf.mxu0
      %v1690 = vadd.f32 %v1529, %v1689
      %v1691 = vpop.f32.mrf.mxu0
      %1692 = vmatprep.mubr.bf16.mxu0 %v784
      %1693 = vmatmul.mubr.bf16.gmra.mxu0 %v783
      %v1694 = vpop.f32.mrf.mxu0
      %v1695 = vadd.f32 %v1534, %v1694
      %v1696 = vpop.f32.mrf.mxu0
      %v1697 = vpop.f32.mrf.mxu0
      %v1698 = vadd.f32 %v1537, %v1697
      %v1699 = vpop.f32.mrf.mxu0
      %1700 = vmatprep.mubr.bf16.mxu0 %v791
      %1701 = vmatmul.mubr.bf16.gmra.mxu0 %v790
      %v1702 = vpop.f32.mrf.mxu0
      %v1703 = vadd.f32 %v1542, %v1702
      %v1704 = vpop.f32.mrf.mxu0
      %v1705 = vpop.f32.mrf.mxu0
      %v1706 = vadd.f32 %v1545, %v1705
      %v1707 = vpop.f32.mrf.mxu0
      %1708 = vmatprep.mubr.bf16.mxu0 %v798
      %1709 = vmatmul.mubr.bf16.gmra.mxu0 %v797
      %v1710 = vpop.f32.mrf.mxu0
      %v1711 = vadd.f32 %v1550, %v1710
      %v1712 = vpop.f32.mrf.mxu0
      %v1713 = vpop.f32.mrf.mxu0
      %v1714 = vadd.f32 %v1553, %v1713
      %v1715 = vpop.f32.mrf.mxu0
      %1716 = vmatprep.mubr.bf16.mxu0 %v805
      %1717 = vmatmul.mubr.bf16.gmra.mxu0 %v804
      %v1718 = vpop.f32.mrf.mxu0
      %v1719 = vadd.f32 %v1558, %v1718
      %v1720 = vpop.f32.mrf.mxu0
      %v1721 = vpop.f32.mrf.mxu0
      %v1722 = vadd.f32 %v1561, %v1721
      %v1723 = vpop.f32.mrf.mxu0
      %1724 = vmatprep.mubr.bf16.mxu0 %v812
      %1725 = vmatmul.mubr.bf16.gmra.mxu0 %v811
      %v1726 = vpop.f32.mrf.mxu0
      %v1727 = vadd.f32 %v1566, %v1726
      %v1728 = vpop.f32.mrf.mxu0
      %v1729 = vpop.f32.mrf.mxu0
      %v1730 = vadd.f32 %v1569, %v1729
      %v1731 = vpop.f32.mrf.mxu0
      %1732 = vmatprep.mubr.bf16.mxu0 %v819
      %1733 = vmatmul.mubr.bf16.gmra.mxu0 %v818
      %v1734 = vpop.f32.mrf.mxu0
      %v1735 = vadd.f32 %v1574, %v1734
      %v1736 = vpop.f32.mrf.mxu0
      %v1737 = vpop.f32.mrf.mxu0
      %v1738 = vadd.f32 %v1577, %v1737
      %v1739 = vpop.f32.mrf.mxu0
      %1740 = vmatprep.mubr.bf16.mxu0 %v826
      %1741 = vmatmul.mubr.bf16.gmra.mxu0 %v825
      %v1742 = vpop.f32.mrf.mxu0
      %v1743 = vadd.f32 %v1582, %v1742
      %v1744 = vpop.f32.mrf.mxu0
      %v1745 = vpop.f32.mrf.mxu0
      %v1746 = vadd.f32 %v1585, %v1745
      %v1747 = vpop.f32.mrf.mxu0
      %1748 = vmatprep.mubr.bf16.mxu0 %v833
      %1749 = vmatmul.mubr.bf16.gmra.mxu0 %v832
      %v1750 = vpop.f32.mrf.mxu0
      %v1751 = vadd.f32 %v1590, %v1750
      %v1752 = vpop.f32.mrf.mxu0
      %v1753 = vpop.f32.mrf.mxu0
      %v1754 = vadd.f32 %v1593, %v1753
      %v1755 = vpop.f32.mrf.mxu0
      %1756 = vmatprep.mubr.bf16.mxu0 %v840
      %1757 = vmatmul.mubr.bf16.gmra.mxu0 %v839
      %v1758 = vpop.f32.mrf.mxu0
      %v1759 = vadd.f32 %v1598, %v1758
      %v1760 = vpop.f32.mrf.mxu0
      %v1761 = vpop.f32.mrf.mxu0
      %v1762 = vadd.f32 %v1601, %v1761
      %v1763 = vpop.f32.mrf.mxu0
      %1764 = vmatprep.mubr.bf16.mxu0 %v847
      %1765 = vmatmul.mubr.bf16.gmra.mxu0 %v846
      %v1766 = vpop.f32.mrf.mxu0
      %v1767 = vadd.f32 %v1606, %v1766
      %v1768 = vpop.f32.mrf.mxu0
      %v1769 = vpop.f32.mrf.mxu0
      %v1770 = vadd.f32 %v1609, %v1769
      %v1771 = vpop.f32.mrf.mxu0
      %1772 = vmatprep.mubr.bf16.mxu0 %v854
      %1773 = vmatmul.mubr.bf16.gmra.mxu0 %v853
      %v1774 = vpop.f32.mrf.mxu0
      %v1775 = vadd.f32 %v1614, %v1774
      %v1776 = vpop.f32.mrf.mxu0
      %v1777 = vpop.f32.mrf.mxu0
      %v1778 = vadd.f32 %v1617, %v1777
      %v1779 = vpop.f32.mrf.mxu0
      %1780 = vmatprep.mubr.bf16.mxu0 %v861
      %1781 = vmatmul.mubr.bf16.gmra.mxu0 %v860
      %v1782 = vpop.f32.mrf.mxu0
      %v1783 = vadd.f32 %v1622, %v1782
      %v1784 = vpop.f32.mrf.mxu0
      %v1785 = vpop.f32.mrf.mxu0
      %v1786 = vadd.f32 %v1625, %v1785
      %v1787 = vpop.f32.mrf.mxu0
      %1788 = vmatprep.mubr.bf16.mxu0 %v868
      %1789 = vmatmul.mubr.bf16.gmra.mxu0 %v867
      %v1790 = vpop.f32.mrf.mxu0
      %v1791 = vadd.f32 %v1630, %v1790
      %v1792 = vpop.f32.mrf.mxu0
      %v1793 = vpop.f32.mrf.mxu0
      %v1794 = vadd.f32 %v1633, %v1793
      %v1795 = vpop.f32.mrf.mxu0
      %1796 = vmatprep.mubr.bf16.mxu0 %v875
      %1797 = vmatmul.mubr.bf16.gmra.mxu0 %v874
      %v1798 = vpop.f32.mrf.mxu0
      %v1799 = vadd.f32 %v1638, %v1798
      %v1800 = vpop.f32.mrf.mxu0
      %v1801 = vpop.f32.mrf.mxu0
      %v1802 = vadd.f32 %v1641, %v1801
      %v1803 = vpop.f32.mrf.mxu0
      %1804 = vdwg.mxu0
      %1805 = vmatprep.subr.bf16.mxu0 0
      %1806 = vmatpush1.bf16.msra.mxu0 0
      %1807 = vmatprep.subr.bf16.mxu0 0
      %1808 = vmatpush1.bf16.msra.mxu0 0
      %1809 = vmatprep.subr.bf16.mxu0 0
      %1810 = vmatpush1.bf16.msra.mxu0 0
      %1811 = vmatprep.subr.bf16.mxu0 0
      %1812 = vmatpush1.bf16.msra.mxu0 0
      %1813 = vmatprep.subr.bf16.mxu0 0
      %1814 = vmatpush1.bf16.msra.mxu0 0
      %1815 = vmatprep.subr.bf16.mxu0 0
      %1816 = vmatpush1.bf16.msra.mxu0 0
      %1817 = vmatprep.subr.bf16.mxu0 0
      %1818 = vmatpush1.bf16.msra.mxu0 %v1222
      %1819 = vmatprep.subr.bf16.mxu0 0
      %1820 = vmatpush1.bf16.msra.mxu0 %v1221
      %1821 = vmatprep.subr.bf16.mxu0 0
      %1822 = vmatpush2.bf16.msra.mxu0 0
      %1823 = vmatprep.subr.bf16.mxu0 0
      %1824 = vmatpush2.bf16.msra.mxu0 0
      %1825 = vmatprep.subr.bf16.mxu0 0
      %1826 = vmatpush2.bf16.msra.mxu0 0
      %1827 = vmatprep.subr.bf16.mxu0 0
      %1828 = vmatpush2.bf16.msra.mxu0 0
      %1829 = vmatprep.subr.bf16.mxu0 0
      %1830 = vmatpush2.bf16.msra.mxu0 0
      %1831 = vmatprep.subr.bf16.mxu0 0
      %1832 = vmatpush2.bf16.msra.mxu0 0
      %1833 = vmatprep.subr.bf16.mxu0 0
      %1834 = vmatpush2.bf16.msra.mxu0 0
      %1835 = vmatprep.subr.bf16.mxu0 0
      %1836 = vmatpush2.bf16.msra.mxu0 0
      %1837 = vmatprep.mubr.bf16.mxu0 0
      %1838 = vmatmul.mubr.bf16.gmra.mxu0 %v1275
      %v1839 = vpop.f32.mrf.mxu0
      %v1840 = vadd.f32 %v1679, %v1839
      %v1841 = vpop.f32.mrf.mxu0
      %v1842 = vpop.f32.mrf.mxu0
      %v1843 = vadd.f32 %v1682, %v1842
      %v1844 = vpop.f32.mrf.mxu0
      %1845 = vmatprep.mubr.bf16.mxu0 0
      %1846 = vmatmul.mubr.bf16.gmra.mxu0 %v1278
      %v1847 = vpop.f32.mrf.mxu0
      %v1848 = vadd.f32 %v1687, %v1847
      %v1849 = vpop.f32.mrf.mxu0
      %v1850 = vpop.f32.mrf.mxu0
      %v1851 = vadd.f32 %v1690, %v1850
      %v1852 = vpop.f32.mrf.mxu0
      %1853 = vmatprep.mubr.bf16.mxu0 0
      %1854 = vmatmul.mubr.bf16.gmra.mxu0 %v1281
      %v1855 = vpop.f32.mrf.mxu0
      %v1856 = vadd.f32 %v1695, %v1855
      %v1857 = vpop.f32.mrf.mxu0
      %v1858 = vpop.f32.mrf.mxu0
      %v1859 = vadd.f32 %v1698, %v1858
      %v1860 = vpop.f32.mrf.mxu0
      %1861 = vmatprep.mubr.bf16.mxu0 0
      %1862 = vmatmul.mubr.bf16.gmra.mxu0 %v1284
      %v1863 = vpop.f32.mrf.mxu0
      %v1864 = vadd.f32 %v1703, %v1863
      %v1865 = vpop.f32.mrf.mxu0
      %v1866 = vpop.f32.mrf.mxu0
      %v1867 = vadd.f32 %v1706, %v1866
      %v1868 = vpop.f32.mrf.mxu0
      %1869 = vmatprep.mubr.bf16.mxu0 0
      %1870 = vmatmul.mubr.bf16.gmra.mxu0 %v1287
      %v1871 = vpop.f32.mrf.mxu0
      %v1872 = vadd.f32 %v1711, %v1871
      %v1873 = vpop.f32.mrf.mxu0
      %v1874 = vpop.f32.mrf.mxu0
      %v1875 = vadd.f32 %v1714, %v1874
      %v1876 = vpop.f32.mrf.mxu0
      %1877 = vmatprep.mubr.bf16.mxu0 0
      %1878 = vmatmul.mubr.bf16.gmra.mxu0 %v1290
      %v1879 = vpop.f32.mrf.mxu0
      %v1880 = vadd.f32 %v1719, %v1879
      %v1881 = vpop.f32.mrf.mxu0
      %v1882 = vpop.f32.mrf.mxu0
      %v1883 = vadd.f32 %v1722, %v1882
      %v1884 = vpop.f32.mrf.mxu0
      %1885 = vmatprep.mubr.bf16.mxu0 0
      %1886 = vmatmul.mubr.bf16.gmra.mxu0 %v1293
      %v1887 = vpop.f32.mrf.mxu0
      %v1888 = vadd.f32 %v1727, %v1887
      %v1889 = vpop.f32.mrf.mxu0
      %v1890 = vpop.f32.mrf.mxu0
      %v1891 = vadd.f32 %v1730, %v1890
      %v1892 = vpop.f32.mrf.mxu0
      %1893 = vmatprep.mubr.bf16.mxu0 0
      %1894 = vmatmul.mubr.bf16.gmra.mxu0 %v1296
      %v1895 = vpop.f32.mrf.mxu0
      %v1896 = vadd.f32 %v1735, %v1895
      %v1897 = vpop.f32.mrf.mxu0
      %v1898 = vpop.f32.mrf.mxu0
      %v1899 = vadd.f32 %v1738, %v1898
      %v1900 = vpop.f32.mrf.mxu0
      %1901 = vmatprep.mubr.bf16.mxu0 0
      %1902 = vmatmul.mubr.bf16.gmra.mxu0 %v1299
      %v1903 = vpop.f32.mrf.mxu0
      %v1904 = vadd.f32 %v1743, %v1903
      %v1905 = vpop.f32.mrf.mxu0
      %v1906 = vpop.f32.mrf.mxu0
      %v1907 = vadd.f32 %v1746, %v1906
      %v1908 = vpop.f32.mrf.mxu0
      %1909 = vmatprep.mubr.bf16.mxu0 0
      %1910 = vmatmul.mubr.bf16.gmra.mxu0 %v1302
      %v1911 = vpop.f32.mrf.mxu0
      %v1912 = vadd.f32 %v1751, %v1911
      %v1913 = vpop.f32.mrf.mxu0
      %v1914 = vpop.f32.mrf.mxu0
      %v1915 = vadd.f32 %v1754, %v1914
      %v1916 = vpop.f32.mrf.mxu0
      %1917 = vmatprep.mubr.bf16.mxu0 0
      %1918 = vmatmul.mubr.bf16.gmra.mxu0 %v1305
      %v1919 = vpop.f32.mrf.mxu0
      %v1920 = vadd.f32 %v1759, %v1919
      %v1921 = vpop.f32.mrf.mxu0
      %v1922 = vpop.f32.mrf.mxu0
      %v1923 = vadd.f32 %v1762, %v1922
      %v1924 = vpop.f32.mrf.mxu0
      %1925 = vmatprep.mubr.bf16.mxu0 0
      %1926 = vmatmul.mubr.bf16.gmra.mxu0 %v1308
      %v1927 = vpop.f32.mrf.mxu0
      %v1928 = vadd.f32 %v1767, %v1927
      %v1929 = vpop.f32.mrf.mxu0
      %v1930 = vpop.f32.mrf.mxu0
      %v1931 = vadd.f32 %v1770, %v1930
      %v1932 = vpop.f32.mrf.mxu0
      %1933 = vmatprep.mubr.bf16.mxu0 0
      %1934 = vmatmul.mubr.bf16.gmra.mxu0 %v1311
      %v1935 = vpop.f32.mrf.mxu0
      %v1936 = vadd.f32 %v1775, %v1935
      %v1937 = vpop.f32.mrf.mxu0
      %v1938 = vpop.f32.mrf.mxu0
      %v1939 = vadd.f32 %v1778, %v1938
      %v1940 = vpop.f32.mrf.mxu0
      %1941 = vmatprep.mubr.bf16.mxu0 0
      %1942 = vmatmul.mubr.bf16.gmra.mxu0 %v1314
      %v1943 = vpop.f32.mrf.mxu0
      %v1944 = vadd.f32 %v1783, %v1943
      %v1945 = vpop.f32.mrf.mxu0
      %v1946 = vpop.f32.mrf.mxu0
      %v1947 = vadd.f32 %v1786, %v1946
      %v1948 = vpop.f32.mrf.mxu0
      %1949 = vmatprep.mubr.bf16.mxu0 0
      %1950 = vmatmul.mubr.bf16.gmra.mxu0 %v1317
      %v1951 = vpop.f32.mrf.mxu0
      %v1952 = vadd.f32 %v1791, %v1951
      %v1953 = vpop.f32.mrf.mxu0
      %v1954 = vpop.f32.mrf.mxu0
      %v1955 = vadd.f32 %v1794, %v1954
      %v1956 = vpop.f32.mrf.mxu0
      %1957 = vmatprep.mubr.bf16.mxu0 0
      %1958 = vmatmul.mubr.bf16.gmra.mxu0 %v1320
      %v1959 = vpop.f32.mrf.mxu0
      %v1960 = vadd.f32 %v1799, %v1959
      %v1961 = vpop.f32.mrf.mxu0
      %v1962 = vpop.f32.mrf.mxu0
      %v1963 = vadd.f32 %v1802, %v1962
      %v1964 = vpop.f32.mrf.mxu0
      %1965 = vdwg.mxu0
      %v1966 = vxor.u32 %v1840, 2147483648
      %v1967 = vxor.u32 %v1843, 2147483648
      %v1968 = vxor.u32 %v1848, 2147483648
      %v1969 = vxor.u32 %v1851, 2147483648
      %v1970 = vxor.u32 %v1856, 2147483648
      %v1971 = vxor.u32 %v1859, 2147483648
      %v1972 = vxor.u32 %v1864, 2147483648
      %v1973 = vxor.u32 %v1867, 2147483648
      %v1974 = vxor.u32 %v1872, 2147483648
      %v1975 = vxor.u32 %v1875, 2147483648
      %v1976 = vxor.u32 %v1880, 2147483648
      %v1977 = vxor.u32 %v1883, 2147483648
      %v1978 = vxor.u32 %v1888, 2147483648
      %v1979 = vxor.u32 %v1891, 2147483648
      %v1980 = vxor.u32 %v1896, 2147483648
      %v1981 = vxor.u32 %v1899, 2147483648
      %v1982 = vxor.u32 %v1904, 2147483648
      %v1983 = vxor.u32 %v1907, 2147483648
      %v1984 = vxor.u32 %v1912, 2147483648
      %v1985 = vxor.u32 %v1915, 2147483648
      %v1986 = vxor.u32 %v1920, 2147483648
      %v1987 = vxor.u32 %v1923, 2147483648
      %v1988 = vxor.u32 %v1928, 2147483648
      %v1989 = vxor.u32 %v1931, 2147483648
      %v1990 = vxor.u32 %v1936, 2147483648
      %v1991 = vxor.u32 %v1939, 2147483648
      %v1992 = vxor.u32 %v1944, 2147483648
      %v1993 = vxor.u32 %v1947, 2147483648
      %v1994 = vxor.u32 %v1952, 2147483648
      %v1995 = vxor.u32 %v1955, 2147483648
      %v1996 = vxor.u32 %v1960, 2147483648
      %v1997 = vxor.u32 %v1963, 2147483648
      %v1998 = vmul.f32 %v1966, 1.442695
      %v1999 = vpow.pop %v1998
      %v2000 = vmul.f32 %v1967, 1.442695
      %v2001 = vpow.pop %v2000
      %v2002 = vmul.f32 %v1968, 1.442695
      %v2003 = vpow.pop %v2002
      %v2004 = vmul.f32 %v1969, 1.442695
      %v2005 = vpow.pop %v2004
      %v2006 = vmul.f32 %v1970, 1.442695
      %v2007 = vpow.pop %v2006
      %v2008 = vmul.f32 %v1971, 1.442695
      %v2009 = vpow.pop %v2008
      %v2010 = vmul.f32 %v1972, 1.442695
      %v2011 = vpow.pop %v2010
      %v2012 = vmul.f32 %v1973, 1.442695
      %v2013 = vpow.pop %v2012
      %v2014 = vmul.f32 %v1974, 1.442695
      %v2015 = vpow.pop %v2014
      %v2016 = vmul.f32 %v1975, 1.442695
      %v2017 = vpow.pop %v2016
      %v2018 = vmul.f32 %v1976, 1.442695
      %v2019 = vpow.pop %v2018
      %v2020 = vmul.f32 %v1977, 1.442695
      %v2021 = vpow.pop %v2020
      %v2022 = vmul.f32 %v1978, 1.442695
      %v2023 = vpow.pop %v2022
      %v2024 = vmul.f32 %v1979, 1.442695
      %v2025 = vpow.pop %v2024
      %v2026 = vmul.f32 %v1980, 1.442695
      %v2027 = vpow.pop %v2026
      %v2028 = vmul.f32 %v1981, 1.442695
      %v2029 = vpow.pop %v2028
      %v2030 = vmul.f32 %v1982, 1.442695
      %v2031 = vpow.pop %v2030
      %v2032 = vmul.f32 %v1983, 1.442695
      %v2033 = vpow.pop %v2032
      %v2034 = vmul.f32 %v1984, 1.442695
      %v2035 = vpow.pop %v2034
      %v2036 = vmul.f32 %v1985, 1.442695
      %v2037 = vpow.pop %v2036
      %v2038 = vmul.f32 %v1986, 1.442695
      %v2039 = vpow.pop %v2038
      %v2040 = vmul.f32 %v1987, 1.442695
      %v2041 = vpow.pop %v2040
      %v2042 = vmul.f32 %v1988, 1.442695
      %v2043 = vpow.pop %v2042
      %v2044 = vmul.f32 %v1989, 1.442695
      %v2045 = vpow.pop %v2044
      %v2046 = vmul.f32 %v1990, 1.442695
      %v2047 = vpow.pop %v2046
      %v2048 = vmul.f32 %v1991, 1.442695
      %v2049 = vpow.pop %v2048
      %v2050 = vmul.f32 %v1992, 1.442695
      %v2051 = vpow.pop %v2050
      %v2052 = vmul.f32 %v1993, 1.442695
      %v2053 = vpow.pop %v2052
      %v2054 = vmul.f32 %v1994, 1.442695
      %v2055 = vpow.pop %v2054
      %v2056 = vmul.f32 %v1995, 1.442695
      %v2057 = vpow.pop %v2056
      %v2058 = vmul.f32 %v1996, 1.442695
      %v2059 = vpow.pop %v2058
      %v2060 = vmul.f32 %v1997, 1.442695
      %v2061 = vpow.pop %v2060
      %v2062 = vadd.f32 %v1999, 1.0
      %v2063 = vadd.f32 %v2001, 1.0
      %v2064 = vadd.f32 %v2003, 1.0
      %v2065 = vadd.f32 %v2005, 1.0
      %v2066 = vadd.f32 %v2007, 1.0
      %v2067 = vadd.f32 %v2009, 1.0
      %v2068 = vadd.f32 %v2011, 1.0
      %v2069 = vadd.f32 %v2013, 1.0
      %v2070 = vadd.f32 %v2015, 1.0
      %v2071 = vadd.f32 %v2017, 1.0
      %v2072 = vadd.f32 %v2019, 1.0
      %v2073 = vadd.f32 %v2021, 1.0
      %v2074 = vadd.f32 %v2023, 1.0
      %v2075 = vadd.f32 %v2025, 1.0
      %v2076 = vadd.f32 %v2027, 1.0
      %v2077 = vadd.f32 %v2029, 1.0
      %v2078 = vadd.f32 %v2031, 1.0
      %v2079 = vadd.f32 %v2033, 1.0
      %v2080 = vadd.f32 %v2035, 1.0
      %v2081 = vadd.f32 %v2037, 1.0
      %v2082 = vadd.f32 %v2039, 1.0
      %v2083 = vadd.f32 %v2041, 1.0
      %v2084 = vadd.f32 %v2043, 1.0
      %v2085 = vadd.f32 %v2045, 1.0
      %v2086 = vadd.f32 %v2047, 1.0
      %v2087 = vadd.f32 %v2049, 1.0
      %v2088 = vadd.f32 %v2051, 1.0
      %v2089 = vadd.f32 %v2053, 1.0
      %v2090 = vadd.f32 %v2055, 1.0
      %v2091 = vadd.f32 %v2057, 1.0
      %v2092 = vadd.f32 %v2059, 1.0
      %v2093 = vadd.f32 %v2061, 1.0
      %v2094 = vrcp.pop %v2062
      %v2095 = vmul.f32 1.0, %v2094
      %v2096 = vrcp.pop %v2063
      %v2097 = vmul.f32 1.0, %v2096
      %v2098 = vrcp.pop %v2064
      %v2099 = vmul.f32 1.0, %v2098
      %v2100 = vrcp.pop %v2065
      %v2101 = vmul.f32 1.0, %v2100
      %v2102 = vrcp.pop %v2066
      %v2103 = vmul.f32 1.0, %v2102
      %v2104 = vrcp.pop %v2067
      %v2105 = vmul.f32 1.0, %v2104
      %v2106 = vrcp.pop %v2068
      %v2107 = vmul.f32 1.0, %v2106
      %v2108 = vrcp.pop %v2069
      %v2109 = vmul.f32 1.0, %v2108
      %v2110 = vrcp.pop %v2070
      %v2111 = vmul.f32 1.0, %v2110
      %v2112 = vrcp.pop %v2071
      %v2113 = vmul.f32 1.0, %v2112
      %v2114 = vrcp.pop %v2072
      %v2115 = vmul.f32 1.0, %v2114
      %v2116 = vrcp.pop %v2073
      %v2117 = vmul.f32 1.0, %v2116
      %v2118 = vrcp.pop %v2074
      %v2119 = vmul.f32 1.0, %v2118
      %v2120 = vrcp.pop %v2075
      %v2121 = vmul.f32 1.0, %v2120
      %v2122 = vrcp.pop %v2076
      %v2123 = vmul.f32 1.0, %v2122
      %v2124 = vrcp.pop %v2077
      %v2125 = vmul.f32 1.0, %v2124
      %v2126 = vrcp.pop %v2078
      %v2127 = vmul.f32 1.0, %v2126
      %v2128 = vrcp.pop %v2079
      %v2129 = vmul.f32 1.0, %v2128
      %v2130 = vrcp.pop %v2080
      %v2131 = vmul.f32 1.0, %v2130
      %v2132 = vrcp.pop %v2081
      %v2133 = vmul.f32 1.0, %v2132
      %v2134 = vrcp.pop %v2082
      %v2135 = vmul.f32 1.0, %v2134
      %v2136 = vrcp.pop %v2083
      %v2137 = vmul.f32 1.0, %v2136
      %v2138 = vrcp.pop %v2084
      %v2139 = vmul.f32 1.0, %v2138
      %v2140 = vrcp.pop %v2085
      %v2141 = vmul.f32 1.0, %v2140
      %v2142 = vrcp.pop %v2086
      %v2143 = vmul.f32 1.0, %v2142
      %v2144 = vrcp.pop %v2087
      %v2145 = vmul.f32 1.0, %v2144
      %v2146 = vrcp.pop %v2088
      %v2147 = vmul.f32 1.0, %v2146
      %v2148 = vrcp.pop %v2089
      %v2149 = vmul.f32 1.0, %v2148
      %v2150 = vrcp.pop %v2090
      %v2151 = vmul.f32 1.0, %v2150
      %v2152 = vrcp.pop %v2091
      %v2153 = vmul.f32 1.0, %v2152
      %v2154 = vrcp.pop %v2092
      %v2155 = vmul.f32 1.0, %v2154
      %v2156 = vrcp.pop %v2093
      %v2157 = vmul.f32 1.0, %v2156
      %2190 = vrot.lane.b32.xlu0 %v2095, 64
      %v2191 = vpop.permute.xlu0 %2190
      %2192 = vrot.lane.b32.xlu0 %v2097, 64
      %v2193 = vpop.permute.xlu0 %2192
      %2194 = vrot.lane.b32.xlu0 %v2099, 64
      %v2195 = vpop.permute.xlu0 %2194
      %2196 = vrot.lane.b32.xlu0 %v2101, 64
      %v2197 = vpop.permute.xlu0 %2196
      %2198 = vrot.lane.b32.xlu0 %v2103, 64
      %v2199 = vpop.permute.xlu0 %2198
      %2200 = vrot.lane.b32.xlu0 %v2105, 64
      %v2201 = vpop.permute.xlu0 %2200
      %2202 = vrot.lane.b32.xlu0 %v2107, 64
      %v2203 = vpop.permute.xlu0 %2202
      %2204 = vrot.lane.b32.xlu0 %v2109, 64
      %v2205 = vpop.permute.xlu0 %2204
      %2206 = vrot.lane.b32.xlu0 %v2111, 64
      %v2207 = vpop.permute.xlu0 %2206
      %2208 = vrot.lane.b32.xlu0 %v2113, 64
      %v2209 = vpop.permute.xlu0 %2208
      %2210 = vrot.lane.b32.xlu0 %v2115, 64
      %v2211 = vpop.permute.xlu0 %2210
      %2212 = vrot.lane.b32.xlu0 %v2117, 64
      %v2213 = vpop.permute.xlu0 %2212
      %2214 = vrot.lane.b32.xlu0 %v2119, 64
      %v2215 = vpop.permute.xlu0 %2214
      %2216 = vrot.lane.b32.xlu0 %v2121, 64
      %v2217 = vpop.permute.xlu0 %2216
      %2218 = vrot.lane.b32.xlu0 %v2123, 64
      %v2219 = vpop.permute.xlu0 %2218
      %2220 = vrot.lane.b32.xlu0 %v2125, 64
      %v2221 = vpop.permute.xlu0 %2220
      %2222 = vrot.lane.b32.xlu0 %v2127, 64
      %v2223 = vpop.permute.xlu0 %2222
      %2224 = vrot.lane.b32.xlu0 %v2129, 64
      %v2225 = vpop.permute.xlu0 %2224
      %2226 = vrot.lane.b32.xlu0 %v2131, 64
      %v2227 = vpop.permute.xlu0 %2226
      %2228 = vrot.lane.b32.xlu0 %v2133, 64
      %v2229 = vpop.permute.xlu0 %2228
      %2230 = vrot.lane.b32.xlu0 %v2135, 64
      %v2231 = vpop.permute.xlu0 %2230
      %2232 = vrot.lane.b32.xlu0 %v2137, 64
      %v2233 = vpop.permute.xlu0 %2232
      %2234 = vrot.lane.b32.xlu0 %v2139, 64
      %v2235 = vpop.permute.xlu0 %2234
      %2236 = vrot.lane.b32.xlu0 %v2141, 64
      %v2237 = vpop.permute.xlu0 %2236
      %2238 = vrot.lane.b32.xlu0 %v2143, 64
      %v2239 = vpop.permute.xlu0 %2238
      %2240 = vrot.lane.b32.xlu0 %v2145, 64
      %v2241 = vpop.permute.xlu0 %2240
      %2242 = vrot.lane.b32.xlu0 %v2147, 64
      %v2243 = vpop.permute.xlu0 %2242
      %2244 = vrot.lane.b32.xlu0 %v2149, 64
      %v2245 = vpop.permute.xlu0 %2244
      %2246 = vrot.lane.b32.xlu0 %v2151, 64
      %v2247 = vpop.permute.xlu0 %2246
      %2248 = vrot.lane.b32.xlu0 %v2153, 64
      %v2249 = vpop.permute.xlu0 %2248
      %2250 = vrot.lane.b32.xlu0 %v2155, 64
      %v2251 = vpop.permute.xlu0 %2250
      %2252 = vrot.lane.b32.xlu0 %v2157, 64
      %v2253 = vpop.permute.xlu0 %2252
      %v2286 = vmul.f32 %v1840, %v2191
      %v2287 = vmul.f32 %v1843, %v2193
      %v2288 = vmul.f32 %v1848, %v2195
      %v2289 = vmul.f32 %v1851, %v2197
      %v2290 = vmul.f32 %v1856, %v2199
      %v2291 = vmul.f32 %v1859, %v2201
      %v2292 = vmul.f32 %v1864, %v2203
      %v2293 = vmul.f32 %v1867, %v2205
      %v2294 = vmul.f32 %v1872, %v2207
      %v2295 = vmul.f32 %v1875, %v2209
      %v2296 = vmul.f32 %v1880, %v2211
      %v2297 = vmul.f32 %v1883, %v2213
      %v2298 = vmul.f32 %v1888, %v2215
      %v2299 = vmul.f32 %v1891, %v2217
      %v2300 = vmul.f32 %v1896, %v2219
      %v2301 = vmul.f32 %v1899, %v2221
      %v2302 = vmul.f32 %v1904, %v2223
      %v2303 = vmul.f32 %v1907, %v2225
      %v2304 = vmul.f32 %v1912, %v2227
      %v2305 = vmul.f32 %v1915, %v2229
      %v2306 = vmul.f32 %v1920, %v2231
      %v2307 = vmul.f32 %v1923, %v2233
      %v2308 = vmul.f32 %v1928, %v2235
      %v2309 = vmul.f32 %v1931, %v2237
      %v2310 = vmul.f32 %v1936, %v2239
      %v2311 = vmul.f32 %v1939, %v2241
      %v2312 = vmul.f32 %v1944, %v2243
      %v2313 = vmul.f32 %v1947, %v2245
      %v2314 = vmul.f32 %v1952, %v2247
      %v2315 = vmul.f32 %v1955, %v2249
      %v2316 = vmul.f32 %v1960, %v2251
      %v2317 = vmul.f32 %v1963, %v2253
      %v2318 = vpack.c.bf16 %v2287, %v2286
      %v2319 = vpack.c.bf16 %v2289, %v2288
      %v2320 = vpack.c.bf16 %v2291, %v2290
      %v2321 = vpack.c.bf16 %v2293, %v2292
      %v2322 = vpack.c.bf16 %v2295, %v2294
      %v2323 = vpack.c.bf16 %v2297, %v2296
      %v2324 = vpack.c.bf16 %v2299, %v2298
      %v2325 = vpack.c.bf16 %v2301, %v2300
      %v2326 = vpack.c.bf16 %v2303, %v2302
      %v2327 = vpack.c.bf16 %v2305, %v2304
      %v2328 = vpack.c.bf16 %v2307, %v2306
      %v2329 = vpack.c.bf16 %v2309, %v2308
      %v2330 = vpack.c.bf16 %v2311, %v2310
      %v2331 = vpack.c.bf16 %v2313, %v2312
      %v2332 = vpack.c.bf16 %v2315, %v2314
      %v2333 = vpack.c.bf16 %v2317, %v2316
      %v2350 = vunpack.c.l.b16 %v2318
      %v2351 = vunpack.c.h.b16 %v2318
      %v2352 = vunpack.c.l.b16 %v2319
      %v2353 = vunpack.c.h.b16 %v2319
      %v2354 = vunpack.c.l.b16 %v2320
      %v2355 = vunpack.c.h.b16 %v2320
      %v2356 = vunpack.c.l.b16 %v2321
      %v2357 = vunpack.c.h.b16 %v2321
      %v2358 = vunpack.c.l.b16 %v2322
      %v2359 = vunpack.c.h.b16 %v2322
      %v2360 = vunpack.c.l.b16 %v2323
      %v2361 = vunpack.c.h.b16 %v2323
      %v2362 = vunpack.c.l.b16 %v2324
      %v2363 = vunpack.c.h.b16 %v2324
      %v2364 = vunpack.c.l.b16 %v2325
      %v2365 = vunpack.c.h.b16 %v2325
      %v2366 = vunpack.c.l.b16 %v2326
      %v2367 = vunpack.c.h.b16 %v2326
      %v2368 = vunpack.c.l.b16 %v2327
      %v2369 = vunpack.c.h.b16 %v2327
      %v2370 = vunpack.c.l.b16 %v2328
      %v2371 = vunpack.c.h.b16 %v2328
      %v2372 = vunpack.c.l.b16 %v2329
      %v2373 = vunpack.c.h.b16 %v2329
      %v2374 = vunpack.c.l.b16 %v2330
      %v2375 = vunpack.c.h.b16 %v2330
      %v2376 = vunpack.c.l.b16 %v2331
      %v2377 = vunpack.c.h.b16 %v2331
      %v2378 = vunpack.c.l.b16 %v2332
      %v2379 = vunpack.c.h.b16 %v2332
      %v2380 = vunpack.c.l.b16 %v2333
      %v2381 = vunpack.c.h.b16 %v2333
      %v2382 = vpack.c.b16 %v2350, %v2350
      %v2383 = vpack.c.b16 %v2351, %v2351
      %v2384 = vpack.c.b16 %v2352, %v2352
      %v2385 = vpack.c.b16 %v2353, %v2353
      %v2386 = vpack.c.b16 %v2354, %v2354
      %v2387 = vpack.c.b16 %v2355, %v2355
      %v2388 = vpack.c.b16 %v2356, %v2356
      %v2389 = vpack.c.b16 %v2357, %v2357
      %v2390 = vpack.c.b16 %v2358, %v2358
      %v2391 = vpack.c.b16 %v2359, %v2359
      %v2392 = vpack.c.b16 %v2360, %v2360
      %v2393 = vpack.c.b16 %v2361, %v2361
      %v2394 = vpack.c.b16 %v2362, %v2362
      %v2395 = vpack.c.b16 %v2363, %v2363
      %v2396 = vpack.c.b16 %v2364, %v2364
      %v2397 = vpack.c.b16 %v2365, %v2365
      %v2398 = vpack.c.b16 %v2366, %v2366
      %v2399 = vpack.c.b16 %v2367, %v2367
      %v2400 = vpack.c.b16 %v2368, %v2368
      %v2401 = vpack.c.b16 %v2369, %v2369
      %v2402 = vpack.c.b16 %v2370, %v2370
      %v2403 = vpack.c.b16 %v2371, %v2371
      %v2404 = vpack.c.b16 %v2372, %v2372
      %v2405 = vpack.c.b16 %v2373, %v2373
      %v2406 = vpack.c.b16 %v2374, %v2374
      %v2407 = vpack.c.b16 %v2375, %v2375
      %v2408 = vpack.c.b16 %v2376, %v2376
      %v2409 = vpack.c.b16 %v2377, %v2377
      %v2410 = vpack.c.b16 %v2378, %v2378
      %v2411 = vpack.c.b16 %v2379, %v2379
      %v2412 = vpack.c.b16 %v2380, %v2380
      %v2413 = vpack.c.b16 %v2381, %v2381
      %vm2446 = vcmask 519168
      %2447 = vst.msk [vmem:[%s175] sm:$0xf] %vm2446, %v2382
      %2448 = vst.msk [vmem:[%s175 + $0x4] sm:$0xf] %vm2446, %v2383
      %2449 = vst.msk [vmem:[%s175 + $0x8] sm:$0xf] %vm2446, %v2384
      %2450 = vst.msk [vmem:[%s175 + $0xc] sm:$0xf] %vm2446, %v2385
      %2451 = vst.msk [vmem:[%s175 + $0x10] sm:$0xf] %vm2446, %v2386
      %2452 = vst.msk [vmem:[%s175 + $0x14] sm:$0xf] %vm2446, %v2387
      %2453 = vst.msk [vmem:[%s175 + $0x18] sm:$0xf] %vm2446, %v2388
      %2454 = vst.msk [vmem:[%s175 + $0x1c] sm:$0xf] %vm2446, %v2389
      %2455 = vst.msk [vmem:[%s175 + $0x20] sm:$0xf] %vm2446, %v2390
      %2456 = vst.msk [vmem:[%s175 + $0x24] sm:$0xf] %vm2446, %v2391
      %2457 = vst.msk [vmem:[%s175 + $0x28] sm:$0xf] %vm2446, %v2392
      %2458 = vst.msk [vmem:[%s175 + $0x2c] sm:$0xf] %vm2446, %v2393
      %2459 = vst.msk [vmem:[%s175 + $0x30] sm:$0xf] %vm2446, %v2394
      %2460 = vst.msk [vmem:[%s175 + $0x34] sm:$0xf] %vm2446, %v2395
      %2461 = vst.msk [vmem:[%s175 + $0x38] sm:$0xf] %vm2446, %v2396
      %2462 = vst.msk [vmem:[%s175 + $0x3c] sm:$0xf] %vm2446, %v2397
      %2463 = vst.msk [vmem:[%s175 + $0x40] sm:$0xf] %vm2446, %v2398
      %2464 = vst.msk [vmem:[%s175 + $0x44] sm:$0xf] %vm2446, %v2399
      %2465 = vst.msk [vmem:[%s175 + $0x48] sm:$0xf] %vm2446, %v2400
      %2466 = vst.msk [vmem:[%s175 + $0x4c] sm:$0xf] %vm2446, %v2401
      %2467 = vst.msk [vmem:[%s175 + $0x50] sm:$0xf] %vm2446, %v2402
      %2468 = vst.msk [vmem:[%s175 + $0x54] sm:$0xf] %vm2446, %v2403
      %2469 = vst.msk [vmem:[%s175 + $0x58] sm:$0xf] %vm2446, %v2404
      %2470 = vst.msk [vmem:[%s175 + $0x5c] sm:$0xf] %vm2446, %v2405
      %2471 = vst.msk [vmem:[%s175 + $0x60] sm:$0xf] %vm2446, %v2406
      %2472 = vst.msk [vmem:[%s175 + $0x64] sm:$0xf] %vm2446, %v2407
      %2473 = vst.msk [vmem:[%s175 + $0x68] sm:$0xf] %vm2446, %v2408
      %2474 = vst.msk [vmem:[%s175 + $0x6c] sm:$0xf] %vm2446, %v2409
      %2475 = vst.msk [vmem:[%s175 + $0x70] sm:$0xf] %vm2446, %v2410
      %2476 = vst.msk [vmem:[%s175 + $0x74] sm:$0xf] %vm2446, %v2411
      %2477 = vst.msk [vmem:[%s175 + $0x78] sm:$0xf] %vm2446, %v2412
      %2478 = vst.msk [vmem:[%s175 + $0x7c] sm:$0xf] %vm2446, %v2413
      %s2479 = smul.u32 32, %s14
      %p2480 = scmp.lt.s32.totalorder %s2479, 63
      %s2481 = scalar_select %p2480, %s2479, 63
      %s2482 = smul.addr %s2481, 4
      %s2483 = scalar_lea.vmem %s3, %s2482
      // Predicated region
      $region33: #{gated_conv2d_encoder_forward.8} parent=31 // pred_check
        %p2484 = pneg %p100
      $region34: #{gated_conv2d_encoder_forward.8} parent=31 // pred_check_branch
        %2486 = sbr.rel (%p2484) target = $region36
      $region35: #{gated_conv2d_encoder_forward.8} parent=31 // pred_region
        %s2487 = smul.u32 32, %s14
      $region36: #{gated_conv2d_encoder_forward.8} parent=31 // pred_fallthru
        _
    $region32: #{gated_conv2d_encoder_forward.8} parent=5 // pred_fallthru
      _
    %p2488 = scmp.le.s32.totalorder 2, %s9
    // Predicated region
    $region37: #{gated_conv2d_encoder_forward.8} parent=5 // pred_check
      %p2489 = pneg %p2488
    $region38: #{gated_conv2d_encoder_forward.8} parent=5 // pred_check_branch
      %2491 = sbr.rel (%p2489) target = $region40
    $region39: #{gated_conv2d_encoder_forward.8} parent=5 // pred_region
      %s2492 = ssub.s32 %s9, 2
      // Predicated region
      $region41: #{gated_conv2d_encoder_forward.8} parent=39 // pred_check
        %p2493 = pneg %p106
      $region42: #{gated_conv2d_encoder_forward.8} parent=39 // pred_check_branch
        %2495 = sbr.rel (%p2493) target = $region44
      $region43: #{gated_conv2d_encoder_forward.8} parent=39 // pred_region
        %s2496 = smul.u32 32, %s15
        %p2497 = scmp.lt.s32.totalorder %s2496, 63
        %s2498 = scalar_select %p2497, %s2496, 63
        %s2499 = smul.addr %s2498, 4
        %s2500 = scalar_lea.vmem %s3, %s2499
      $region44: #{gated_conv2d_encoder_forward.8} parent=39 // pred_fallthru
        _
    $region40: #{gated_conv2d_encoder_forward.8} parent=5 // pred_fallthru
      _
  $region6: #{gated_conv2d_encoder_forward.8} parent=0 // loop_footer
    %s13 = sadd.s32 1, %s9
  $region7: #{gated_conv2d_encoder_forward.8} parent=0 // loop_footer_branch
    %8 = sbr.rel target = $region3
  $region8: #{gated_conv2d_encoder_forward.8} parent=0 // loop_exit
    _

// kernel: gated_conv2d_encoder_forward.9
$region0: #{gated_conv2d_encoder_forward.9}
  #allocation0 [shape = 'u32[]', space=smem, size = 0x4, offset = 0x4, fixed_abs, tag = 'smem constant byte address 0x4 - core index']
  #allocation1 [shape = 'u32[144,128]{1,0:T(1,128)}', space=vmem, size = 0x12000, scoped, tag = 'internal scratch']
  %s0 = inlined_call_operand.vmem [shape: bf16[112,576], index: 0, kind: input, shape index: {}]
  %s1 = inlined_call_operand.vmem [shape: bf16[576,128], index: 1, kind: input, shape index: {}]
  %s2 = inlined_call_operand.vmem [shape: f32[1,128], index: 2, kind: input, shape index: {}]
  %s3 = inlined_call_operand.vmem [shape: bf16[112,64], index: 3, kind: output, shape index: {}]
  %s4 = sld [smem:[#allocation0]]
  $region22: #{gated_conv2d_encoder_forward.9} parent=0
    _
  %s6 = ssub.s32 1, %s4
  %s7 = scalar_select 0, %s6, %s4
  // Predicated region
  $region2: #{gated_conv2d_encoder_forward.9} parent=0 // pred_check
    _
  $region3: #{gated_conv2d_encoder_forward.9} parent=0 // pred_check_branch
    %9 = sbr.rel (0) target = $region5
  $region4: #{gated_conv2d_encoder_forward.9} parent=0 // pred_region
    _
  $region5: #{gated_conv2d_encoder_forward.9} parent=0 // pred_fallthru
    _
  // Predicated region
  $region6: #{gated_conv2d_encoder_forward.9} parent=0 // pred_check
    _
  $region7: #{gated_conv2d_encoder_forward.9} parent=0 // pred_check_branch
    %11 = sbr.rel (0) target = $region9
  $region8: #{gated_conv2d_encoder_forward.9} parent=0 // pred_region
    _
  $region9: #{gated_conv2d_encoder_forward.9} parent=0 // pred_fallthru
    _
  // Predicated region
  $region10: #{gated_conv2d_encoder_forward.9} parent=0 // pred_check
    _
  $region11: #{gated_conv2d_encoder_forward.9} parent=0 // pred_check_branch
    %13 = sbr.rel (0) target = $region13
  $region12: #{gated_conv2d_encoder_forward.9} parent=0 // pred_region
    _
  $region13: #{gated_conv2d_encoder_forward.9} parent=0 // pred_fallthru
    _
  %v15 = vld [vmem:[%s0] sm:$0xff]
  %v16 = vld [vmem:[%s0 + $0x8] sm:$0xff]
  %v17 = vld [vmem:[%s0 + $0x10] sm:$0xf]
  %v18 = vld [vmem:[%s0 + $0x14] sm:$0xff]
  %v19 = vld [vmem:[%s0 + $0x1c] sm:$0xff]
  %v20 = vld [vmem:[%s0 + $0x24] sm:$0xf]
  %v21 = vld [vmem:[%s0 + $0x28] sm:$0xff]
  %v22 = vld [vmem:[%s0 + $0x30] sm:$0xff]
  %v23 = vld [vmem:[%s0 + $0x38] sm:$0xf]
  %v24 = vld [vmem:[%s0 + $0x3c] sm:$0xff]
  %v25 = vld [vmem:[%s0 + $0x44] sm:$0xff]
  %v26 = vld [vmem:[%s0 + $0x4c] sm:$0xf]
  %v27 = vld [vmem:[%s0 + $0x50] sm:$0xff]
  %v28 = vld [vmem:[%s0 + $0x58] sm:$0xff]
  %v29 = vld [vmem:[%s0 + $0x60] sm:$0xf]
  %v30 = vld [vmem:[%s0 + $0x64] sm:$0xff]
  %v31 = vld [vmem:[%s0 + $0x6c] sm:$0xff]
  %v32 = vld [vmem:[%s0 + $0x74] sm:$0xf]
  %v33 = vld [vmem:[%s0 + $0x78] sm:$0xff]
  %v34 = vld [vmem:[%s0 + $0x80] sm:$0xff]
  %v35 = vld [vmem:[%s0 + $0x88] sm:$0xf]
  %v36 = vld [vmem:[%s0 + $0x8c] sm:$0xff]
  %v37 = vld [vmem:[%s0 + $0x94] sm:$0xff]
  %v38 = vld [vmem:[%s0 + $0x9c] sm:$0xf]
  %v39 = vld [vmem:[%s0 + $0xa0] sm:$0xff]
  %v40 = vld [vmem:[%s0 + $0xa8] sm:$0xff]
  %v41 = vld [vmem:[%s0 + $0xb0] sm:$0xf]
  %v42 = vld [vmem:[%s0 + $0xb4] sm:$0xff]
  %v43 = vld [vmem:[%s0 + $0xbc] sm:$0xff]
  %v44 = vld [vmem:[%s0 + $0xc4] sm:$0xf]
  %v45 = vld [vmem:[%s0 + $0xc8] sm:$0xff]
  %v46 = vld [vmem:[%s0 + $0xd0] sm:$0xff]
  %v47 = vld [vmem:[%s0 + $0xd8] sm:$0xf]
  %v48 = vld [vmem:[%s0 + $0xdc] sm:$0xff]
  %v49 = vld [vmem:[%s0 + $0xe4] sm:$0xff]
  %v50 = vld [vmem:[%s0 + $0xec] sm:$0xf]
  %v51 = vld [vmem:[%s0 + $0xf0] sm:$0xff]
  %v52 = vld [vmem:[%s0 + $0xf8] sm:$0xff]
  %v53 = vld [vmem:[%s0 + $0x100] sm:$0xf]
  %v54 = vld [vmem:[%s0 + $0x104] sm:$0xff]
  %v55 = vld [vmem:[%s0 + $0x10c] sm:$0xff]
  %v56 = vld [vmem:[%s0 + $0x114] sm:$0xf]
  %v57 = vld [vmem:[%s1] sm:$0xf]
  %v58 = vld [vmem:[%s1 + $0x4] sm:$0xf]
  %v59 = vld [vmem:[%s1 + $0x8] sm:$0xf]
  %v60 = vld [vmem:[%s1 + $0xc] sm:$0xf]
  %v61 = vld [vmem:[%s1 + $0x10] sm:$0xf]
  %v62 = vld [vmem:[%s1 + $0x14] sm:$0xf]
  %v63 = vld [vmem:[%s1 + $0x18] sm:$0xf]
  %v64 = vld [vmem:[%s1 + $0x1c] sm:$0xf]
  %v65 = vld [vmem:[%s1 + $0x20] sm:$0xf]
  %v66 = vld [vmem:[%s1 + $0x24] sm:$0xf]
  %v67 = vld [vmem:[%s1 + $0x28] sm:$0xf]
  %v68 = vld [vmem:[%s1 + $0x2c] sm:$0xf]
  %v69 = vld [vmem:[%s1 + $0x30] sm:$0xf]
  %v70 = vld [vmem:[%s1 + $0x34] sm:$0xf]
  %v71 = vld [vmem:[%s1 + $0x38] sm:$0xf]
  %v72 = vld [vmem:[%s1 + $0x3c] sm:$0xf]
  %v73 = vld [vmem:[%s1 + $0x40] sm:$0xf]
  %v74 = vld [vmem:[%s1 + $0x44] sm:$0xf]
  %v75 = vld [vmem:[%s1 + $0x48] sm:$0xf]
  %v76 = vld [vmem:[%s1 + $0x4c] sm:$0xf]
  %v77 = vld [vmem:[%s1 + $0x50] sm:$0xf]
  %v78 = vld [vmem:[%s1 + $0x54] sm:$0xf]
  %v79 = vld [vmem:[%s1 + $0x58] sm:$0xf]
  %v80 = vld [vmem:[%s1 + $0x5c] sm:$0xf]
  %v81 = vld [vmem:[%s1 + $0x60] sm:$0xf]
  %v82 = vld [vmem:[%s1 + $0x64] sm:$0xf]
  %v83 = vld [vmem:[%s1 + $0x68] sm:$0xf]
  %v84 = vld [vmem:[%s1 + $0x6c] sm:$0xf]
  %v85 = vld [vmem:[%s1 + $0x70] sm:$0xf]
  %v86 = vld [vmem:[%s1 + $0x74] sm:$0xf]
  %v87 = vld [vmem:[%s1 + $0x78] sm:$0xf]
  %v88 = vld [vmem:[%s1 + $0x7c] sm:$0xf]
  %v89 = vld [vmem:[%s1 + $0x80] sm:$0xf]
  %v90 = vld [vmem:[%s1 + $0x84] sm:$0xf]
  %v91 = vld [vmem:[%s1 + $0x88] sm:$0xf]
  %v92 = vld [vmem:[%s1 + $0x8c] sm:$0xf]
  %v93 = vld [vmem:[%s1 + $0x90] sm:$0xf]
  %v94 = vld [vmem:[%s1 + $0x94] sm:$0xf]
  %v95 = vld [vmem:[%s1 + $0x98] sm:$0xf]
  %v96 = vld [vmem:[%s1 + $0x9c] sm:$0xf]
  %v97 = vld [vmem:[%s1 + $0xa0] sm:$0xf]
  %v98 = vld [vmem:[%s1 + $0xa4] sm:$0xf]
  %v99 = vld [vmem:[%s1 + $0xa8] sm:$0xf]
  %v100 = vld [vmem:[%s1 + $0xac] sm:$0xf]
  %v101 = vld [vmem:[%s1 + $0xb0] sm:$0xf]
  %v102 = vld [vmem:[%s1 + $0xb4] sm:$0xf]
  %v103 = vld [vmem:[%s1 + $0xb8] sm:$0xf]
  %v104 = vld [vmem:[%s1 + $0xbc] sm:$0xf]
  %v105 = vld [vmem:[%s1 + $0xc0] sm:$0xf]
  %v106 = vld [vmem:[%s1 + $0xc4] sm:$0xf]
  %v107 = vld [vmem:[%s1 + $0xc8] sm:$0xf]
  %v108 = vld [vmem:[%s1 + $0xcc] sm:$0xf]
  %v109 = vld [vmem:[%s1 + $0xd0] sm:$0xf]
  %v110 = vld [vmem:[%s1 + $0xd4] sm:$0xf]
  %v111 = vld [vmem:[%s1 + $0xd8] sm:$0xf]
  %v112 = vld [vmem:[%s1 + $0xdc] sm:$0xf]
  %v113 = vld [vmem:[%s1 + $0xe0] sm:$0xf]
  %v114 = vld [vmem:[%s1 + $0xe4] sm:$0xf]
  %v115 = vld [vmem:[%s1 + $0xe8] sm:$0xf]
  %v116 = vld [vmem:[%s1 + $0xec] sm:$0xf]
  %v117 = vld [vmem:[%s1 + $0xf0] sm:$0xf]
  %v118 = vld [vmem:[%s1 + $0xf4] sm:$0xf]
  %v119 = vld [vmem:[%s1 + $0xf8] sm:$0xf]
  %v120 = vld [vmem:[%s1 + $0xfc] sm:$0xf]
  %v121 = vld [vmem:[%s1 + $0x100] sm:$0xf]
  %v122 = vld [vmem:[%s1 + $0x104] sm:$0xf]
  %v123 = vld [vmem:[%s1 + $0x108] sm:$0xf]
  %v124 = vld [vmem:[%s1 + $0x10c] sm:$0xf]
  %v125 = vld [vmem:[%s1 + $0x110] sm:$0xf]
  %v126 = vld [vmem:[%s1 + $0x114] sm:$0xf]
  %v127 = vld [vmem:[%s1 + $0x118] sm:$0xf]
  %v128 = vld [vmem:[%s1 + $0x11c] sm:$0xf]
  %v129 = vld [vmem:[%s2] sm:$0x1]
  %v131 = vlaneseq
  %v132 = vshrl.u32 %v131, 7
  %v133 = vsub.s32 0, %v132
  %v134 = vrot.slane %v129, %v133
  %v178 = vunpack.c.l.b16 %v15
  %v179 = vunpack.c.h.b16 %v15
  %v180 = vunpack.c.l.b16 %v16
  %v181 = vunpack.c.h.b16 %v16
  %v182 = vunpack.c.l.b16 %v17
  %v183 = vunpack.c.l.b16 %v18
  %v184 = vunpack.c.h.b16 %v18
  %v185 = vunpack.c.l.b16 %v19
  %v186 = vunpack.c.h.b16 %v19
  %v187 = vunpack.c.l.b16 %v20
  %v188 = vunpack.c.l.b16 %v21
  %v189 = vunpack.c.h.b16 %v21
  %v190 = vunpack.c.l.b16 %v22
  %v191 = vunpack.c.h.b16 %v22
  %v192 = vunpack.c.l.b16 %v23
  %v193 = vunpack.c.l.b16 %v24
  %v194 = vunpack.c.h.b16 %v24
  %v195 = vunpack.c.l.b16 %v25
  %v196 = vunpack.c.h.b16 %v25
  %v197 = vunpack.c.l.b16 %v26
  %v198 = vunpack.c.l.b16 %v27
  %v199 = vunpack.c.h.b16 %v27
  %v200 = vunpack.c.l.b16 %v28
  %v201 = vunpack.c.h.b16 %v28
  %v202 = vunpack.c.l.b16 %v29
  %v203 = vunpack.c.l.b16 %v30
  %v204 = vunpack.c.h.b16 %v30
  %v205 = vunpack.c.l.b16 %v31
  %v206 = vunpack.c.h.b16 %v31
  %v207 = vunpack.c.l.b16 %v32
  %v208 = vunpack.c.l.b16 %v33
  %v209 = vunpack.c.h.b16 %v33
  %v210 = vunpack.c.l.b16 %v34
  %v211 = vunpack.c.h.b16 %v34
  %v212 = vunpack.c.l.b16 %v35
  %v213 = vunpack.c.l.b16 %v36
  %v214 = vunpack.c.h.b16 %v36
  %v215 = vunpack.c.l.b16 %v37
  %v216 = vunpack.c.h.b16 %v37
  %v217 = vunpack.c.l.b16 %v38
  %v218 = vunpack.c.l.b16 %v39
  %v219 = vunpack.c.h.b16 %v39
  %v220 = vunpack.c.l.b16 %v40
  %v221 = vunpack.c.h.b16 %v40
  %v222 = vunpack.c.l.b16 %v41
  %v223 = vunpack.c.l.b16 %v42
  %v224 = vunpack.c.h.b16 %v42
  %v225 = vunpack.c.l.b16 %v43
  %v226 = vunpack.c.h.b16 %v43
  %v227 = vunpack.c.l.b16 %v44
  %v228 = vunpack.c.l.b16 %v45
  %v229 = vunpack.c.h.b16 %v45
  %v230 = vunpack.c.l.b16 %v46
  %v231 = vunpack.c.h.b16 %v46
  %v232 = vunpack.c.l.b16 %v47
  %v233 = vunpack.c.l.b16 %v48
  %v234 = vunpack.c.h.b16 %v48
  %v235 = vunpack.c.l.b16 %v49
  %v236 = vunpack.c.h.b16 %v49
  %v237 = vunpack.c.l.b16 %v50
  %v238 = vunpack.c.l.b16 %v51
  %v239 = vunpack.c.h.b16 %v51
  %v240 = vunpack.c.l.b16 %v52
  %v241 = vunpack.c.h.b16 %v52
  %v242 = vunpack.c.l.b16 %v53
  %v243 = vunpack.c.l.b16 %v54
  %v244 = vunpack.c.h.b16 %v54
  %v245 = vunpack.c.l.b16 %v55
  %v246 = vunpack.c.h.b16 %v55
  %v247 = vunpack.c.l.b16 %v56
  %v248 = vpack.c.b16 %v183, %v178
  %v249 = vpack.c.b16 %v184, %v179
  %v250 = vpack.c.b16 %v185, %v180
  %v251 = vpack.c.b16 %v186, %v181
  %v252 = vpack.c.b16 %v187, %v182
  %v253 = vpack.c.b16 %v193, %v188
  %v254 = vpack.c.b16 %v194, %v189
  %v255 = vpack.c.b16 %v195, %v190
  %v256 = vpack.c.b16 %v196, %v191
  %v257 = vpack.c.b16 %v197, %v192
  %v258 = vpack.c.b16 %v203, %v198
  %v259 = vpack.c.b16 %v204, %v199
  %v260 = vpack.c.b16 %v205, %v200
  %v261 = vpack.c.b16 %v206, %v201
  %v262 = vpack.c.b16 %v207, %v202
  %v263 = vpack.c.b16 %v213, %v208
  %v264 = vpack.c.b16 %v214, %v209
  %v265 = vpack.c.b16 %v215, %v210
  %v266 = vpack.c.b16 %v216, %v211
  %v267 = vpack.c.b16 %v217, %v212
  %v268 = vpack.c.b16 %v223, %v218
  %v269 = vpack.c.b16 %v224, %v219
  %v270 = vpack.c.b16 %v225, %v220
  %v271 = vpack.c.b16 %v226, %v221
  %v272 = vpack.c.b16 %v227, %v222
  %v273 = vpack.c.b16 %v233, %v228
  %v274 = vpack.c.b16 %v234, %v229
  %v275 = vpack.c.b16 %v235, %v230
  %v276 = vpack.c.b16 %v236, %v231
  %v277 = vpack.c.b16 %v237, %v232
  %v278 = vpack.c.b16 %v243, %v238
  %v279 = vpack.c.b16 %v244, %v239
  %v280 = vpack.c.b16 %v245, %v240
  %v281 = vpack.c.b16 %v246, %v241
  %v282 = vpack.c.b16 %v247, %v242
  %v383 = vunpack.c.l.b16 %v57
  %v384 = vunpack.c.l.b16 %v58
  %v385 = vunpack.c.l.b16 %v59
  %v386 = vunpack.c.l.b16 %v60
  %v387 = vunpack.c.l.b16 %v61
  %v388 = vunpack.c.l.b16 %v62
  %v389 = vunpack.c.l.b16 %v63
  %v390 = vunpack.c.l.b16 %v64
  %v391 = vunpack.c.l.b16 %v65
  %v392 = vunpack.c.l.b16 %v66
  %v393 = vunpack.c.l.b16 %v67
  %v394 = vunpack.c.l.b16 %v68
  %v395 = vunpack.c.l.b16 %v69
  %v396 = vunpack.c.l.b16 %v70
  %v397 = vunpack.c.l.b16 %v71
  %v398 = vunpack.c.l.b16 %v72
  %v399 = vunpack.c.l.b16 %v73
  %v400 = vunpack.c.l.b16 %v74
  %v401 = vunpack.c.l.b16 %v75
  %v402 = vunpack.c.l.b16 %v76
  %v403 = vunpack.c.l.b16 %v77
  %v404 = vunpack.c.l.b16 %v78
  %v405 = vunpack.c.l.b16 %v79
  %v406 = vunpack.c.l.b16 %v80
  %v407 = vunpack.c.l.b16 %v81
  %v408 = vunpack.c.l.b16 %v82
  %v409 = vunpack.c.l.b16 %v83
  %v410 = vunpack.c.l.b16 %v84
  %v411 = vunpack.c.l.b16 %v85
  %v412 = vunpack.c.l.b16 %v86
  %v413 = vunpack.c.l.b16 %v87
  %v414 = vunpack.c.l.b16 %v88
  %v415 = vunpack.c.l.b16 %v89
  %v416 = vunpack.c.l.b16 %v90
  %v417 = vunpack.c.l.b16 %v91
  %v418 = vunpack.c.l.b16 %v92
  %v419 = vunpack.c.l.b16 %v93
  %v420 = vunpack.c.l.b16 %v94
  %v421 = vunpack.c.l.b16 %v95
  %v422 = vunpack.c.l.b16 %v96
  %v423 = vunpack.c.l.b16 %v97
  %v424 = vunpack.c.l.b16 %v98
  %v425 = vunpack.c.l.b16 %v99
  %v426 = vunpack.c.l.b16 %v100
  %v427 = vunpack.c.l.b16 %v101
  %v428 = vunpack.c.l.b16 %v102
  %v429 = vunpack.c.l.b16 %v103
  %v430 = vunpack.c.l.b16 %v104
  %v431 = vunpack.c.l.b16 %v105
  %v432 = vunpack.c.l.b16 %v106
  %v433 = vunpack.c.l.b16 %v107
  %v434 = vunpack.c.l.b16 %v108
  %v435 = vunpack.c.l.b16 %v109
  %v436 = vunpack.c.l.b16 %v110
  %v437 = vunpack.c.l.b16 %v111
  %v438 = vunpack.c.l.b16 %v112
  %v439 = vunpack.c.l.b16 %v113
  %v440 = vunpack.c.l.b16 %v114
  %v441 = vunpack.c.l.b16 %v115
  %v442 = vunpack.c.l.b16 %v116
  %v443 = vunpack.c.l.b16 %v117
  %v444 = vunpack.c.l.b16 %v118
  %v445 = vunpack.c.l.b16 %v119
  %v446 = vunpack.c.l.b16 %v120
  %v447 = vunpack.c.l.b16 %v121
  %v448 = vunpack.c.l.b16 %v122
  %v449 = vunpack.c.l.b16 %v123
  %v450 = vunpack.c.l.b16 %v124
  %v451 = vunpack.c.l.b16 %v125
  %v452 = vunpack.c.l.b16 %v126
  %v453 = vunpack.c.l.b16 %v127
  %v454 = vunpack.c.l.b16 %v128
  %v455 = vpack.c.b16 %v384, %v383
  %v456 = vpack.c.b16 %v386, %v385
  %v457 = vpack.c.b16 %v388, %v387
  %v458 = vpack.c.b16 %v390, %v389
  %v459 = vpack.c.b16 %v392, %v391
  %v460 = vpack.c.b16 %v394, %v393
  %v461 = vpack.c.b16 %v396, %v395
  %v462 = vpack.c.b16 %v398, %v397
  %v463 = vpack.c.b16 %v400, %v399
  %v464 = vpack.c.b16 %v402, %v401
  %v465 = vpack.c.b16 %v404, %v403
  %v466 = vpack.c.b16 %v406, %v405
  %v467 = vpack.c.b16 %v408, %v407
  %v468 = vpack.c.b16 %v410, %v409
  %v469 = vpack.c.b16 %v412, %v411
  %v470 = vpack.c.b16 %v414, %v413
  %v471 = vpack.c.b16 %v416, %v415
  %v472 = vpack.c.b16 %v418, %v417
  %v473 = vpack.c.b16 %v420, %v419
  %v474 = vpack.c.b16 %v422, %v421
  %v475 = vpack.c.b16 %v424, %v423
  %v476 = vpack.c.b16 %v426, %v425
  %v477 = vpack.c.b16 %v428, %v427
  %v478 = vpack.c.b16 %v430, %v429
  %v479 = vpack.c.b16 %v432, %v431
  %v480 = vpack.c.b16 %v434, %v433
  %v481 = vpack.c.b16 %v436, %v435
  %v482 = vpack.c.b16 %v438, %v437
  %v483 = vpack.c.b16 %v440, %v439
  %v484 = vpack.c.b16 %v442, %v441
  %v485 = vpack.c.b16 %v444, %v443
  %v486 = vpack.c.b16 %v446, %v445
  %v487 = vpack.c.b16 %v448, %v447
  %v488 = vpack.c.b16 %v450, %v449
  %v489 = vpack.c.b16 %v452, %v451
  %v490 = vpack.c.b16 %v454, %v453
  %vm527 = vcmask 523264
  %v529 = vsel %vm527, %v252, 0
  %v532 = vsel %vm527, %v257, 0
  %v535 = vsel %vm527, %v262, 0
  %v538 = vsel %vm527, %v267, 0
  %v541 = vsel %vm527, %v272, 0
  %v544 = vsel %vm527, %v277, 0
  %v547 = vsel %vm527, %v282, 0
  %549 = vmatprep.subr.bf16.mxu0 0
  %550 = vmatpush1.bf16.msra.mxu0 %v462
  %551 = vmatprep.subr.bf16.mxu0 0
  %552 = vmatpush1.bf16.msra.mxu0 %v461
  %553 = vmatprep.subr.bf16.mxu0 0
  %554 = vmatpush1.bf16.msra.mxu0 %v460
  %555 = vmatprep.subr.bf16.mxu0 0
  %556 = vmatpush1.bf16.msra.mxu0 %v459
  %557 = vmatprep.subr.bf16.mxu0 0
  %558 = vmatpush1.bf16.msra.mxu0 %v458
  %559 = vmatprep.subr.bf16.mxu0 0
  %560 = vmatpush1.bf16.msra.mxu0 %v457
  %561 = vmatprep.subr.bf16.mxu0 0
  %562 = vmatpush1.bf16.msra.mxu0 %v456
  %563 = vmatprep.subr.bf16.mxu0 0
  %564 = vmatpush1.bf16.msra.mxu0 %v455
  %565 = vmatprep.subr.bf16.mxu0 0
  %566 = vmatpush2.bf16.msra.mxu0 %v470
  %567 = vmatprep.subr.bf16.mxu0 0
  %568 = vmatpush2.bf16.msra.mxu0 %v469
  %569 = vmatprep.subr.bf16.mxu0 0
  %570 = vmatpush2.bf16.msra.mxu0 %v468
  %571 = vmatprep.subr.bf16.mxu0 0
  %572 = vmatpush2.bf16.msra.mxu0 %v467
  %573 = vmatprep.subr.bf16.mxu0 0
  %574 = vmatpush2.bf16.msra.mxu0 %v466
  %575 = vmatprep.subr.bf16.mxu0 0
  %576 = vmatpush2.bf16.msra.mxu0 %v465
  %577 = vmatprep.subr.bf16.mxu0 0
  %578 = vmatpush2.bf16.msra.mxu0 %v464
  %579 = vmatprep.subr.bf16.mxu0 0
  %580 = vmatpush2.bf16.msra.mxu0 %v463
  %581 = vmatprep.mubr.bf16.mxu0 %v249
  %582 = vmatmul.mubr.bf16.gmra.mxu0 %v248
  %v583 = vpop.f32.mrf.mxu0
  %v584 = vadd.f32 %v134, %v583
  %v585 = vpop.f32.mrf.mxu0
  %v586 = vpop.f32.mrf.mxu0
  %v587 = vadd.f32 %v134, %v586
  %v588 = vpop.f32.mrf.mxu0
  %589 = vmatprep.mubr.bf16.mxu0 %v254
  %590 = vmatmul.mubr.bf16.gmra.mxu0 %v253
  %v591 = vpop.f32.mrf.mxu0
  %v592 = vadd.f32 %v134, %v591
  %v593 = vpop.f32.mrf.mxu0
  %v594 = vpop.f32.mrf.mxu0
  %v595 = vadd.f32 %v134, %v594
  %v596 = vpop.f32.mrf.mxu0
  %597 = vmatprep.mubr.bf16.mxu0 %v259
  %598 = vmatmul.mubr.bf16.gmra.mxu0 %v258
  %v599 = vpop.f32.mrf.mxu0
  %v600 = vadd.f32 %v134, %v599
  %v601 = vpop.f32.mrf.mxu0
  %v602 = vpop.f32.mrf.mxu0
  %v603 = vadd.f32 %v134, %v602
  %v604 = vpop.f32.mrf.mxu0
  %605 = vmatprep.mubr.bf16.mxu0 %v264
  %606 = vmatmul.mubr.bf16.gmra.mxu0 %v263
  %v607 = vpop.f32.mrf.mxu0
  %v608 = vadd.f32 %v134, %v607
  %v609 = vpop.f32.mrf.mxu0
  %v610 = vpop.f32.mrf.mxu0
  %v611 = vadd.f32 %v134, %v610
  %v612 = vpop.f32.mrf.mxu0
  %613 = vmatprep.mubr.bf16.mxu0 %v269
  %614 = vmatmul.mubr.bf16.gmra.mxu0 %v268
  %v615 = vpop.f32.mrf.mxu0
  %v616 = vadd.f32 %v134, %v615
  %v617 = vpop.f32.mrf.mxu0
  %v618 = vpop.f32.mrf.mxu0
  %v619 = vadd.f32 %v134, %v618
  %v620 = vpop.f32.mrf.mxu0
  %621 = vmatprep.mubr.bf16.mxu0 %v274
  %622 = vmatmul.mubr.bf16.gmra.mxu0 %v273
  %v623 = vpop.f32.mrf.mxu0
  %v624 = vadd.f32 %v134, %v623
  %v625 = vpop.f32.mrf.mxu0
  %v626 = vpop.f32.mrf.mxu0
  %v627 = vadd.f32 %v134, %v626
  %v628 = vpop.f32.mrf.mxu0
  %629 = vmatprep.mubr.bf16.mxu0 %v279
  %630 = vmatmul.mubr.bf16.gmra.mxu0 %v278
  %v631 = vpop.f32.mrf.mxu0
  %v632 = vadd.f32 %v134, %v631
  %v633 = vpop.f32.mrf.mxu0
  %v634 = vpop.f32.mrf.mxu0
  %v635 = vadd.f32 %v134, %v634
  %v636 = vpop.f32.mrf.mxu0
  %637 = vdwg.mxu0
  %638 = vmatprep.subr.bf16.mxu0 0
  %639 = vmatpush1.bf16.msra.mxu0 %v478
  %640 = vmatprep.subr.bf16.mxu0 0
  %641 = vmatpush1.bf16.msra.mxu0 %v477
  %642 = vmatprep.subr.bf16.mxu0 0
  %643 = vmatpush1.bf16.msra.mxu0 %v476
  %644 = vmatprep.subr.bf16.mxu0 0
  %645 = vmatpush1.bf16.msra.mxu0 %v475
  %646 = vmatprep.subr.bf16.mxu0 0
  %647 = vmatpush1.bf16.msra.mxu0 %v474
  %648 = vmatprep.subr.bf16.mxu0 0
  %649 = vmatpush1.bf16.msra.mxu0 %v473
  %650 = vmatprep.subr.bf16.mxu0 0
  %651 = vmatpush1.bf16.msra.mxu0 %v472
  %652 = vmatprep.subr.bf16.mxu0 0
  %653 = vmatpush1.bf16.msra.mxu0 %v471
  %654 = vmatprep.subr.bf16.mxu0 0
  %655 = vmatpush2.bf16.msra.mxu0 %v486
  %656 = vmatprep.subr.bf16.mxu0 0
  %657 = vmatpush2.bf16.msra.mxu0 %v485
  %658 = vmatprep.subr.bf16.mxu0 0
  %659 = vmatpush2.bf16.msra.mxu0 %v484
  %660 = vmatprep.subr.bf16.mxu0 0
  %661 = vmatpush2.bf16.msra.mxu0 %v483
  %662 = vmatprep.subr.bf16.mxu0 0
  %663 = vmatpush2.bf16.msra.mxu0 %v482
  %664 = vmatprep.subr.bf16.mxu0 0
  %665 = vmatpush2.bf16.msra.mxu0 %v481
  %666 = vmatprep.subr.bf16.mxu0 0
  %667 = vmatpush2.bf16.msra.mxu0 %v480
  %668 = vmatprep.subr.bf16.mxu0 0
  %669 = vmatpush2.bf16.msra.mxu0 %v479
  %670 = vmatprep.mubr.bf16.mxu0 %v251
  %671 = vmatmul.mubr.bf16.gmra.mxu0 %v250
  %v672 = vpop.f32.mrf.mxu0
  %v673 = vadd.f32 %v584, %v672
  %v674 = vpop.f32.mrf.mxu0
  %v675 = vpop.f32.mrf.mxu0
  %v676 = vadd.f32 %v587, %v675
  %v677 = vpop.f32.mrf.mxu0
  %678 = vmatprep.mubr.bf16.mxu0 %v256
  %679 = vmatmul.mubr.bf16.gmra.mxu0 %v255
  %v680 = vpop.f32.mrf.mxu0
  %v681 = vadd.f32 %v592, %v680
  %v682 = vpop.f32.mrf.mxu0
  %v683 = vpop.f32.mrf.mxu0
  %v684 = vadd.f32 %v595, %v683
  %v685 = vpop.f32.mrf.mxu0
  %686 = vmatprep.mubr.bf16.mxu0 %v261
  %687 = vmatmul.mubr.bf16.gmra.mxu0 %v260
  %v688 = vpop.f32.mrf.mxu0
  %v689 = vadd.f32 %v600, %v688
  %v690 = vpop.f32.mrf.mxu0
  %v691 = vpop.f32.mrf.mxu0
  %v692 = vadd.f32 %v603, %v691
  %v693 = vpop.f32.mrf.mxu0
  %694 = vmatprep.mubr.bf16.mxu0 %v266
  %695 = vmatmul.mubr.bf16.gmra.mxu0 %v265
  %v696 = vpop.f32.mrf.mxu0
  %v697 = vadd.f32 %v608, %v696
  %v698 = vpop.f32.mrf.mxu0
  %v699 = vpop.f32.mrf.mxu0
  %v700 = vadd.f32 %v611, %v699
  %v701 = vpop.f32.mrf.mxu0
  %702 = vmatprep.mubr.bf16.mxu0 %v271
  %703 = vmatmul.mubr.bf16.gmra.mxu0 %v270
  %v704 = vpop.f32.mrf.mxu0
  %v705 = vadd.f32 %v616, %v704
  %v706 = vpop.f32.mrf.mxu0
  %v707 = vpop.f32.mrf.mxu0
  %v708 = vadd.f32 %v619, %v707
  %v709 = vpop.f32.mrf.mxu0
  %710 = vmatprep.mubr.bf16.mxu0 %v276
  %711 = vmatmul.mubr.bf16.gmra.mxu0 %v275
  %v712 = vpop.f32.mrf.mxu0
  %v713 = vadd.f32 %v624, %v712
  %v714 = vpop.f32.mrf.mxu0
  %v715 = vpop.f32.mrf.mxu0
  %v716 = vadd.f32 %v627, %v715
  %v717 = vpop.f32.mrf.mxu0
  %718 = vmatprep.mubr.bf16.mxu0 %v281
  %719 = vmatmul.mubr.bf16.gmra.mxu0 %v280
  %v720 = vpop.f32.mrf.mxu0
  %v721 = vadd.f32 %v632, %v720
  %v722 = vpop.f32.mrf.mxu0
  %v723 = vpop.f32.mrf.mxu0
  %v724 = vadd.f32 %v635, %v723
  %v725 = vpop.f32.mrf.mxu0
  %726 = vdwg.mxu0
  %727 = vmatprep.subr.bf16.mxu0 0
  %728 = vmatpush1.bf16.msra.mxu0 0
  %729 = vmatprep.subr.bf16.mxu0 0
  %730 = vmatpush1.bf16.msra.mxu0 0
  %731 = vmatprep.subr.bf16.mxu0 0
  %732 = vmatpush1.bf16.msra.mxu0 0
  %733 = vmatprep.subr.bf16.mxu0 0
  %734 = vmatpush1.bf16.msra.mxu0 0
  %735 = vmatprep.subr.bf16.mxu0 0
  %736 = vmatpush1.bf16.msra.mxu0 %v490
  %737 = vmatprep.subr.bf16.mxu0 0
  %738 = vmatpush1.bf16.msra.mxu0 %v489
  %739 = vmatprep.subr.bf16.mxu0 0
  %740 = vmatpush1.bf16.msra.mxu0 %v488
  %741 = vmatprep.subr.bf16.mxu0 0
  %742 = vmatpush1.bf16.msra.mxu0 %v487
  %743 = vmatprep.subr.bf16.mxu0 0
  %744 = vmatpush2.bf16.msra.mxu0 0
  %745 = vmatprep.subr.bf16.mxu0 0
  %746 = vmatpush2.bf16.msra.mxu0 0
  %747 = vmatprep.subr.bf16.mxu0 0
  %748 = vmatpush2.bf16.msra.mxu0 0
  %749 = vmatprep.subr.bf16.mxu0 0
  %750 = vmatpush2.bf16.msra.mxu0 0
  %751 = vmatprep.subr.bf16.mxu0 0
  %752 = vmatpush2.bf16.msra.mxu0 0
  %753 = vmatprep.subr.bf16.mxu0 0
  %754 = vmatpush2.bf16.msra.mxu0 0
  %755 = vmatprep.subr.bf16.mxu0 0
  %756 = vmatpush2.bf16.msra.mxu0 0
  %757 = vmatprep.subr.bf16.mxu0 0
  %758 = vmatpush2.bf16.msra.mxu0 0
  %759 = vmatprep.mubr.bf16.mxu0 0
  %760 = vmatmul.mubr.bf16.gmra.mxu0 %v529
  %v761 = vpop.f32.mrf.mxu0
  %v762 = vadd.f32 %v673, %v761
  %v763 = vpop.f32.mrf.mxu0
  %v764 = vpop.f32.mrf.mxu0
  %v765 = vadd.f32 %v676, %v764
  %v766 = vpop.f32.mrf.mxu0
  %767 = vmatprep.mubr.bf16.mxu0 0
  %768 = vmatmul.mubr.bf16.gmra.mxu0 %v532
  %v769 = vpop.f32.mrf.mxu0
  %v770 = vadd.f32 %v681, %v769
  %v771 = vpop.f32.mrf.mxu0
  %v772 = vpop.f32.mrf.mxu0
  %v773 = vadd.f32 %v684, %v772
  %v774 = vpop.f32.mrf.mxu0
  %775 = vmatprep.mubr.bf16.mxu0 0
  %776 = vmatmul.mubr.bf16.gmra.mxu0 %v535
  %v777 = vpop.f32.mrf.mxu0
  %v778 = vadd.f32 %v689, %v777
  %v779 = vpop.f32.mrf.mxu0
  %v780 = vpop.f32.mrf.mxu0
  %v781 = vadd.f32 %v692, %v780
  %v782 = vpop.f32.mrf.mxu0
  %783 = vmatprep.mubr.bf16.mxu0 0
  %784 = vmatmul.mubr.bf16.gmra.mxu0 %v538
  %v785 = vpop.f32.mrf.mxu0
  %v786 = vadd.f32 %v697, %v785
  %v787 = vpop.f32.mrf.mxu0
  %v788 = vpop.f32.mrf.mxu0
  %v789 = vadd.f32 %v700, %v788
  %v790 = vpop.f32.mrf.mxu0
  %791 = vmatprep.mubr.bf16.mxu0 0
  %792 = vmatmul.mubr.bf16.gmra.mxu0 %v541
  %v793 = vpop.f32.mrf.mxu0
  %v794 = vadd.f32 %v705, %v793
  %v795 = vpop.f32.mrf.mxu0
  %v796 = vpop.f32.mrf.mxu0
  %v797 = vadd.f32 %v708, %v796
  %v798 = vpop.f32.mrf.mxu0
  %799 = vmatprep.mubr.bf16.mxu0 0
  %800 = vmatmul.mubr.bf16.gmra.mxu0 %v544
  %v801 = vpop.f32.mrf.mxu0
  %v802 = vadd.f32 %v713, %v801
  %v803 = vpop.f32.mrf.mxu0
  %v804 = vpop.f32.mrf.mxu0
  %v805 = vadd.f32 %v716, %v804
  %v806 = vpop.f32.mrf.mxu0
  %807 = vmatprep.mubr.bf16.mxu0 0
  %808 = vmatmul.mubr.bf16.gmra.mxu0 %v547
  %v809 = vpop.f32.mrf.mxu0
  %v810 = vadd.f32 %v721, %v809
  %v811 = vpop.f32.mrf.mxu0
  %v812 = vpop.f32.mrf.mxu0
  %v813 = vadd.f32 %v724, %v812
  %v814 = vpop.f32.mrf.mxu0
  %815 = vdwg.mxu0
  %v816 = vxor.u32 %v762, 2147483648
  %v817 = vxor.u32 %v765, 2147483648
  %v818 = vxor.u32 %v770, 2147483648
  %v819 = vxor.u32 %v773, 2147483648
  %v820 = vxor.u32 %v778, 2147483648
  %v821 = vxor.u32 %v781, 2147483648
  %v822 = vxor.u32 %v786, 2147483648
  %v823 = vxor.u32 %v789, 2147483648
  %v824 = vxor.u32 %v794, 2147483648
  %v825 = vxor.u32 %v797, 2147483648
  %v826 = vxor.u32 %v802, 2147483648
  %v827 = vxor.u32 %v805, 2147483648
  %v828 = vxor.u32 %v810, 2147483648
  %v829 = vxor.u32 %v813, 2147483648
  %v830 = vmul.f32 %v816, 1.442695
  %v831 = vpow.pop %v830
  %v832 = vmul.f32 %v817, 1.442695
  %v833 = vpow.pop %v832
  %v834 = vmul.f32 %v818, 1.442695
  %v835 = vpow.pop %v834
  %v836 = vmul.f32 %v819, 1.442695
  %v837 = vpow.pop %v836
  %v838 = vmul.f32 %v820, 1.442695
  %v839 = vpow.pop %v838
  %v840 = vmul.f32 %v821, 1.442695
  %v841 = vpow.pop %v840
  %v842 = vmul.f32 %v822, 1.442695
  %v843 = vpow.pop %v842
  %v844 = vmul.f32 %v823, 1.442695
  %v845 = vpow.pop %v844
  %v846 = vmul.f32 %v824, 1.442695
  %v847 = vpow.pop %v846
  %v848 = vmul.f32 %v825, 1.442695
  %v849 = vpow.pop %v848
  %v850 = vmul.f32 %v826, 1.442695
  %v851 = vpow.pop %v850
  %v852 = vmul.f32 %v827, 1.442695
  %v853 = vpow.pop %v852
  %v854 = vmul.f32 %v828, 1.442695
  %v855 = vpow.pop %v854
  %v856 = vmul.f32 %v829, 1.442695
  %v857 = vpow.pop %v856
  %v858 = vadd.f32 %v831, 1.0
  %v859 = vadd.f32 %v833, 1.0
  %v860 = vadd.f32 %v835, 1.0
  %v861 = vadd.f32 %v837, 1.0
  %v862 = vadd.f32 %v839, 1.0
  %v863 = vadd.f32 %v841, 1.0
  %v864 = vadd.f32 %v843, 1.0
  %v865 = vadd.f32 %v845, 1.0
  %v866 = vadd.f32 %v847, 1.0
  %v867 = vadd.f32 %v849, 1.0
  %v868 = vadd.f32 %v851, 1.0
  %v869 = vadd.f32 %v853, 1.0
  %v870 = vadd.f32 %v855, 1.0
  %v871 = vadd.f32 %v857, 1.0
  %v872 = vrcp.pop %v858
  %v873 = vmul.f32 1.0, %v872
  %v874 = vrcp.pop %v859
  %v875 = vmul.f32 1.0, %v874
  %v876 = vrcp.pop %v860
  %v877 = vmul.f32 1.0, %v876
  %v878 = vrcp.pop %v861
  %v879 = vmul.f32 1.0, %v878
  %v880 = vrcp.pop %v862
  %v881 = vmul.f32 1.0, %v880
  %v882 = vrcp.pop %v863
  %v883 = vmul.f32 1.0, %v882
  %v884 = vrcp.pop %v864
  %v885 = vmul.f32 1.0, %v884
  %v886 = vrcp.pop %v865
  %v887 = vmul.f32 1.0, %v886
  %v888 = vrcp.pop %v866
  %v889 = vmul.f32 1.0, %v888
  %v890 = vrcp.pop %v867
  %v891 = vmul.f32 1.0, %v890
  %v892 = vrcp.pop %v868
  %v893 = vmul.f32 1.0, %v892
  %v894 = vrcp.pop %v869
  %v895 = vmul.f32 1.0, %v894
  %v896 = vrcp.pop %v870
  %v897 = vmul.f32 1.0, %v896
  %v898 = vrcp.pop %v871
  %v899 = vmul.f32 1.0, %v898
  %914 = vrot.lane.b32.xlu0 %v873, 64
  %v915 = vpop.permute.xlu0 %914
  %916 = vrot.lane.b32.xlu0 %v875, 64
  %v917 = vpop.permute.xlu0 %916
  %918 = vrot.lane.b32.xlu0 %v877, 64
  %v919 = vpop.permute.xlu0 %918
  %920 = vrot.lane.b32.xlu0 %v879, 64
  %v921 = vpop.permute.xlu0 %920
  %922 = vrot.lane.b32.xlu0 %v881, 64
  %v923 = vpop.permute.xlu0 %922
  %924 = vrot.lane.b32.xlu0 %v883, 64
  %v925 = vpop.permute.xlu0 %924
  %926 = vrot.lane.b32.xlu0 %v885, 64
  %v927 = vpop.permute.xlu0 %926
  %928 = vrot.lane.b32.xlu0 %v887, 64
  %v929 = vpop.permute.xlu0 %928
  %930 = vrot.lane.b32.xlu0 %v889, 64
  %v931 = vpop.permute.xlu0 %930
  %932 = vrot.lane.b32.xlu0 %v891, 64
  %v933 = vpop.permute.xlu0 %932
  %934 = vrot.lane.b32.xlu0 %v893, 64
  %v935 = vpop.permute.xlu0 %934
  %936 = vrot.lane.b32.xlu0 %v895, 64
  %v937 = vpop.permute.xlu0 %936
  %938 = vrot.lane.b32.xlu0 %v897, 64
  %v939 = vpop.permute.xlu0 %938
  %940 = vrot.lane.b32.xlu0 %v899, 64
  %v941 = vpop.permute.xlu0 %940
  %v956 = vmul.f32 %v762, %v915
  %v957 = vmul.f32 %v765, %v917
  %v958 = vmul.f32 %v770, %v919
  %v959 = vmul.f32 %v773, %v921
  %v960 = vmul.f32 %v778, %v923
  %v961 = vmul.f32 %v781, %v925
  %v962 = vmul.f32 %v786, %v927
  %v963 = vmul.f32 %v789, %v929
  %v964 = vmul.f32 %v794, %v931
  %v965 = vmul.f32 %v797, %v933
  %v966 = vmul.f32 %v802, %v935
  %v967 = vmul.f32 %v805, %v937
  %v968 = vmul.f32 %v810, %v939
  %v969 = vmul.f32 %v813, %v941
  %v970 = vpack.c.bf16 %v957, %v956
  %v971 = vpack.c.bf16 %v959, %v958
  %v972 = vpack.c.bf16 %v961, %v960
  %v973 = vpack.c.bf16 %v963, %v962
  %v974 = vpack.c.bf16 %v965, %v964
  %v975 = vpack.c.bf16 %v967, %v966
  %v976 = vpack.c.bf16 %v969, %v968
  %v984 = vunpack.c.l.b16 %v970
  %v985 = vunpack.c.h.b16 %v970
  %v986 = vunpack.c.l.b16 %v971
  %v987 = vunpack.c.h.b16 %v971
  %v988 = vunpack.c.l.b16 %v972
  %v989 = vunpack.c.h.b16 %v972
  %v990 = vunpack.c.l.b16 %v973
  %v991 = vunpack.c.h.b16 %v973
  %v992 = vunpack.c.l.b16 %v974
  %v993 = vunpack.c.h.b16 %v974
  %v994 = vunpack.c.l.b16 %v975
  %v995 = vunpack.c.h.b16 %v975
  %v996 = vunpack.c.l.b16 %v976
  %v997 = vunpack.c.h.b16 %v976
  %v998 = vpack.c.b16 %v984, %v984
  %v999 = vpack.c.b16 %v985, %v985
  %v1000 = vpack.c.b16 %v986, %v986
  %v1001 = vpack.c.b16 %v987, %v987
  %v1002 = vpack.c.b16 %v988, %v988
  %v1003 = vpack.c.b16 %v989, %v989
  %v1004 = vpack.c.b16 %v990, %v990
  %v1005 = vpack.c.b16 %v991, %v991
  %v1006 = vpack.c.b16 %v992, %v992
  %v1007 = vpack.c.b16 %v993, %v993
  %v1008 = vpack.c.b16 %v994, %v994
  %v1009 = vpack.c.b16 %v995, %v995
  %v1010 = vpack.c.b16 %v996, %v996
  %v1011 = vpack.c.b16 %v997, %v997
  %vm1026 = vcmask 519168
  %1027 = vst.msk [vmem:[%s3] sm:$0xf] %vm1026, %v998
  %1028 = vst.msk [vmem:[%s3 + $0x4] sm:$0xf] %vm1026, %v999
  %1029 = vst.msk [vmem:[%s3 + $0x8] sm:$0xf] %vm1026, %v1000
  %1030 = vst.msk [vmem:[%s3 + $0xc] sm:$0xf] %vm1026, %v1001
  %1031 = vst.msk [vmem:[%s3 + $0x10] sm:$0xf] %vm1026, %v1002
  %1032 = vst.msk [vmem:[%s3 + $0x14] sm:$0xf] %vm1026, %v1003
  %1033 = vst.msk [vmem:[%s3 + $0x18] sm:$0xf] %vm1026, %v1004
  %1034 = vst.msk [vmem:[%s3 + $0x1c] sm:$0xf] %vm1026, %v1005
  %1035 = vst.msk [vmem:[%s3 + $0x20] sm:$0xf] %vm1026, %v1006
  %1036 = vst.msk [vmem:[%s3 + $0x24] sm:$0xf] %vm1026, %v1007
  %1037 = vst.msk [vmem:[%s3 + $0x28] sm:$0xf] %vm1026, %v1008
  %1038 = vst.msk [vmem:[%s3 + $0x2c] sm:$0xf] %vm1026, %v1009
  %1039 = vst.msk [vmem:[%s3 + $0x30] sm:$0xf] %vm1026, %v1010
  %1040 = vst.msk [vmem:[%s3 + $0x34] sm:$0xf] %vm1026, %v1011
  // Predicated region
  $region14: #{gated_conv2d_encoder_forward.9} parent=0 // pred_check
    _
  $region15: #{gated_conv2d_encoder_forward.9} parent=0 // pred_check_branch
    %1042 = sbr.rel (0) target = $region17
  $region16: #{gated_conv2d_encoder_forward.9} parent=0 // pred_region
    _
  $region17: #{gated_conv2d_encoder_forward.9} parent=0 // pred_fallthru
    _
  // Predicated region
  $region18: #{gated_conv2d_encoder_forward.9} parent=0 // pred_check
    _
  $region19: #{gated_conv2d_encoder_forward.9} parent=0 // pred_check_branch
    %1044 = sbr.rel (0) target = $region21
  $region20: #{gated_conv2d_encoder_forward.9} parent=0 // pred_region
    _
  $region21: #{gated_conv2d_encoder_forward.9} parent=0 // pred_fallthru
    _

// kernel: gated_conv2d_encoder_forward.10
$region0: #{gated_conv2d_encoder_forward.10}
  #allocation0 [shape = 'u32[]', space=smem, size = 0x4, offset = 0x4, fixed_abs, tag = 'smem constant byte address 0x4 - core index']
  #allocation1 [shape = 'u32[144,128]{1,0:T(1,128)}', space=vmem, size = 0x12000, scoped, tag = 'internal scratch']
  %s0 = inlined_call_operand.vmem [shape: bf16[112,576], index: 0, kind: input, shape index: {}]
  %s1 = inlined_call_operand.vmem [shape: bf16[576,12], index: 1, kind: input, shape index: {}]
  %s2 = inlined_call_operand.vmem [shape: f32[1,12], index: 2, kind: input, shape index: {}]
  %s3 = inlined_call_operand.vmem [shape: bf16[112,6], index: 3, kind: output, shape index: {}]
  %s4 = sld [smem:[#allocation0]]
  $region22: #{gated_conv2d_encoder_forward.10} parent=0
    _
  %s6 = ssub.s32 1, %s4
  %s7 = scalar_select 0, %s6, %s4
  // Predicated region
  $region2: #{gated_conv2d_encoder_forward.10} parent=0 // pred_check
    _
  $region3: #{gated_conv2d_encoder_forward.10} parent=0 // pred_check_branch
    %9 = sbr.rel (0) target = $region5
  $region4: #{gated_conv2d_encoder_forward.10} parent=0 // pred_region
    _
  $region5: #{gated_conv2d_encoder_forward.10} parent=0 // pred_fallthru
    _
  // Predicated region
  $region6: #{gated_conv2d_encoder_forward.10} parent=0 // pred_check
    _
  $region7: #{gated_conv2d_encoder_forward.10} parent=0 // pred_check_branch
    %11 = sbr.rel (0) target = $region9
  $region8: #{gated_conv2d_encoder_forward.10} parent=0 // pred_region
    _
  $region9: #{gated_conv2d_encoder_forward.10} parent=0 // pred_fallthru
    _
  // Predicated region
  $region10: #{gated_conv2d_encoder_forward.10} parent=0 // pred_check
    _
  $region11: #{gated_conv2d_encoder_forward.10} parent=0 // pred_check_branch
    %13 = sbr.rel (0) target = $region13
  $region12: #{gated_conv2d_encoder_forward.10} parent=0 // pred_region
    _
  $region13: #{gated_conv2d_encoder_forward.10} parent=0 // pred_fallthru
    _
  %v15 = vld [vmem:[%s0] sm:$0xff]
  %v16 = vld [vmem:[%s0 + $0x8] sm:$0xff]
  %v17 = vld [vmem:[%s0 + $0x10] sm:$0xf]
  %v18 = vld [vmem:[%s0 + $0x14] sm:$0xff]
  %v19 = vld [vmem:[%s0 + $0x1c] sm:$0xff]
  %v20 = vld [vmem:[%s0 + $0x24] sm:$0xf]
  %v21 = vld [vmem:[%s0 + $0x28] sm:$0xff]
  %v22 = vld [vmem:[%s0 + $0x30] sm:$0xff]
  %v23 = vld [vmem:[%s0 + $0x38] sm:$0xf]
  %v24 = vld [vmem:[%s0 + $0x3c] sm:$0xff]
  %v25 = vld [vmem:[%s0 + $0x44] sm:$0xff]
  %v26 = vld [vmem:[%s0 + $0x4c] sm:$0xf]
  %v27 = vld [vmem:[%s0 + $0x50] sm:$0xff]
  %v28 = vld [vmem:[%s0 + $0x58] sm:$0xff]
  %v29 = vld [vmem:[%s0 + $0x60] sm:$0xf]
  %v30 = vld [vmem:[%s0 + $0x64] sm:$0xff]
  %v31 = vld [vmem:[%s0 + $0x6c] sm:$0xff]
  %v32 = vld [vmem:[%s0 + $0x74] sm:$0xf]
  %v33 = vld [vmem:[%s0 + $0x78] sm:$0xff]
  %v34 = vld [vmem:[%s0 + $0x80] sm:$0xff]
  %v35 = vld [vmem:[%s0 + $0x88] sm:$0xf]
  %v36 = vld [vmem:[%s0 + $0x8c] sm:$0xff]
  %v37 = vld [vmem:[%s0 + $0x94] sm:$0xff]
  %v38 = vld [vmem:[%s0 + $0x9c] sm:$0xf]
  %v39 = vld [vmem:[%s0 + $0xa0] sm:$0xff]
  %v40 = vld [vmem:[%s0 + $0xa8] sm:$0xff]
  %v41 = vld [vmem:[%s0 + $0xb0] sm:$0xf]
  %v42 = vld [vmem:[%s0 + $0xb4] sm:$0xff]
  %v43 = vld [vmem:[%s0 + $0xbc] sm:$0xff]
  %v44 = vld [vmem:[%s0 + $0xc4] sm:$0xf]
  %v45 = vld [vmem:[%s0 + $0xc8] sm:$0xff]
  %v46 = vld [vmem:[%s0 + $0xd0] sm:$0xff]
  %v47 = vld [vmem:[%s0 + $0xd8] sm:$0xf]
  %v48 = vld [vmem:[%s0 + $0xdc] sm:$0xff]
  %v49 = vld [vmem:[%s0 + $0xe4] sm:$0xff]
  %v50 = vld [vmem:[%s0 + $0xec] sm:$0xf]
  %v51 = vld [vmem:[%s0 + $0xf0] sm:$0xff]
  %v52 = vld [vmem:[%s0 + $0xf8] sm:$0xff]
  %v53 = vld [vmem:[%s0 + $0x100] sm:$0xf]
  %v54 = vld [vmem:[%s0 + $0x104] sm:$0xff]
  %v55 = vld [vmem:[%s0 + $0x10c] sm:$0xff]
  %v56 = vld [vmem:[%s0 + $0x114] sm:$0xf]
  %v57 = vld [vmem:[%s1] sm:$0xf]
  %v58 = vld [vmem:[%s1 + $0x4] sm:$0xf]
  %v59 = vld [vmem:[%s1 + $0x8] sm:$0xf]
  %v60 = vld [vmem:[%s1 + $0xc] sm:$0xf]
  %v61 = vld [vmem:[%s1 + $0x10] sm:$0xf]
  %v62 = vld [vmem:[%s1 + $0x14] sm:$0xf]
  %v63 = vld [vmem:[%s1 + $0x18] sm:$0xf]
  %v64 = vld [vmem:[%s1 + $0x1c] sm:$0xf]
  %v65 = vld [vmem:[%s1 + $0x20] sm:$0xf]
  %v66 = vld [vmem:[%s1 + $0x24] sm:$0xf]
  %v67 = vld [vmem:[%s1 + $0x28] sm:$0xf]
  %v68 = vld [vmem:[%s1 + $0x2c] sm:$0xf]
  %v69 = vld [vmem:[%s1 + $0x30] sm:$0xf]
  %v70 = vld [vmem:[%s1 + $0x34] sm:$0xf]
  %v71 = vld [vmem:[%s1 + $0x38] sm:$0xf]
  %v72 = vld [vmem:[%s1 + $0x3c] sm:$0xf]
  %v73 = vld [vmem:[%s1 + $0x40] sm:$0xf]
  %v74 = vld [vmem:[%s1 + $0x44] sm:$0xf]
  %v75 = vld [vmem:[%s1 + $0x48] sm:$0xf]
  %v76 = vld [vmem:[%s1 + $0x4c] sm:$0xf]
  %v77 = vld [vmem:[%s1 + $0x50] sm:$0xf]
  %v78 = vld [vmem:[%s1 + $0x54] sm:$0xf]
  %v79 = vld [vmem:[%s1 + $0x58] sm:$0xf]
  %v80 = vld [vmem:[%s1 + $0x5c] sm:$0xf]
  %v81 = vld [vmem:[%s1 + $0x60] sm:$0xf]
  %v82 = vld [vmem:[%s1 + $0x64] sm:$0xf]
  %v83 = vld [vmem:[%s1 + $0x68] sm:$0xf]
  %v84 = vld [vmem:[%s1 + $0x6c] sm:$0xf]
  %v85 = vld [vmem:[%s1 + $0x70] sm:$0xf]
  %v86 = vld [vmem:[%s1 + $0x74] sm:$0xf]
  %v87 = vld [vmem:[%s1 + $0x78] sm:$0xf]
  %v88 = vld [vmem:[%s1 + $0x7c] sm:$0xf]
  %v89 = vld [vmem:[%s1 + $0x80] sm:$0xf]
  %v90 = vld [vmem:[%s1 + $0x84] sm:$0xf]
  %v91 = vld [vmem:[%s1 + $0x88] sm:$0xf]
  %v92 = vld [vmem:[%s1 + $0x8c] sm:$0xf]
  %v93 = vld [vmem:[%s1 + $0x90] sm:$0xf]
  %v94 = vld [vmem:[%s1 + $0x94] sm:$0xf]
  %v95 = vld [vmem:[%s1 + $0x98] sm:$0xf]
  %v96 = vld [vmem:[%s1 + $0x9c] sm:$0xf]
  %v97 = vld [vmem:[%s1 + $0xa0] sm:$0xf]
  %v98 = vld [vmem:[%s1 + $0xa4] sm:$0xf]
  %v99 = vld [vmem:[%s1 + $0xa8] sm:$0xf]
  %v100 = vld [vmem:[%s1 + $0xac] sm:$0xf]
  %v101 = vld [vmem:[%s1 + $0xb0] sm:$0xf]
  %v102 = vld [vmem:[%s1 + $0xb4] sm:$0xf]
  %v103 = vld [vmem:[%s1 + $0xb8] sm:$0xf]
  %v104 = vld [vmem:[%s1 + $0xbc] sm:$0xf]
  %v105 = vld [vmem:[%s1 + $0xc0] sm:$0xf]
  %v106 = vld [vmem:[%s1 + $0xc4] sm:$0xf]
  %v107 = vld [vmem:[%s1 + $0xc8] sm:$0xf]
  %v108 = vld [vmem:[%s1 + $0xcc] sm:$0xf]
  %v109 = vld [vmem:[%s1 + $0xd0] sm:$0xf]
  %v110 = vld [vmem:[%s1 + $0xd4] sm:$0xf]
  %v111 = vld [vmem:[%s1 + $0xd8] sm:$0xf]
  %v112 = vld [vmem:[%s1 + $0xdc] sm:$0xf]
  %v113 = vld [vmem:[%s1 + $0xe0] sm:$0xf]
  %v114 = vld [vmem:[%s1 + $0xe4] sm:$0xf]
  %v115 = vld [vmem:[%s1 + $0xe8] sm:$0xf]
  %v116 = vld [vmem:[%s1 + $0xec] sm:$0xf]
  %v117 = vld [vmem:[%s1 + $0xf0] sm:$0xf]
  %v118 = vld [vmem:[%s1 + $0xf4] sm:$0xf]
  %v119 = vld [vmem:[%s1 + $0xf8] sm:$0xf]
  %v120 = vld [vmem:[%s1 + $0xfc] sm:$0xf]
  %v121 = vld [vmem:[%s1 + $0x100] sm:$0xf]
  %v122 = vld [vmem:[%s1 + $0x104] sm:$0xf]
  %v123 = vld [vmem:[%s1 + $0x108] sm:$0xf]
  %v124 = vld [vmem:[%s1 + $0x10c] sm:$0xf]
  %v125 = vld [vmem:[%s1 + $0x110] sm:$0xf]
  %v126 = vld [vmem:[%s1 + $0x114] sm:$0xf]
  %v127 = vld [vmem:[%s1 + $0x118] sm:$0xf]
  %v128 = vld [vmem:[%s1 + $0x11c] sm:$0xf]
  %v129 = vld [vmem:[%s2] sm:$0x1]
  %v131 = vlaneseq
  %v132 = vshrl.u32 %v131, 7
  %v133 = vsub.s32 0, %v132
  %v134 = vrot.slane %v129, %v133
  %v178 = vunpack.c.l.b16 %v15
  %v179 = vunpack.c.h.b16 %v15
  %v180 = vunpack.c.l.b16 %v16
  %v181 = vunpack.c.h.b16 %v16
  %v182 = vunpack.c.l.b16 %v17
  %v183 = vunpack.c.l.b16 %v18
  %v184 = vunpack.c.h.b16 %v18
  %v185 = vunpack.c.l.b16 %v19
  %v186 = vunpack.c.h.b16 %v19
  %v187 = vunpack.c.l.b16 %v20
  %v188 = vunpack.c.l.b16 %v21
  %v189 = vunpack.c.h.b16 %v21
  %v190 = vunpack.c.l.b16 %v22
  %v191 = vunpack.c.h.b16 %v22
  %v192 = vunpack.c.l.b16 %v23
  %v193 = vunpack.c.l.b16 %v24
  %v194 = vunpack.c.h.b16 %v24
  %v195 = vunpack.c.l.b16 %v25
  %v196 = vunpack.c.h.b16 %v25
  %v197 = vunpack.c.l.b16 %v26
  %v198 = vunpack.c.l.b16 %v27
  %v199 = vunpack.c.h.b16 %v27
  %v200 = vunpack.c.l.b16 %v28
  %v201 = vunpack.c.h.b16 %v28
  %v202 = vunpack.c.l.b16 %v29
  %v203 = vunpack.c.l.b16 %v30
  %v204 = vunpack.c.h.b16 %v30
  %v205 = vunpack.c.l.b16 %v31
  %v206 = vunpack.c.h.b16 %v31
  %v207 = vunpack.c.l.b16 %v32
  %v208 = vunpack.c.l.b16 %v33
  %v209 = vunpack.c.h.b16 %v33
  %v210 = vunpack.c.l.b16 %v34
  %v211 = vunpack.c.h.b16 %v34
  %v212 = vunpack.c.l.b16 %v35
  %v213 = vunpack.c.l.b16 %v36
  %v214 = vunpack.c.h.b16 %v36
  %v215 = vunpack.c.l.b16 %v37
  %v216 = vunpack.c.h.b16 %v37
  %v217 = vunpack.c.l.b16 %v38
  %v218 = vunpack.c.l.b16 %v39
  %v219 = vunpack.c.h.b16 %v39
  %v220 = vunpack.c.l.b16 %v40
  %v221 = vunpack.c.h.b16 %v40
  %v222 = vunpack.c.l.b16 %v41
  %v223 = vunpack.c.l.b16 %v42
  %v224 = vunpack.c.h.b16 %v42
  %v225 = vunpack.c.l.b16 %v43
  %v226 = vunpack.c.h.b16 %v43
  %v227 = vunpack.c.l.b16 %v44
  %v228 = vunpack.c.l.b16 %v45
  %v229 = vunpack.c.h.b16 %v45
  %v230 = vunpack.c.l.b16 %v46
  %v231 = vunpack.c.h.b16 %v46
  %v232 = vunpack.c.l.b16 %v47
  %v233 = vunpack.c.l.b16 %v48
  %v234 = vunpack.c.h.b16 %v48
  %v235 = vunpack.c.l.b16 %v49
  %v236 = vunpack.c.h.b16 %v49
  %v237 = vunpack.c.l.b16 %v50
  %v238 = vunpack.c.l.b16 %v51
  %v239 = vunpack.c.h.b16 %v51
  %v240 = vunpack.c.l.b16 %v52
  %v241 = vunpack.c.h.b16 %v52
  %v242 = vunpack.c.l.b16 %v53
  %v243 = vunpack.c.l.b16 %v54
  %v244 = vunpack.c.h.b16 %v54
  %v245 = vunpack.c.l.b16 %v55
  %v246 = vunpack.c.h.b16 %v55
  %v247 = vunpack.c.l.b16 %v56
  %v248 = vpack.c.b16 %v183, %v178
  %v249 = vpack.c.b16 %v184, %v179
  %v250 = vpack.c.b16 %v185, %v180
  %v251 = vpack.c.b16 %v186, %v181
  %v252 = vpack.c.b16 %v187, %v182
  %v253 = vpack.c.b16 %v193, %v188
  %v254 = vpack.c.b16 %v194, %v189
  %v255 = vpack.c.b16 %v195, %v190
  %v256 = vpack.c.b16 %v196, %v191
  %v257 = vpack.c.b16 %v197, %v192
  %v258 = vpack.c.b16 %v203, %v198
  %v259 = vpack.c.b16 %v204, %v199
  %v260 = vpack.c.b16 %v205, %v200
  %v261 = vpack.c.b16 %v206, %v201
  %v262 = vpack.c.b16 %v207, %v202
  %v263 = vpack.c.b16 %v213, %v208
  %v264 = vpack.c.b16 %v214, %v209
  %v265 = vpack.c.b16 %v215, %v210
  %v266 = vpack.c.b16 %v216, %v211
  %v267 = vpack.c.b16 %v217, %v212
  %v268 = vpack.c.b16 %v223, %v218
  %v269 = vpack.c.b16 %v224, %v219
  %v270 = vpack.c.b16 %v225, %v220
  %v271 = vpack.c.b16 %v226, %v221
  %v272 = vpack.c.b16 %v227, %v222
  %v273 = vpack.c.b16 %v233, %v228
  %v274 = vpack.c.b16 %v234, %v229
  %v275 = vpack.c.b16 %v235, %v230
  %v276 = vpack.c.b16 %v236, %v231
  %v277 = vpack.c.b16 %v237, %v232
  %v278 = vpack.c.b16 %v243, %v238
  %v279 = vpack.c.b16 %v244, %v239
  %v280 = vpack.c.b16 %v245, %v240
  %v281 = vpack.c.b16 %v246, %v241
  %v282 = vpack.c.b16 %v247, %v242
  %v383 = vunpack.c.l.b16 %v57
  %v384 = vunpack.c.l.b16 %v58
  %v385 = vunpack.c.l.b16 %v59
  %v386 = vunpack.c.l.b16 %v60
  %v387 = vunpack.c.l.b16 %v61
  %v388 = vunpack.c.l.b16 %v62
  %v389 = vunpack.c.l.b16 %v63
  %v390 = vunpack.c.l.b16 %v64
  %v391 = vunpack.c.l.b16 %v65
  %v392 = vunpack.c.l.b16 %v66
  %v393 = vunpack.c.l.b16 %v67
  %v394 = vunpack.c.l.b16 %v68
  %v395 = vunpack.c.l.b16 %v69
  %v396 = vunpack.c.l.b16 %v70
  %v397 = vunpack.c.l.b16 %v71
  %v398 = vunpack.c.l.b16 %v72
  %v399 = vunpack.c.l.b16 %v73
  %v400 = vunpack.c.l.b16 %v74
  %v401 = vunpack.c.l.b16 %v75
  %v402 = vunpack.c.l.b16 %v76
  %v403 = vunpack.c.l.b16 %v77
  %v404 = vunpack.c.l.b16 %v78
  %v405 = vunpack.c.l.b16 %v79
  %v406 = vunpack.c.l.b16 %v80
  %v407 = vunpack.c.l.b16 %v81
  %v408 = vunpack.c.l.b16 %v82
  %v409 = vunpack.c.l.b16 %v83
  %v410 = vunpack.c.l.b16 %v84
  %v411 = vunpack.c.l.b16 %v85
  %v412 = vunpack.c.l.b16 %v86
  %v413 = vunpack.c.l.b16 %v87
  %v414 = vunpack.c.l.b16 %v88
  %v415 = vunpack.c.l.b16 %v89
  %v416 = vunpack.c.l.b16 %v90
  %v417 = vunpack.c.l.b16 %v91
  %v418 = vunpack.c.l.b16 %v92
  %v419 = vunpack.c.l.b16 %v93
  %v420 = vunpack.c.l.b16 %v94
  %v421 = vunpack.c.l.b16 %v95
  %v422 = vunpack.c.l.b16 %v96
  %v423 = vunpack.c.l.b16 %v97
  %v424 = vunpack.c.l.b16 %v98
  %v425 = vunpack.c.l.b16 %v99
  %v426 = vunpack.c.l.b16 %v100
  %v427 = vunpack.c.l.b16 %v101
  %v428 = vunpack.c.l.b16 %v102
  %v429 = vunpack.c.l.b16 %v103
  %v430 = vunpack.c.l.b16 %v104
  %v431 = vunpack.c.l.b16 %v105
  %v432 = vunpack.c.l.b16 %v106
  %v433 = vunpack.c.l.b16 %v107
  %v434 = vunpack.c.l.b16 %v108
  %v435 = vunpack.c.l.b16 %v109
  %v436 = vunpack.c.l.b16 %v110
  %v437 = vunpack.c.l.b16 %v111
  %v438 = vunpack.c.l.b16 %v112
  %v439 = vunpack.c.l.b16 %v113
  %v440 = vunpack.c.l.b16 %v114
  %v441 = vunpack.c.l.b16 %v115
  %v442 = vunpack.c.l.b16 %v116
  %v443 = vunpack.c.l.b16 %v117
  %v444 = vunpack.c.l.b16 %v118
  %v445 = vunpack.c.l.b16 %v119
  %v446 = vunpack.c.l.b16 %v120
  %v447 = vunpack.c.l.b16 %v121
  %v448 = vunpack.c.l.b16 %v122
  %v449 = vunpack.c.l.b16 %v123
  %v450 = vunpack.c.l.b16 %v124
  %v451 = vunpack.c.l.b16 %v125
  %v452 = vunpack.c.l.b16 %v126
  %v453 = vunpack.c.l.b16 %v127
  %v454 = vunpack.c.l.b16 %v128
  %v455 = vpack.c.b16 %v384, %v383
  %v456 = vpack.c.b16 %v386, %v385
  %v457 = vpack.c.b16 %v388, %v387
  %v458 = vpack.c.b16 %v390, %v389
  %v459 = vpack.c.b16 %v392, %v391
  %v460 = vpack.c.b16 %v394, %v393
  %v461 = vpack.c.b16 %v396, %v395
  %v462 = vpack.c.b16 %v398, %v397
  %v463 = vpack.c.b16 %v400, %v399
  %v464 = vpack.c.b16 %v402, %v401
  %v465 = vpack.c.b16 %v404, %v403
  %v466 = vpack.c.b16 %v406, %v405
  %v467 = vpack.c.b16 %v408, %v407
  %v468 = vpack.c.b16 %v410, %v409
  %v469 = vpack.c.b16 %v412, %v411
  %v470 = vpack.c.b16 %v414, %v413
  %v471 = vpack.c.b16 %v416, %v415
  %v472 = vpack.c.b16 %v418, %v417
  %v473 = vpack.c.b16 %v420, %v419
  %v474 = vpack.c.b16 %v422, %v421
  %v475 = vpack.c.b16 %v424, %v423
  %v476 = vpack.c.b16 %v426, %v425
  %v477 = vpack.c.b16 %v428, %v427
  %v478 = vpack.c.b16 %v430, %v429
  %v479 = vpack.c.b16 %v432, %v431
  %v480 = vpack.c.b16 %v434, %v433
  %v481 = vpack.c.b16 %v436, %v435
  %v482 = vpack.c.b16 %v438, %v437
  %v483 = vpack.c.b16 %v440, %v439
  %v484 = vpack.c.b16 %v442, %v441
  %v485 = vpack.c.b16 %v444, %v443
  %v486 = vpack.c.b16 %v446, %v445
  %v487 = vpack.c.b16 %v448, %v447
  %v488 = vpack.c.b16 %v450, %v449
  %v489 = vpack.c.b16 %v452, %v451
  %v490 = vpack.c.b16 %v454, %v453
  %vm527 = vcmask 523264
  %v529 = vsel %vm527, %v252, 0
  %v532 = vsel %vm527, %v257, 0
  %v535 = vsel %vm527, %v262, 0
  %v538 = vsel %vm527, %v267, 0
  %v541 = vsel %vm527, %v272, 0
  %v544 = vsel %vm527, %v277, 0
  %v547 = vsel %vm527, %v282, 0
  %549 = vmatprep.subr.bf16.mxu0 0
  %550 = vmatpush1.bf16.msra.mxu0 %v462
  %551 = vmatprep.subr.bf16.mxu0 0
  %552 = vmatpush1.bf16.msra.mxu0 %v461
  %553 = vmatprep.subr.bf16.mxu0 0
  %554 = vmatpush1.bf16.msra.mxu0 %v460
  %555 = vmatprep.subr.bf16.mxu0 0
  %556 = vmatpush1.bf16.msra.mxu0 %v459
  %557 = vmatprep.subr.bf16.mxu0 0
  %558 = vmatpush1.bf16.msra.mxu0 %v458
  %559 = vmatprep.subr.bf16.mxu0 0
  %560 = vmatpush1.bf16.msra.mxu0 %v457
  %561 = vmatprep.subr.bf16.mxu0 0
  %562 = vmatpush1.bf16.msra.mxu0 %v456
  %563 = vmatprep.subr.bf16.mxu0 0
  %564 = vmatpush1.bf16.msra.mxu0 %v455
  %565 = vmatprep.subr.bf16.mxu0 0
  %566 = vmatpush2.bf16.msra.mxu0 %v470
  %567 = vmatprep.subr.bf16.mxu0 0
  %568 = vmatpush2.bf16.msra.mxu0 %v469
  %569 = vmatprep.subr.bf16.mxu0 0
  %570 = vmatpush2.bf16.msra.mxu0 %v468
  %571 = vmatprep.subr.bf16.mxu0 0
  %572 = vmatpush2.bf16.msra.mxu0 %v467
  %573 = vmatprep.subr.bf16.mxu0 0
  %574 = vmatpush2.bf16.msra.mxu0 %v466
  %575 = vmatprep.subr.bf16.mxu0 0
  %576 = vmatpush2.bf16.msra.mxu0 %v465
  %577 = vmatprep.subr.bf16.mxu0 0
  %578 = vmatpush2.bf16.msra.mxu0 %v464
  %579 = vmatprep.subr.bf16.mxu0 0
  %580 = vmatpush2.bf16.msra.mxu0 %v463
  %581 = vmatprep.mubr.bf16.mxu0 %v249
  %582 = vmatmul.mubr.bf16.gmra.mxu0 %v248
  %v583 = vpop.f32.mrf.mxu0
  %v584 = vadd.f32 %v134, %v583
  %v585 = vpop.f32.mrf.mxu0
  %v586 = vpop.f32.mrf.mxu0
  %v587 = vadd.f32 %v134, %v586
  %v588 = vpop.f32.mrf.mxu0
  %589 = vmatprep.mubr.bf16.mxu0 %v254
  %590 = vmatmul.mubr.bf16.gmra.mxu0 %v253
  %v591 = vpop.f32.mrf.mxu0
  %v592 = vadd.f32 %v134, %v591
  %v593 = vpop.f32.mrf.mxu0
  %v594 = vpop.f32.mrf.mxu0
  %v595 = vadd.f32 %v134, %v594
  %v596 = vpop.f32.mrf.mxu0
  %597 = vmatprep.mubr.bf16.mxu0 %v259
  %598 = vmatmul.mubr.bf16.gmra.mxu0 %v258
  %v599 = vpop.f32.mrf.mxu0
  %v600 = vadd.f32 %v134, %v599
  %v601 = vpop.f32.mrf.mxu0
  %v602 = vpop.f32.mrf.mxu0
  %v603 = vadd.f32 %v134, %v602
  %v604 = vpop.f32.mrf.mxu0
  %605 = vmatprep.mubr.bf16.mxu0 %v264
  %606 = vmatmul.mubr.bf16.gmra.mxu0 %v263
  %v607 = vpop.f32.mrf.mxu0
  %v608 = vadd.f32 %v134, %v607
  %v609 = vpop.f32.mrf.mxu0
  %v610 = vpop.f32.mrf.mxu0
  %v611 = vadd.f32 %v134, %v610
  %v612 = vpop.f32.mrf.mxu0
  %613 = vmatprep.mubr.bf16.mxu0 %v269
  %614 = vmatmul.mubr.bf16.gmra.mxu0 %v268
  %v615 = vpop.f32.mrf.mxu0
  %v616 = vadd.f32 %v134, %v615
  %v617 = vpop.f32.mrf.mxu0
  %v618 = vpop.f32.mrf.mxu0
  %v619 = vadd.f32 %v134, %v618
  %v620 = vpop.f32.mrf.mxu0
  %621 = vmatprep.mubr.bf16.mxu0 %v274
  %622 = vmatmul.mubr.bf16.gmra.mxu0 %v273
  %v623 = vpop.f32.mrf.mxu0
  %v624 = vadd.f32 %v134, %v623
  %v625 = vpop.f32.mrf.mxu0
  %v626 = vpop.f32.mrf.mxu0
  %v627 = vadd.f32 %v134, %v626
  %v628 = vpop.f32.mrf.mxu0
  %629 = vmatprep.mubr.bf16.mxu0 %v279
  %630 = vmatmul.mubr.bf16.gmra.mxu0 %v278
  %v631 = vpop.f32.mrf.mxu0
  %v632 = vadd.f32 %v134, %v631
  %v633 = vpop.f32.mrf.mxu0
  %v634 = vpop.f32.mrf.mxu0
  %v635 = vadd.f32 %v134, %v634
  %v636 = vpop.f32.mrf.mxu0
  %637 = vdwg.mxu0
  %638 = vmatprep.subr.bf16.mxu0 0
  %639 = vmatpush1.bf16.msra.mxu0 %v478
  %640 = vmatprep.subr.bf16.mxu0 0
  %641 = vmatpush1.bf16.msra.mxu0 %v477
  %642 = vmatprep.subr.bf16.mxu0 0
  %643 = vmatpush1.bf16.msra.mxu0 %v476
  %644 = vmatprep.subr.bf16.mxu0 0
  %645 = vmatpush1.bf16.msra.mxu0 %v475
  %646 = vmatprep.subr.bf16.mxu0 0
  %647 = vmatpush1.bf16.msra.mxu0 %v474
  %648 = vmatprep.subr.bf16.mxu0 0
  %649 = vmatpush1.bf16.msra.mxu0 %v473
  %650 = vmatprep.subr.bf16.mxu0 0
  %651 = vmatpush1.bf16.msra.mxu0 %v472
  %652 = vmatprep.subr.bf16.mxu0 0
  %653 = vmatpush1.bf16.msra.mxu0 %v471
  %654 = vmatprep.subr.bf16.mxu0 0
  %655 = vmatpush2.bf16.msra.mxu0 %v486
  %656 = vmatprep.subr.bf16.mxu0 0
  %657 = vmatpush2.bf16.msra.mxu0 %v485
  %658 = vmatprep.subr.bf16.mxu0 0
  %659 = vmatpush2.bf16.msra.mxu0 %v484
  %660 = vmatprep.subr.bf16.mxu0 0
  %661 = vmatpush2.bf16.msra.mxu0 %v483
  %662 = vmatprep.subr.bf16.mxu0 0
  %663 = vmatpush2.bf16.msra.mxu0 %v482
  %664 = vmatprep.subr.bf16.mxu0 0
  %665 = vmatpush2.bf16.msra.mxu0 %v481
  %666 = vmatprep.subr.bf16.mxu0 0
  %667 = vmatpush2.bf16.msra.mxu0 %v480
  %668 = vmatprep.subr.bf16.mxu0 0
  %669 = vmatpush2.bf16.msra.mxu0 %v479
  %670 = vmatprep.mubr.bf16.mxu0 %v251
  %671 = vmatmul.mubr.bf16.gmra.mxu0 %v250
  %v672 = vpop.f32.mrf.mxu0
  %v673 = vadd.f32 %v584, %v672
  %v674 = vpop.f32.mrf.mxu0
  %v675 = vpop.f32.mrf.mxu0
  %v676 = vadd.f32 %v587, %v675
  %v677 = vpop.f32.mrf.mxu0
  %678 = vmatprep.mubr.bf16.mxu0 %v256
  %679 = vmatmul.mubr.bf16.gmra.mxu0 %v255
  %v680 = vpop.f32.mrf.mxu0
  %v681 = vadd.f32 %v592, %v680
  %v682 = vpop.f32.mrf.mxu0
  %v683 = vpop.f32.mrf.mxu0
  %v684 = vadd.f32 %v595, %v683
  %v685 = vpop.f32.mrf.mxu0
  %686 = vmatprep.mubr.bf16.mxu0 %v261
  %687 = vmatmul.mubr.bf16.gmra.mxu0 %v260
  %v688 = vpop.f32.mrf.mxu0
  %v689 = vadd.f32 %v600, %v688
  %v690 = vpop.f32.mrf.mxu0
  %v691 = vpop.f32.mrf.mxu0
  %v692 = vadd.f32 %v603, %v691
  %v693 = vpop.f32.mrf.mxu0
  %694 = vmatprep.mubr.bf16.mxu0 %v266
  %695 = vmatmul.mubr.bf16.gmra.mxu0 %v265
  %v696 = vpop.f32.mrf.mxu0
  %v697 = vadd.f32 %v608, %v696
  %v698 = vpop.f32.mrf.mxu0
  %v699 = vpop.f32.mrf.mxu0
  %v700 = vadd.f32 %v611, %v699
  %v701 = vpop.f32.mrf.mxu0
  %702 = vmatprep.mubr.bf16.mxu0 %v271
  %703 = vmatmul.mubr.bf16.gmra.mxu0 %v270
  %v704 = vpop.f32.mrf.mxu0
  %v705 = vadd.f32 %v616, %v704
  %v706 = vpop.f32.mrf.mxu0
  %v707 = vpop.f32.mrf.mxu0
  %v708 = vadd.f32 %v619, %v707
  %v709 = vpop.f32.mrf.mxu0
  %710 = vmatprep.mubr.bf16.mxu0 %v276
  %711 = vmatmul.mubr.bf16.gmra.mxu0 %v275
  %v712 = vpop.f32.mrf.mxu0
  %v713 = vadd.f32 %v624, %v712
  %v714 = vpop.f32.mrf.mxu0
  %v715 = vpop.f32.mrf.mxu0
  %v716 = vadd.f32 %v627, %v715
  %v717 = vpop.f32.mrf.mxu0
  %718 = vmatprep.mubr.bf16.mxu0 %v281
  %719 = vmatmul.mubr.bf16.gmra.mxu0 %v280
  %v720 = vpop.f32.mrf.mxu0
  %v721 = vadd.f32 %v632, %v720
  %v722 = vpop.f32.mrf.mxu0
  %v723 = vpop.f32.mrf.mxu0
  %v724 = vadd.f32 %v635, %v723
  %v725 = vpop.f32.mrf.mxu0
  %726 = vdwg.mxu0
  %727 = vmatprep.subr.bf16.mxu0 0
  %728 = vmatpush1.bf16.msra.mxu0 0
  %729 = vmatprep.subr.bf16.mxu0 0
  %730 = vmatpush1.bf16.msra.mxu0 0
  %731 = vmatprep.subr.bf16.mxu0 0
  %732 = vmatpush1.bf16.msra.mxu0 0
  %733 = vmatprep.subr.bf16.mxu0 0
  %734 = vmatpush1.bf16.msra.mxu0 0
  %735 = vmatprep.subr.bf16.mxu0 0
  %736 = vmatpush1.bf16.msra.mxu0 %v490
  %737 = vmatprep.subr.bf16.mxu0 0
  %738 = vmatpush1.bf16.msra.mxu0 %v489
  %739 = vmatprep.subr.bf16.mxu0 0
  %740 = vmatpush1.bf16.msra.mxu0 %v488
  %741 = vmatprep.subr.bf16.mxu0 0
  %742 = vmatpush1.bf16.msra.mxu0 %v487
  %743 = vmatprep.subr.bf16.mxu0 0
  %744 = vmatpush2.bf16.msra.mxu0 0
  %745 = vmatprep.subr.bf16.mxu0 0
  %746 = vmatpush2.bf16.msra.mxu0 0
  %747 = vmatprep.subr.bf16.mxu0 0
  %748 = vmatpush2.bf16.msra.mxu0 0
  %749 = vmatprep.subr.bf16.mxu0 0
  %750 = vmatpush2.bf16.msra.mxu0 0
  %751 = vmatprep.subr.bf16.mxu0 0
  %752 = vmatpush2.bf16.msra.mxu0 0
  %753 = vmatprep.subr.bf16.mxu0 0
  %754 = vmatpush2.bf16.msra.mxu0 0
  %755 = vmatprep.subr.bf16.mxu0 0
  %756 = vmatpush2.bf16.msra.mxu0 0
  %757 = vmatprep.subr.bf16.mxu0 0
  %758 = vmatpush2.bf16.msra.mxu0 0
  %759 = vmatprep.mubr.bf16.mxu0 0
  %760 = vmatmul.mubr.bf16.gmra.mxu0 %v529
  %v761 = vpop.f32.mrf.mxu0
  %v762 = vadd.f32 %v673, %v761
  %v763 = vpop.f32.mrf.mxu0
  %v764 = vpop.f32.mrf.mxu0
  %v765 = vadd.f32 %v676, %v764
  %v766 = vpop.f32.mrf.mxu0
  %767 = vmatprep.mubr.bf16.mxu0 0
  %768 = vmatmul.mubr.bf16.gmra.mxu0 %v532
  %v769 = vpop.f32.mrf.mxu0
  %v770 = vadd.f32 %v681, %v769
  %v771 = vpop.f32.mrf.mxu0
  %v772 = vpop.f32.mrf.mxu0
  %v773 = vadd.f32 %v684, %v772
  %v774 = vpop.f32.mrf.mxu0
  %775 = vmatprep.mubr.bf16.mxu0 0
  %776 = vmatmul.mubr.bf16.gmra.mxu0 %v535
  %v777 = vpop.f32.mrf.mxu0
  %v778 = vadd.f32 %v689, %v777
  %v779 = vpop.f32.mrf.mxu0
  %v780 = vpop.f32.mrf.mxu0
  %v781 = vadd.f32 %v692, %v780
  %v782 = vpop.f32.mrf.mxu0
  %783 = vmatprep.mubr.bf16.mxu0 0
  %784 = vmatmul.mubr.bf16.gmra.mxu0 %v538
  %v785 = vpop.f32.mrf.mxu0
  %v786 = vadd.f32 %v697, %v785
  %v787 = vpop.f32.mrf.mxu0
  %v788 = vpop.f32.mrf.mxu0
  %v789 = vadd.f32 %v700, %v788
  %v790 = vpop.f32.mrf.mxu0
  %791 = vmatprep.mubr.bf16.mxu0 0
  %792 = vmatmul.mubr.bf16.gmra.mxu0 %v541
  %v793 = vpop.f32.mrf.mxu0
  %v794 = vadd.f32 %v705, %v793
  %v795 = vpop.f32.mrf.mxu0
  %v796 = vpop.f32.mrf.mxu0
  %v797 = vadd.f32 %v708, %v796
  %v798 = vpop.f32.mrf.mxu0
  %799 = vmatprep.mubr.bf16.mxu0 0
  %800 = vmatmul.mubr.bf16.gmra.mxu0 %v544
  %v801 = vpop.f32.mrf.mxu0
  %v802 = vadd.f32 %v713, %v801
  %v803 = vpop.f32.mrf.mxu0
  %v804 = vpop.f32.mrf.mxu0
  %v805 = vadd.f32 %v716, %v804
  %v806 = vpop.f32.mrf.mxu0
  %807 = vmatprep.mubr.bf16.mxu0 0
  %808 = vmatmul.mubr.bf16.gmra.mxu0 %v547
  %v809 = vpop.f32.mrf.mxu0
  %v810 = vadd.f32 %v721, %v809
  %v811 = vpop.f32.mrf.mxu0
  %v812 = vpop.f32.mrf.mxu0
  %v813 = vadd.f32 %v724, %v812
  %v814 = vpop.f32.mrf.mxu0
  %815 = vdwg.mxu0
  %v816 = vxor.u32 %v762, 2147483648
  %v817 = vxor.u32 %v765, 2147483648
  %v818 = vxor.u32 %v770, 2147483648
  %v819 = vxor.u32 %v773, 2147483648
  %v820 = vxor.u32 %v778, 2147483648
  %v821 = vxor.u32 %v781, 2147483648
  %v822 = vxor.u32 %v786, 2147483648
  %v823 = vxor.u32 %v789, 2147483648
  %v824 = vxor.u32 %v794, 2147483648
  %v825 = vxor.u32 %v797, 2147483648
  %v826 = vxor.u32 %v802, 2147483648
  %v827 = vxor.u32 %v805, 2147483648
  %v828 = vxor.u32 %v810, 2147483648
  %v829 = vxor.u32 %v813, 2147483648
  %v830 = vmul.f32 %v816, 1.442695
  %v831 = vpow.pop %v830
  %v832 = vmul.f32 %v817, 1.442695
  %v833 = vpow.pop %v832
  %v834 = vmul.f32 %v818, 1.442695
  %v835 = vpow.pop %v834
  %v836 = vmul.f32 %v819, 1.442695
  %v837 = vpow.pop %v836
  %v838 = vmul.f32 %v820, 1.442695
  %v839 = vpow.pop %v838
  %v840 = vmul.f32 %v821, 1.442695
  %v841 = vpow.pop %v840
  %v842 = vmul.f32 %v822, 1.442695
  %v843 = vpow.pop %v842
  %v844 = vmul.f32 %v823, 1.442695
  %v845 = vpow.pop %v844
  %v846 = vmul.f32 %v824, 1.442695
  %v847 = vpow.pop %v846
  %v848 = vmul.f32 %v825, 1.442695
  %v849 = vpow.pop %v848
  %v850 = vmul.f32 %v826, 1.442695
  %v851 = vpow.pop %v850
  %v852 = vmul.f32 %v827, 1.442695
  %v853 = vpow.pop %v852
  %v854 = vmul.f32 %v828, 1.442695
  %v855 = vpow.pop %v854
  %v856 = vmul.f32 %v829, 1.442695
  %v857 = vpow.pop %v856
  %v858 = vadd.f32 %v831, 1.0
  %v859 = vadd.f32 %v833, 1.0
  %v860 = vadd.f32 %v835, 1.0
  %v861 = vadd.f32 %v837, 1.0
  %v862 = vadd.f32 %v839, 1.0
  %v863 = vadd.f32 %v841, 1.0
  %v864 = vadd.f32 %v843, 1.0
  %v865 = vadd.f32 %v845, 1.0
  %v866 = vadd.f32 %v847, 1.0
  %v867 = vadd.f32 %v849, 1.0
  %v868 = vadd.f32 %v851, 1.0
  %v869 = vadd.f32 %v853, 1.0
  %v870 = vadd.f32 %v855, 1.0
  %v871 = vadd.f32 %v857, 1.0
  %v872 = vrcp.pop %v858
  %v873 = vmul.f32 1.0, %v872
  %v874 = vrcp.pop %v859
  %v875 = vmul.f32 1.0, %v874
  %v876 = vrcp.pop %v860
  %v877 = vmul.f32 1.0, %v876
  %v878 = vrcp.pop %v861
  %v879 = vmul.f32 1.0, %v878
  %v880 = vrcp.pop %v862
  %v881 = vmul.f32 1.0, %v880
  %v882 = vrcp.pop %v863
  %v883 = vmul.f32 1.0, %v882
  %v884 = vrcp.pop %v864
  %v885 = vmul.f32 1.0, %v884
  %v886 = vrcp.pop %v865
  %v887 = vmul.f32 1.0, %v886
  %v888 = vrcp.pop %v866
  %v889 = vmul.f32 1.0, %v888
  %v890 = vrcp.pop %v867
  %v891 = vmul.f32 1.0, %v890
  %v892 = vrcp.pop %v868
  %v893 = vmul.f32 1.0, %v892
  %v894 = vrcp.pop %v869
  %v895 = vmul.f32 1.0, %v894
  %v896 = vrcp.pop %v870
  %v897 = vmul.f32 1.0, %v896
  %v898 = vrcp.pop %v871
  %v899 = vmul.f32 1.0, %v898
  %914 = vrot.lane.b32.xlu0 %v873, 122
  %v915 = vpop.permute.xlu0 %914
  %916 = vrot.lane.b32.xlu0 %v875, 122
  %v917 = vpop.permute.xlu0 %916
  %918 = vrot.lane.b32.xlu0 %v877, 122
  %v919 = vpop.permute.xlu0 %918
  %920 = vrot.lane.b32.xlu0 %v879, 122
  %v921 = vpop.permute.xlu0 %920
  %922 = vrot.lane.b32.xlu0 %v881, 122
  %v923 = vpop.permute.xlu0 %922
  %924 = vrot.lane.b32.xlu0 %v883, 122
  %v925 = vpop.permute.xlu0 %924
  %926 = vrot.lane.b32.xlu0 %v885, 122
  %v927 = vpop.permute.xlu0 %926
  %928 = vrot.lane.b32.xlu0 %v887, 122
  %v929 = vpop.permute.xlu0 %928
  %930 = vrot.lane.b32.xlu0 %v889, 122
  %v931 = vpop.permute.xlu0 %930
  %932 = vrot.lane.b32.xlu0 %v891, 122
  %v933 = vpop.permute.xlu0 %932
  %934 = vrot.lane.b32.xlu0 %v893, 122
  %v935 = vpop.permute.xlu0 %934
  %936 = vrot.lane.b32.xlu0 %v895, 122
  %v937 = vpop.permute.xlu0 %936
  %938 = vrot.lane.b32.xlu0 %v897, 122
  %v939 = vpop.permute.xlu0 %938
  %940 = vrot.lane.b32.xlu0 %v899, 122
  %v941 = vpop.permute.xlu0 %940
  %v956 = vmul.f32 %v762, %v915
  %v957 = vmul.f32 %v765, %v917
  %v958 = vmul.f32 %v770, %v919
  %v959 = vmul.f32 %v773, %v921
  %v960 = vmul.f32 %v778, %v923
  %v961 = vmul.f32 %v781, %v925
  %v962 = vmul.f32 %v786, %v927
  %v963 = vmul.f32 %v789, %v929
  %v964 = vmul.f32 %v794, %v931
  %v965 = vmul.f32 %v797, %v933
  %v966 = vmul.f32 %v802, %v935
  %v967 = vmul.f32 %v805, %v937
  %v968 = vmul.f32 %v810, %v939
  %v969 = vmul.f32 %v813, %v941
  %v970 = vpack.c.bf16 %v957, %v956
  %v971 = vpack.c.bf16 %v959, %v958
  %v972 = vpack.c.bf16 %v961, %v960
  %v973 = vpack.c.bf16 %v963, %v962
  %v974 = vpack.c.bf16 %v965, %v964
  %v975 = vpack.c.bf16 %v967, %v966
  %v976 = vpack.c.bf16 %v969, %v968
  %v984 = vunpack.c.l.b16 %v970
  %v985 = vunpack.c.h.b16 %v970
  %v986 = vunpack.c.l.b16 %v971
  %v987 = vunpack.c.h.b16 %v971
  %v988 = vunpack.c.l.b16 %v972
  %v989 = vunpack.c.h.b16 %v972
  %v990 = vunpack.c.l.b16 %v973
  %v991 = vunpack.c.h.b16 %v973
  %v992 = vunpack.c.l.b16 %v974
  %v993 = vunpack.c.h.b16 %v974
  %v994 = vunpack.c.l.b16 %v975
  %v995 = vunpack.c.h.b16 %v975
  %v996 = vunpack.c.l.b16 %v976
  %v997 = vunpack.c.h.b16 %v976
  %v998 = vpack.c.b16 %v984, %v984
  %v999 = vpack.c.b16 %v985, %v985
  %v1000 = vpack.c.b16 %v986, %v986
  %v1001 = vpack.c.b16 %v987, %v987
  %v1002 = vpack.c.b16 %v988, %v988
  %v1003 = vpack.c.b16 %v989, %v989
  %v1004 = vpack.c.b16 %v990, %v990
  %v1005 = vpack.c.b16 %v991, %v991
  %v1006 = vpack.c.b16 %v992, %v992
  %v1007 = vpack.c.b16 %v993, %v993
  %v1008 = vpack.c.b16 %v994, %v994
  %v1009 = vpack.c.b16 %v995, %v995
  %v1010 = vpack.c.b16 %v996, %v996
  %v1011 = vpack.c.b16 %v997, %v997
  %vm1026 = vcmask 44032
  %1027 = vst.msk [vmem:[%s3] sm:$0xf] %vm1026, %v998
  %1028 = vst.msk [vmem:[%s3 + $0x4] sm:$0xf] %vm1026, %v999
  %1029 = vst.msk [vmem:[%s3 + $0x8] sm:$0xf] %vm1026, %v1000
  %1030 = vst.msk [vmem:[%s3 + $0xc] sm:$0xf] %vm1026, %v1001
  %1031 = vst.msk [vmem:[%s3 + $0x10] sm:$0xf] %vm1026, %v1002
  %1032 = vst.msk [vmem:[%s3 + $0x14] sm:$0xf] %vm1026, %v1003
  %1033 = vst.msk [vmem:[%s3 + $0x18] sm:$0xf] %vm1026, %v1004
  %1034 = vst.msk [vmem:[%s3 + $0x1c] sm:$0xf] %vm1026, %v1005
  %1035 = vst.msk [vmem:[%s3 + $0x20] sm:$0xf] %vm1026, %v1006
  %1036 = vst.msk [vmem:[%s3 + $0x24] sm:$0xf] %vm1026, %v1007
  %1037 = vst.msk [vmem:[%s3 + $0x28] sm:$0xf] %vm1026, %v1008
  %1038 = vst.msk [vmem:[%s3 + $0x2c] sm:$0xf] %vm1026, %v1009
  %1039 = vst.msk [vmem:[%s3 + $0x30] sm:$0xf] %vm1026, %v1010
  %1040 = vst.msk [vmem:[%s3 + $0x34] sm:$0xf] %vm1026, %v1011
  // Predicated region
  $region14: #{gated_conv2d_encoder_forward.10} parent=0 // pred_check
    _
  $region15: #{gated_conv2d_encoder_forward.10} parent=0 // pred_check_branch
    %1042 = sbr.rel (0) target = $region17
  $region16: #{gated_conv2d_encoder_forward.10} parent=0 // pred_region
    _
  $region17: #{gated_conv2d_encoder_forward.10} parent=0 // pred_fallthru
    _
  // Predicated region
  $region18: #{gated_conv2d_encoder_forward.10} parent=0 // pred_check
    _
  $region19: #{gated_conv2d_encoder_forward.10} parent=0 // pred_check_branch
    %1044 = sbr.rel (0) target = $region21
  $region20: #{gated_conv2d_encoder_forward.10} parent=0 // pred_region
    _
  $region21: #{gated_conv2d_encoder_forward.10} parent=0 // pred_fallthru
    _

// kernel: gated_conv2d_encoder_forward.11
$region0: #{gated_conv2d_encoder_forward.11}
  #allocation0 [shape = 'u32[]', space=smem, size = 0x4, offset = 0x4, fixed_abs, tag = 'smem constant byte address 0x4 - core index']
  #allocation1 [shape = 'u32[144,128]{1,0:T(1,128)}', space=vmem, size = 0x12000, scoped, tag = 'internal scratch']
  %s0 = inlined_call_operand.vmem [shape: bf16[2,302], index: 0, kind: input, shape index: {}]
  %s1 = inlined_call_operand.vmem [shape: bf16[302,32], index: 1, kind: input, shape index: {}]
  %s2 = inlined_call_operand.vmem [shape: f32[1,32], index: 2, kind: input, shape index: {}]
  %s3 = inlined_call_operand.hbm [shape: f32[2,16], index: 3, kind: output, shape index: {0}]
  %s4 = inlined_call_operand.hbm [shape: f32[2,16], index: 4, kind: output, shape index: {1}]
  %5 = xla_tuple %s3, %s4
  %s6 = sld [smem:[#allocation0]]
  $region30: #{gated_conv2d_encoder_forward.11} parent=0
    _
  %s8 = ssub.s32 1, %s6
  %s9 = scalar_select 0, %s8, %s6
  $region1: #{gated_conv2d_encoder_forward.11} parent=0
    #allocation2 [shape = 'u8[1024]{0}', space=vmem, size = 0x400, scoped, tag = 'output window, operand 0, single buffered']
    #allocation3 [shape = 's32[1]{0}', space=sflag, size = 0x4, scoped, tag = 'scoped memory for gated_conv2d_encoder_forward.11']
    #allocation4 [shape = 'u8[1024]{0}', space=vmem, size = 0x400, scoped, tag = 'output window, operand 1, single buffered']
    #allocation5 [shape = 's32[1]{0}', space=sflag, size = 0x4, scoped, tag = 'scoped memory for gated_conv2d_encoder_forward.11']
    %10 = vsyncpa [#allocation3], 0
    %11 = vsyncpa [#allocation5], 0
    // Predicated region
    $region2: #{gated_conv2d_encoder_forward.11} parent=1 // pred_check
      _
    $region3: #{gated_conv2d_encoder_forward.11} parent=1 // pred_check_branch
      %13 = sbr.rel (0) target = $region5
    $region4: #{gated_conv2d_encoder_forward.11} parent=1 // pred_region
      _
    $region5: #{gated_conv2d_encoder_forward.11} parent=1 // pred_fallthru
      _
    // Predicated region
    $region6: #{gated_conv2d_encoder_forward.11} parent=1 // pred_check
      _
    $region7: #{gated_conv2d_encoder_forward.11} parent=1 // pred_check_branch
      %15 = sbr.rel (0) target = $region9
    $region8: #{gated_conv2d_encoder_forward.11} parent=1 // pred_region
      _
    $region9: #{gated_conv2d_encoder_forward.11} parent=1 // pred_fallthru
      _
    // Predicated region
    $region10: #{gated_conv2d_encoder_forward.11} parent=1 // pred_check
      _
    $region11: #{gated_conv2d_encoder_forward.11} parent=1 // pred_check_branch
      %17 = sbr.rel (0) target = $region13
    $region12: #{gated_conv2d_encoder_forward.11} parent=1 // pred_region
      _
    $region13: #{gated_conv2d_encoder_forward.11} parent=1 // pred_fallthru
      _
    %v19 = vld [vmem:[%s0] sm:$0x7]
    %v20 = vld [vmem:[%s1] sm:$0xf]
    %v21 = vld [vmem:[%s1 + $0x4] sm:$0xf]
    %v22 = vld [vmem:[%s1 + $0x8] sm:$0xf]
    %v23 = vld [vmem:[%s1 + $0xc] sm:$0xf]
    %v24 = vld [vmem:[%s1 + $0x10] sm:$0xf]
    %v25 = vld [vmem:[%s1 + $0x14] sm:$0xf]
    %v26 = vld [vmem:[%s1 + $0x18] sm:$0xf]
    %v27 = vld [vmem:[%s1 + $0x1c] sm:$0xf]
    %v28 = vld [vmem:[%s1 + $0x20] sm:$0xf]
    %v29 = vld [vmem:[%s1 + $0x24] sm:$0xf]
    %v30 = vld [vmem:[%s1 + $0x28] sm:$0xf]
    %v31 = vld [vmem:[%s1 + $0x2c] sm:$0xf]
    %v32 = vld [vmem:[%s1 + $0x30] sm:$0xf]
    %v33 = vld [vmem:[%s1 + $0x34] sm:$0xf]
    %v34 = vld [vmem:[%s1 + $0x38] sm:$0xf]
    %v35 = vld [vmem:[%s1 + $0x3c] sm:$0xf]
    %v36 = vld [vmem:[%s1 + $0x40] sm:$0xf]
    %v37 = vld [vmem:[%s1 + $0x44] sm:$0xf]
    %v38 = vld [vmem:[%s1 + $0x48] sm:$0xf]
    %v39 = vld [vmem:[%s1 + $0x4c] sm:$0xf]
    %v40 = vld [vmem:[%s1 + $0x50] sm:$0xf]
    %v41 = vld [vmem:[%s1 + $0x54] sm:$0xf]
    %v42 = vld [vmem:[%s1 + $0x58] sm:$0xf]
    %v43 = vld [vmem:[%s1 + $0x5c] sm:$0xf]
    %v44 = vld [vmem:[%s1 + $0x60] sm:$0xf]
    %v45 = vld [vmem:[%s1 + $0x64] sm:$0xf]
    %v46 = vld [vmem:[%s1 + $0x68] sm:$0xf]
    %v47 = vld [vmem:[%s1 + $0x6c] sm:$0xf]
    %v48 = vld [vmem:[%s1 + $0x70] sm:$0xf]
    %v49 = vld [vmem:[%s1 + $0x74] sm:$0xf]
    %v50 = vld [vmem:[%s1 + $0x78] sm:$0xf]
    %v51 = vld [vmem:[%s1 + $0x7c] sm:$0xf]
    %v52 = vld [vmem:[%s1 + $0x80] sm:$0xf]
    %v53 = vld [vmem:[%s1 + $0x84] sm:$0xf]
    %v54 = vld [vmem:[%s1 + $0x88] sm:$0xf]
    %v55 = vld [vmem:[%s1 + $0x8c] sm:$0xf]
    %v56 = vld [vmem:[%s1 + $0x90] sm:$0xf]
    %v57 = vld [vmem:[%s1 + $0x94] sm:$0x7]
    %v58 = vld [vmem:[%s2] sm:$0x1]
    %v60 = vlaneseq
    %v61 = vshrl.u32 %v60, 7
    %v62 = vsub.s32 0, %v61
    %v63 = vrot.slane %v58, %v62
    %v67 = vunpack.c.l.s4 1966171168
    %v68 = vunpack.c.0.s8 %v67
    %v69 = vlaneseq
    %v70 = vshrl.u32 %v69, 7
    %v71 = vsub.s32 %v68, %v70
    %v72 = vrot.slane %v19, %v71
    %v73 = vcombine.high %v72, %v72
    %v75 = vunpack.c.l.s4 1966171168
    %v76 = vunpack.c.0.s8 %v75
    %v77 = vlaneseq
    %v78 = vshrl.u32 %v77, 7
    %v79 = vsub.s32 %v76, %v78
    %v80 = vrot.slane %v72, %v79
    %v82 = vunpack.c.l.s4 1966171168
    %v83 = vunpack.c.0.s8 %v82
    %v84 = vlaneseq
    %v85 = vshrl.u32 %v84, 7
    %v86 = vsub.s32 %v83, %v85
    %v87 = vrot.slane %v73, %v86
    %v88 = vcombine.high %v80, %v80
    %v129 = vunpack.c.l.b16 %v20
    %v130 = vunpack.c.l.b16 %v21
    %v131 = vunpack.c.l.b16 %v22
    %v132 = vunpack.c.l.b16 %v23
    %v133 = vunpack.c.l.b16 %v24
    %v134 = vunpack.c.l.b16 %v25
    %v135 = vunpack.c.l.b16 %v26
    %v136 = vunpack.c.l.b16 %v27
    %v137 = vunpack.c.l.b16 %v28
    %v138 = vunpack.c.l.b16 %v29
    %v139 = vunpack.c.l.b16 %v30
    %v140 = vunpack.c.l.b16 %v31
    %v141 = vunpack.c.l.b16 %v32
    %v142 = vunpack.c.l.b16 %v33
    %v143 = vunpack.c.l.b16 %v34
    %v144 = vunpack.c.l.b16 %v35
    %v145 = vunpack.c.l.b16 %v36
    %v146 = vunpack.c.l.b16 %v37
    %v147 = vunpack.c.l.b16 %v38
    %v148 = vunpack.c.l.b16 %v39
    %v149 = vunpack.c.l.b16 %v40
    %v150 = vunpack.c.l.b16 %v41
    %v151 = vunpack.c.l.b16 %v42
    %v152 = vunpack.c.l.b16 %v43
    %v153 = vunpack.c.l.b16 %v44
    %v154 = vunpack.c.l.b16 %v45
    %v155 = vunpack.c.l.b16 %v46
    %v156 = vunpack.c.l.b16 %v47
    %v157 = vunpack.c.l.b16 %v48
    %v158 = vunpack.c.l.b16 %v49
    %v159 = vunpack.c.l.b16 %v50
    %v160 = vunpack.c.l.b16 %v51
    %v161 = vunpack.c.l.b16 %v52
    %v162 = vunpack.c.l.b16 %v53
    %v163 = vunpack.c.l.b16 %v54
    %v164 = vunpack.c.l.b16 %v55
    %v165 = vunpack.c.l.b16 %v56
    %v166 = vunpack.c.l.b16 %v57
    %v167 = vpack.c.b16 %v130, %v129
    %v168 = vpack.c.b16 %v132, %v131
    %v169 = vpack.c.b16 %v134, %v133
    %v170 = vpack.c.b16 %v136, %v135
    %v171 = vpack.c.b16 %v138, %v137
    %v172 = vpack.c.b16 %v140, %v139
    %v173 = vpack.c.b16 %v142, %v141
    %v174 = vpack.c.b16 %v144, %v143
    %v175 = vpack.c.b16 %v146, %v145
    %v176 = vpack.c.b16 %v148, %v147
    %v177 = vpack.c.b16 %v150, %v149
    %v178 = vpack.c.b16 %v152, %v151
    %v179 = vpack.c.b16 %v154, %v153
    %v180 = vpack.c.b16 %v156, %v155
    %v181 = vpack.c.b16 %v158, %v157
    %v182 = vpack.c.b16 %v160, %v159
    %v183 = vpack.c.b16 %v162, %v161
    %v184 = vpack.c.b16 %v164, %v163
    %v185 = vpack.c.b16 %v166, %v165
    %vm204 = vcmask 375808
    %v206 = vsel %vm204, %v88, 0
    %vm208 = vcmask 1046528
    %v210 = vsel %vm208, %v185, 0
    %212 = vmatprep.subr.bf16.mxu0 0
    %213 = vmatpush1.bf16.msra.mxu0 %v174
    %214 = vmatprep.subr.bf16.mxu0 0
    %215 = vmatpush1.bf16.msra.mxu0 %v173
    %216 = vmatprep.subr.bf16.mxu0 0
    %217 = vmatpush1.bf16.msra.mxu0 %v172
    %218 = vmatprep.subr.bf16.mxu0 0
    %219 = vmatpush1.bf16.msra.mxu0 %v171
    %220 = vmatprep.subr.bf16.mxu0 0
    %221 = vmatpush1.bf16.msra.mxu0 %v170
    %222 = vmatprep.subr.bf16.mxu0 0
    %223 = vmatpush1.bf16.msra.mxu0 %v169
    %224 = vmatprep.subr.bf16.mxu0 0
    %225 = vmatpush1.bf16.msra.mxu0 %v168
    %226 = vmatprep.subr.bf16.mxu0 0
    %227 = vmatpush1.bf16.msra.mxu0 %v167
    %228 = vmatprep.subr.bf16.mxu0 0
    %229 = vmatpush2.bf16.msra.mxu0 %v182
    %230 = vmatprep.subr.bf16.mxu0 0
    %231 = vmatpush2.bf16.msra.mxu0 %v181
    %232 = vmatprep.subr.bf16.mxu0 0
    %233 = vmatpush2.bf16.msra.mxu0 %v180
    %234 = vmatprep.subr.bf16.mxu0 0
    %235 = vmatpush2.bf16.msra.mxu0 %v179
    %236 = vmatprep.subr.bf16.mxu0 0
    %237 = vmatpush2.bf16.msra.mxu0 %v178
    %238 = vmatprep.subr.bf16.mxu0 0
    %239 = vmatpush2.bf16.msra.mxu0 %v177
    %240 = vmatprep.subr.bf16.mxu0 0
    %241 = vmatpush2.bf16.msra.mxu0 %v176
    %242 = vmatprep.subr.bf16.mxu0 0
    %243 = vmatpush2.bf16.msra.mxu0 %v175
    %244 = vmatprep.mubr.bf16.mxu0 %v87
    %245 = vmatmul.mubr.bf16.gmra.mxu0 %v80
    %v246 = vpop.f32.mrf.mxu0
    %v247 = vadd.f32 %v63, %v246
    %v248 = vpop.f32.mrf.mxu0
    %v249 = vpop.f32.mrf.mxu0
    %v250 = vpop.f32.mrf.mxu0
    %251 = vdwg.mxu0
    %252 = vmatprep.subr.bf16.mxu0 0
    %253 = vmatpush1.bf16.msra.mxu0 0
    %254 = vmatprep.subr.bf16.mxu0 0
    %255 = vmatpush1.bf16.msra.mxu0 0
    %256 = vmatprep.subr.bf16.mxu0 0
    %257 = vmatpush1.bf16.msra.mxu0 0
    %258 = vmatprep.subr.bf16.mxu0 0
    %259 = vmatpush1.bf16.msra.mxu0 0
    %260 = vmatprep.subr.bf16.mxu0 0
    %261 = vmatpush1.bf16.msra.mxu0 0
    %262 = vmatprep.subr.bf16.mxu0 0
    %263 = vmatpush1.bf16.msra.mxu0 %v210
    %264 = vmatprep.subr.bf16.mxu0 0
    %265 = vmatpush1.bf16.msra.mxu0 %v184
    %266 = vmatprep.subr.bf16.mxu0 0
    %267 = vmatpush1.bf16.msra.mxu0 %v183
    %268 = vmatprep.subr.bf16.mxu0 0
    %269 = vmatpush2.bf16.msra.mxu0 0
    %270 = vmatprep.subr.bf16.mxu0 0
    %271 = vmatpush2.bf16.msra.mxu0 0
    %272 = vmatprep.subr.bf16.mxu0 0
    %273 = vmatpush2.bf16.msra.mxu0 0
    %274 = vmatprep.subr.bf16.mxu0 0
    %275 = vmatpush2.bf16.msra.mxu0 0
    %276 = vmatprep.subr.bf16.mxu0 0
    %277 = vmatpush2.bf16.msra.mxu0 0
    %278 = vmatprep.subr.bf16.mxu0 0
    %279 = vmatpush2.bf16.msra.mxu0 0
    %280 = vmatprep.subr.bf16.mxu0 0
    %281 = vmatpush2.bf16.msra.mxu0 0
    %282 = vmatprep.subr.bf16.mxu0 0
    %283 = vmatpush2.bf16.msra.mxu0 0
    %284 = vmatprep.mubr.bf16.mxu0 0
    %285 = vmatmul.mubr.bf16.gmra.mxu0 %v206
    %v286 = vpop.f32.mrf.mxu0
    %v287 = vadd.f32 %v247, %v286
    %v288 = vpop.f32.mrf.mxu0
    %v289 = vpop.f32.mrf.mxu0
    %v290 = vpop.f32.mrf.mxu0
    %291 = vdwg.mxu0
    %v292 = vmax.f32 %v287, -6.0
    %v293 = vmin.f32 %v292, 2.0
    %vm294 = vcmask 123904
    %295 = vst.msk [vmem:[#allocation2] sm:$0x3] %vm294, %v287
    %v296 = vmul.f32 %v293, 0.5
    %v297 = vmul.f32 %v296, 1.442695
    %v298 = vpow.pop %v297
    %300 = vrot.lane.b32.xlu0 %v298, 112
    %v301 = vpop.permute.xlu0 %300
    %303 = vst.msk [vmem:[#allocation4] sm:$0x3] %vm294, %v301
    // Predicated region
    $region14: #{gated_conv2d_encoder_forward.11} parent=1 // pred_check
      _
    $region15: #{gated_conv2d_encoder_forward.11} parent=1 // pred_check_branch
      %305 = sbr.rel (0) target = $region17
    $region16: #{gated_conv2d_encoder_forward.11} parent=1 // pred_region
      %s307 = ssub.s32 32, 32
      %308 = vsyncadd [#allocation3], %s307
      %s310 = sshll.u32 [#allocation2], 4
      %s311 = int_to_ptr.vmem [resolvable:$true] %s310
      %313 = dma.vmem_to_hbm [thread:$0]  %s311, 32, %s3, [#allocation3]
    $region17: #{gated_conv2d_encoder_forward.11} parent=1 // pred_fallthru
      _
    // Predicated region
    $region18: #{gated_conv2d_encoder_forward.11} parent=1 // pred_check
      _
    $region19: #{gated_conv2d_encoder_forward.11} parent=1 // pred_check_branch
      %315 = sbr.rel (0) target = $region21
    $region20: #{gated_conv2d_encoder_forward.11} parent=1 // pred_region
      %s317 = ssub.s32 32, 32
      %318 = vsyncadd [#allocation5], %s317
      %s320 = sshll.u32 [#allocation4], 4
      %s321 = int_to_ptr.vmem [resolvable:$true] %s320
      %323 = dma.vmem_to_hbm [thread:$0]  %s321, 32, %s4, [#allocation5]
    $region21: #{gated_conv2d_encoder_forward.11} parent=1 // pred_fallthru
      _
    // Predicated region
    $region22: #{gated_conv2d_encoder_forward.11} parent=1 // pred_check
      _
    $region23: #{gated_conv2d_encoder_forward.11} parent=1 // pred_check_branch
      %325 = sbr.rel (0) target = $region25
    $region24: #{gated_conv2d_encoder_forward.11} parent=1 // pred_region
      %326 = dma.done [#allocation3], 32
    $region25: #{gated_conv2d_encoder_forward.11} parent=1 // pred_fallthru
      _
    // Predicated region
    $region26: #{gated_conv2d_encoder_forward.11} parent=1 // pred_check
      _
    $region27: #{gated_conv2d_encoder_forward.11} parent=1 // pred_check_branch
      %328 = sbr.rel (0) target = $region29
    $region28: #{gated_conv2d_encoder_forward.11} parent=1 // pred_region
      %329 = dma.done [#allocation5], 32
    $region29: #{gated_conv2d_encoder_forward.11} parent=1 // pred_fallthru
      _
    %330 = vsyncpa [#allocation3], 1
    %331 = vsyncpa [#allocation5], 1

</llo_original>
